<compile_context>
chip_gen: v7x
topology: tpu7x:2x2x1
jax: 0.10.0
libtpu: 0.0.40
codegen_flags: <defaults>
</compile_context>

<pallas_src>
import functools

import jax
import jax.numpy as jnp
from jax.experimental import pallas as pl
from jax.experimental.pallas import tpu as pltpu

# ----------------------------- config ---------------------------------------
ENC1 = 16          # encoder conv1 channels
ENC2 = 32          # encoder conv2 channels
FDIM = 32          # correlation feature dim
HDIM = 32          # GRU hidden dim
CDIM = 32          # context dim
MOT = 32           # motion-encoder inner dim
ENC_OUT = 64       # motion feature dim (conv out (ENC_OUT-2) + flow (2))
FH_HID = 64        # flow head hidden
MASK_HID = 64      # mask head hidden
N_DOWNSAMPLE = 2
FACTOR = 2 ** N_DOWNSAMPLE
CORR_LEVELS = 2
CORR_RADIUS = 2
COR_PLANES = CORR_LEVELS * (2 * CORR_RADIUS + 1)

# row tile for matmul-style kernels: 1024 rows x <=864 bf16 cols x 2 buffers ~ 3.5MiB
# + weights + 256-wide f32 output ~ 2MiB  -> comfortably inside v7x's 64MiB VMEM and
# the 32MiB default scoped limit on v5e/v6e; larger tiles cut per-step overhead.
MM_TILE_M = 1024


def _round_up(v, m):
    return (v + m - 1) // m * m


def _pad_rows(m, tile_m):
    """Return (padded_M, TM) with padded_M % TM == 0 (TM multiple of 16 or == padded_M)."""
    m16 = _round_up(m, 16)
    if m16 <= tile_m:
        return m16, m16
    return _round_up(m, tile_m), tile_m


# ------------------------- Pallas kernels -----------------------------------
def _apply_act(x, act):
    if act == "relu":
        return jnp.maximum(x, 0.0)
    if act == "tanh":
        return jnp.tanh(x)
    if act == "sigmoid":
        return jax.nn.sigmoid(x)
    return x


def _mm_multi_kernel(*refs, n_in, segs):
    """sum_i x_i @ w_i + b with per-column-segment activation epilogue.

    refs = (x_0..x_{n-1}, w_0..w_{n-1}, b, out).  bf16 operands, f32 accumulation.
    Multi-segment activations are applied to their static column slice only (no
    full-tile transcendental + select)."""
    xs = refs[:n_in]
    ws = refs[n_in:2 * n_in]
    b_ref = refs[2 * n_in]
    o_ref = refs[2 * n_in + 1]
    acc = jnp.dot(xs[0][...], ws[0][...], preferred_element_type=jnp.float32)
    for i in range(1, n_in):
        acc = acc + jnp.dot(xs[i][...], ws[i][...], preferred_element_type=jnp.float32)
    acc = acc + b_ref[...]
    if len(segs) == 1:
        o_ref[...] = _apply_act(acc, segs[0][2])
    else:
        for lo, hi, act in segs:
            o_ref[:, lo:hi] = _apply_act(acc[:, lo:hi], act)


def _fused_mm_call(xs, ws_padded, b_full, segs, Np, tile_m):
    M = xs[0].shape[0]
    Mp, TM = _pad_rows(M, tile_m)
    xps = [jnp.pad(x, ((0, Mp - M), (0, 0))).astype(jnp.bfloat16) for x in xs]
    wps = [w.astype(jnp.bfloat16) for w in ws_padded]
    bp = b_full.reshape(1, Np).astype(jnp.float32)
    n_in = len(xs)
    in_specs = ([pl.BlockSpec((TM, x.shape[1]), lambda i: (i, 0)) for x in xps]
                + [pl.BlockSpec(w.shape, lambda i: (0, 0)) for w in wps]
                + [pl.BlockSpec((1, Np), lambda i: (0, 0))])
    out = pl.pallas_call(
        functools.partial(_mm_multi_kernel, n_in=n_in, segs=tuple(segs)),
        grid=(Mp // TM,),
        in_specs=in_specs,
        out_specs=pl.BlockSpec((TM, Np), lambda i: (i, 0)),
        out_shape=jax.ShapeDtypeStruct((Mp, Np), jnp.float32),
        compiler_params=pltpu.CompilerParams(dimension_semantics=("parallel",)),
    )(*xps, *wps, bp)
    return out[:M]


def fused_matmul(x, w, b, segs, pad_out_to=None, tile_m=MM_TILE_M):
    """(M,K)@(K,N)+b with per-column-segment activations, tiled over rows.

    Returns (M, Np) f32; the caller slices the columns it needs."""
    M, K = x.shape
    N = w.shape[1]
    Np = N if pad_out_to is None else max(N, pad_out_to)
    acts = {a for _, _, a in segs}
    if len(acts) == 1:                       # uniform activation -> single segment
        segs2 = ((0, Np, segs[0][2]),)
    else:
        segs2 = list(segs)
        if segs2[-1][1] < Np:
            segs2.append((segs2[-1][1], Np, "none"))
        segs2 = tuple(segs2)
    wp = jnp.pad(w, ((0, 0), (0, Np - N)))
    bp = jnp.pad(b, (0, Np - N))
    return _fused_mm_call([x], [wp], bp, segs2, Np, tile_m)


def fused_matmul_blockdiag(xs, ws, bs, acts, pad_out_to=None, tile_m=MM_TILE_M):
    """Block-diagonal fused matmul: out = [x_0@w_0 | x_1@w_1 | ...] + b (per-block act).

    Inputs are passed as separate refs (no wrapper-side concat of the K operands).
    Returns the full (M, Np) f32 output; callers slice by cumulative widths."""
    Ns = [w.shape[1] for w in ws]
    N = sum(Ns)
    Np = N if pad_out_to is None else max(N, pad_out_to)
    ws_padded, segs, off = [], [], 0
    for w, a in zip(ws, acts):
        n_i = w.shape[1]
        ws_padded.append(jnp.pad(w, ((0, 0), (off, Np - off - n_i))))
        segs.append((off, off + n_i, a))
        off += n_i
    b_full = jnp.pad(jnp.concatenate(bs, axis=0), (0, Np - N))
    if len(set(acts)) == 1:
        segs = [(0, Np, acts[0])]
    elif segs[-1][1] < Np:
        segs.append((segs[-1][1], Np, "none"))
    return _fused_mm_call(xs, ws_padded, b_full, segs, Np, tile_m)


def _gru_zr_kernel(x1_ref, w1_ref, x2_ref, w2_ref, b_ref, cz_ref, cr_ref, h_ref,
                   o_ref, *, hdim):
    # fused: [az|ar] = net_p @ w1 + mf_p @ w2 + b ; z = sigm(az+cz) ; rh = sigm(ar+cr)*h
    # single lane-dense (TM, 2*hdim) output = [z | rh].
    acc = jnp.dot(x1_ref[...], w1_ref[...], preferred_element_type=jnp.float32)
    acc = acc + jnp.dot(x2_ref[...], w2_ref[...], preferred_element_type=jnp.float32)
    acc = acc + b_ref[...]
    z = jax.nn.sigmoid(acc[:, :hdim] + cz_ref[...])
    r = jax.nn.sigmoid(acc[:, hdim:] + cr_ref[...])
    o_ref[:, :hdim] = z
    o_ref[:, hdim:] = r * h_ref[...]


def gru_zr_matmul(net_p, mf_p, wz, bz, wr, br, cz, cr, h, tile_m=MM_TILE_M):
    """Fused z/r gates.  Weights (3,3,HDIM+ENC_OUT,HDIM) are split along cin so the
    motion-feature patch slab can be shared (and built only once per iteration)."""
    M = net_p.shape[0]
    HD = wz.shape[-1]
    w1 = jnp.concatenate([wz[:, :, :HDIM, :].reshape(-1, HD),
                          wr[:, :, :HDIM, :].reshape(-1, HD)], axis=1)
    w2 = jnp.concatenate([wz[:, :, HDIM:, :].reshape(-1, HD),
                          wr[:, :, HDIM:, :].reshape(-1, HD)], axis=1)
    b = jnp.concatenate([bz, br], axis=0).reshape(1, 2 * HD).astype(jnp.float32)
    Mp, TM = _pad_rows(M, tile_m)
    pad = lambda a: jnp.pad(a, ((0, Mp - M), (0, 0)))
    out = pl.pallas_call(
        functools.partial(_gru_zr_kernel, hdim=HD),
        grid=(Mp // TM,),
        in_specs=[pl.BlockSpec((TM, net_p.shape[1]), lambda i: (i, 0)),
                  pl.BlockSpec(w1.shape, lambda i: (0, 0)),
                  pl.BlockSpec((TM, mf_p.shape[1]), lambda i: (i, 0)),
                  pl.BlockSpec(w2.shape, lambda i: (0, 0)),
                  pl.BlockSpec((1, 2 * HD), lambda i: (0, 0)),
                  pl.BlockSpec((TM, HD), lambda i: (i, 0)),
                  pl.BlockSpec((TM, HD), lambda i: (i, 0)),
                  pl.BlockSpec((TM, HD), lambda i: (i, 0))],
        out_specs=pl.BlockSpec((TM, 2 * HD), lambda i: (i, 0)),
        out_shape=jax.ShapeDtypeStruct((Mp, 2 * HD), jnp.float32),
        compiler_params=pltpu.CompilerParams(dimension_semantics=("parallel",)),
    )(pad(net_p).astype(jnp.bfloat16), w1.astype(jnp.bfloat16),
      pad(mf_p).astype(jnp.bfloat16), w2.astype(jnp.bfloat16),
      b, pad(cz), pad(cr), pad(h))
    return out[:M, :HD], out[:M, HD:]


def _gru_q_kernel(x1_ref, w1_ref, x2_ref, w2_ref, b_ref, cq_ref, z_ref, h_ref, o_ref):
    # fused: q = tanh(rh_p @ w1 + mf_p @ w2 + b + cq) ; h' = (1-z)*h + z*q
    acc = jnp.dot(x1_ref[...], w1_ref[...], preferred_element_type=jnp.float32)
    acc = acc + jnp.dot(x2_ref[...], w2_ref[...], preferred_element_type=jnp.float32)
    q = jnp.tanh(acc + b_ref[...] + cq_ref[...])
    z = z_ref[...]
    o_ref[...] = (1.0 - z) * h_ref[...] + z * q


def gru_q_matmul(rh_p, mf_p, wq, bq, cq, z, h, tile_m=MM_TILE_M):
    M = rh_p.shape[0]
    HD = wq.shape[-1]
    w1 = wq[:, :, :HDIM, :].reshape(-1, HD)
    w2 = wq[:, :, HDIM:, :].reshape(-1, HD)
    Mp, TM = _pad_rows(M, tile_m)
    pad = lambda a: jnp.pad(a, ((0, Mp - M), (0, 0)))
    # note: 32-wide output block -> masked store; acceptable (single small epilogue).
    out = pl.pallas_call(
        _gru_q_kernel,
        grid=(Mp // TM,),
        in_specs=[pl.BlockSpec((TM, rh_p.shape[1]), lambda i: (i, 0)),
                  pl.BlockSpec(w1.shape, lambda i: (0, 0)),
                  pl.BlockSpec((TM, mf_p.shape[1]), lambda i: (i, 0)),
                  pl.BlockSpec(w2.shape, lambda i: (0, 0)),
                  pl.BlockSpec((1, HD), lambda i: (0, 0)),
                  pl.BlockSpec((TM, HD), lambda i: (i, 0)),
                  pl.BlockSpec((TM, HD), lambda i: (i, 0)),
                  pl.BlockSpec((TM, HD), lambda i: (i, 0))],
        out_specs=pl.BlockSpec((TM, HD), lambda i: (i, 0)),
        out_shape=jax.ShapeDtypeStruct((Mp, HD), jnp.float32),
        compiler_params=pltpu.CompilerParams(dimension_semantics=("parallel",)),
    )(pad(rh_p).astype(jnp.bfloat16), w1.astype(jnp.bfloat16),
      pad(mf_p).astype(jnp.bfloat16), w2.astype(jnp.bfloat16),
      bq.reshape(1, HD).astype(jnp.float32), pad(cq), pad(z), pad(h))
    return out[:M]


def _corr_vol_kernel(f1_ref, f2_ref, f2p_ref, o0_ref, o1_ref, *, scale):
    # batched (TH, W, C) x (TH, W, C) -> (TH, W, W): contract C, batch over rows.
    # Level 1 of the pyramid is emitted from the same kernel using the avg-pooled f2
    # (linear => identical to avg-pooling corr0); saves a full HBM read of corr0.
    f1 = f1_ref[...]
    dn = (((2,), (2,)), ((0,), (0,)))
    o0_ref[...] = jax.lax.dot_general(
        f1, f2_ref[...], dn, preferred_element_type=jnp.float32) * scale
    o1_ref[...] = jax.lax.dot_general(
        f1, f2p_ref[...], dn, preferred_element_type=jnp.float32) * scale


def corr_volume_pyramid(f1, f2, tile_bh=8):
    """f1,f2: (B*H, W, C) -> [corr0 (BH,W,W), corr1 (BH,W,W//2)], scaled by 1/sqrt(C).

    Operands are cast to bf16 (MXU rate); accumulation stays f32, matching the
    reference 'reg' correlation's .float() accumulate (bf16 input rounding only)."""
    BH, W, C = f1.shape
    W2 = W // 2
    scale = 1.0 / (C ** 0.5)
    f2p = f2.reshape(BH, W2, 2, C).mean(axis=2)            # avg_pool1d(k=2,s=2) over W
    TH = min(tile_bh, BH)
    BHp = _round_up(BH, TH)
    padb = lambda a: jnp.pad(a, ((0, BHp - BH), (0, 0), (0, 0))).astype(jnp.bfloat16)
    out0, out1 = pl.pallas_call(
        functools.partial(_corr_vol_kernel, scale=scale),
        grid=(BHp // TH,),
        in_specs=[pl.BlockSpec((TH, W, C), lambda i: (i, 0, 0)),
                  pl.BlockSpec((TH, W, C), lambda i: (i, 0, 0)),
                  pl.BlockSpec((TH, W2, C), lambda i: (i, 0, 0))],
        out_specs=[pl.BlockSpec((TH, W, W), lambda i: (i, 0, 0)),
                   pl.BlockSpec((TH, W, W2), lambda i: (i, 0, 0))],
        out_shape=(jax.ShapeDtypeStruct((BHp, W, W), jnp.float32),
                   jax.ShapeDtypeStruct((BHp, W, W2), jnp.float32)),
        compiler_params=pltpu.CompilerParams(dimension_semantics=("parallel",)),
    )(padb(f1), padb(f2), padb(f2p))
    return [out0[:BH], out1[:BH]]


def _corr_sample_mec1_kernel(c0_ref, c1_ref, cx_ref, wm_ref, bm_ref, o_ref, *, radius):
    # Bilinear 1-D correlation lookup for both pyramid levels + fused 1x1 conv (mec1).
    # Per level only 2r+2 gathered columns are computed (frac(x+dx) == frac(x)), and
    # the 2r+1 taps are linear interps of adjacent columns.
    cx = cx_ref[...]                                       # (TH, W1, 1) f32
    wm = wm_ref[...]                                       # (COR_PLANES, MOT)
    taps = []
    for lvl, c_ref in enumerate((c0_ref, c1_ref)):
        corr = c_ref[...]                                  # (TH, W1, W2l)
        idx = jax.lax.broadcasted_iota(jnp.int32, corr.shape, 2)
        x = cx * (1.0 / (2.0 ** lvl))
        x0f = jnp.floor(x)
        a = x - x0f                                        # shared interp fraction
        x0 = x0f.astype(jnp.int32)
        # integer compare == zero-padded gather (matches zero padding outside [0, W2))
        g = [jnp.sum((idx == (x0 + j)).astype(jnp.float32) * corr, axis=2, keepdims=True)
             for j in range(-radius, radius + 2)]
        for t in range(2 * radius + 1):
            taps.append(g[t] * (1.0 - a) + g[t + 1] * a)   # (TH, W1, 1)
    # fused motion-encoder convc1 (1x1, COR_PLANES->MOT) + bias + relu: the lane-sparse
    # (M, COR_PLANES) corr slab is never written to HBM.
    acc = taps[0] * wm[0:1, :]
    for k in range(1, len(taps)):
        acc = acc + taps[k] * wm[k:k + 1, :]
    o_ref[...] = jnp.maximum(acc + bm_ref[...], 0.0)


def corr_sample_mec1(pyramid, cx, wm, bm, radius, tile_bh=8):
    """pyramid: [(BH,W1,W2), (BH,W1,W2//2)], cx: (BH,W1,1), wm: (COR_PLANES,MOT)
    -> relu(mec1(bilinear_corr_lookup)) of shape (BH, W1, MOT)."""
    BH, W1, _ = pyramid[0].shape
    MOTd = wm.shape[1]
    TH = min(tile_bh, BH)
    BHp = _round_up(BH, TH)
    padb = lambda a: jnp.pad(a, ((0, BHp - BH), (0, 0), (0, 0)))
    out = pl.pallas_call(
        functools.partial(_corr_sample_mec1_kernel, radius=radius),
        grid=(BHp // TH,),
        in_specs=[pl.BlockSpec((TH,) + pyramid[0].shape[1:], lambda i: (i, 0, 0)),
                  pl.BlockSpec((TH,) + pyramid[1].shape[1:], lambda i: (i, 0, 0)),
                  pl.BlockSpec((TH, W1, 1), lambda i: (i, 0, 0)),
                  pl.BlockSpec(wm.shape, lambda i: (0, 0)),
                  pl.BlockSpec((1, MOTd), lambda i: (0, 0))],
        out_specs=pl.BlockSpec((TH, W1, MOTd), lambda i: (i, 0, 0)),
        out_shape=jax.ShapeDtypeStruct((BHp, W1, MOTd), jnp.float32),
        compiler_params=pltpu.CompilerParams(dimension_semantics=("parallel",)),
    )(padb(pyramid[0]), padb(pyramid[1]), padb(cx),
      wm.astype(jnp.float32), bm.reshape(1, MOTd).astype(jnp.float32))
    return out[:BH]


def _upsample_kernel(m_ref, nb_ref, o_ref, *, f2):
    m = m_ref[...]                                         # (TM, 9, F2) logits
    nb = nb_ref[...]                                       # (TM, 9, D)  neighbour flows
    m = m - jnp.max(m, axis=1, keepdims=True)
    e = jnp.exp(m)
    inv = pl.reciprocal(jnp.sum(e, axis=1, keepdims=True), approx=True)
    sm = e * inv                                           # softmax over the 9 taps
    d = nb.shape[2]
    # flattened (TM, D*F2) output (lane-denser than a 16-lane 3-D block); no
    # (TM,9,D,F2) broadcast intermediate.
    for di in range(d):
        o_ref[:, di * f2:(di + 1) * f2] = jnp.sum(sm * nb[:, :, di:di + 1], axis=1)


def upsample_combine(mask, nb, tile_m=MM_TILE_M):
    M, K9, F2 = mask.shape
    D = nb.shape[2]
    Mp, TM = _pad_rows(M, tile_m)
    maskp = jnp.pad(mask, ((0, Mp - M), (0, 0), (0, 0)))
    nbp = jnp.pad(nb, ((0, Mp - M), (0, 0), (0, 0)))
    out = pl.pallas_call(
        functools.partial(_upsample_kernel, f2=F2),
        grid=(Mp // TM,),
        in_specs=[pl.BlockSpec((TM, K9, F2), lambda i: (i, 0, 0)),
                  pl.BlockSpec((TM, K9, D), lambda i: (i, 0, 0))],
        out_specs=pl.BlockSpec((TM, D * F2), lambda i: (i, 0)),
        out_shape=jax.ShapeDtypeStruct((Mp, D * F2), jnp.float32),
        compiler_params=pltpu.CompilerParams(dimension_semantics=("parallel",)),
    )(maskp, nbp)
    return out[:M].reshape(M, D, F2)


# ----------------------------- JAX glue -------------------------------------
def im2col(x, kh, kw, stride=1):
    """NHWC 'same' im2col -> ((N*Ho*Wo, kh*kw*C), Ho, Wo)."""
    # TODO(synk): at real resolutions accumulate the kh*kw taps in-kernel (shifted
    # index_maps on the padded NHWC input) instead of materializing the 9x/49x slab.
    ph, pw = kh // 2, kw // 2
    N, H, W, C = x.shape
    xp = jnp.pad(x, ((0, 0), (ph, ph), (pw, pw), (0, 0)))
    Ho = (H + 2 * ph - kh) // stride + 1
    Wo = (W + 2 * pw - kw) // stride + 1
    cols = []
    for ki in range(kh):
        for kj in range(kw):
            cols.append(xp[:, ki:ki + stride * (Ho - 1) + 1:stride,
                           kj:kj + stride * (Wo - 1) + 1:stride, :])
    patches = jnp.concatenate(cols, axis=-1)
    return patches.reshape(N * Ho * Wo, kh * kw * C), Ho, Wo


def conv2d_multi(x, heads, stride=1, pad_out_to=None):
    """Fused sibling convs sharing input x. heads: [(w(kh,kw,cin,cout), b, act)].
    Returns one NHWC array per head (single lane-dense matmul under the hood)."""
    kh, kw, cin, _ = heads[0][0].shape
    N = x.shape[0]
    patches, Ho, Wo = im2col(x, kh, kw, stride)
    w_cat = jnp.concatenate([w.reshape(kh * kw * cin, w.shape[-1]) for w, _, _ in heads],
                            axis=-1)
    b_cat = jnp.concatenate([b for _, b, _ in heads], axis=0)
    segs, off = [], 0
    for w, _, act in heads:
        co = w.shape[-1]
        segs.append((off, off + co, act))
        off += co
    out = fused_matmul(patches, w_cat, b_cat, segs, pad_out_to=pad_out_to)
    res, off = [], 0
    for w, _, _ in heads:
        co = w.shape[-1]
        res.append(out[:, off:off + co].reshape(N, Ho, Wo, co))
        off += co
    return res


def conv2d(x, w, b, stride=1, act="none", pad_out_to=None):
    return conv2d_multi(x, [(w, b, act)], stride=stride, pad_out_to=pad_out_to)[0]


def coords_grid_nhwc(batch, ht, wd):
    ys, xs = jnp.meshgrid(jnp.arange(ht, dtype=jnp.float32),
                          jnp.arange(wd, dtype=jnp.float32), indexing="ij")
    g = jnp.stack([xs, ys], axis=-1)                      # channel 0 = x, 1 = y
    return jnp.broadcast_to(g[None], (batch, ht, wd, 2))


def upsample_flow(flow, mask, factor):
    """Convex upsampling. flow: (N,Hc,Wc,2), mask: (N,Hc,Wc,9*factor^2) -> (N,2,fH,fW)."""
    N, Hc, Wc, D = flow.shape
    F2 = factor * factor
    fp = jnp.pad(factor * flow, ((0, 0), (1, 1), (1, 1), (0, 0)))   # zero pad (F.unfold)
    nbs = []
    for ki in range(3):
        for kj in range(3):
            nbs.append(fp[:, ki:ki + Hc, kj:kj + Wc, :])
    nb = jnp.stack(nbs, axis=3)                           # (N,Hc,Wc,9,D), k = ki*3+kj
    m = mask.reshape(N, Hc, Wc, 9, F2)                    # channel = k*F2 + fi*factor + fj
    M = N * Hc * Wc
    out = upsample_combine(m.reshape(M, 9, F2), nb.reshape(M, 9, D))   # (M, D, F2)
    out = out.reshape(N, Hc, Wc, D, factor, factor)
    out = jnp.transpose(out, (0, 3, 1, 4, 2, 5))          # (N,D,Hc,fi,Wc,fj)
    return out.reshape(N, D, factor * Hc, factor * Wc)


# --------------------------- parameters -------------------------------------
def init_params(key):
    keys = iter(jax.random.split(key, 40))

    def w(shape, scale=0.1):
        return scale * jax.random.normal(next(keys), shape, dtype=jnp.float32)

    def b(n):
        return jnp.zeros((n,), dtype=jnp.float32)

    p = {}
    # MultiBasicEncoder (simplified: 2 strided convs + heads)
    p["c1_w"], p["c1_b"] = w((3, 3, 3, ENC1)), b(ENC1)
    p["c2_w"], p["c2_b"] = w((3, 3, ENC1, ENC2)), b(ENC2)
    p["fmap_w"], p["fmap_b"] = w((3, 3, ENC2, FDIM)), b(FDIM)
    p["hid_w"], p["hid_b"] = w((3, 3, ENC2, HDIM)), b(HDIM)
    p["ctx_w"], p["ctx_b"] = w((3, 3, ENC2, CDIM)), b(CDIM)
    # context_zqr_convs[0]
    p["zqr_w"], p["zqr_b"] = w((3, 3, CDIM, 3 * HDIM)), b(3 * HDIM)
    # BasicMotionEncoder
    p["mec1_w"], p["mec1_b"] = w((1, 1, COR_PLANES, MOT)), b(MOT)
    p["mec2_w"], p["mec2_b"] = w((3, 3, MOT, MOT)), b(MOT)
    p["mef1_w"], p["mef1_b"] = w((7, 7, 2, MOT)), b(MOT)
    p["mef2_w"], p["mef2_b"] = w((3, 3, MOT, MOT)), b(MOT)
    p["me_w"], p["me_b"] = w((3, 3, 2 * MOT, ENC_OUT - 2)), b(ENC_OUT - 2)
    # ConvGRU (gru08)
    p["gz_w"], p["gz_b"] = w((3, 3, HDIM + ENC_OUT, HDIM)), b(HDIM)
    p["gr_w"], p["gr_b"] = w((3, 3, HDIM + ENC_OUT, HDIM)), b(HDIM)
    p["gq_w"], p["gq_b"] = w((3, 3, HDIM + ENC_OUT, HDIM)), b(HDIM)
    # FlowHead
    p["fh1_w"], p["fh1_b"] = w((3, 3, HDIM, FH_HID)), b(FH_HID)
    p["fh2_w"], p["fh2_b"] = w((3, 3, FH_HID, 2)), b(2)
    # mask head
    p["mk1_w"], p["mk1_b"] = w((3, 3, HDIM, MASK_HID)), b(MASK_HID)
    p["mk2_w"], p["mk2_b"] = w((1, 1, MASK_HID, 9 * FACTOR * FACTOR)), b(9 * FACTOR * FACTOR)
    return p


# ---------------------------- forward pass ----------------------------------
def raft_stereo_human_forward(params, image_pair, iters=2, flow_init=None,
                              test_mode=False):
    p = params
    x = jnp.transpose(image_pair, (0, 2, 3, 1)).astype(jnp.float32)   # NCHW -> NHWC
    B = x.shape[0]

    if flow_init is not None:
        # TODO(synk): downflow8(flow_init) + zeros concat path not exercised here.
        raise NotImplementedError("flow_init path not implemented")

    # ----- cnet -----
    f = conv2d(x, p["c1_w"], p["c1_b"], stride=2, act="relu")
    f = conv2d(f, p["c2_w"], p["c2_b"], stride=2, act="relu")
    # fmap / hidden / context heads fused into one lane-dense (…,128) matmul
    fmap, net, inp = conv2d_multi(
        f, [(p["fmap_w"], p["fmap_b"], "none"),
            (p["hid_w"], p["hid_b"], "tanh"),       # tanh(x[0])
            (p["ctx_w"], p["ctx_b"], "relu")],      # relu(x[1])
        pad_out_to=128)

    fmap1, fmap2 = fmap[:B // 2], fmap[B // 2:]
    fmap12 = jnp.concatenate([fmap1, fmap2], axis=0)
    fmap21 = jnp.concatenate([fmap2, fmap1], axis=0)

    # context_zqr_convs -> split into (cz, cr, cq)
    zqr = conv2d(inp, p["zqr_w"], p["zqr_b"], act="none", pad_out_to=128)
    cz, cr, cq = jnp.split(zqr, 3, axis=-1)

    Hc, Wc = net.shape[1], net.shape[2]
    M = B * Hc * Wc
    cz2, cr2, cq2 = (t.reshape(M, HDIM) for t in (cz, cr, cq))

    # ----- correlation pyramid (CorrBlock1D, both levels from one kernel) -----
    f1 = fmap12.reshape(B * Hc, Wc, FDIM)
    f2 = fmap21.reshape(B * Hc, Wc, FDIM)
    pyramid = corr_volume_pyramid(f1, f2)                   # [(BH,Wc,Wc), (BH,Wc,Wc//2)]

    # ----- initialize flow -----
    coords0 = coords_grid_nhwc(B, Hc, Wc)
    coords1 = coords0
    xy_mask = jnp.array([1.0, 0.0], dtype=jnp.float32)      # stereo: zero dy updates

    mec1_w = p["mec1_w"].reshape(COR_PLANES, MOT)

    flow_predictions = []
    flow_up = None
    for itr in range(iters):
        # correlation lookup + fused mec1 (1x1 conv + relu) in one kernel
        cx = coords1[..., 0:1].reshape(B * Hc, Wc, 1)
        cor1 = corr_sample_mec1(pyramid, cx, mec1_w, p["mec1_b"],
                                CORR_RADIUS).reshape(B, Hc, Wc, MOT)
        flow = coords1 - coords0

        # BasicMotionEncoder: mec2 + mef2 fused into one block-diagonal matmul whose
        # output is directly the [cor|flo] concat consumed by the `me` conv.
        flo1 = conv2d(flow, p["mef1_w"], p["mef1_b"], act="relu")
        cor_p, _, _ = im2col(cor1, 3, 3)
        flo_p, _, _ = im2col(flo1, 3, 3)
        corflo = fused_matmul_blockdiag(
            [cor_p, flo_p],
            [p["mec2_w"].reshape(9 * MOT, MOT), p["mef2_w"].reshape(9 * MOT, MOT)],
            [p["mec2_b"], p["mef2_b"]],
            ["relu", "relu"])[:, :2 * MOT].reshape(B, Hc, Wc, 2 * MOT)
        mot = conv2d(corflo, p["me_w"], p["me_b"], act="relu")
        motion_features = jnp.concatenate([mot, flow], axis=-1)     # (B,Hc,Wc,ENC_OUT)

        # ConvGRU (n_gru_layers == 1); gate convs + gate math fused in-kernel.
        # The motion-feature 3x3 tap slab is built once and shared by zr and q.
        mf_p, _, _ = im2col(motion_features, 3, 3)
        net_p, _, _ = im2col(net, 3, 3)
        z, rh = gru_zr_matmul(net_p, mf_p,
                              p["gz_w"], p["gz_b"], p["gr_w"], p["gr_b"],
                              cz2, cr2, net.reshape(M, HDIM))
        rh_p, _, _ = im2col(rh.reshape(B, Hc, Wc, HDIM), 3, 3)
        net = gru_q_matmul(rh_p, mf_p, p["gq_w"], p["gq_b"],
                           cq2, z, net.reshape(M, HDIM)).reshape(B, Hc, Wc, HDIM)

        # FlowHead + mask head: first convs fused into one 128-wide matmul;
        # fh2 (3x3 -> 2) + mk2 (1x1 -> 144) fused into one 256-wide block-diag matmul
        # (kills the 2-lane masked-store delta_flow output).
        dh, mh = conv2d_multi(net, [(p["fh1_w"], p["fh1_b"], "relu"),
                                    (p["mk1_w"], p["mk1_b"], "relu")])
        dh_p, _, _ = im2col(dh, 3, 3)
        mh_flat = mh.reshape(M, MASK_HID)
        head = fused_matmul_blockdiag(
            [dh_p, mh_flat],
            [p["fh2_w"].reshape(9 * FH_HID, 2), p["mk2_w"].reshape(MASK_HID, 9 * FACTOR * FACTOR)],
            [p["fh2_b"], p["mk2_b"]],
            ["none", "none"], pad_out_to=256)
        delta_flow = head[:, :2].reshape(B, Hc, Wc, 2)
        up_mask = 0.25 * head[:, 2:2 + 9 * FACTOR * FACTOR].reshape(
            B, Hc, Wc, 9 * FACTOR * FACTOR)

        # stereo: zero out the y-component of the update (broadcast mask, no scatter)
        delta_flow = delta_flow * xy_mask
        coords1 = coords1 + delta_flow

        if test_mode and itr < iters - 1:
            continue

        up = upsample_flow(coords1 - coords0, up_mask, FACTOR)      # (B,2,H,W)
        flow_up = up[:, :1]                                         # (B,1,H,W)
        flow_predictions.append(flow_up)

    if test_mode:
        half = flow_up.shape[0] // 2
        return flow_up[:half], flow_up[half:]
    return flow_predictions


# -------------------------------- main ---------------------------------------
if __name__ == "__main__":
    key = jax.random.PRNGKey(0)
    # image_pair = cat(left, right) along batch: (2N, 3, H, W) with N=1, H=W=16
    image_pair = jax.random.normal(key, (2, 3, 16, 16), dtype=jnp.float32)

    params = init_params(jax.random.PRNGKey(42))

    fwd = jax.jit(raft_stereo_human_forward, static_argnames=("iters", "test_mode"))

    preds = jax.block_until_ready(fwd(params, image_pair, iters=2, test_mode=False))
    assert isinstance(preds, (list, tuple)) and len(preds) == 2
    for fp in preds:
        assert fp.shape == (2, 1, 16, 16)
        assert bool(jnp.all(jnp.isfinite(fp)))

    # also exercise test_mode (returns the batch split into the two stereo directions)
    fu1, fu2 = jax.block_until_ready(fwd(params, image_pair, iters=2, test_mode=True))
    assert fu1.shape == (1, 1, 16, 16) and fu2.shape == (1, 1, 16, 16)
    assert bool(jnp.all(jnp.isfinite(fu1))) and bool(jnp.all(jnp.isfinite(fu2)))

    print("KERNEL_OK")
</pallas_src>

<mosaic_0001>
module attributes {stable_mosaic.version = 11 : i64} {
  func.func @_mm_multi_kernel(%arg0: i32, %arg1: memref<128x27xbf16, #tpu.memory_space<vmem>>, %arg2: memref<27x16xbf16, #tpu.memory_space<vmem>>, %arg3: memref<1x16xf32, #tpu.memory_space<vmem>>, %arg4: memref<128x16xf32, #tpu.memory_space<vmem>>) attributes {dimension_semantics = [#tpu.dimension_semantics<parallel>], iteration_bounds = array<i64: 1>, scalar_prefetch = 0 : i64, scratch_operands = 0 : i64, tpu.core_type = #tpu.core_type<tc>, window_params = [{transform_indices = @transform_0, window_bounds = array<i64: 128, 27>}, {pipeline_mode = #tpu.pipeline_mode<synchronous>, transform_indices = @transform_1, window_bounds = array<i64: 27, 16>}, {pipeline_mode = #tpu.pipeline_mode<synchronous>, transform_indices = @transform_2, window_bounds = array<i64: 1, 16>}, {transform_indices = @transform_3, window_bounds = array<i64: 128, 16>}]} {
    %c0 = arith.constant 0 : index
    %c0_0 = arith.constant 0 : index
    %0 = vector.load %arg1[%c0, %c0_0] : memref<128x27xbf16, #tpu.memory_space<vmem>>, vector<128x27xbf16>
    %c0_1 = arith.constant 0 : index
    %c0_2 = arith.constant 0 : index
    %1 = vector.load %arg2[%c0_1, %c0_2] : memref<27x16xbf16, #tpu.memory_space<vmem>>, vector<27x16xbf16>
    %cst = arith.constant dense<0.000000e+00> : vector<128x16xf32>
    %2 = tpu.matmul %0, %1, %cst {dimension_numbers = #tpu.dot_dimension_numbers<[1], [0], [0], [1], [0, 0, 1, 1], [], []>} : vector<128x27xbf16>, vector<27x16xbf16>, vector<128x16xf32> -> vector<128x16xf32>
    %c0_3 = arith.constant 0 : index
    %c0_4 = arith.constant 0 : index
    %3 = vector.load %arg3[%c0_3, %c0_4] : memref<1x16xf32, #tpu.memory_space<vmem>>, vector<1x16xf32>
    %4 = vector.broadcast %3 : vector<1x16xf32> to vector<128x16xf32>
    %5 = arith.addf %2, %4 : vector<128x16xf32>
    %cst_5 = arith.constant 0.000000e+00 : f32
    %6 = vector.broadcast %cst_5 : f32 to vector<128x16xf32>
    %7 = arith.maximumf %5, %6 : vector<128x16xf32>
    %c0_6 = arith.constant 0 : index
    %c0_7 = arith.constant 0 : index
    %8 = vector.load %arg4[%c0_6, %c0_7] : memref<128x16xf32, #tpu.memory_space<vmem>>, vector<128x16xf32>
    tpu.vector_store %arg4[%c0_6, %c0_7], %7 {strides = array<i32>} : memref<128x16xf32, #tpu.memory_space<vmem>>, vector<128x16xf32>,
    return
  }
  func.func @transform_0(%arg0: i32) -> (i32, i32) {
    %c0_i32 = arith.constant 0 : i32
    %c0_i32_0 = arith.constant 0 : i32
    return %arg0, %c0_i32 : i32, i32
  }
  func.func @transform_1(%arg0: i32) -> (i32, i32) {
    %c0_i32 = arith.constant 0 : i32
    %c0_i32_0 = arith.constant 0 : i32
    %c0_i32_1 = arith.constant 0 : i32
    return %c0_i32, %c0_i32_0 : i32, i32
  }
  func.func @transform_2(%arg0: i32) -> (i32, i32) {
    %c0_i32 = arith.constant 0 : i32
    %c0_i32_0 = arith.constant 0 : i32
    %c0_i32_1 = arith.constant 0 : i32
    return %c0_i32, %c0_i32_0 : i32, i32
  }
  func.func @transform_3(%arg0: i32) -> (i32, i32) {
    %c0_i32 = arith.constant 0 : i32
    %c0_i32_0 = arith.constant 0 : i32
    return %arg0, %c0_i32 : i32, i32
  }
}

module attributes {stable_mosaic.version = 11 : i64} {
  func.func @_mm_multi_kernel(%arg0: i32, %arg1: memref<32x144xbf16, #tpu.memory_space<vmem>>, %arg2: memref<144x32xbf16, #tpu.memory_space<vmem>>, %arg3: memref<1x32xf32, #tpu.memory_space<vmem>>, %arg4: memref<32x32xf32, #tpu.memory_space<vmem>>) attributes {dimension_semantics = [#tpu.dimension_semantics<parallel>], iteration_bounds = array<i64: 1>, scalar_prefetch = 0 : i64, scratch_operands = 0 : i64, tpu.core_type = #tpu.core_type<tc>, window_params = [{transform_indices = @transform_0, window_bounds = array<i64: 32, 144>}, {pipeline_mode = #tpu.pipeline_mode<synchronous>, transform_indices = @transform_1, window_bounds = array<i64: 144, 32>}, {pipeline_mode = #tpu.pipeline_mode<synchronous>, transform_indices = @transform_2, window_bounds = array<i64: 1, 32>}, {transform_indices = @transform_3, window_bounds = array<i64: 32, 32>}]} {
    %c0 = arith.constant 0 : index
    %c0_0 = arith.constant 0 : index
    %0 = vector.load %arg1[%c0, %c0_0] : memref<32x144xbf16, #tpu.memory_space<vmem>>, vector<32x144xbf16>
    %c0_1 = arith.constant 0 : index
    %c0_2 = arith.constant 0 : index
    %1 = vector.load %arg2[%c0_1, %c0_2] : memref<144x32xbf16, #tpu.memory_space<vmem>>, vector<144x32xbf16>
    %cst = arith.constant dense<0.000000e+00> : vector<32x32xf32>
    %2 = tpu.matmul %0, %1, %cst {dimension_numbers = #tpu.dot_dimension_numbers<[1], [0], [0], [1], [0, 0, 1, 1], [], []>} : vector<32x144xbf16>, vector<144x32xbf16>, vector<32x32xf32> -> vector<32x32xf32>
    %c0_3 = arith.constant 0 : index
    %c0_4 = arith.constant 0 : index
    %3 = vector.load %arg3[%c0_3, %c0_4] : memref<1x32xf32, #tpu.memory_space<vmem>>, vector<1x32xf32>
    %4 = vector.broadcast %3 : vector<1x32xf32> to vector<32x32xf32>
    %5 = arith.addf %2, %4 : vector<32x32xf32>
    %cst_5 = arith.constant 0.000000e+00 : f32
    %6 = vector.broadcast %cst_5 : f32 to vector<32x32xf32>
    %7 = arith.maximumf %5, %6 : vector<32x32xf32>
    %c0_6 = arith.constant 0 : index
    %c0_7 = arith.constant 0 : index
    %8 = vector.load %arg4[%c0_6, %c0_7] : memref<32x32xf32, #tpu.memory_space<vmem>>, vector<32x32xf32>
    tpu.vector_store %arg4[%c0_6, %c0_7], %7 {strides = array<i32>} : memref<32x32xf32, #tpu.memory_space<vmem>>, vector<32x32xf32>,
    return
  }
  func.func @transform_0(%arg0: i32) -> (i32, i32) {
    %c0_i32 = arith.constant 0 : i32
    %c0_i32_0 = arith.constant 0 : i32
    return %arg0, %c0_i32 : i32, i32
  }
  func.func @transform_1(%arg0: i32) -> (i32, i32) {
    %c0_i32 = arith.constant 0 : i32
    %c0_i32_0 = arith.constant 0 : i32
    %c0_i32_1 = arith.constant 0 : i32
    return %c0_i32, %c0_i32_0 : i32, i32
  }
  func.func @transform_2(%arg0: i32) -> (i32, i32) {
    %c0_i32 = arith.constant 0 : i32
    %c0_i32_0 = arith.constant 0 : i32
    %c0_i32_1 = arith.constant 0 : i32
    return %c0_i32, %c0_i32_0 : i32, i32
  }
  func.func @transform_3(%arg0: i32) -> (i32, i32) {
    %c0_i32 = arith.constant 0 : i32
    %c0_i32_0 = arith.constant 0 : i32
    return %arg0, %c0_i32 : i32, i32
  }
}

module attributes {stable_mosaic.version = 11 : i64} {
  func.func @_mm_multi_kernel(%arg0: i32, %arg1: memref<32x288xbf16, #tpu.memory_space<vmem>>, %arg2: memref<288x128xbf16, #tpu.memory_space<vmem>>, %arg3: memref<1x128xf32, #tpu.memory_space<vmem>>, %arg4: memref<32x128xf32, #tpu.memory_space<vmem>>) attributes {dimension_semantics = [#tpu.dimension_semantics<parallel>], iteration_bounds = array<i64: 1>, scalar_prefetch = 0 : i64, scratch_operands = 0 : i64, tpu.core_type = #tpu.core_type<tc>, window_params = [{transform_indices = @transform_0, window_bounds = array<i64: 32, 288>}, {pipeline_mode = #tpu.pipeline_mode<synchronous>, transform_indices = @transform_1, window_bounds = array<i64: 288, 128>}, {pipeline_mode = #tpu.pipeline_mode<synchronous>, transform_indices = @transform_2, window_bounds = array<i64: 1, 128>}, {transform_indices = @transform_3, window_bounds = array<i64: 32, 128>}]} {
    %c0 = arith.constant 0 : index
    %c0_0 = arith.constant 0 : index
    %0 = vector.load %arg1[%c0, %c0_0] : memref<32x288xbf16, #tpu.memory_space<vmem>>, vector<32x288xbf16>
    %c0_1 = arith.constant 0 : index
    %c0_2 = arith.constant 0 : index
    %1 = vector.load %arg2[%c0_1, %c0_2] : memref<288x128xbf16, #tpu.memory_space<vmem>>, vector<288x128xbf16>
    %cst = arith.constant dense<0.000000e+00> : vector<32x128xf32>
    %2 = tpu.matmul %0, %1, %cst {dimension_numbers = #tpu.dot_dimension_numbers<[1], [0], [0], [1], [0, 0, 1, 1], [], []>} : vector<32x288xbf16>, vector<288x128xbf16>, vector<32x128xf32> -> vector<32x128xf32>
    %c0_3 = arith.constant 0 : index
    %c0_4 = arith.constant 0 : index
    %3 = vector.load %arg3[%c0_3, %c0_4] : memref<1x128xf32, #tpu.memory_space<vmem>>, vector<1x128xf32>
    %4 = vector.broadcast %3 : vector<1x128xf32> to vector<32x128xf32>
    %5 = arith.addf %2, %4 : vector<32x128xf32>
    %6 = vector.extract_strided_slice %5 {offsets = [0, 0], sizes = [32, 32], strides = [1, 1]} : vector<32x128xf32> to vector<32x32xf32>
    %c0_5 = arith.constant 0 : index
    %c0_6 = arith.constant 0 : index
    %7 = vector.load %arg4[%c0_5, %c0_6] : memref<32x128xf32, #tpu.memory_space<vmem>>, vector<32x32xf32>
    tpu.vector_store %arg4[%c0_5, %c0_6], %6 {strides = array<i32>} : memref<32x128xf32, #tpu.memory_space<vmem>>, vector<32x32xf32>,
    %8 = vector.extract_strided_slice %5 {offsets = [0, 32], sizes = [32, 32], strides = [1, 1]} : vector<32x128xf32> to vector<32x32xf32>
    %9 = math.tanh %8 : vector<32x32xf32>
    %c0_7 = arith.constant 0 : index
    %c32 = arith.constant 32 : index
    %10 = vector.load %arg4[%c0_7, %c32] : memref<32x128xf32, #tpu.memory_space<vmem>>, vector<32x32xf32>
    tpu.vector_store %arg4[%c0_7, %c32], %9 {strides = array<i32>} : memref<32x128xf32, #tpu.memory_space<vmem>>, vector<32x32xf32>,
    %11 = vector.extract_strided_slice %5 {offsets = [0, 64], sizes = [32, 32], strides = [1, 1]} : vector<32x128xf32> to vector<32x32xf32>
    %cst_8 = arith.constant 0.000000e+00 : f32
    %12 = vector.broadcast %cst_8 : f32 to vector<32x32xf32>
    %13 = arith.maximumf %11, %12 : vector<32x32xf32>
    %c0_9 = arith.constant 0 : index
    %c64 = arith.constant 64 : index
    %14 = vector.load %arg4[%c0_9, %c64] : memref<32x128xf32, #tpu.memory_space<vmem>>, vector<32x32xf32>
    tpu.vector_store %arg4[%c0_9, %c64], %13 {strides = array<i32>} : memref<32x128xf32, #tpu.memory_space<vmem>>, vector<32x32xf32>,
    %15 = vector.extract_strided_slice %5 {offsets = [0, 96], sizes = [32, 32], strides = [1, 1]} : vector<32x128xf32> to vector<32x32xf32>
    %c0_10 = arith.constant 0 : index
    %c96 = arith.constant 96 : index
    %16 = vector.load %arg4[%c0_10, %c96] : memref<32x128xf32, #tpu.memory_space<vmem>>, vector<32x32xf32>
    tpu.vector_store %arg4[%c0_10, %c96], %15 {strides = array<i32>} : memref<32x128xf32, #tpu.memory_space<vmem>>, vector<32x32xf32>,
    return
  }
  func.func @transform_0(%arg0: i32) -> (i32, i32) {
    %c0_i32 = arith.constant 0 : i32
    %c0_i32_0 = arith.constant 0 : i32
    return %arg0, %c0_i32 : i32, i32
  }
  func.func @transform_1(%arg0: i32) -> (i32, i32) {
    %c0_i32 = arith.constant 0 : i32
    %c0_i32_0 = arith.constant 0 : i32
    %c0_i32_1 = arith.constant 0 : i32
    return %c0_i32, %c0_i32_0 : i32, i32
  }
  func.func @transform_2(%arg0: i32) -> (i32, i32) {
    %c0_i32 = arith.constant 0 : i32
    %c0_i32_0 = arith.constant 0 : i32
    %c0_i32_1 = arith.constant 0 : i32
    return %c0_i32, %c0_i32_0 : i32, i32
  }
  func.func @transform_3(%arg0: i32) -> (i32, i32) {
    %c0_i32 = arith.constant 0 : i32
    %c0_i32_0 = arith.constant 0 : i32
    return %arg0, %c0_i32 : i32, i32
  }
}

module attributes {stable_mosaic.version = 11 : i64} {
  func.func @_mm_multi_kernel(%arg0: i32, %arg1: memref<32x288xbf16, #tpu.memory_space<vmem>>, %arg2: memref<288x128xbf16, #tpu.memory_space<vmem>>, %arg3: memref<1x128xf32, #tpu.memory_space<vmem>>, %arg4: memref<32x128xf32, #tpu.memory_space<vmem>>) attributes {dimension_semantics = [#tpu.dimension_semantics<parallel>], iteration_bounds = array<i64: 1>, scalar_prefetch = 0 : i64, scratch_operands = 0 : i64, tpu.core_type = #tpu.core_type<tc>, window_params = [{transform_indices = @transform_0, window_bounds = array<i64: 32, 288>}, {pipeline_mode = #tpu.pipeline_mode<synchronous>, transform_indices = @transform_1, window_bounds = array<i64: 288, 128>}, {pipeline_mode = #tpu.pipeline_mode<synchronous>, transform_indices = @transform_2, window_bounds = array<i64: 1, 128>}, {transform_indices = @transform_3, window_bounds = array<i64: 32, 128>}]} {
    %c0 = arith.constant 0 : index
    %c0_0 = arith.constant 0 : index
    %0 = vector.load %arg1[%c0, %c0_0] : memref<32x288xbf16, #tpu.memory_space<vmem>>, vector<32x288xbf16>
    %c0_1 = arith.constant 0 : index
    %c0_2 = arith.constant 0 : index
    %1 = vector.load %arg2[%c0_1, %c0_2] : memref<288x128xbf16, #tpu.memory_space<vmem>>, vector<288x128xbf16>
    %cst = arith.constant dense<0.000000e+00> : vector<32x128xf32>
    %2 = tpu.matmul %0, %1, %cst {dimension_numbers = #tpu.dot_dimension_numbers<[1], [0], [0], [1], [0, 0, 1, 1], [], []>} : vector<32x288xbf16>, vector<288x128xbf16>, vector<32x128xf32> -> vector<32x128xf32>
    %c0_3 = arith.constant 0 : index
    %c0_4 = arith.constant 0 : index
    %3 = vector.load %arg3[%c0_3, %c0_4] : memref<1x128xf32, #tpu.memory_space<vmem>>, vector<1x128xf32>
    %4 = vector.broadcast %3 : vector<1x128xf32> to vector<32x128xf32>
    %5 = arith.addf %2, %4 : vector<32x128xf32>
    %c0_5 = arith.constant 0 : index
    %c0_6 = arith.constant 0 : index
    %6 = vector.load %arg4[%c0_5, %c0_6] : memref<32x128xf32, #tpu.memory_space<vmem>>, vector<32x128xf32>
    tpu.vector_store %arg4[%c0_5, %c0_6], %5 {strides = array<i32>} : memref<32x128xf32, #tpu.memory_space<vmem>>, vector<32x128xf32>,
    return
  }
  func.func @transform_0(%arg0: i32) -> (i32, i32) {
    %c0_i32 = arith.constant 0 : i32
    %c0_i32_0 = arith.constant 0 : i32
    return %arg0, %c0_i32 : i32, i32
  }
  func.func @transform_1(%arg0: i32) -> (i32, i32) {
    %c0_i32 = arith.constant 0 : i32
    %c0_i32_0 = arith.constant 0 : i32
    %c0_i32_1 = arith.constant 0 : i32
    return %c0_i32, %c0_i32_0 : i32, i32
  }
  func.func @transform_2(%arg0: i32) -> (i32, i32) {
    %c0_i32 = arith.constant 0 : i32
    %c0_i32_0 = arith.constant 0 : i32
    %c0_i32_1 = arith.constant 0 : i32
    return %c0_i32, %c0_i32_0 : i32, i32
  }
  func.func @transform_3(%arg0: i32) -> (i32, i32) {
    %c0_i32 = arith.constant 0 : i32
    %c0_i32_0 = arith.constant 0 : i32
    return %arg0, %c0_i32 : i32, i32
  }
}

module attributes {stable_mosaic.version = 11 : i64} {
  func.func @_mm_multi_kernel(%arg0: i32, %arg1: memref<32x98xbf16, #tpu.memory_space<vmem>>, %arg2: memref<98x32xbf16, #tpu.memory_space<vmem>>, %arg3: memref<1x32xf32, #tpu.memory_space<vmem>>, %arg4: memref<32x32xf32, #tpu.memory_space<vmem>>) attributes {dimension_semantics = [#tpu.dimension_semantics<parallel>], iteration_bounds = array<i64: 1>, scalar_prefetch = 0 : i64, scratch_operands = 0 : i64, tpu.core_type = #tpu.core_type<tc>, window_params = [{transform_indices = @transform_0, window_bounds = array<i64: 32, 98>}, {pipeline_mode = #tpu.pipeline_mode<synchronous>, transform_indices = @transform_1, window_bounds = array<i64: 98, 32>}, {pipeline_mode = #tpu.pipeline_mode<synchronous>, transform_indices = @transform_2, window_bounds = array<i64: 1, 32>}, {transform_indices = @transform_3, window_bounds = array<i64: 32, 32>}]} {
    %c0 = arith.constant 0 : index
    %c0_0 = arith.constant 0 : index
    %0 = vector.load %arg1[%c0, %c0_0] : memref<32x98xbf16, #tpu.memory_space<vmem>>, vector<32x98xbf16>
    %c0_1 = arith.constant 0 : index
    %c0_2 = arith.constant 0 : index
    %1 = vector.load %arg2[%c0_1, %c0_2] : memref<98x32xbf16, #tpu.memory_space<vmem>>, vector<98x32xbf16>
    %cst = arith.constant dense<0.000000e+00> : vector<32x32xf32>
    %2 = tpu.matmul %0, %1, %cst {dimension_numbers = #tpu.dot_dimension_numbers<[1], [0], [0], [1], [0, 0, 1, 1], [], []>} : vector<32x98xbf16>, vector<98x32xbf16>, vector<32x32xf32> -> vector<32x32xf32>
    %c0_3 = arith.constant 0 : index
    %c0_4 = arith.constant 0 : index
    %3 = vector.load %arg3[%c0_3, %c0_4] : memref<1x32xf32, #tpu.memory_space<vmem>>, vector<1x32xf32>
    %4 = vector.broadcast %3 : vector<1x32xf32> to vector<32x32xf32>
    %5 = arith.addf %2, %4 : vector<32x32xf32>
    %cst_5 = arith.constant 0.000000e+00 : f32
    %6 = vector.broadcast %cst_5 : f32 to vector<32x32xf32>
    %7 = arith.maximumf %5, %6 : vector<32x32xf32>
    %c0_6 = arith.constant 0 : index
    %c0_7 = arith.constant 0 : index
    %8 = vector.load %arg4[%c0_6, %c0_7] : memref<32x32xf32, #tpu.memory_space<vmem>>, vector<32x32xf32>
    tpu.vector_store %arg4[%c0_6, %c0_7], %7 {strides = array<i32>} : memref<32x32xf32, #tpu.memory_space<vmem>>, vector<32x32xf32>,
    return
  }
  func.func @transform_0(%arg0: i32) -> (i32, i32) {
    %c0_i32 = arith.constant 0 : i32
    %c0_i32_0 = arith.constant 0 : i32
    return %arg0, %c0_i32 : i32, i32
  }
  func.func @transform_1(%arg0: i32) -> (i32, i32) {
    %c0_i32 = arith.constant 0 : i32
    %c0_i32_0 = arith.constant 0 : i32
    %c0_i32_1 = arith.constant 0 : i32
    return %c0_i32, %c0_i32_0 : i32, i32
  }
  func.func @transform_2(%arg0: i32) -> (i32, i32) {
    %c0_i32 = arith.constant 0 : i32
    %c0_i32_0 = arith.constant 0 : i32
    %c0_i32_1 = arith.constant 0 : i32
    return %c0_i32, %c0_i32_0 : i32, i32
  }
  func.func @transform_3(%arg0: i32) -> (i32, i32) {
    %c0_i32 = arith.constant 0 : i32
    %c0_i32_0 = arith.constant 0 : i32
    return %arg0, %c0_i32 : i32, i32
  }
}

module attributes {stable_mosaic.version = 11 : i64} {
  func.func @_corr_vol_kernel(%arg0: i32, %arg1: memref<8x4x32xbf16, #tpu.memory_space<vmem>>, %arg2: memref<8x4x32xbf16, #tpu.memory_space<vmem>>, %arg3: memref<8x2x32xbf16, #tpu.memory_space<vmem>>, %arg4: memref<8x4x4xf32, #tpu.memory_space<vmem>>, %arg5: memref<8x4x2xf32, #tpu.memory_space<vmem>>) attributes {dimension_semantics = [#tpu.dimension_semantics<parallel>], iteration_bounds = array<i64: 1>, scalar_prefetch = 0 : i64, scratch_operands = 0 : i64, tpu.core_type = #tpu.core_type<tc>, window_params = [{transform_indices = @transform_0, window_bounds = array<i64: 8, 4, 32>}, {transform_indices = @transform_1, window_bounds = array<i64: 8, 4, 32>}, {transform_indices = @transform_2, window_bounds = array<i64: 8, 2, 32>}, {transform_indices = @transform_3, window_bounds = array<i64: 8, 4, 4>}, {transform_indices = @transform_4, window_bounds = array<i64: 8, 4, 2>}]} {
    %c0 = arith.constant 0 : index
    %c0_0 = arith.constant 0 : index
    %c0_1 = arith.constant 0 : index
    %0 = vector.load %arg1[%c0, %c0_0, %c0_1] : memref<8x4x32xbf16, #tpu.memory_space<vmem>>, vector<8x4x32xbf16>
    %c0_2 = arith.constant 0 : index
    %c0_3 = arith.constant 0 : index
    %c0_4 = arith.constant 0 : index
    %1 = vector.load %arg2[%c0_2, %c0_3, %c0_4] : memref<8x4x32xbf16, #tpu.memory_space<vmem>>, vector<8x4x32xbf16>
    %cst = arith.constant dense<0.000000e+00> : vector<8x4x4xf32>
    %2 = tpu.matmul %0, %1, %cst {dimension_numbers = #tpu.dot_dimension_numbers<[2], [2], [1], [1], [0, 0, 0, 1, 1, 1], [0], [0]>} : vector<8x4x32xbf16>, vector<8x4x32xbf16>, vector<8x4x4xf32> -> vector<8x4x4xf32>
    %cst_5 = arith.constant 0.176776692 : f32
    %3 = vector.broadcast %cst_5 : f32 to vector<8x4x4xf32>
    %4 = arith.mulf %2, %3 : vector<8x4x4xf32>
    %c0_6 = arith.constant 0 : index
    %c0_7 = arith.constant 0 : index
    %c0_8 = arith.constant 0 : index
    %5 = vector.load %arg4[%c0_6, %c0_7, %c0_8] : memref<8x4x4xf32, #tpu.memory_space<vmem>>, vector<8x4x4xf32>
    tpu.vector_store %arg4[%c0_6, %c0_7, %c0_8], %4 {strides = array<i32>} : memref<8x4x4xf32, #tpu.memory_space<vmem>>, vector<8x4x4xf32>,
    %c0_9 = arith.constant 0 : index
    %c0_10 = arith.constant 0 : index
    %c0_11 = arith.constant 0 : index
    %6 = vector.load %arg3[%c0_9, %c0_10, %c0_11] : memref<8x2x32xbf16, #tpu.memory_space<vmem>>, vector<8x2x32xbf16>
    %cst_12 = arith.constant dense<0.000000e+00> : vector<8x4x2xf32>
    %7 = tpu.matmul %0, %6, %cst_12 {dimension_numbers = #tpu.dot_dimension_numbers<[2], [2], [1], [1], [0, 0, 0, 1, 1, 1], [0], [0]>} : vector<8x4x32xbf16>, vector<8x2x32xbf16>, vector<8x4x2xf32> -> vector<8x4x2xf32>
    %cst_13 = arith.constant 0.176776692 : f32
    %8 = vector.broadcast %cst_13 : f32 to vector<8x4x2xf32>
    %9 = arith.mulf %7, %8 : vector<8x4x2xf32>
    %c0_14 = arith.constant 0 : index
    %c0_15 = arith.constant 0 : index
    %c0_16 = arith.constant 0 : index
    %10 = vector.load %arg5[%c0_14, %c0_15, %c0_16] : memref<8x4x2xf32, #tpu.memory_space<vmem>>, vector<8x4x2xf32>
    tpu.vector_store %arg5[%c0_14, %c0_15, %c0_16], %9 {strides = array<i32>} : memref<8x4x2xf32, #tpu.memory_space<vmem>>, vector<8x4x2xf32>,
    return
  }
  func.func @transform_0(%arg0: i32) -> (i32, i32, i32) {
    %c0_i32 = arith.constant 0 : i32
    %c0_i32_0 = arith.constant 0 : i32
    %c0_i32_1 = arith.constant 0 : i32
    return %arg0, %c0_i32, %c0_i32_0 : i32, i32, i32
  }
  func.func @transform_1(%arg0: i32) -> (i32, i32, i32) {
    %c0_i32 = arith.constant 0 : i32
    %c0_i32_0 = arith.constant 0 : i32
    %c0_i32_1 = arith.constant 0 : i32
    return %arg0, %c0_i32, %c0_i32_0 : i32, i32, i32
  }
  func.func @transform_2(%arg0: i32) -> (i32, i32, i32) {
    %c0_i32 = arith.constant 0 : i32
    %c0_i32_0 = arith.constant 0 : i32
    %c0_i32_1 = arith.constant 0 : i32
    return %arg0, %c0_i32, %c0_i32_0 : i32, i32, i32
  }
  func.func @transform_3(%arg0: i32) -> (i32, i32, i32) {
    %c0_i32 = arith.constant 0 : i32
    %c0_i32_0 = arith.constant 0 : i32
    %c0_i32_1 = arith.constant 0 : i32
    return %arg0, %c0_i32, %c0_i32_0 : i32, i32, i32
  }
  func.func @transform_4(%arg0: i32) -> (i32, i32, i32) {
    %c0_i32 = arith.constant 0 : i32
    %c0_i32_0 = arith.constant 0 : i32
    %c0_i32_1 = arith.constant 0 : i32
    return %arg0, %c0_i32, %c0_i32_0 : i32, i32, i32
  }
}

module attributes {stable_mosaic.version = 11 : i64} {
  func.func @_corr_sample_mec1_kernel(%arg0: i32, %arg1: memref<8x4x4xf32, #tpu.memory_space<vmem>>, %arg2: memref<8x4x2xf32, #tpu.memory_space<vmem>>, %arg3: memref<8x4x1xf32, #tpu.memory_space<vmem>>, %arg4: memref<10x32xf32, #tpu.memory_space<vmem>>, %arg5: memref<1x32xf32, #tpu.memory_space<vmem>>, %arg6: memref<8x4x32xf32, #tpu.memory_space<vmem>>) attributes {dimension_semantics = [#tpu.dimension_semantics<parallel>], iteration_bounds = array<i64: 1>, scalar_prefetch = 0 : i64, scratch_operands = 0 : i64, tpu.core_type = #tpu.core_type<tc>, window_params = [{transform_indices = @transform_0, window_bounds = array<i64: 8, 4, 4>}, {transform_indices = @transform_1, window_bounds = array<i64: 8, 4, 2>}, {transform_indices = @transform_2, window_bounds = array<i64: 8, 4, 1>}, {pipeline_mode = #tpu.pipeline_mode<synchronous>, transform_indices = @transform_3, window_bounds = array<i64: 10, 32>}, {pipeline_mode = #tpu.pipeline_mode<synchronous>, transform_indices = @transform_4, window_bounds = array<i64: 1, 32>}, {transform_indices = @transform_5, window_bounds = array<i64: 8, 4, 32>}]} {
    %c0 = arith.constant 0 : index
    %c0_0 = arith.constant 0 : index
    %c0_1 = arith.constant 0 : index
    %0 = vector.load %arg3[%c0, %c0_0, %c0_1] : memref<8x4x1xf32, #tpu.memory_space<vmem>>, vector<8x4x1xf32>
    %c0_2 = arith.constant 0 : index
    %c0_3 = arith.constant 0 : index
    %1 = vector.load %arg4[%c0_2, %c0_3] : memref<10x32xf32, #tpu.memory_space<vmem>>, vector<10x32xf32>
    %c0_4 = arith.constant 0 : index
    %c0_5 = arith.constant 0 : index
    %c0_6 = arith.constant 0 : index
    %2 = vector.load %arg1[%c0_4, %c0_5, %c0_6] : memref<8x4x4xf32, #tpu.memory_space<vmem>>, vector<8x4x4xf32>
    %3 = tpu.iota {dimensions = array<i32: 2>} : vector<8x4x4xi32>
    %cst = arith.constant 1.000000e+00 : f32
    %4 = vector.broadcast %cst : f32 to vector<8x4x1xf32>
    %5 = arith.mulf %0, %4 : vector<8x4x1xf32>
    %6 = math.floor %5 : vector<8x4x1xf32>
    %7 = arith.subf %5, %6 : vector<8x4x1xf32>
    %8 = arith.fptosi %6 : vector<8x4x1xf32> to vector<8x4x1xi32>
    %c-2_i32 = arith.constant -2 : i32
    %9 = vector.broadcast %c-2_i32 : i32 to vector<8x4x1xi32>
    %10 = arith.addi %8, %9 : vector<8x4x1xi32>
    %11 = vector.broadcast %10 : vector<8x4x1xi32> to vector<8x4x4xi32>
    %12 = arith.cmpi eq, %3, %11 : vector<8x4x4xi32>
    %13 = arith.extui %12 : vector<8x4x4xi1> to vector<8x4x4xi32>
    %14 = arith.sitofp %13 : vector<8x4x4xi32> to vector<8x4x4xf32>
    %15 = arith.mulf %14, %2 : vector<8x4x4xf32>
    %cst_7 = arith.constant dense<0.000000e+00> : vector<8x4xf32>
    %16 = vector.multi_reduction <add>, %15, %cst_7 [2] : vector<8x4x4xf32> to vector<8x4xf32>
    %17 = vector.shape_cast %16 : vector<8x4xf32> to vector<8x4x1xf32>
    %c-1_i32 = arith.constant -1 : i32
    %18 = vector.broadcast %c-1_i32 : i32 to vector<8x4x1xi32>
    %19 = arith.addi %8, %18 : vector<8x4x1xi32>
    %20 = vector.broadcast %19 : vector<8x4x1xi32> to vector<8x4x4xi32>
    %21 = arith.cmpi eq, %3, %20 : vector<8x4x4xi32>
    %22 = arith.extui %21 : vector<8x4x4xi1> to vector<8x4x4xi32>
    %23 = arith.sitofp %22 : vector<8x4x4xi32> to vector<8x4x4xf32>
    %24 = arith.mulf %23, %2 : vector<8x4x4xf32>
    %cst_8 = arith.constant dense<0.000000e+00> : vector<8x4xf32>
    %25 = vector.multi_reduction <add>, %24, %cst_8 [2] : vector<8x4x4xf32> to vector<8x4xf32>
    %26 = vector.shape_cast %25 : vector<8x4xf32> to vector<8x4x1xf32>
    %c0_i32 = arith.constant 0 : i32
    %27 = vector.broadcast %c0_i32 : i32 to vector<8x4x1xi32>
    %28 = arith.addi %8, %27 : vector<8x4x1xi32>
    %29 = vector.broadcast %28 : vector<8x4x1xi32> to vector<8x4x4xi32>
    %30 = arith.cmpi eq, %3, %29 : vector<8x4x4xi32>
    %31 = arith.extui %30 : vector<8x4x4xi1> to vector<8x4x4xi32>
    %32 = arith.sitofp %31 : vector<8x4x4xi32> to vector<8x4x4xf32>
    %33 = arith.mulf %32, %2 : vector<8x4x4xf32>
    %cst_9 = arith.constant dense<0.000000e+00> : vector<8x4xf32>
    %34 = vector.multi_reduction <add>, %33, %cst_9 [2] : vector<8x4x4xf32> to vector<8x4xf32>
    %35 = vector.shape_cast %34 : vector<8x4xf32> to vector<8x4x1xf32>
    %c1_i32 = arith.constant 1 : i32
    %36 = vector.broadcast %c1_i32 : i32 to vector<8x4x1xi32>
    %37 = arith.addi %8, %36 : vector<8x4x1xi32>
    %38 = vector.broadcast %37 : vector<8x4x1xi32> to vector<8x4x4xi32>
    %39 = arith.cmpi eq, %3, %38 : vector<8x4x4xi32>
    %40 = arith.extui %39 : vector<8x4x4xi1> to vector<8x4x4xi32>
    %41 = arith.sitofp %40 : vector<8x4x4xi32> to vector<8x4x4xf32>
    %42 = arith.mulf %41, %2 : vector<8x4x4xf32>
    %cst_10 = arith.constant dense<0.000000e+00> : vector<8x4xf32>
    %43 = vector.multi_reduction <add>, %42, %cst_10 [2] : vector<8x4x4xf32> to vector<8x4xf32>
    %44 = vector.shape_cast %43 : vector<8x4xf32> to vector<8x4x1xf32>
    %c2_i32 = arith.constant 2 : i32
    %45 = vector.broadcast %c2_i32 : i32 to vector<8x4x1xi32>
    %46 = arith.addi %8, %45 : vector<8x4x1xi32>
    %47 = vector.broadcast %46 : vector<8x4x1xi32> to vector<8x4x4xi32>
    %48 = arith.cmpi eq, %3, %47 : vector<8x4x4xi32>
    %49 = arith.extui %48 : vector<8x4x4xi1> to vector<8x4x4xi32>
    %50 = arith.sitofp %49 : vector<8x4x4xi32> to vector<8x4x4xf32>
    %51 = arith.mulf %50, %2 : vector<8x4x4xf32>
    %cst_11 = arith.constant dense<0.000000e+00> : vector<8x4xf32>
    %52 = vector.multi_reduction <add>, %51, %cst_11 [2] : vector<8x4x4xf32> to vector<8x4xf32>
    %53 = vector.shape_cast %52 : vector<8x4xf32> to vector<8x4x1xf32>
    %c3_i32 = arith.constant 3 : i32
    %54 = vector.broadcast %c3_i32 : i32 to vector<8x4x1xi32>
    %55 = arith.addi %8, %54 : vector<8x4x1xi32>
    %56 = vector.broadcast %55 : vector<8x4x1xi32> to vector<8x4x4xi32>
    %57 = arith.cmpi eq, %3, %56 : vector<8x4x4xi32>
    %58 = arith.extui %57 : vector<8x4x4xi1> to vector<8x4x4xi32>
    %59 = arith.sitofp %58 : vector<8x4x4xi32> to vector<8x4x4xf32>
    %60 = arith.mulf %59, %2 : vector<8x4x4xf32>
    %cst_12 = arith.constant dense<0.000000e+00> : vector<8x4xf32>
    %61 = vector.multi_reduction <add>, %60, %cst_12 [2] : vector<8x4x4xf32> to vector<8x4xf32>
    %62 = vector.shape_cast %61 : vector<8x4xf32> to vector<8x4x1xf32>
    %cst_13 = arith.constant 1.000000e+00 : f32
    %63 = vector.broadcast %cst_13 : f32 to vector<8x4x1xf32>
    %64 = arith.subf %63, %7 : vector<8x4x1xf32>
    %65 = arith.mulf %17, %64 : vector<8x4x1xf32>
    %66 = arith.mulf %26, %7 : vector<8x4x1xf32>
    %67 = arith.addf %65, %66 : vector<8x4x1xf32>
    %cst_14 = arith.constant 1.000000e+00 : f32
    %68 = vector.broadcast %cst_14 : f32 to vector<8x4x1xf32>
    %69 = arith.subf %68, %7 : vector<8x4x1xf32>
    %70 = arith.mulf %26, %69 : vector<8x4x1xf32>
    %71 = arith.mulf %35, %7 : vector<8x4x1xf32>
    %72 = arith.addf %70, %71 : vector<8x4x1xf32>
    %cst_15 = arith.constant 1.000000e+00 : f32
    %73 = vector.broadcast %cst_15 : f32 to vector<8x4x1xf32>
    %74 = arith.subf %73, %7 : vector<8x4x1xf32>
    %75 = arith.mulf %35, %74 : vector<8x4x1xf32>
    %76 = arith.mulf %44, %7 : vector<8x4x1xf32>
    %77 = arith.addf %75, %76 : vector<8x4x1xf32>
    %cst_16 = arith.constant 1.000000e+00 : f32
    %78 = vector.broadcast %cst_16 : f32 to vector<8x4x1xf32>
    %79 = arith.subf %78, %7 : vector<8x4x1xf32>
    %80 = arith.mulf %44, %79 : vector<8x4x1xf32>
    %81 = arith.mulf %53, %7 : vector<8x4x1xf32>
    %82 = arith.addf %80, %81 : vector<8x4x1xf32>
    %cst_17 = arith.constant 1.000000e+00 : f32
    %83 = vector.broadcast %cst_17 : f32 to vector<8x4x1xf32>
    %84 = arith.subf %83, %7 : vector<8x4x1xf32>
    %85 = arith.mulf %53, %84 : vector<8x4x1xf32>
    %86 = arith.mulf %62, %7 : vector<8x4x1xf32>
    %87 = arith.addf %85, %86 : vector<8x4x1xf32>
    %c0_18 = arith.constant 0 : index
    %c0_19 = arith.constant 0 : index
    %c0_20 = arith.constant 0 : index
    %88 = vector.load %arg2[%c0_18, %c0_19, %c0_20] : memref<8x4x2xf32, #tpu.memory_space<vmem>>, vector<8x4x2xf32>
    %89 = tpu.iota {dimensions = array<i32: 2>} : vector<8x4x2xi32>
    %cst_21 = arith.constant 5.000000e-01 : f32
    %90 = vector.broadcast %cst_21 : f32 to vector<8x4x1xf32>
    %91 = arith.mulf %0, %90 : vector<8x4x1xf32>
    %92 = math.floor %91 : vector<8x4x1xf32>
    %93 = arith.subf %91, %92 : vector<8x4x1xf32>
    %94 = arith.fptosi %92 : vector<8x4x1xf32> to vector<8x4x1xi32>
    %c-2_i32_22 = arith.constant -2 : i32
    %95 = vector.broadcast %c-2_i32_22 : i32 to vector<8x4x1xi32>
    %96 = arith.addi %94, %95 : vector<8x4x1xi32>
    %97 = vector.broadcast %96 : vector<8x4x1xi32> to vector<8x4x2xi32>
    %98 = arith.cmpi eq, %89, %97 : vector<8x4x2xi32>
    %99 = arith.extui %98 : vector<8x4x2xi1> to vector<8x4x2xi32>
    %100 = arith.sitofp %99 : vector<8x4x2xi32> to vector<8x4x2xf32>
    %101 = arith.mulf %100, %88 : vector<8x4x2xf32>
    %cst_23 = arith.constant dense<0.000000e+00> : vector<8x4xf32>
    %102 = vector.multi_reduction <add>, %101, %cst_23 [2] : vector<8x4x2xf32> to vector<8x4xf32>
    %103 = vector.shape_cast %102 : vector<8x4xf32> to vector<8x4x1xf32>
    %c-1_i32_24 = arith.constant -1 : i32
    %104 = vector.broadcast %c-1_i32_24 : i32 to vector<8x4x1xi32>
    %105 = arith.addi %94, %104 : vector<8x4x1xi32>
    %106 = vector.broadcast %105 : vector<8x4x1xi32> to vector<8x4x2xi32>
    %107 = arith.cmpi eq, %89, %106 : vector<8x4x2xi32>
    %108 = arith.extui %107 : vector<8x4x2xi1> to vector<8x4x2xi32>
    %109 = arith.sitofp %108 : vector<8x4x2xi32> to vector<8x4x2xf32>
    %110 = arith.mulf %109, %88 : vector<8x4x2xf32>
    %cst_25 = arith.constant dense<0.000000e+00> : vector<8x4xf32>
    %111 = vector.multi_reduction <add>, %110, %cst_25 [2] : vector<8x4x2xf32> to vector<8x4xf32>
    %112 = vector.shape_cast %111 : vector<8x4xf32> to vector<8x4x1xf32>
    %c0_i32_26 = arith.constant 0 : i32
    %113 = vector.broadcast %c0_i32_26 : i32 to vector<8x4x1xi32>
    %114 = arith.addi %94, %113 : vector<8x4x1xi32>
    %115 = vector.broadcast %114 : vector<8x4x1xi32> to vector<8x4x2xi32>
    %116 = arith.cmpi eq, %89, %115 : vector<8x4x2xi32>
    %117 = arith.extui %116 : vector<8x4x2xi1> to vector<8x4x2xi32>
    %118 = arith.sitofp %117 : vector<8x4x2xi32> to vector<8x4x2xf32>
    %119 = arith.mulf %118, %88 : vector<8x4x2xf32>
    %cst_27 = arith.constant dense<0.000000e+00> : vector<8x4xf32>
    %120 = vector.multi_reduction <add>, %119, %cst_27 [2] : vector<8x4x2xf32> to vector<8x4xf32>
    %121 = vector.shape_cast %120 : vector<8x4xf32> to vector<8x4x1xf32>
    %c1_i32_28 = arith.constant 1 : i32
    %122 = vector.broadcast %c1_i32_28 : i32 to vector<8x4x1xi32>
    %123 = arith.addi %94, %122 : vector<8x4x1xi32>
    %124 = vector.broadcast %123 : vector<8x4x1xi32> to vector<8x4x2xi32>
    %125 = arith.cmpi eq, %89, %124 : vector<8x4x2xi32>
    %126 = arith.extui %125 : vector<8x4x2xi1> to vector<8x4x2xi32>
    %127 = arith.sitofp %126 : vector<8x4x2xi32> to vector<8x4x2xf32>
    %128 = arith.mulf %127, %88 : vector<8x4x2xf32>
    %cst_29 = arith.constant dense<0.000000e+00> : vector<8x4xf32>
    %129 = vector.multi_reduction <add>, %128, %cst_29 [2] : vector<8x4x2xf32> to vector<8x4xf32>
    %130 = vector.shape_cast %129 : vector<8x4xf32> to vector<8x4x1xf32>
    %c2_i32_30 = arith.constant 2 : i32
    %131 = vector.broadcast %c2_i32_30 : i32 to vector<8x4x1xi32>
    %132 = arith.addi %94, %131 : vector<8x4x1xi32>
    %133 = vector.broadcast %132 : vector<8x4x1xi32> to vector<8x4x2xi32>
    %134 = arith.cmpi eq, %89, %133 : vector<8x4x2xi32>
    %135 = arith.extui %134 : vector<8x4x2xi1> to vector<8x4x2xi32>
    %136 = arith.sitofp %135 : vector<8x4x2xi32> to vector<8x4x2xf32>
    %137 = arith.mulf %136, %88 : vector<8x4x2xf32>
    %cst_31 = arith.constant dense<0.000000e+00> : vector<8x4xf32>
    %138 = vector.multi_reduction <add>, %137, %cst_31 [2] : vector<8x4x2xf32> to vector<8x4xf32>
    %139 = vector.shape_cast %138 : vector<8x4xf32> to vector<8x4x1xf32>
    %c3_i32_32 = arith.constant 3 : i32
    %140 = vector.broadcast %c3_i32_32 : i32 to vector<8x4x1xi32>
    %141 = arith.addi %94, %140 : vector<8x4x1xi32>
    %142 = vector.broadcast %141 : vector<8x4x1xi32> to vector<8x4x2xi32>
    %143 = arith.cmpi eq, %89, %142 : vector<8x4x2xi32>
    %144 = arith.extui %143 : vector<8x4x2xi1> to vector<8x4x2xi32>
    %145 = arith.sitofp %144 : vector<8x4x2xi32> to vector<8x4x2xf32>
    %146 = arith.mulf %145, %88 : vector<8x4x2xf32>
    %cst_33 = arith.constant dense<0.000000e+00> : vector<8x4xf32>
    %147 = vector.multi_reduction <add>, %146, %cst_33 [2] : vector<8x4x2xf32> to vector<8x4xf32>
    %148 = vector.shape_cast %147 : vector<8x4xf32> to vector<8x4x1xf32>
    %cst_34 = arith.constant 1.000000e+00 : f32
    %149 = vector.broadcast %cst_34 : f32 to vector<8x4x1xf32>
    %150 = arith.subf %149, %93 : vector<8x4x1xf32>
    %151 = arith.mulf %103, %150 : vector<8x4x1xf32>
    %152 = arith.mulf %112, %93 : vector<8x4x1xf32>
    %153 = arith.addf %151, %152 : vector<8x4x1xf32>
    %cst_35 = arith.constant 1.000000e+00 : f32
    %154 = vector.broadcast %cst_35 : f32 to vector<8x4x1xf32>
    %155 = arith.subf %154, %93 : vector<8x4x1xf32>
    %156 = arith.mulf %112, %155 : vector<8x4x1xf32>
    %157 = arith.mulf %121, %93 : vector<8x4x1xf32>
    %158 = arith.addf %156, %157 : vector<8x4x1xf32>
    %cst_36 = arith.constant 1.000000e+00 : f32
    %159 = vector.broadcast %cst_36 : f32 to vector<8x4x1xf32>
    %160 = arith.subf %159, %93 : vector<8x4x1xf32>
    %161 = arith.mulf %121, %160 : vector<8x4x1xf32>
    %162 = arith.mulf %130, %93 : vector<8x4x1xf32>
    %163 = arith.addf %161, %162 : vector<8x4x1xf32>
    %cst_37 = arith.constant 1.000000e+00 : f32
    %164 = vector.broadcast %cst_37 : f32 to vector<8x4x1xf32>
    %165 = arith.subf %164, %93 : vector<8x4x1xf32>
    %166 = arith.mulf %130, %165 : vector<8x4x1xf32>
    %167 = arith.mulf %139, %93 : vector<8x4x1xf32>
    %168 = arith.addf %166, %167 : vector<8x4x1xf32>
    %cst_38 = arith.constant 1.000000e+00 : f32
    %169 = vector.broadcast %cst_38 : f32 to vector<8x4x1xf32>
    %170 = arith.subf %169, %93 : vector<8x4x1xf32>
    %171 = arith.mulf %139, %170 : vector<8x4x1xf32>
    %172 = arith.mulf %148, %93 : vector<8x4x1xf32>
    %173 = arith.addf %171, %172 : vector<8x4x1xf32>
    %174 = vector.extract_strided_slice %1 {offsets = [0, 0], sizes = [1, 32], strides = [1, 1]} : vector<10x32xf32> to vector<1x32xf32>
    %175 = vector.shape_cast %174 : vector<1x32xf32> to vector<1x1x32xf32>
    %176 = vector.broadcast %67 : vector<8x4x1xf32> to vector<8x4x32xf32>
    %177 = vector.broadcast %175 : vector<1x1x32xf32> to vector<8x4x32xf32>
    %178 = arith.mulf %176, %177 : vector<8x4x32xf32>
    %179 = vector.extract_strided_slice %1 {offsets = [1, 0], sizes = [1, 32], strides = [1, 1]} : vector<10x32xf32> to vector<1x32xf32>
    %180 = vector.shape_cast %179 : vector<1x32xf32> to vector<1x1x32xf32>
    %181 = vector.broadcast %72 : vector<8x4x1xf32> to vector<8x4x32xf32>
    %182 = vector.broadcast %180 : vector<1x1x32xf32> to vector<8x4x32xf32>
    %183 = arith.mulf %181, %182 : vector<8x4x32xf32>
    %184 = arith.addf %178, %183 : vector<8x4x32xf32>
    %185 = vector.extract_strided_slice %1 {offsets = [2, 0], sizes = [1, 32], strides = [1, 1]} : vector<10x32xf32> to vector<1x32xf32>
    %186 = vector.shape_cast %185 : vector<1x32xf32> to vector<1x1x32xf32>
    %187 = vector.broadcast %77 : vector<8x4x1xf32> to vector<8x4x32xf32>
    %188 = vector.broadcast %186 : vector<1x1x32xf32> to vector<8x4x32xf32>
    %189 = arith.mulf %187, %188 : vector<8x4x32xf32>
    %190 = arith.addf %184, %189 : vector<8x4x32xf32>
    %191 = vector.extract_strided_slice %1 {offsets = [3, 0], sizes = [1, 32], strides = [1, 1]} : vector<10x32xf32> to vector<1x32xf32>
    %192 = vector.shape_cast %191 : vector<1x32xf32> to vector<1x1x32xf32>
    %193 = vector.broadcast %82 : vector<8x4x1xf32> to vector<8x4x32xf32>
    %194 = vector.broadcast %192 : vector<1x1x32xf32> to vector<8x4x32xf32>
    %195 = arith.mulf %193, %194 : vector<8x4x32xf32>
    %196 = arith.addf %190, %195 : vector<8x4x32xf32>
    %197 = vector.extract_strided_slice %1 {offsets = [4, 0], sizes = [1, 32], strides = [1, 1]} : vector<10x32xf32> to vector<1x32xf32>
    %198 = vector.shape_cast %197 : vector<1x32xf32> to vector<1x1x32xf32>
    %199 = vector.broadcast %87 : vector<8x4x1xf32> to vector<8x4x32xf32>
    %200 = vector.broadcast %198 : vector<1x1x32xf32> to vector<8x4x32xf32>
    %201 = arith.mulf %199, %200 : vector<8x4x32xf32>
    %202 = arith.addf %196, %201 : vector<8x4x32xf32>
    %203 = vector.extract_strided_slice %1 {offsets = [5, 0], sizes = [1, 32], strides = [1, 1]} : vector<10x32xf32> to vector<1x32xf32>
    %204 = vector.shape_cast %203 : vector<1x32xf32> to vector<1x1x32xf32>
    %205 = vector.broadcast %153 : vector<8x4x1xf32> to vector<8x4x32xf32>
    %206 = vector.broadcast %204 : vector<1x1x32xf32> to vector<8x4x32xf32>
    %207 = arith.mulf %205, %206 : vector<8x4x32xf32>
    %208 = arith.addf %202, %207 : vector<8x4x32xf32>
    %209 = vector.extract_strided_slice %1 {offsets = [6, 0], sizes = [1, 32], strides = [1, 1]} : vector<10x32xf32> to vector<1x32xf32>
    %210 = vector.shape_cast %209 : vector<1x32xf32> to vector<1x1x32xf32>
    %211 = vector.broadcast %158 : vector<8x4x1xf32> to vector<8x4x32xf32>
    %212 = vector.broadcast %210 : vector<1x1x32xf32> to vector<8x4x32xf32>
    %213 = arith.mulf %211, %212 : vector<8x4x32xf32>
    %214 = arith.addf %208, %213 : vector<8x4x32xf32>
    %215 = vector.extract_strided_slice %1 {offsets = [7, 0], sizes = [1, 32], strides = [1, 1]} : vector<10x32xf32> to vector<1x32xf32>
    %216 = vector.shape_cast %215 : vector<1x32xf32> to vector<1x1x32xf32>
    %217 = vector.broadcast %163 : vector<8x4x1xf32> to vector<8x4x32xf32>
    %218 = vector.broadcast %216 : vector<1x1x32xf32> to vector<8x4x32xf32>
    %219 = arith.mulf %217, %218 : vector<8x4x32xf32>
    %220 = arith.addf %214, %219 : vector<8x4x32xf32>
    %221 = vector.extract_strided_slice %1 {offsets = [8, 0], sizes = [1, 32], strides = [1, 1]} : vector<10x32xf32> to vector<1x32xf32>
    %222 = vector.shape_cast %221 : vector<1x32xf32> to vector<1x1x32xf32>
    %223 = vector.broadcast %168 : vector<8x4x1xf32> to vector<8x4x32xf32>
    %224 = vector.broadcast %222 : vector<1x1x32xf32> to vector<8x4x32xf32>
    %225 = arith.mulf %223, %224 : vector<8x4x32xf32>
    %226 = arith.addf %220, %225 : vector<8x4x32xf32>
    %227 = vector.extract_strided_slice %1 {offsets = [9, 0], sizes = [1, 32], strides = [1, 1]} : vector<10x32xf32> to vector<1x32xf32>
    %228 = vector.shape_cast %227 : vector<1x32xf32> to vector<1x1x32xf32>
    %229 = vector.broadcast %173 : vector<8x4x1xf32> to vector<8x4x32xf32>
    %230 = vector.broadcast %228 : vector<1x1x32xf32> to vector<8x4x32xf32>
    %231 = arith.mulf %229, %230 : vector<8x4x32xf32>
    %232 = arith.addf %226, %231 : vector<8x4x32xf32>
    %c0_39 = arith.constant 0 : index
    %c0_40 = arith.constant 0 : index
    %233 = vector.load %arg5[%c0_39, %c0_40] : memref<1x32xf32, #tpu.memory_space<vmem>>, vector<1x32xf32>
    %234 = vector.shape_cast %233 : vector<1x32xf32> to vector<1x1x32xf32>
    %235 = vector.broadcast %234 : vector<1x1x32xf32> to vector<8x4x32xf32>
    %236 = arith.addf %232, %235 : vector<8x4x32xf32>
    %cst_41 = arith.constant 0.000000e+00 : f32
    %237 = vector.broadcast %cst_41 : f32 to vector<8x4x32xf32>
    %238 = arith.maximumf %236, %237 : vector<8x4x32xf32>
    %c0_42 = arith.constant 0 : index
    %c0_43 = arith.constant 0 : index
    %c0_44 = arith.constant 0 : index
    %239 = vector.load %arg6[%c0_42, %c0_43, %c0_44] : memref<8x4x32xf32, #tpu.memory_space<vmem>>, vector<8x4x32xf32>
    tpu.vector_store %arg6[%c0_42, %c0_43, %c0_44], %238 {strides = array<i32>} : memref<8x4x32xf32, #tpu.memory_space<vmem>>, vector<8x4x32xf32>,
    return
  }
  func.func @transform_0(%arg0: i32) -> (i32, i32, i32) {
    %c0_i32 = arith.constant 0 : i32
    %c0_i32_0 = arith.constant 0 : i32
    %c0_i32_1 = arith.constant 0 : i32
    return %arg0, %c0_i32, %c0_i32_0 : i32, i32, i32
  }
  func.func @transform_1(%arg0: i32) -> (i32, i32, i32) {
    %c0_i32 = arith.constant 0 : i32
    %c0_i32_0 = arith.constant 0 : i32
    %c0_i32_1 = arith.constant 0 : i32
    return %arg0, %c0_i32, %c0_i32_0 : i32, i32, i32
  }
  func.func @transform_2(%arg0: i32) -> (i32, i32, i32) {
    %c0_i32 = arith.constant 0 : i32
    %c0_i32_0 = arith.constant 0 : i32
    %c0_i32_1 = arith.constant 0 : i32
    return %arg0, %c0_i32, %c0_i32_0 : i32, i32, i32
  }
  func.func @transform_3(%arg0: i32) -> (i32, i32) {
    %c0_i32 = arith.constant 0 : i32
    %c0_i32_0 = arith.constant 0 : i32
    %c0_i32_1 = arith.constant 0 : i32
    return %c0_i32, %c0_i32_0 : i32, i32
  }
  func.func @transform_4(%arg0: i32) -> (i32, i32) {
    %c0_i32 = arith.constant 0 : i32
    %c0_i32_0 = arith.constant 0 : i32
    %c0_i32_1 = arith.constant 0 : i32
    return %c0_i32, %c0_i32_0 : i32, i32
  }
  func.func @transform_5(%arg0: i32) -> (i32, i32, i32) {
    %c0_i32 = arith.constant 0 : i32
    %c0_i32_0 = arith.constant 0 : i32
    %c0_i32_1 = arith.constant 0 : i32
    return %arg0, %c0_i32, %c0_i32_0 : i32, i32, i32
  }
}

module attributes {stable_mosaic.version = 11 : i64} {
  func.func @_mm_multi_kernel(%arg0: i32, %arg1: memref<32x288xbf16, #tpu.memory_space<vmem>>, %arg2: memref<32x288xbf16, #tpu.memory_space<vmem>>, %arg3: memref<288x64xbf16, #tpu.memory_space<vmem>>, %arg4: memref<288x64xbf16, #tpu.memory_space<vmem>>, %arg5: memref<1x64xf32, #tpu.memory_space<vmem>>, %arg6: memref<32x64xf32, #tpu.memory_space<vmem>>) attributes {dimension_semantics = [#tpu.dimension_semantics<parallel>], iteration_bounds = array<i64: 1>, scalar_prefetch = 0 : i64, scratch_operands = 0 : i64, tpu.core_type = #tpu.core_type<tc>, window_params = [{transform_indices = @transform_0, window_bounds = array<i64: 32, 288>}, {transform_indices = @transform_1, window_bounds = array<i64: 32, 288>}, {pipeline_mode = #tpu.pipeline_mode<synchronous>, transform_indices = @transform_2, window_bounds = array<i64: 288, 64>}, {pipeline_mode = #tpu.pipeline_mode<synchronous>, transform_indices = @transform_3, window_bounds = array<i64: 288, 64>}, {pipeline_mode = #tpu.pipeline_mode<synchronous>, transform_indices = @transform_4, window_bounds = array<i64: 1, 64>}, {transform_indices = @transform_5, window_bounds = array<i64: 32, 64>}]} {
    %c0 = arith.constant 0 : index
    %c0_0 = arith.constant 0 : index
    %0 = vector.load %arg1[%c0, %c0_0] : memref<32x288xbf16, #tpu.memory_space<vmem>>, vector<32x288xbf16>
    %c0_1 = arith.constant 0 : index
    %c0_2 = arith.constant 0 : index
    %1 = vector.load %arg3[%c0_1, %c0_2] : memref<288x64xbf16, #tpu.memory_space<vmem>>, vector<288x64xbf16>
    %cst = arith.constant dense<0.000000e+00> : vector<32x64xf32>
    %2 = tpu.matmul %0, %1, %cst {dimension_numbers = #tpu.dot_dimension_numbers<[1], [0], [0], [1], [0, 0, 1, 1], [], []>} : vector<32x288xbf16>, vector<288x64xbf16>, vector<32x64xf32> -> vector<32x64xf32>
    %c0_3 = arith.constant 0 : index
    %c0_4 = arith.constant 0 : index
    %3 = vector.load %arg2[%c0_3, %c0_4] : memref<32x288xbf16, #tpu.memory_space<vmem>>, vector<32x288xbf16>
    %c0_5 = arith.constant 0 : index
    %c0_6 = arith.constant 0 : index
    %4 = vector.load %arg4[%c0_5, %c0_6] : memref<288x64xbf16, #tpu.memory_space<vmem>>, vector<288x64xbf16>
    %cst_7 = arith.constant dense<0.000000e+00> : vector<32x64xf32>
    %5 = tpu.matmul %3, %4, %cst_7 {dimension_numbers = #tpu.dot_dimension_numbers<[1], [0], [0], [1], [0, 0, 1, 1], [], []>} : vector<32x288xbf16>, vector<288x64xbf16>, vector<32x64xf32> -> vector<32x64xf32>
    %6 = arith.addf %2, %5 : vector<32x64xf32>
    %c0_8 = arith.constant 0 : index
    %c0_9 = arith.constant 0 : index
    %7 = vector.load %arg5[%c0_8, %c0_9] : memref<1x64xf32, #tpu.memory_space<vmem>>, vector<1x64xf32>
    %8 = vector.broadcast %7 : vector<1x64xf32> to vector<32x64xf32>
    %9 = arith.addf %6, %8 : vector<32x64xf32>
    %cst_10 = arith.constant 0.000000e+00 : f32
    %10 = vector.broadcast %cst_10 : f32 to vector<32x64xf32>
    %11 = arith.maximumf %9, %10 : vector<32x64xf32>
    %c0_11 = arith.constant 0 : index
    %c0_12 = arith.constant 0 : index
    %12 = vector.load %arg6[%c0_11, %c0_12] : memref<32x64xf32, #tpu.memory_space<vmem>>, vector<32x64xf32>
    tpu.vector_store %arg6[%c0_11, %c0_12], %11 {strides = array<i32>} : memref<32x64xf32, #tpu.memory_space<vmem>>, vector<32x64xf32>,
    return
  }
  func.func @transform_0(%arg0: i32) -> (i32, i32) {
    %c0_i32 = arith.constant 0 : i32
    %c0_i32_0 = arith.constant 0 : i32
    return %arg0, %c0_i32 : i32, i32
  }
  func.func @transform_1(%arg0: i32) -> (i32, i32) {
    %c0_i32 = arith.constant 0 : i32
    %c0_i32_0 = arith.constant 0 : i32
    return %arg0, %c0_i32 : i32, i32
  }
  func.func @transform_2(%arg0: i32) -> (i32, i32) {
    %c0_i32 = arith.constant 0 : i32
    %c0_i32_0 = arith.constant 0 : i32
    %c0_i32_1 = arith.constant 0 : i32
    return %c0_i32, %c0_i32_0 : i32, i32
  }
  func.func @transform_3(%arg0: i32) -> (i32, i32) {
    %c0_i32 = arith.constant 0 : i32
    %c0_i32_0 = arith.constant 0 : i32
    %c0_i32_1 = arith.constant 0 : i32
    return %c0_i32, %c0_i32_0 : i32, i32
  }
  func.func @transform_4(%arg0: i32) -> (i32, i32) {
    %c0_i32 = arith.constant 0 : i32
    %c0_i32_0 = arith.constant 0 : i32
    %c0_i32_1 = arith.constant 0 : i32
    return %c0_i32, %c0_i32_0 : i32, i32
  }
  func.func @transform_5(%arg0: i32) -> (i32, i32) {
    %c0_i32 = arith.constant 0 : i32
    %c0_i32_0 = arith.constant 0 : i32
    return %arg0, %c0_i32 : i32, i32
  }
}

module attributes {stable_mosaic.version = 11 : i64} {
  func.func @_mm_multi_kernel(%arg0: i32, %arg1: memref<32x576xbf16, #tpu.memory_space<vmem>>, %arg2: memref<576x62xbf16, #tpu.memory_space<vmem>>, %arg3: memref<1x62xf32, #tpu.memory_space<vmem>>, %arg4: memref<32x62xf32, #tpu.memory_space<vmem>>) attributes {dimension_semantics = [#tpu.dimension_semantics<parallel>], iteration_bounds = array<i64: 1>, scalar_prefetch = 0 : i64, scratch_operands = 0 : i64, tpu.core_type = #tpu.core_type<tc>, window_params = [{transform_indices = @transform_0, window_bounds = array<i64: 32, 576>}, {pipeline_mode = #tpu.pipeline_mode<synchronous>, transform_indices = @transform_1, window_bounds = array<i64: 576, 62>}, {pipeline_mode = #tpu.pipeline_mode<synchronous>, transform_indices = @transform_2, window_bounds = array<i64: 1, 62>}, {transform_indices = @transform_3, window_bounds = array<i64: 32, 62>}]} {
    %c0 = arith.constant 0 : index
    %c0_0 = arith.constant 0 : index
    %0 = vector.load %arg1[%c0, %c0_0] : memref<32x576xbf16, #tpu.memory_space<vmem>>, vector<32x576xbf16>
    %c0_1 = arith.constant 0 : index
    %c0_2 = arith.constant 0 : index
    %1 = vector.load %arg2[%c0_1, %c0_2] : memref<576x62xbf16, #tpu.memory_space<vmem>>, vector<576x62xbf16>
    %cst = arith.constant dense<0.000000e+00> : vector<32x62xf32>
    %2 = tpu.matmul %0, %1, %cst {dimension_numbers = #tpu.dot_dimension_numbers<[1], [0], [0], [1], [0, 0, 1, 1], [], []>} : vector<32x576xbf16>, vector<576x62xbf16>, vector<32x62xf32> -> vector<32x62xf32>
    %c0_3 = arith.constant 0 : index
    %c0_4 = arith.constant 0 : index
    %3 = vector.load %arg3[%c0_3, %c0_4] : memref<1x62xf32, #tpu.memory_space<vmem>>, vector<1x62xf32>
    %4 = vector.broadcast %3 : vector<1x62xf32> to vector<32x62xf32>
    %5 = arith.addf %2, %4 : vector<32x62xf32>
    %cst_5 = arith.constant 0.000000e+00 : f32
    %6 = vector.broadcast %cst_5 : f32 to vector<32x62xf32>
    %7 = arith.maximumf %5, %6 : vector<32x62xf32>
    %c0_6 = arith.constant 0 : index
    %c0_7 = arith.constant 0 : index
    %8 = vector.load %arg4[%c0_6, %c0_7] : memref<32x62xf32, #tpu.memory_space<vmem>>, vector<32x62xf32>
    tpu.vector_store %arg4[%c0_6, %c0_7], %7 {strides = array<i32>} : memref<32x62xf32, #tpu.memory_space<vmem>>, vector<32x62xf32>,
    return
  }
  func.func @transform_0(%arg0: i32) -> (i32, i32) {
    %c0_i32 = arith.constant 0 : i32
    %c0_i32_0 = arith.constant 0 : i32
    return %arg0, %c0_i32 : i32, i32
  }
  func.func @transform_1(%arg0: i32) -> (i32, i32) {
    %c0_i32 = arith.constant 0 : i32
    %c0_i32_0 = arith.constant 0 : i32
    %c0_i32_1 = arith.constant 0 : i32
    return %c0_i32, %c0_i32_0 : i32, i32
  }
  func.func @transform_2(%arg0: i32) -> (i32, i32) {
    %c0_i32 = arith.constant 0 : i32
    %c0_i32_0 = arith.constant 0 : i32
    %c0_i32_1 = arith.constant 0 : i32
    return %c0_i32, %c0_i32_0 : i32, i32
  }
  func.func @transform_3(%arg0: i32) -> (i32, i32) {
    %c0_i32 = arith.constant 0 : i32
    %c0_i32_0 = arith.constant 0 : i32
    return %arg0, %c0_i32 : i32, i32
  }
}

module attributes {stable_mosaic.version = 11 : i64} {
  func.func @_gru_q_kernel(%arg0: i32, %arg1: memref<32x288xbf16, #tpu.memory_space<vmem>>, %arg2: memref<288x32xbf16, #tpu.memory_space<vmem>>, %arg3: memref<32x576xbf16, #tpu.memory_space<vmem>>, %arg4: memref<576x32xbf16, #tpu.memory_space<vmem>>, %arg5: memref<1x32xf32, #tpu.memory_space<vmem>>, %arg6: memref<32x32xf32, #tpu.memory_space<vmem>>, %arg7: memref<32x32xf32, #tpu.memory_space<vmem>>, %arg8: memref<32x32xf32, #tpu.memory_space<vmem>>, %arg9: memref<32x32xf32, #tpu.memory_space<vmem>>) attributes {dimension_semantics = [#tpu.dimension_semantics<parallel>], iteration_bounds = array<i64: 1>, scalar_prefetch = 0 : i64, scratch_operands = 0 : i64, tpu.core_type = #tpu.core_type<tc>, window_params = [{transform_indices = @transform_0, window_bounds = array<i64: 32, 288>}, {pipeline_mode = #tpu.pipeline_mode<synchronous>, transform_indices = @transform_1, window_bounds = array<i64: 288, 32>}, {transform_indices = @transform_2, window_bounds = array<i64: 32, 576>}, {pipeline_mode = #tpu.pipeline_mode<synchronous>, transform_indices = @transform_3, window_bounds = array<i64: 576, 32>}, {pipeline_mode = #tpu.pipeline_mode<synchronous>, transform_indices = @transform_4, window_bounds = array<i64: 1, 32>}, {transform_indices = @transform_5, window_bounds = array<i64: 32, 32>}, {transform_indices = @transform_6, window_bounds = array<i64: 32, 32>}, {transform_indices = @transform_7, window_bounds = array<i64: 32, 32>}, {transform_indices = @transform_8, window_bounds = array<i64: 32, 32>}]} {
    %c0 = arith.constant 0 : index
    %c0_0 = arith.constant 0 : index
    %0 = vector.load %arg1[%c0, %c0_0] : memref<32x288xbf16, #tpu.memory_space<vmem>>, vector<32x288xbf16>
    %c0_1 = arith.constant 0 : index
    %c0_2 = arith.constant 0 : index
    %1 = vector.load %arg2[%c0_1, %c0_2] : memref<288x32xbf16, #tpu.memory_space<vmem>>, vector<288x32xbf16>
    %cst = arith.constant dense<0.000000e+00> : vector<32x32xf32>
    %2 = tpu.matmul %0, %1, %cst {dimension_numbers = #tpu.dot_dimension_numbers<[1], [0], [0], [1], [0, 0, 1, 1], [], []>} : vector<32x288xbf16>, vector<288x32xbf16>, vector<32x32xf32> -> vector<32x32xf32>
    %c0_3 = arith.constant 0 : index
    %c0_4 = arith.constant 0 : index
    %3 = vector.load %arg3[%c0_3, %c0_4] : memref<32x576xbf16, #tpu.memory_space<vmem>>, vector<32x576xbf16>
    %c0_5 = arith.constant 0 : index
    %c0_6 = arith.constant 0 : index
    %4 = vector.load %arg4[%c0_5, %c0_6] : memref<576x32xbf16, #tpu.memory_space<vmem>>, vector<576x32xbf16>
    %cst_7 = arith.constant dense<0.000000e+00> : vector<32x32xf32>
    %5 = tpu.matmul %3, %4, %cst_7 {dimension_numbers = #tpu.dot_dimension_numbers<[1], [0], [0], [1], [0, 0, 1, 1], [], []>} : vector<32x576xbf16>, vector<576x32xbf16>, vector<32x32xf32> -> vector<32x32xf32>
    %6 = arith.addf %2, %5 : vector<32x32xf32>
    %c0_8 = arith.constant 0 : index
    %c0_9 = arith.constant 0 : index
    %7 = vector.load %arg5[%c0_8, %c0_9] : memref<1x32xf32, #tpu.memory_space<vmem>>, vector<1x32xf32>
    %8 = vector.broadcast %7 : vector<1x32xf32> to vector<32x32xf32>
    %9 = arith.addf %6, %8 : vector<32x32xf32>
    %c0_10 = arith.constant 0 : index
    %c0_11 = arith.constant 0 : index
    %10 = vector.load %arg6[%c0_10, %c0_11] : memref<32x32xf32, #tpu.memory_space<vmem>>, vector<32x32xf32>
    %11 = arith.addf %9, %10 : vector<32x32xf32>
    %12 = math.tanh %11 : vector<32x32xf32>
    %c0_12 = arith.constant 0 : index
    %c0_13 = arith.constant 0 : index
    %13 = vector.load %arg7[%c0_12, %c0_13] : memref<32x32xf32, #tpu.memory_space<vmem>>, vector<32x32xf32>
    %cst_14 = arith.constant 1.000000e+00 : f32
    %14 = vector.broadcast %cst_14 : f32 to vector<32x32xf32>
    %15 = arith.subf %14, %13 : vector<32x32xf32>
    %c0_15 = arith.constant 0 : index
    %c0_16 = arith.constant 0 : index
    %16 = vector.load %arg8[%c0_15, %c0_16] : memref<32x32xf32, #tpu.memory_space<vmem>>, vector<32x32xf32>
    %17 = arith.mulf %15, %16 : vector<32x32xf32>
    %18 = arith.mulf %13, %12 : vector<32x32xf32>
    %19 = arith.addf %17, %18 : vector<32x32xf32>
    %c0_17 = arith.constant 0 : index
    %c0_18 = arith.constant 0 : index
    %20 = vector.load %arg9[%c0_17, %c0_18] : memref<32x32xf32, #tpu.memory_space<vmem>>, vector<32x32xf32>
    tpu.vector_store %arg9[%c0_17, %c0_18], %19 {strides = array<i32>} : memref<32x32xf32, #tpu.memory_space<vmem>>, vector<32x32xf32>,
    return
  }
  func.func @transform_0(%arg0: i32) -> (i32, i32) {
    %c0_i32 = arith.constant 0 : i32
    %c0_i32_0 = arith.constant 0 : i32
    return %arg0, %c0_i32 : i32, i32
  }
  func.func @transform_1(%arg0: i32) -> (i32, i32) {
    %c0_i32 = arith.constant 0 : i32
    %c0_i32_0 = arith.constant 0 : i32
    %c0_i32_1 = arith.constant 0 : i32
    return %c0_i32, %c0_i32_0 : i32, i32
  }
  func.func @transform_2(%arg0: i32) -> (i32, i32) {
    %c0_i32 = arith.constant 0 : i32
    %c0_i32_0 = arith.constant 0 : i32
    return %arg0, %c0_i32 : i32, i32
  }
  func.func @transform_3(%arg0: i32) -> (i32, i32) {
    %c0_i32 = arith.constant 0 : i32
    %c0_i32_0 = arith.constant 0 : i32
    %c0_i32_1 = arith.constant 0 : i32
    return %c0_i32, %c0_i32_0 : i32, i32
  }
  func.func @transform_4(%arg0: i32) -> (i32, i32) {
    %c0_i32 = arith.constant 0 : i32
    %c0_i32_0 = arith.constant 0 : i32
    %c0_i32_1 = arith.constant 0 : i32
    return %c0_i32, %c0_i32_0 : i32, i32
  }
  func.func @transform_5(%arg0: i32) -> (i32, i32) {
    %c0_i32 = arith.constant 0 : i32
    %c0_i32_0 = arith.constant 0 : i32
    return %arg0, %c0_i32 : i32, i32
  }
  func.func @transform_6(%arg0: i32) -> (i32, i32) {
    %c0_i32 = arith.constant 0 : i32
    %c0_i32_0 = arith.constant 0 : i32
    return %arg0, %c0_i32 : i32, i32
  }
  func.func @transform_7(%arg0: i32) -> (i32, i32) {
    %c0_i32 = arith.constant 0 : i32
    %c0_i32_0 = arith.constant 0 : i32
    return %arg0, %c0_i32 : i32, i32
  }
  func.func @transform_8(%arg0: i32) -> (i32, i32) {
    %c0_i32 = arith.constant 0 : i32
    %c0_i32_0 = arith.constant 0 : i32
    return %arg0, %c0_i32 : i32, i32
  }
}

module attributes {stable_mosaic.version = 11 : i64} {
  func.func @_gru_zr_kernel(%arg0: i32, %arg1: memref<32x288xbf16, #tpu.memory_space<vmem>>, %arg2: memref<288x64xbf16, #tpu.memory_space<vmem>>, %arg3: memref<32x576xbf16, #tpu.memory_space<vmem>>, %arg4: memref<576x64xbf16, #tpu.memory_space<vmem>>, %arg5: memref<1x64xf32, #tpu.memory_space<vmem>>, %arg6: memref<32x32xf32, #tpu.memory_space<vmem>>, %arg7: memref<32x32xf32, #tpu.memory_space<vmem>>, %arg8: memref<32x32xf32, #tpu.memory_space<vmem>>, %arg9: memref<32x64xf32, #tpu.memory_space<vmem>>) attributes {dimension_semantics = [#tpu.dimension_semantics<parallel>], iteration_bounds = array<i64: 1>, scalar_prefetch = 0 : i64, scratch_operands = 0 : i64, tpu.core_type = #tpu.core_type<tc>, window_params = [{transform_indices = @transform_0, window_bounds = array<i64: 32, 288>}, {pipeline_mode = #tpu.pipeline_mode<synchronous>, transform_indices = @transform_1, window_bounds = array<i64: 288, 64>}, {transform_indices = @transform_2, window_bounds = array<i64: 32, 576>}, {pipeline_mode = #tpu.pipeline_mode<synchronous>, transform_indices = @transform_3, window_bounds = array<i64: 576, 64>}, {pipeline_mode = #tpu.pipeline_mode<synchronous>, transform_indices = @transform_4, window_bounds = array<i64: 1, 64>}, {transform_indices = @transform_5, window_bounds = array<i64: 32, 32>}, {transform_indices = @transform_6, window_bounds = array<i64: 32, 32>}, {transform_indices = @transform_7, window_bounds = array<i64: 32, 32>}, {transform_indices = @transform_8, window_bounds = array<i64: 32, 64>}]} {
    %c0 = arith.constant 0 : index
    %c0_0 = arith.constant 0 : index
    %0 = vector.load %arg1[%c0, %c0_0] : memref<32x288xbf16, #tpu.memory_space<vmem>>, vector<32x288xbf16>
    %c0_1 = arith.constant 0 : index
    %c0_2 = arith.constant 0 : index
    %1 = vector.load %arg2[%c0_1, %c0_2] : memref<288x64xbf16, #tpu.memory_space<vmem>>, vector<288x64xbf16>
    %cst = arith.constant dense<0.000000e+00> : vector<32x64xf32>
    %2 = tpu.matmul %0, %1, %cst {dimension_numbers = #tpu.dot_dimension_numbers<[1], [0], [0], [1], [0, 0, 1, 1], [], []>} : vector<32x288xbf16>, vector<288x64xbf16>, vector<32x64xf32> -> vector<32x64xf32>
    %c0_3 = arith.constant 0 : index
    %c0_4 = arith.constant 0 : index
    %3 = vector.load %arg3[%c0_3, %c0_4] : memref<32x576xbf16, #tpu.memory_space<vmem>>, vector<32x576xbf16>
    %c0_5 = arith.constant 0 : index
    %c0_6 = arith.constant 0 : index
    %4 = vector.load %arg4[%c0_5, %c0_6] : memref<576x64xbf16, #tpu.memory_space<vmem>>, vector<576x64xbf16>
    %cst_7 = arith.constant dense<0.000000e+00> : vector<32x64xf32>
    %5 = tpu.matmul %3, %4, %cst_7 {dimension_numbers = #tpu.dot_dimension_numbers<[1], [0], [0], [1], [0, 0, 1, 1], [], []>} : vector<32x576xbf16>, vector<576x64xbf16>, vector<32x64xf32> -> vector<32x64xf32>
    %6 = arith.addf %2, %5 : vector<32x64xf32>
    %c0_8 = arith.constant 0 : index
    %c0_9 = arith.constant 0 : index
    %7 = vector.load %arg5[%c0_8, %c0_9] : memref<1x64xf32, #tpu.memory_space<vmem>>, vector<1x64xf32>
    %8 = vector.broadcast %7 : vector<1x64xf32> to vector<32x64xf32>
    %9 = arith.addf %6, %8 : vector<32x64xf32>
    %10 = vector.extract_strided_slice %9 {offsets = [0, 0], sizes = [32, 32], strides = [1, 1]} : vector<32x64xf32> to vector<32x32xf32>
    %c0_10 = arith.constant 0 : index
    %c0_11 = arith.constant 0 : index
    %11 = vector.load %arg6[%c0_10, %c0_11] : memref<32x32xf32, #tpu.memory_space<vmem>>, vector<32x32xf32>
    %12 = arith.addf %10, %11 : vector<32x32xf32>
    %13 = arith.negf %12 : vector<32x32xf32>
    %14 = math.exp %13 : vector<32x32xf32>
    %cst_12 = arith.constant 1.000000e+00 : f32
    %15 = vector.broadcast %cst_12 : f32 to vector<32x32xf32>
    %16 = arith.addf %15, %14 : vector<32x32xf32>
    %17 = arith.divf %15, %16 : vector<32x32xf32>
    %18 = vector.extract_strided_slice %9 {offsets = [0, 32], sizes = [32, 32], strides = [1, 1]} : vector<32x64xf32> to vector<32x32xf32>
    %c0_13 = arith.constant 0 : index
    %c0_14 = arith.constant 0 : index
    %19 = vector.load %arg7[%c0_13, %c0_14] : memref<32x32xf32, #tpu.memory_space<vmem>>, vector<32x32xf32>
    %20 = arith.addf %18, %19 : vector<32x32xf32>
    %21 = arith.negf %20 : vector<32x32xf32>
    %22 = math.exp %21 : vector<32x32xf32>
    %cst_15 = arith.constant 1.000000e+00 : f32
    %23 = vector.broadcast %cst_15 : f32 to vector<32x32xf32>
    %24 = arith.addf %23, %22 : vector<32x32xf32>
    %25 = arith.divf %23, %24 : vector<32x32xf32>
    %c0_16 = arith.constant 0 : index
    %c0_17 = arith.constant 0 : index
    %26 = vector.load %arg9[%c0_16, %c0_17] : memref<32x64xf32, #tpu.memory_space<vmem>>, vector<32x32xf32>
    tpu.vector_store %arg9[%c0_16, %c0_17], %17 {strides = array<i32>} : memref<32x64xf32, #tpu.memory_space<vmem>>, vector<32x32xf32>,
    %c0_18 = arith.constant 0 : index
    %c0_19 = arith.constant 0 : index
    %27 = vector.load %arg8[%c0_18, %c0_19] : memref<32x32xf32, #tpu.memory_space<vmem>>, vector<32x32xf32>
    %28 = arith.mulf %25, %27 : vector<32x32xf32>
    %c0_20 = arith.constant 0 : index
    %c32 = arith.constant 32 : index
    %29 = vector.load %arg9[%c0_20, %c32] : memref<32x64xf32, #tpu.memory_space<vmem>>, vector<32x32xf32>
    tpu.vector_store %arg9[%c0_20, %c32], %28 {strides = array<i32>} : memref<32x64xf32, #tpu.memory_space<vmem>>, vector<32x32xf32>,
    return
  }
  func.func @transform_0(%arg0: i32) -> (i32, i32) {
    %c0_i32 = arith.constant 0 : i32
    %c0_i32_0 = arith.constant 0 : i32
    return %arg0, %c0_i32 : i32, i32
  }
  func.func @transform_1(%arg0: i32) -> (i32, i32) {
    %c0_i32 = arith.constant 0 : i32
    %c0_i32_0 = arith.constant 0 : i32
    %c0_i32_1 = arith.constant 0 : i32
    return %c0_i32, %c0_i32_0 : i32, i32
  }
  func.func @transform_2(%arg0: i32) -> (i32, i32) {
    %c0_i32 = arith.constant 0 : i32
    %c0_i32_0 = arith.constant 0 : i32
    return %arg0, %c0_i32 : i32, i32
  }
  func.func @transform_3(%arg0: i32) -> (i32, i32) {
    %c0_i32 = arith.constant 0 : i32
    %c0_i32_0 = arith.constant 0 : i32
    %c0_i32_1 = arith.constant 0 : i32
    return %c0_i32, %c0_i32_0 : i32, i32
  }
  func.func @transform_4(%arg0: i32) -> (i32, i32) {
    %c0_i32 = arith.constant 0 : i32
    %c0_i32_0 = arith.constant 0 : i32
    %c0_i32_1 = arith.constant 0 : i32
    return %c0_i32, %c0_i32_0 : i32, i32
  }
  func.func @transform_5(%arg0: i32) -> (i32, i32) {
    %c0_i32 = arith.constant 0 : i32
    %c0_i32_0 = arith.constant 0 : i32
    return %arg0, %c0_i32 : i32, i32
  }
  func.func @transform_6(%arg0: i32) -> (i32, i32) {
    %c0_i32 = arith.constant 0 : i32
    %c0_i32_0 = arith.constant 0 : i32
    return %arg0, %c0_i32 : i32, i32
  }
  func.func @transform_7(%arg0: i32) -> (i32, i32) {
    %c0_i32 = arith.constant 0 : i32
    %c0_i32_0 = arith.constant 0 : i32
    return %arg0, %c0_i32 : i32, i32
  }
  func.func @transform_8(%arg0: i32) -> (i32, i32) {
    %c0_i32 = arith.constant 0 : i32
    %c0_i32_0 = arith.constant 0 : i32
    return %arg0, %c0_i32 : i32, i32
  }
}

module attributes {stable_mosaic.version = 11 : i64} {
  func.func @_mm_multi_kernel(%arg0: i32, %arg1: memref<32x288xbf16, #tpu.memory_space<vmem>>, %arg2: memref<288x128xbf16, #tpu.memory_space<vmem>>, %arg3: memref<1x128xf32, #tpu.memory_space<vmem>>, %arg4: memref<32x128xf32, #tpu.memory_space<vmem>>) attributes {dimension_semantics = [#tpu.dimension_semantics<parallel>], iteration_bounds = array<i64: 1>, scalar_prefetch = 0 : i64, scratch_operands = 0 : i64, tpu.core_type = #tpu.core_type<tc>, window_params = [{transform_indices = @transform_0, window_bounds = array<i64: 32, 288>}, {pipeline_mode = #tpu.pipeline_mode<synchronous>, transform_indices = @transform_1, window_bounds = array<i64: 288, 128>}, {pipeline_mode = #tpu.pipeline_mode<synchronous>, transform_indices = @transform_2, window_bounds = array<i64: 1, 128>}, {transform_indices = @transform_3, window_bounds = array<i64: 32, 128>}]} {
    %c0 = arith.constant 0 : index
    %c0_0 = arith.constant 0 : index
    %0 = vector.load %arg1[%c0, %c0_0] : memref<32x288xbf16, #tpu.memory_space<vmem>>, vector<32x288xbf16>
    %c0_1 = arith.constant 0 : index
    %c0_2 = arith.constant 0 : index
    %1 = vector.load %arg2[%c0_1, %c0_2] : memref<288x128xbf16, #tpu.memory_space<vmem>>, vector<288x128xbf16>
    %cst = arith.constant dense<0.000000e+00> : vector<32x128xf32>
    %2 = tpu.matmul %0, %1, %cst {dimension_numbers = #tpu.dot_dimension_numbers<[1], [0], [0], [1], [0, 0, 1, 1], [], []>} : vector<32x288xbf16>, vector<288x128xbf16>, vector<32x128xf32> -> vector<32x128xf32>
    %c0_3 = arith.constant 0 : index
    %c0_4 = arith.constant 0 : index
    %3 = vector.load %arg3[%c0_3, %c0_4] : memref<1x128xf32, #tpu.memory_space<vmem>>, vector<1x128xf32>
    %4 = vector.broadcast %3 : vector<1x128xf32> to vector<32x128xf32>
    %5 = arith.addf %2, %4 : vector<32x128xf32>
    %cst_5 = arith.constant 0.000000e+00 : f32
    %6 = vector.broadcast %cst_5 : f32 to vector<32x128xf32>
    %7 = arith.maximumf %5, %6 : vector<32x128xf32>
    %c0_6 = arith.constant 0 : index
    %c0_7 = arith.constant 0 : index
    %8 = vector.load %arg4[%c0_6, %c0_7] : memref<32x128xf32, #tpu.memory_space<vmem>>, vector<32x128xf32>
    tpu.vector_store %arg4[%c0_6, %c0_7], %7 {strides = array<i32>} : memref<32x128xf32, #tpu.memory_space<vmem>>, vector<32x128xf32>,
    return
  }
  func.func @transform_0(%arg0: i32) -> (i32, i32) {
    %c0_i32 = arith.constant 0 : i32
    %c0_i32_0 = arith.constant 0 : i32
    return %arg0, %c0_i32 : i32, i32
  }
  func.func @transform_1(%arg0: i32) -> (i32, i32) {
    %c0_i32 = arith.constant 0 : i32
    %c0_i32_0 = arith.constant 0 : i32
    %c0_i32_1 = arith.constant 0 : i32
    return %c0_i32, %c0_i32_0 : i32, i32
  }
  func.func @transform_2(%arg0: i32) -> (i32, i32) {
    %c0_i32 = arith.constant 0 : i32
    %c0_i32_0 = arith.constant 0 : i32
    %c0_i32_1 = arith.constant 0 : i32
    return %c0_i32, %c0_i32_0 : i32, i32
  }
  func.func @transform_3(%arg0: i32) -> (i32, i32) {
    %c0_i32 = arith.constant 0 : i32
    %c0_i32_0 = arith.constant 0 : i32
    return %arg0, %c0_i32 : i32, i32
  }
}

module attributes {stable_mosaic.version = 11 : i64} {
  func.func @_mm_multi_kernel(%arg0: i32, %arg1: memref<32x576xbf16, #tpu.memory_space<vmem>>, %arg2: memref<32x64xbf16, #tpu.memory_space<vmem>>, %arg3: memref<576x256xbf16, #tpu.memory_space<vmem>>, %arg4: memref<64x256xbf16, #tpu.memory_space<vmem>>, %arg5: memref<1x256xf32, #tpu.memory_space<vmem>>, %arg6: memref<32x256xf32, #tpu.memory_space<vmem>>) attributes {dimension_semantics = [#tpu.dimension_semantics<parallel>], iteration_bounds = array<i64: 1>, scalar_prefetch = 0 : i64, scratch_operands = 0 : i64, tpu.core_type = #tpu.core_type<tc>, window_params = [{transform_indices = @transform_0, window_bounds = array<i64: 32, 576>}, {transform_indices = @transform_1, window_bounds = array<i64: 32, 64>}, {pipeline_mode = #tpu.pipeline_mode<synchronous>, transform_indices = @transform_2, window_bounds = array<i64: 576, 256>}, {pipeline_mode = #tpu.pipeline_mode<synchronous>, transform_indices = @transform_3, window_bounds = array<i64: 64, 256>}, {pipeline_mode = #tpu.pipeline_mode<synchronous>, transform_indices = @transform_4, window_bounds = array<i64: 1, 256>}, {transform_indices = @transform_5, window_bounds = array<i64: 32, 256>}]} {
    %c0 = arith.constant 0 : index
    %c0_0 = arith.constant 0 : index
    %0 = vector.load %arg1[%c0, %c0_0] : memref<32x576xbf16, #tpu.memory_space<vmem>>, vector<32x576xbf16>
    %c0_1 = arith.constant 0 : index
    %c0_2 = arith.constant 0 : index
    %1 = vector.load %arg3[%c0_1, %c0_2] : memref<576x256xbf16, #tpu.memory_space<vmem>>, vector<576x256xbf16>
    %cst = arith.constant dense<0.000000e+00> : vector<32x256xf32>
    %2 = tpu.matmul %0, %1, %cst {dimension_numbers = #tpu.dot_dimension_numbers<[1], [0], [0], [1], [0, 0, 1, 1], [], []>} : vector<32x576xbf16>, vector<576x256xbf16>, vector<32x256xf32> -> vector<32x256xf32>
    %c0_3 = arith.constant 0 : index
    %c0_4 = arith.constant 0 : index
    %3 = vector.load %arg2[%c0_3, %c0_4] : memref<32x64xbf16, #tpu.memory_space<vmem>>, vector<32x64xbf16>
    %c0_5 = arith.constant 0 : index
    %c0_6 = arith.constant 0 : index
    %4 = vector.load %arg4[%c0_5, %c0_6] : memref<64x256xbf16, #tpu.memory_space<vmem>>, vector<64x256xbf16>
    %cst_7 = arith.constant dense<0.000000e+00> : vector<32x256xf32>
    %5 = tpu.matmul %3, %4, %cst_7 {dimension_numbers = #tpu.dot_dimension_numbers<[1], [0], [0], [1], [0, 0, 1, 1], [], []>} : vector<32x64xbf16>, vector<64x256xbf16>, vector<32x256xf32> -> vector<32x256xf32>
    %6 = arith.addf %2, %5 : vector<32x256xf32>
    %c0_8 = arith.constant 0 : index
    %c0_9 = arith.constant 0 : index
    %7 = vector.load %arg5[%c0_8, %c0_9] : memref<1x256xf32, #tpu.memory_space<vmem>>, vector<1x256xf32>
    %8 = vector.broadcast %7 : vector<1x256xf32> to vector<32x256xf32>
    %9 = arith.addf %6, %8 : vector<32x256xf32>
    %c0_10 = arith.constant 0 : index
    %c0_11 = arith.constant 0 : index
    %10 = vector.load %arg6[%c0_10, %c0_11] : memref<32x256xf32, #tpu.memory_space<vmem>>, vector<32x256xf32>
    tpu.vector_store %arg6[%c0_10, %c0_11], %9 {strides = array<i32>} : memref<32x256xf32, #tpu.memory_space<vmem>>, vector<32x256xf32>,
    return
  }
  func.func @transform_0(%arg0: i32) -> (i32, i32) {
    %c0_i32 = arith.constant 0 : i32
    %c0_i32_0 = arith.constant 0 : i32
    return %arg0, %c0_i32 : i32, i32
  }
  func.func @transform_1(%arg0: i32) -> (i32, i32) {
    %c0_i32 = arith.constant 0 : i32
    %c0_i32_0 = arith.constant 0 : i32
    return %arg0, %c0_i32 : i32, i32
  }
  func.func @transform_2(%arg0: i32) -> (i32, i32) {
    %c0_i32 = arith.constant 0 : i32
    %c0_i32_0 = arith.constant 0 : i32
    %c0_i32_1 = arith.constant 0 : i32
    return %c0_i32, %c0_i32_0 : i32, i32
  }
  func.func @transform_3(%arg0: i32) -> (i32, i32) {
    %c0_i32 = arith.constant 0 : i32
    %c0_i32_0 = arith.constant 0 : i32
    %c0_i32_1 = arith.constant 0 : i32
    return %c0_i32, %c0_i32_0 : i32, i32
  }
  func.func @transform_4(%arg0: i32) -> (i32, i32) {
    %c0_i32 = arith.constant 0 : i32
    %c0_i32_0 = arith.constant 0 : i32
    %c0_i32_1 = arith.constant 0 : i32
    return %c0_i32, %c0_i32_0 : i32, i32
  }
  func.func @transform_5(%arg0: i32) -> (i32, i32) {
    %c0_i32 = arith.constant 0 : i32
    %c0_i32_0 = arith.constant 0 : i32
    return %arg0, %c0_i32 : i32, i32
  }
}

module attributes {stable_mosaic.version = 11 : i64} {
  func.func @_upsample_kernel(%arg0: i32, %arg1: memref<32x9x16xf32, #tpu.memory_space<vmem>>, %arg2: memref<32x9x2xf32, #tpu.memory_space<vmem>>, %arg3: memref<32x32xf32, #tpu.memory_space<vmem>>) attributes {dimension_semantics = [#tpu.dimension_semantics<parallel>], iteration_bounds = array<i64: 1>, scalar_prefetch = 0 : i64, scratch_operands = 0 : i64, tpu.core_type = #tpu.core_type<tc>, window_params = [{transform_indices = @transform_0, window_bounds = array<i64: 32, 9, 16>}, {transform_indices = @transform_1, window_bounds = array<i64: 32, 9, 2>}, {transform_indices = @transform_2, window_bounds = array<i64: 32, 32>}]} {
    %c0 = arith.constant 0 : index
    %c0_0 = arith.constant 0 : index
    %c0_1 = arith.constant 0 : index
    %0 = vector.load %arg1[%c0, %c0_0, %c0_1] : memref<32x9x16xf32, #tpu.memory_space<vmem>>, vector<32x9x16xf32>
    %c0_2 = arith.constant 0 : index
    %c0_3 = arith.constant 0 : index
    %c0_4 = arith.constant 0 : index
    %1 = vector.load %arg2[%c0_2, %c0_3, %c0_4] : memref<32x9x2xf32, #tpu.memory_space<vmem>>, vector<32x9x2xf32>
    %cst = arith.constant dense<0xFF800000> : vector<32x16xf32>
    %2 = vector.multi_reduction <maximumf>, %0, %cst [1] : vector<32x9x16xf32> to vector<32x16xf32>
    %3 = vector.shape_cast %2 : vector<32x16xf32> to vector<32x1x16xf32>
    %4 = vector.broadcast %3 : vector<32x1x16xf32> to vector<32x9x16xf32>
    %5 = arith.subf %0, %4 : vector<32x9x16xf32>
    %6 = math.exp %5 : vector<32x9x16xf32>
    %cst_5 = arith.constant dense<0.000000e+00> : vector<32x16xf32>
    %7 = vector.multi_reduction <add>, %6, %cst_5 [1] : vector<32x9x16xf32> to vector<32x16xf32>
    %8 = vector.shape_cast %7 : vector<32x16xf32> to vector<32x1x16xf32>
    %9 = tpu.reciprocal %8 {approx = true} : vector<32x1x16xf32> -> vector<32x1x16xf32>
    %10 = vector.broadcast %9 : vector<32x1x16xf32> to vector<32x9x16xf32>
    %11 = arith.mulf %6, %10 : vector<32x9x16xf32>
    %12 = vector.extract_strided_slice %1 {offsets = [0, 0, 0], sizes = [32, 9, 1], strides = [1, 1, 1]} : vector<32x9x2xf32> to vector<32x9x1xf32>
    %13 = vector.broadcast %12 : vector<32x9x1xf32> to vector<32x9x16xf32>
    %14 = arith.mulf %11, %13 : vector<32x9x16xf32>
    %cst_6 = arith.constant dense<0.000000e+00> : vector<32x16xf32>
    %15 = vector.multi_reduction <add>, %14, %cst_6 [1] : vector<32x9x16xf32> to vector<32x16xf32>
    %c0_7 = arith.constant 0 : index
    %c0_8 = arith.constant 0 : index
    %16 = vector.load %arg3[%c0_7, %c0_8] : memref<32x32xf32, #tpu.memory_space<vmem>>, vector<32x16xf32>
    tpu.vector_store %arg3[%c0_7, %c0_8], %15 {strides = array<i32>} : memref<32x32xf32, #tpu.memory_space<vmem>>, vector<32x16xf32>,
    %17 = vector.extract_strided_slice %1 {offsets = [0, 0, 1], sizes = [32, 9, 1], strides = [1, 1, 1]} : vector<32x9x2xf32> to vector<32x9x1xf32>
    %18 = vector.broadcast %17 : vector<32x9x1xf32> to vector<32x9x16xf32>
    %19 = arith.mulf %11, %18 : vector<32x9x16xf32>
    %cst_9 = arith.constant dense<0.000000e+00> : vector<32x16xf32>
    %20 = vector.multi_reduction <add>, %19, %cst_9 [1] : vector<32x9x16xf32> to vector<32x16xf32>
    %c0_10 = arith.constant 0 : index
    %c16 = arith.constant 16 : index
    %21 = vector.load %arg3[%c0_10, %c16] : memref<32x32xf32, #tpu.memory_space<vmem>>, vector<32x16xf32>
    tpu.vector_store %arg3[%c0_10, %c16], %20 {strides = array<i32>} : memref<32x32xf32, #tpu.memory_space<vmem>>, vector<32x16xf32>,
    return
  }
  func.func @transform_0(%arg0: i32) -> (i32, i32, i32) {
    %c0_i32 = arith.constant 0 : i32
    %c0_i32_0 = arith.constant 0 : i32
    %c0_i32_1 = arith.constant 0 : i32
    return %arg0, %c0_i32, %c0_i32_0 : i32, i32, i32
  }
  func.func @transform_1(%arg0: i32) -> (i32, i32, i32) {
    %c0_i32 = arith.constant 0 : i32
    %c0_i32_0 = arith.constant 0 : i32
    %c0_i32_1 = arith.constant 0 : i32
    return %arg0, %c0_i32, %c0_i32_0 : i32, i32, i32
  }
  func.func @transform_2(%arg0: i32) -> (i32, i32) {
    %c0_i32 = arith.constant 0 : i32
    %c0_i32_0 = arith.constant 0 : i32
    return %arg0, %c0_i32 : i32, i32
  }
}

</mosaic_0001>

<llo_original>
// kernel: raft_stereo_human_forward.23
$region0: #{raft_stereo_human_forward.23}
  #allocation0 [shape = 'u32[]', space=smem, size = 0x4, offset = 0x4, fixed_abs, tag = 'smem constant byte address 0x4 - core index']
  #allocation1 [shape = 'u32[144,128]{1,0:T(1,128)}', space=vmem, size = 0x12000, scoped, tag = 'internal scratch']
  %s0 = inlined_call_operand.vmem [shape: bf16[128,27], index: 0, kind: input, shape index: {}]
  %s1 = inlined_call_operand.vmem [shape: bf16[27,16], index: 1, kind: input, shape index: {}]
  %s2 = inlined_call_operand.vmem [shape: f32[1,16], index: 2, kind: input, shape index: {}]
  %s3 = inlined_call_operand.vmem [shape: f32[128,16], index: 3, kind: output, shape index: {}]
  %s4 = sld [smem:[#allocation0]]
  $region22: #{raft_stereo_human_forward.23} parent=0
    _
  %s6 = ssub.s32 1, %s4
  %s7 = scalar_select 0, %s6, %s4
  // Predicated region
  $region2: #{raft_stereo_human_forward.23} parent=0 // pred_check
    _
  $region3: #{raft_stereo_human_forward.23} parent=0 // pred_check_branch
    %9 = sbr.rel (0) target = $region5
  $region4: #{raft_stereo_human_forward.23} parent=0 // pred_region
    _
  $region5: #{raft_stereo_human_forward.23} parent=0 // pred_fallthru
    _
  // Predicated region
  $region6: #{raft_stereo_human_forward.23} parent=0 // pred_check
    _
  $region7: #{raft_stereo_human_forward.23} parent=0 // pred_check_branch
    %11 = sbr.rel (0) target = $region9
  $region8: #{raft_stereo_human_forward.23} parent=0 // pred_region
    _
  $region9: #{raft_stereo_human_forward.23} parent=0 // pred_fallthru
    _
  // Predicated region
  $region10: #{raft_stereo_human_forward.23} parent=0 // pred_check
    _
  $region11: #{raft_stereo_human_forward.23} parent=0 // pred_check_branch
    %13 = sbr.rel (0) target = $region13
  $region12: #{raft_stereo_human_forward.23} parent=0 // pred_region
    _
  $region13: #{raft_stereo_human_forward.23} parent=0 // pred_fallthru
    _
  %v15 = vld [vmem:[%s0] sm:$0xf]
  %v16 = vld [vmem:[%s0 + $0x4] sm:$0xf]
  %v17 = vld [vmem:[%s0 + $0x8] sm:$0xf]
  %v18 = vld [vmem:[%s0 + $0xc] sm:$0xf]
  %v19 = vld [vmem:[%s0 + $0x10] sm:$0xf]
  %v20 = vld [vmem:[%s0 + $0x14] sm:$0xf]
  %v21 = vld [vmem:[%s0 + $0x18] sm:$0xf]
  %v22 = vld [vmem:[%s0 + $0x1c] sm:$0xf]
  %v23 = vld [vmem:[%s0 + $0x20] sm:$0xf]
  %v24 = vld [vmem:[%s0 + $0x24] sm:$0xf]
  %v25 = vld [vmem:[%s0 + $0x28] sm:$0xf]
  %v26 = vld [vmem:[%s0 + $0x2c] sm:$0xf]
  %v27 = vld [vmem:[%s0 + $0x30] sm:$0xf]
  %v28 = vld [vmem:[%s0 + $0x34] sm:$0xf]
  %v29 = vld [vmem:[%s0 + $0x38] sm:$0xf]
  %v30 = vld [vmem:[%s0 + $0x3c] sm:$0xf]
  %v31 = vld [vmem:[%s1] sm:$0xf]
  %v32 = vld [vmem:[%s1 + $0x4] sm:$0xf]
  %v33 = vld [vmem:[%s1 + $0x8] sm:$0xf]
  %v34 = vld [vmem:[%s1 + $0xc] sm:$0x3]
  %v35 = vld [vmem:[%s2] sm:$0x1]
  %v37 = vlaneseq
  %v38 = vshrl.u32 %v37, 7
  %v39 = vsub.s32 0, %v38
  %v40 = vrot.slane %v35, %v39
  %v58 = vunpack.c.l.b16 %v15
  %v59 = vunpack.c.l.b16 %v16
  %v60 = vunpack.c.l.b16 %v17
  %v61 = vunpack.c.l.b16 %v18
  %v62 = vunpack.c.l.b16 %v19
  %v63 = vunpack.c.l.b16 %v20
  %v64 = vunpack.c.l.b16 %v21
  %v65 = vunpack.c.l.b16 %v22
  %v66 = vunpack.c.l.b16 %v23
  %v67 = vunpack.c.l.b16 %v24
  %v68 = vunpack.c.l.b16 %v25
  %v69 = vunpack.c.l.b16 %v26
  %v70 = vunpack.c.l.b16 %v27
  %v71 = vunpack.c.l.b16 %v28
  %v72 = vunpack.c.l.b16 %v29
  %v73 = vunpack.c.l.b16 %v30
  %v74 = vpack.c.b16 %v59, %v58
  %v75 = vpack.c.b16 %v61, %v60
  %v76 = vpack.c.b16 %v63, %v62
  %v77 = vpack.c.b16 %v65, %v64
  %v78 = vpack.c.b16 %v67, %v66
  %v79 = vpack.c.b16 %v69, %v68
  %v80 = vpack.c.b16 %v71, %v70
  %v81 = vpack.c.b16 %v73, %v72
  %v86 = vunpack.c.l.b16 %v31
  %v87 = vunpack.c.l.b16 %v32
  %v88 = vunpack.c.l.b16 %v33
  %v89 = vunpack.c.l.b16 %v34
  %v90 = vpack.c.b16 %v87, %v86
  %v91 = vpack.c.b16 %v89, %v88
  %vm93 = vcmask 220160
  %v95 = vsel %vm93, %v74, 0
  %v98 = vsel %vm93, %v75, 0
  %v101 = vsel %vm93, %v76, 0
  %v104 = vsel %vm93, %v77, 0
  %v107 = vsel %vm93, %v78, 0
  %v110 = vsel %vm93, %v79, 0
  %v113 = vsel %vm93, %v80, 0
  %v116 = vsel %vm93, %v81, 0
  %vm118 = vcmask 1044480
  %vm119 = vcmask 1045504
  %v120 = vsel %vm118, 4294967295, 65535
  %v121 = vsel %vm119, %v120, 0
  %v123 = vand.u32 %v91, %v121
  %125 = vmatprep.subr.bf16.mxu0 0
  %126 = vmatpush1.bf16.msra.mxu0 %v90
  %127 = vmatprep.subr.bf16.mxu0 0
  %128 = vmatpush1.bf16.msra.mxu0 %v123
  %129 = vmatprep.subr.bf16.mxu0 0
  %130 = vmatpush1.bf16.msra.mxu0 0
  %131 = vmatprep.subr.bf16.mxu0 0
  %132 = vmatpush1.bf16.msra.mxu0 0
  %133 = vmatprep.subr.bf16.mxu0 0
  %134 = vmatpush1.bf16.msra.mxu0 0
  %135 = vmatprep.subr.bf16.mxu0 0
  %136 = vmatpush1.bf16.msra.mxu0 0
  %137 = vmatprep.subr.bf16.mxu0 0
  %138 = vmatpush1.bf16.msra.mxu0 0
  %139 = vmatprep.subr.bf16.mxu0 0
  %140 = vmatpush1.bf16.msra.mxu0 0
  %141 = vmatprep.subr.bf16.mxu0 0
  %142 = vmatpush1.bf16.msra.mxu0 0
  %143 = vmatprep.subr.bf16.mxu0 0
  %144 = vmatpush1.bf16.msra.mxu0 0
  %145 = vmatprep.subr.bf16.mxu0 0
  %146 = vmatpush1.bf16.msra.mxu0 0
  %147 = vmatprep.subr.bf16.mxu0 0
  %148 = vmatpush1.bf16.msra.mxu0 0
  %149 = vmatprep.subr.bf16.mxu0 0
  %150 = vmatpush1.bf16.msra.mxu0 0
  %151 = vmatprep.subr.bf16.mxu0 0
  %152 = vmatpush1.bf16.msra.mxu0 0
  %153 = vmatprep.subr.bf16.mxu0 0
  %154 = vmatpush1.bf16.msra.mxu0 0
  %155 = vmatprep.subr.bf16.mxu0 0
  %156 = vmatpush1.bf16.msra.mxu0 0
  %157 = vmatprep.mubr.bf16.mxu0 0
  %158 = vmatmul.mubr.bf16.gmra.mrb[0].mxu0 %v95
  %v159 = vpop.f32.mrb[0].mxu0
  %v160 = vadd.f32 %v40, %v159
  %v161 = vpop.f32.mrb[0].mxu0
  %v162 = vpop.f32.mrb[0].mxu0
  %v163 = vadd.f32 %v40, %v162
  %v164 = vpop.f32.mrb[0].mxu0
  %165 = vmatprep.mubr.bf16.mxu0 0
  %166 = vmatmul.mubr.bf16.gmra.mrb[0].mxu0 %v98
  %v167 = vpop.f32.mrb[0].mxu0
  %v168 = vadd.f32 %v40, %v167
  %v169 = vpop.f32.mrb[0].mxu0
  %v170 = vpop.f32.mrb[0].mxu0
  %v171 = vadd.f32 %v40, %v170
  %v172 = vpop.f32.mrb[0].mxu0
  %173 = vmatprep.mubr.bf16.mxu0 0
  %174 = vmatmul.mubr.bf16.gmra.mrb[0].mxu0 %v101
  %v175 = vpop.f32.mrb[0].mxu0
  %v176 = vadd.f32 %v40, %v175
  %v177 = vpop.f32.mrb[0].mxu0
  %v178 = vpop.f32.mrb[0].mxu0
  %v179 = vadd.f32 %v40, %v178
  %v180 = vpop.f32.mrb[0].mxu0
  %181 = vmatprep.mubr.bf16.mxu0 0
  %182 = vmatmul.mubr.bf16.gmra.mrb[0].mxu0 %v104
  %v183 = vpop.f32.mrb[0].mxu0
  %v184 = vadd.f32 %v40, %v183
  %v185 = vpop.f32.mrb[0].mxu0
  %v186 = vpop.f32.mrb[0].mxu0
  %v187 = vadd.f32 %v40, %v186
  %v188 = vpop.f32.mrb[0].mxu0
  %189 = vmatprep.mubr.bf16.mxu0 0
  %190 = vmatmul.mubr.bf16.gmra.mrb[0].mxu0 %v107
  %v191 = vpop.f32.mrb[0].mxu0
  %v192 = vadd.f32 %v40, %v191
  %v193 = vpop.f32.mrb[0].mxu0
  %v194 = vpop.f32.mrb[0].mxu0
  %v195 = vadd.f32 %v40, %v194
  %v196 = vpop.f32.mrb[0].mxu0
  %197 = vmatprep.mubr.bf16.mxu0 0
  %198 = vmatmul.mubr.bf16.gmra.mrb[0].mxu0 %v110
  %v199 = vpop.f32.mrb[0].mxu0
  %v200 = vadd.f32 %v40, %v199
  %v201 = vpop.f32.mrb[0].mxu0
  %v202 = vpop.f32.mrb[0].mxu0
  %v203 = vadd.f32 %v40, %v202
  %v204 = vpop.f32.mrb[0].mxu0
  %205 = vmatprep.mubr.bf16.mxu0 0
  %206 = vmatmul.mubr.bf16.gmra.mrb[0].mxu0 %v113
  %v207 = vpop.f32.mrb[0].mxu0
  %v208 = vadd.f32 %v40, %v207
  %v209 = vpop.f32.mrb[0].mxu0
  %v210 = vpop.f32.mrb[0].mxu0
  %v211 = vadd.f32 %v40, %v210
  %v212 = vpop.f32.mrb[0].mxu0
  %213 = vmatprep.mubr.bf16.mxu0 0
  %214 = vmatmul.mubr.bf16.gmra.mrb[0].mxu0 %v116
  %v215 = vpop.f32.mrb[0].mxu0
  %v216 = vadd.f32 %v40, %v215
  %v217 = vpop.f32.mrb[0].mxu0
  %v218 = vpop.f32.mrb[0].mxu0
  %v219 = vadd.f32 %v40, %v218
  %v220 = vpop.f32.mrb[0].mxu0
  %221 = vdwg.mxu0
  %v222 = vmax.f32 %v160, 0.0
  %v223 = vmax.f32 %v163, 0.0
  %v224 = vmax.f32 %v168, 0.0
  %v225 = vmax.f32 %v171, 0.0
  %v226 = vmax.f32 %v176, 0.0
  %v227 = vmax.f32 %v179, 0.0
  %v228 = vmax.f32 %v184, 0.0
  %v229 = vmax.f32 %v187, 0.0
  %v230 = vmax.f32 %v192, 0.0
  %v231 = vmax.f32 %v195, 0.0
  %v232 = vmax.f32 %v200, 0.0
  %v233 = vmax.f32 %v203, 0.0
  %v234 = vmax.f32 %v208, 0.0
  %v235 = vmax.f32 %v211, 0.0
  %v236 = vmax.f32 %v216, 0.0
  %v237 = vmax.f32 %v219, 0.0
  %vm238 = vcmask 130048
  %239 = vst.msk [vmem:[%s3] sm:$0xff] %vm238, %v222
  %240 = vst.msk [vmem:[%s3 + $0x8] sm:$0xff] %vm238, %v223
  %241 = vst.msk [vmem:[%s3 + $0x10] sm:$0xff] %vm238, %v224
  %242 = vst.msk [vmem:[%s3 + $0x18] sm:$0xff] %vm238, %v225
  %243 = vst.msk [vmem:[%s3 + $0x20] sm:$0xff] %vm238, %v226
  %244 = vst.msk [vmem:[%s3 + $0x28] sm:$0xff] %vm238, %v227
  %245 = vst.msk [vmem:[%s3 + $0x30] sm:$0xff] %vm238, %v228
  %246 = vst.msk [vmem:[%s3 + $0x38] sm:$0xff] %vm238, %v229
  %247 = vst.msk [vmem:[%s3 + $0x40] sm:$0xff] %vm238, %v230
  %248 = vst.msk [vmem:[%s3 + $0x48] sm:$0xff] %vm238, %v231
  %249 = vst.msk [vmem:[%s3 + $0x50] sm:$0xff] %vm238, %v232
  %250 = vst.msk [vmem:[%s3 + $0x58] sm:$0xff] %vm238, %v233
  %251 = vst.msk [vmem:[%s3 + $0x60] sm:$0xff] %vm238, %v234
  %252 = vst.msk [vmem:[%s3 + $0x68] sm:$0xff] %vm238, %v235
  %253 = vst.msk [vmem:[%s3 + $0x70] sm:$0xff] %vm238, %v236
  %254 = vst.msk [vmem:[%s3 + $0x78] sm:$0xff] %vm238, %v237
  // Predicated region
  $region14: #{raft_stereo_human_forward.23} parent=0 // pred_check
    _
  $region15: #{raft_stereo_human_forward.23} parent=0 // pred_check_branch
    %256 = sbr.rel (0) target = $region17
  $region16: #{raft_stereo_human_forward.23} parent=0 // pred_region
    _
  $region17: #{raft_stereo_human_forward.23} parent=0 // pred_fallthru
    _
  // Predicated region
  $region18: #{raft_stereo_human_forward.23} parent=0 // pred_check
    _
  $region19: #{raft_stereo_human_forward.23} parent=0 // pred_check_branch
    %258 = sbr.rel (0) target = $region21
  $region20: #{raft_stereo_human_forward.23} parent=0 // pred_region
    _
  $region21: #{raft_stereo_human_forward.23} parent=0 // pred_fallthru
    _

// kernel: raft_stereo_human_forward.24
$region0: #{raft_stereo_human_forward.24}
  #allocation0 [shape = 'u32[]', space=smem, size = 0x4, offset = 0x4, fixed_abs, tag = 'smem constant byte address 0x4 - core index']
  #allocation1 [shape = 'u32[144,128]{1,0:T(1,128)}', space=vmem, size = 0x12000, scoped, tag = 'internal scratch']
  %s0 = inlined_call_operand.vmem [shape: bf16[32,144], index: 0, kind: input, shape index: {}]
  %s1 = inlined_call_operand.vmem [shape: bf16[144,32], index: 1, kind: input, shape index: {}]
  %s2 = inlined_call_operand.vmem [shape: f32[1,32], index: 2, kind: input, shape index: {}]
  %s3 = inlined_call_operand.vmem [shape: f32[32,32], index: 3, kind: output, shape index: {}]
  %s4 = sld [smem:[#allocation0]]
  $region22: #{raft_stereo_human_forward.24} parent=0
    _
  %s6 = ssub.s32 1, %s4
  %s7 = scalar_select 0, %s6, %s4
  // Predicated region
  $region2: #{raft_stereo_human_forward.24} parent=0 // pred_check
    _
  $region3: #{raft_stereo_human_forward.24} parent=0 // pred_check_branch
    %9 = sbr.rel (0) target = $region5
  $region4: #{raft_stereo_human_forward.24} parent=0 // pred_region
    _
  $region5: #{raft_stereo_human_forward.24} parent=0 // pred_fallthru
    _
  // Predicated region
  $region6: #{raft_stereo_human_forward.24} parent=0 // pred_check
    _
  $region7: #{raft_stereo_human_forward.24} parent=0 // pred_check_branch
    %11 = sbr.rel (0) target = $region9
  $region8: #{raft_stereo_human_forward.24} parent=0 // pred_region
    _
  $region9: #{raft_stereo_human_forward.24} parent=0 // pred_fallthru
    _
  // Predicated region
  $region10: #{raft_stereo_human_forward.24} parent=0 // pred_check
    _
  $region11: #{raft_stereo_human_forward.24} parent=0 // pred_check_branch
    %13 = sbr.rel (0) target = $region13
  $region12: #{raft_stereo_human_forward.24} parent=0 // pred_region
    _
  $region13: #{raft_stereo_human_forward.24} parent=0 // pred_fallthru
    _
  %v15 = vld [vmem:[%s0] sm:$0xff]
  %v16 = vld [vmem:[%s0 + $0x8] sm:$0xff]
  %v17 = vld [vmem:[%s0 + $0x10] sm:$0xff]
  %v18 = vld [vmem:[%s0 + $0x18] sm:$0xff]
  %v19 = vld [vmem:[%s1] sm:$0xf]
  %v20 = vld [vmem:[%s1 + $0x4] sm:$0xf]
  %v21 = vld [vmem:[%s1 + $0x8] sm:$0xf]
  %v22 = vld [vmem:[%s1 + $0xc] sm:$0xf]
  %v23 = vld [vmem:[%s1 + $0x10] sm:$0xf]
  %v24 = vld [vmem:[%s1 + $0x14] sm:$0xf]
  %v25 = vld [vmem:[%s1 + $0x18] sm:$0xf]
  %v26 = vld [vmem:[%s1 + $0x1c] sm:$0xf]
  %v27 = vld [vmem:[%s1 + $0x20] sm:$0xf]
  %v28 = vld [vmem:[%s1 + $0x24] sm:$0xf]
  %v29 = vld [vmem:[%s1 + $0x28] sm:$0xf]
  %v30 = vld [vmem:[%s1 + $0x2c] sm:$0xf]
  %v31 = vld [vmem:[%s1 + $0x30] sm:$0xf]
  %v32 = vld [vmem:[%s1 + $0x34] sm:$0xf]
  %v33 = vld [vmem:[%s1 + $0x38] sm:$0xf]
  %v34 = vld [vmem:[%s1 + $0x3c] sm:$0xf]
  %v35 = vld [vmem:[%s1 + $0x40] sm:$0xf]
  %v36 = vld [vmem:[%s1 + $0x44] sm:$0xf]
  %v37 = vld [vmem:[%s2] sm:$0x1]
  %v39 = vlaneseq
  %v40 = vshrl.u32 %v39, 7
  %v41 = vsub.s32 0, %v40
  %v42 = vrot.slane %v37, %v41
  %v48 = vunpack.c.l.b16 %v15
  %v49 = vunpack.c.h.b16 %v15
  %v50 = vunpack.c.l.b16 %v16
  %v51 = vunpack.c.h.b16 %v16
  %v52 = vunpack.c.l.b16 %v17
  %v53 = vunpack.c.h.b16 %v17
  %v54 = vunpack.c.l.b16 %v18
  %v55 = vunpack.c.h.b16 %v18
  %v56 = vpack.c.b16 %v50, %v48
  %v57 = vpack.c.b16 %v51, %v49
  %v58 = vpack.c.b16 %v54, %v52
  %v59 = vpack.c.b16 %v55, %v53
  %v80 = vunpack.c.l.b16 %v19
  %v81 = vunpack.c.l.b16 %v20
  %v82 = vunpack.c.l.b16 %v21
  %v83 = vunpack.c.l.b16 %v22
  %v84 = vunpack.c.l.b16 %v23
  %v85 = vunpack.c.l.b16 %v24
  %v86 = vunpack.c.l.b16 %v25
  %v87 = vunpack.c.l.b16 %v26
  %v88 = vunpack.c.l.b16 %v27
  %v89 = vunpack.c.l.b16 %v28
  %v90 = vunpack.c.l.b16 %v29
  %v91 = vunpack.c.l.b16 %v30
  %v92 = vunpack.c.l.b16 %v31
  %v93 = vunpack.c.l.b16 %v32
  %v94 = vunpack.c.l.b16 %v33
  %v95 = vunpack.c.l.b16 %v34
  %v96 = vunpack.c.l.b16 %v35
  %v97 = vunpack.c.l.b16 %v36
  %v98 = vpack.c.b16 %v81, %v80
  %v99 = vpack.c.b16 %v83, %v82
  %v100 = vpack.c.b16 %v85, %v84
  %v101 = vpack.c.b16 %v87, %v86
  %v102 = vpack.c.b16 %v89, %v88
  %v103 = vpack.c.b16 %v91, %v90
  %v104 = vpack.c.b16 %v93, %v92
  %v105 = vpack.c.b16 %v95, %v94
  %v106 = vpack.c.b16 %v97, %v96
  %vm116 = vcmask 130048
  %v118 = vsel %vm116, %v57, 0
  %v121 = vsel %vm116, %v59, 0
  %123 = vmatprep.subr.bf16.mxu0 0
  %124 = vmatpush1.bf16.msra.mxu0 %v98
  %125 = vmatprep.subr.bf16.mxu0 0
  %126 = vmatpush1.bf16.msra.mxu0 %v99
  %127 = vmatprep.subr.bf16.mxu0 0
  %128 = vmatpush1.bf16.msra.mxu0 %v100
  %129 = vmatprep.subr.bf16.mxu0 0
  %130 = vmatpush1.bf16.msra.mxu0 %v101
  %131 = vmatprep.subr.bf16.mxu0 0
  %132 = vmatpush1.bf16.msra.mxu0 %v102
  %133 = vmatprep.subr.bf16.mxu0 0
  %134 = vmatpush1.bf16.msra.mxu0 %v103
  %135 = vmatprep.subr.bf16.mxu0 0
  %136 = vmatpush1.bf16.msra.mxu0 %v104
  %137 = vmatprep.subr.bf16.mxu0 0
  %138 = vmatpush1.bf16.msra.mxu0 %v105
  %139 = vmatprep.subr.bf16.mxu0 0
  %140 = vmatpush1.bf16.msra.mxu0 %v106
  %141 = vmatprep.subr.bf16.mxu0 0
  %142 = vmatpush1.bf16.msra.mxu0 0
  %143 = vmatprep.subr.bf16.mxu0 0
  %144 = vmatpush1.bf16.msra.mxu0 0
  %145 = vmatprep.subr.bf16.mxu0 0
  %146 = vmatpush1.bf16.msra.mxu0 0
  %147 = vmatprep.subr.bf16.mxu0 0
  %148 = vmatpush1.bf16.msra.mxu0 0
  %149 = vmatprep.subr.bf16.mxu0 0
  %150 = vmatpush1.bf16.msra.mxu0 0
  %151 = vmatprep.subr.bf16.mxu0 0
  %152 = vmatpush1.bf16.msra.mxu0 0
  %153 = vmatprep.subr.bf16.mxu0 0
  %154 = vmatpush1.bf16.msra.mxu0 0
  %155 = vmatprep.mubr.bf16.mxu0 %v118
  %156 = vmatmul.mubr.bf16.gmra.mrb[0].mxu0 %v56
  %v157 = vpop.f32.mrb[0].mxu0
  %v158 = vadd.f32 %v42, %v157
  %v159 = vpop.f32.mrb[0].mxu0
  %v160 = vpop.f32.mrb[0].mxu0
  %v161 = vadd.f32 %v42, %v160
  %v162 = vpop.f32.mrb[0].mxu0
  %163 = vmatprep.mubr.bf16.mxu0 %v121
  %164 = vmatmul.mubr.bf16.gmra.mrb[0].mxu0 %v58
  %v165 = vpop.f32.mrb[0].mxu0
  %v166 = vadd.f32 %v42, %v165
  %v167 = vpop.f32.mrb[0].mxu0
  %v168 = vpop.f32.mrb[0].mxu0
  %v169 = vadd.f32 %v42, %v168
  %v170 = vpop.f32.mrb[0].mxu0
  %171 = vdwg.mxu0
  %v172 = vmax.f32 %v158, 0.0
  %v173 = vmax.f32 %v161, 0.0
  %v174 = vmax.f32 %v166, 0.0
  %v175 = vmax.f32 %v169, 0.0
  %vm176 = vcmask 261120
  %177 = vst.msk [vmem:[%s3] sm:$0xff] %vm176, %v172
  %178 = vst.msk [vmem:[%s3 + $0x8] sm:$0xff] %vm176, %v173
  %179 = vst.msk [vmem:[%s3 + $0x10] sm:$0xff] %vm176, %v174
  %180 = vst.msk [vmem:[%s3 + $0x18] sm:$0xff] %vm176, %v175
  // Predicated region
  $region14: #{raft_stereo_human_forward.24} parent=0 // pred_check
    _
  $region15: #{raft_stereo_human_forward.24} parent=0 // pred_check_branch
    %182 = sbr.rel (0) target = $region17
  $region16: #{raft_stereo_human_forward.24} parent=0 // pred_region
    _
  $region17: #{raft_stereo_human_forward.24} parent=0 // pred_fallthru
    _
  // Predicated region
  $region18: #{raft_stereo_human_forward.24} parent=0 // pred_check
    _
  $region19: #{raft_stereo_human_forward.24} parent=0 // pred_check_branch
    %184 = sbr.rel (0) target = $region21
  $region20: #{raft_stereo_human_forward.24} parent=0 // pred_region
    _
  $region21: #{raft_stereo_human_forward.24} parent=0 // pred_fallthru
    _

// kernel: raft_stereo_human_forward.25
$region0: #{raft_stereo_human_forward.25}
  #allocation0 [shape = 'u32[]', space=smem, size = 0x4, offset = 0x4, fixed_abs, tag = 'smem constant byte address 0x4 - core index']
  #allocation1 [shape = 'u32[144,128]{1,0:T(1,128)}', space=vmem, size = 0x12000, scoped, tag = 'internal scratch']
  %s0 = inlined_call_operand.vmem [shape: bf16[32,288], index: 0, kind: input, shape index: {}]
  %s1 = inlined_call_operand.vmem [shape: bf16[288,128], index: 1, kind: input, shape index: {}]
  %s2 = inlined_call_operand.vmem [shape: f32[1,128], index: 2, kind: input, shape index: {}]
  %s3 = inlined_call_operand.vmem [shape: f32[32,128], index: 3, kind: output, shape index: {}]
  %s4 = sld [smem:[#allocation0]]
  $region22: #{raft_stereo_human_forward.25} parent=0
    _
  %s6 = ssub.s32 1, %s4
  %s7 = scalar_select 0, %s6, %s4
  // Predicated region
  $region2: #{raft_stereo_human_forward.25} parent=0 // pred_check
    _
  $region3: #{raft_stereo_human_forward.25} parent=0 // pred_check_branch
    %9 = sbr.rel (0) target = $region5
  $region4: #{raft_stereo_human_forward.25} parent=0 // pred_region
    _
  $region5: #{raft_stereo_human_forward.25} parent=0 // pred_fallthru
    _
  // Predicated region
  $region6: #{raft_stereo_human_forward.25} parent=0 // pred_check
    _
  $region7: #{raft_stereo_human_forward.25} parent=0 // pred_check_branch
    %11 = sbr.rel (0) target = $region9
  $region8: #{raft_stereo_human_forward.25} parent=0 // pred_region
    _
  $region9: #{raft_stereo_human_forward.25} parent=0 // pred_fallthru
    _
  // Predicated region
  $region10: #{raft_stereo_human_forward.25} parent=0 // pred_check
    _
  $region11: #{raft_stereo_human_forward.25} parent=0 // pred_check_branch
    %13 = sbr.rel (0) target = $region13
  $region12: #{raft_stereo_human_forward.25} parent=0 // pred_region
    _
  $region13: #{raft_stereo_human_forward.25} parent=0 // pred_fallthru
    _
  %v15 = vld [vmem:[%s0] sm:$0xff]
  %v16 = vld [vmem:[%s0 + $0x8] sm:$0xf]
  %v17 = vld [vmem:[%s0 + $0xc] sm:$0xff]
  %v18 = vld [vmem:[%s0 + $0x14] sm:$0xf]
  %v19 = vld [vmem:[%s0 + $0x18] sm:$0xff]
  %v20 = vld [vmem:[%s0 + $0x20] sm:$0xf]
  %v21 = vld [vmem:[%s0 + $0x24] sm:$0xff]
  %v22 = vld [vmem:[%s0 + $0x2c] sm:$0xf]
  %v23 = vld [vmem:[%s1] sm:$0xf]
  %v24 = vld [vmem:[%s1 + $0x4] sm:$0xf]
  %v25 = vld [vmem:[%s1 + $0x8] sm:$0xf]
  %v26 = vld [vmem:[%s1 + $0xc] sm:$0xf]
  %v27 = vld [vmem:[%s1 + $0x10] sm:$0xf]
  %v28 = vld [vmem:[%s1 + $0x14] sm:$0xf]
  %v29 = vld [vmem:[%s1 + $0x18] sm:$0xf]
  %v30 = vld [vmem:[%s1 + $0x1c] sm:$0xf]
  %v31 = vld [vmem:[%s1 + $0x20] sm:$0xf]
  %v32 = vld [vmem:[%s1 + $0x24] sm:$0xf]
  %v33 = vld [vmem:[%s1 + $0x28] sm:$0xf]
  %v34 = vld [vmem:[%s1 + $0x2c] sm:$0xf]
  %v35 = vld [vmem:[%s1 + $0x30] sm:$0xf]
  %v36 = vld [vmem:[%s1 + $0x34] sm:$0xf]
  %v37 = vld [vmem:[%s1 + $0x38] sm:$0xf]
  %v38 = vld [vmem:[%s1 + $0x3c] sm:$0xf]
  %v39 = vld [vmem:[%s1 + $0x40] sm:$0xf]
  %v40 = vld [vmem:[%s1 + $0x44] sm:$0xf]
  %v41 = vld [vmem:[%s1 + $0x48] sm:$0xf]
  %v42 = vld [vmem:[%s1 + $0x4c] sm:$0xf]
  %v43 = vld [vmem:[%s1 + $0x50] sm:$0xf]
  %v44 = vld [vmem:[%s1 + $0x54] sm:$0xf]
  %v45 = vld [vmem:[%s1 + $0x58] sm:$0xf]
  %v46 = vld [vmem:[%s1 + $0x5c] sm:$0xf]
  %v47 = vld [vmem:[%s1 + $0x60] sm:$0xf]
  %v48 = vld [vmem:[%s1 + $0x64] sm:$0xf]
  %v49 = vld [vmem:[%s1 + $0x68] sm:$0xf]
  %v50 = vld [vmem:[%s1 + $0x6c] sm:$0xf]
  %v51 = vld [vmem:[%s1 + $0x70] sm:$0xf]
  %v52 = vld [vmem:[%s1 + $0x74] sm:$0xf]
  %v53 = vld [vmem:[%s1 + $0x78] sm:$0xf]
  %v54 = vld [vmem:[%s1 + $0x7c] sm:$0xf]
  %v55 = vld [vmem:[%s1 + $0x80] sm:$0xf]
  %v56 = vld [vmem:[%s1 + $0x84] sm:$0xf]
  %v57 = vld [vmem:[%s1 + $0x88] sm:$0xf]
  %v58 = vld [vmem:[%s1 + $0x8c] sm:$0xf]
  %v59 = vld [vmem:[%s2] sm:$0x1]
  %v61 = vlaneseq
  %v62 = vshrl.u32 %v61, 7
  %v63 = vsub.s32 0, %v62
  %v64 = vrot.slane %v59, %v63
  %v74 = vunpack.c.l.b16 %v15
  %v75 = vunpack.c.h.b16 %v15
  %v76 = vunpack.c.l.b16 %v16
  %v77 = vunpack.c.l.b16 %v17
  %v78 = vunpack.c.h.b16 %v17
  %v79 = vunpack.c.l.b16 %v18
  %v80 = vunpack.c.l.b16 %v19
  %v81 = vunpack.c.h.b16 %v19
  %v82 = vunpack.c.l.b16 %v20
  %v83 = vunpack.c.l.b16 %v21
  %v84 = vunpack.c.h.b16 %v21
  %v85 = vunpack.c.l.b16 %v22
  %v86 = vpack.c.b16 %v77, %v74
  %v87 = vpack.c.b16 %v78, %v75
  %v88 = vpack.c.b16 %v79, %v76
  %v89 = vpack.c.b16 %v83, %v80
  %v90 = vpack.c.b16 %v84, %v81
  %v91 = vpack.c.b16 %v85, %v82
  %v132 = vunpack.c.l.b16 %v23
  %v133 = vunpack.c.l.b16 %v24
  %v134 = vunpack.c.l.b16 %v25
  %v135 = vunpack.c.l.b16 %v26
  %v136 = vunpack.c.l.b16 %v27
  %v137 = vunpack.c.l.b16 %v28
  %v138 = vunpack.c.l.b16 %v29
  %v139 = vunpack.c.l.b16 %v30
  %v140 = vunpack.c.l.b16 %v31
  %v141 = vunpack.c.l.b16 %v32
  %v142 = vunpack.c.l.b16 %v33
  %v143 = vunpack.c.l.b16 %v34
  %v144 = vunpack.c.l.b16 %v35
  %v145 = vunpack.c.l.b16 %v36
  %v146 = vunpack.c.l.b16 %v37
  %v147 = vunpack.c.l.b16 %v38
  %v148 = vunpack.c.l.b16 %v39
  %v149 = vunpack.c.l.b16 %v40
  %v150 = vunpack.c.l.b16 %v41
  %v151 = vunpack.c.l.b16 %v42
  %v152 = vunpack.c.l.b16 %v43
  %v153 = vunpack.c.l.b16 %v44
  %v154 = vunpack.c.l.b16 %v45
  %v155 = vunpack.c.l.b16 %v46
  %v156 = vunpack.c.l.b16 %v47
  %v157 = vunpack.c.l.b16 %v48
  %v158 = vunpack.c.l.b16 %v49
  %v159 = vunpack.c.l.b16 %v50
  %v160 = vunpack.c.l.b16 %v51
  %v161 = vunpack.c.l.b16 %v52
  %v162 = vunpack.c.l.b16 %v53
  %v163 = vunpack.c.l.b16 %v54
  %v164 = vunpack.c.l.b16 %v55
  %v165 = vunpack.c.l.b16 %v56
  %v166 = vunpack.c.l.b16 %v57
  %v167 = vunpack.c.l.b16 %v58
  %v168 = vpack.c.b16 %v133, %v132
  %v169 = vpack.c.b16 %v135, %v134
  %v170 = vpack.c.b16 %v137, %v136
  %v171 = vpack.c.b16 %v139, %v138
  %v172 = vpack.c.b16 %v141, %v140
  %v173 = vpack.c.b16 %v143, %v142
  %v174 = vpack.c.b16 %v145, %v144
  %v175 = vpack.c.b16 %v147, %v146
  %v176 = vpack.c.b16 %v149, %v148
  %v177 = vpack.c.b16 %v151, %v150
  %v178 = vpack.c.b16 %v153, %v152
  %v179 = vpack.c.b16 %v155, %v154
  %v180 = vpack.c.b16 %v157, %v156
  %v181 = vpack.c.b16 %v159, %v158
  %v182 = vpack.c.b16 %v161, %v160
  %v183 = vpack.c.b16 %v163, %v162
  %v184 = vpack.c.b16 %v165, %v164
  %v185 = vpack.c.b16 %v167, %v166
  %vm204 = vcmask 261120
  %v206 = vsel %vm204, %v88, 0
  %v209 = vsel %vm204, %v91, 0
  %211 = vmatprep.subr.bf16.mxu0 0
  %212 = vmatpush1.bf16.msra.mxu0 %v168
  %213 = vmatprep.subr.bf16.mxu0 0
  %214 = vmatpush1.bf16.msra.mxu0 %v169
  %215 = vmatprep.subr.bf16.mxu0 0
  %216 = vmatpush1.bf16.msra.mxu0 %v170
  %217 = vmatprep.subr.bf16.mxu0 0
  %218 = vmatpush1.bf16.msra.mxu0 %v171
  %219 = vmatprep.subr.bf16.mxu0 0
  %220 = vmatpush1.bf16.msra.mxu0 %v172
  %221 = vmatprep.subr.bf16.mxu0 0
  %222 = vmatpush1.bf16.msra.mxu0 %v173
  %223 = vmatprep.subr.bf16.mxu0 0
  %224 = vmatpush1.bf16.msra.mxu0 %v174
  %225 = vmatprep.subr.bf16.mxu0 0
  %226 = vmatpush1.bf16.msra.mxu0 %v175
  %227 = vmatprep.subr.bf16.mxu0 0
  %228 = vmatpush1.bf16.msra.mxu0 %v176
  %229 = vmatprep.subr.bf16.mxu0 0
  %230 = vmatpush1.bf16.msra.mxu0 %v177
  %231 = vmatprep.subr.bf16.mxu0 0
  %232 = vmatpush1.bf16.msra.mxu0 %v178
  %233 = vmatprep.subr.bf16.mxu0 0
  %234 = vmatpush1.bf16.msra.mxu0 %v179
  %235 = vmatprep.subr.bf16.mxu0 0
  %236 = vmatpush1.bf16.msra.mxu0 %v180
  %237 = vmatprep.subr.bf16.mxu0 0
  %238 = vmatpush1.bf16.msra.mxu0 %v181
  %239 = vmatprep.subr.bf16.mxu0 0
  %240 = vmatpush1.bf16.msra.mxu0 %v182
  %241 = vmatprep.subr.bf16.mxu0 0
  %242 = vmatpush1.bf16.msra.mxu0 %v183
  %243 = vmatprep.mubr.bf16.mxu0 %v87
  %244 = vmatmul.mubr.bf16.gmra.mrb[0].mxu0 %v86
  %v245 = vpop.f32.mrb[0].mxu0
  %v246 = vadd.f32 %v64, %v245
  %v247 = vpop.f32.mrb[0].mxu0
  %v248 = vpop.f32.mrb[0].mxu0
  %v249 = vadd.f32 %v64, %v248
  %v250 = vpop.f32.mrb[0].mxu0
  %251 = vmatprep.mubr.bf16.mxu0 %v90
  %252 = vmatmul.mubr.bf16.gmra.mrb[0].mxu0 %v89
  %v253 = vpop.f32.mrb[0].mxu0
  %v254 = vadd.f32 %v64, %v253
  %v255 = vpop.f32.mrb[0].mxu0
  %v256 = vpop.f32.mrb[0].mxu0
  %v257 = vadd.f32 %v64, %v256
  %v258 = vpop.f32.mrb[0].mxu0
  %259 = vdwg.mxu0
  %260 = vmatprep.subr.bf16.mxu0 0
  %261 = vmatpush1.bf16.msra.mxu0 %v184
  %262 = vmatprep.subr.bf16.mxu0 0
  %263 = vmatpush1.bf16.msra.mxu0 %v185
  %264 = vmatprep.subr.bf16.mxu0 0
  %265 = vmatpush1.bf16.msra.mxu0 0
  %266 = vmatprep.subr.bf16.mxu0 0
  %267 = vmatpush1.bf16.msra.mxu0 0
  %268 = vmatprep.subr.bf16.mxu0 0
  %269 = vmatpush1.bf16.msra.mxu0 0
  %270 = vmatprep.subr.bf16.mxu0 0
  %271 = vmatpush1.bf16.msra.mxu0 0
  %272 = vmatprep.subr.bf16.mxu0 0
  %273 = vmatpush1.bf16.msra.mxu0 0
  %274 = vmatprep.subr.bf16.mxu0 0
  %275 = vmatpush1.bf16.msra.mxu0 0
  %276 = vmatprep.subr.bf16.mxu0 0
  %277 = vmatpush1.bf16.msra.mxu0 0
  %278 = vmatprep.subr.bf16.mxu0 0
  %279 = vmatpush1.bf16.msra.mxu0 0
  %280 = vmatprep.subr.bf16.mxu0 0
  %281 = vmatpush1.bf16.msra.mxu0 0
  %282 = vmatprep.subr.bf16.mxu0 0
  %283 = vmatpush1.bf16.msra.mxu0 0
  %284 = vmatprep.subr.bf16.mxu0 0
  %285 = vmatpush1.bf16.msra.mxu0 0
  %286 = vmatprep.subr.bf16.mxu0 0
  %287 = vmatpush1.bf16.msra.mxu0 0
  %288 = vmatprep.subr.bf16.mxu0 0
  %289 = vmatpush1.bf16.msra.mxu0 0
  %290 = vmatprep.subr.bf16.mxu0 0
  %291 = vmatpush1.bf16.msra.mxu0 0
  %292 = vmatprep.mubr.bf16.mxu0 0
  %293 = vmatmul.mubr.bf16.gmra.mrb[0].mxu0 %v206
  %v294 = vpop.f32.mrb[0].mxu0
  %v295 = vadd.f32 %v246, %v294
  %v296 = vpop.f32.mrb[0].mxu0
  %v297 = vpop.f32.mrb[0].mxu0
  %v298 = vadd.f32 %v249, %v297
  %v299 = vpop.f32.mrb[0].mxu0
  %300 = vmatprep.mubr.bf16.mxu0 0
  %301 = vmatmul.mubr.bf16.gmra.mrb[0].mxu0 %v209
  %v302 = vpop.f32.mrb[0].mxu0
  %v303 = vadd.f32 %v254, %v302
  %v304 = vpop.f32.mrb[0].mxu0
  %v305 = vpop.f32.mrb[0].mxu0
  %v306 = vadd.f32 %v257, %v305
  %v307 = vpop.f32.mrb[0].mxu0
  %308 = vdwg.mxu0
  %309 = vst.msk [vmem:[%s3] sm:$0xff] %vm204, %v295
  %310 = vst.msk [vmem:[%s3 + $0x8] sm:$0xff] %vm204, %v298
  %311 = vst.msk [vmem:[%s3 + $0x10] sm:$0xff] %vm204, %v303
  %312 = vst.msk [vmem:[%s3 + $0x18] sm:$0xff] %vm204, %v306
  %v313 = vtanh.pop %v295
  %v314 = vtanh.pop %v298
  %v315 = vtanh.pop %v303
  %v316 = vtanh.pop %v306
  %vm317 = vcmask 523520
  %318 = vst.msk [vmem:[%s3] sm:$0xff] %vm317, %v313
  %319 = vst.msk [vmem:[%s3 + $0x8] sm:$0xff] %vm317, %v314
  %320 = vst.msk [vmem:[%s3 + $0x10] sm:$0xff] %vm317, %v315
  %321 = vst.msk [vmem:[%s3 + $0x18] sm:$0xff] %vm317, %v316
  %v322 = vmax.f32 %v295, 0.0
  %v323 = vmax.f32 %v298, 0.0
  %v324 = vmax.f32 %v303, 0.0
  %v325 = vmax.f32 %v306, 0.0
  %vm326 = vcmask 785920
  %327 = vst.msk [vmem:[%s3] sm:$0xff] %vm326, %v322
  %328 = vst.msk [vmem:[%s3 + $0x8] sm:$0xff] %vm326, %v323
  %329 = vst.msk [vmem:[%s3 + $0x10] sm:$0xff] %vm326, %v324
  %330 = vst.msk [vmem:[%s3 + $0x18] sm:$0xff] %vm326, %v325
  %vm331 = vcmask 1048320
  %332 = vst.msk [vmem:[%s3] sm:$0xff] %vm331, %v295
  %333 = vst.msk [vmem:[%s3 + $0x8] sm:$0xff] %vm331, %v298
  %334 = vst.msk [vmem:[%s3 + $0x10] sm:$0xff] %vm331, %v303
  %335 = vst.msk [vmem:[%s3 + $0x18] sm:$0xff] %vm331, %v306
  // Predicated region
  $region14: #{raft_stereo_human_forward.25} parent=0 // pred_check
    _
  $region15: #{raft_stereo_human_forward.25} parent=0 // pred_check_branch
    %337 = sbr.rel (0) target = $region17
  $region16: #{raft_stereo_human_forward.25} parent=0 // pred_region
    _
  $region17: #{raft_stereo_human_forward.25} parent=0 // pred_fallthru
    _
  // Predicated region
  $region18: #{raft_stereo_human_forward.25} parent=0 // pred_check
    _
  $region19: #{raft_stereo_human_forward.25} parent=0 // pred_check_branch
    %339 = sbr.rel (0) target = $region21
  $region20: #{raft_stereo_human_forward.25} parent=0 // pred_region
    _
  $region21: #{raft_stereo_human_forward.25} parent=0 // pred_fallthru
    _

// kernel: raft_stereo_human_forward.26
$region0: #{raft_stereo_human_forward.26}
  #allocation0 [shape = 'u32[]', space=smem, size = 0x4, offset = 0x4, fixed_abs, tag = 'smem constant byte address 0x4 - core index']
  #allocation1 [shape = 'u32[144,128]{1,0:T(1,128)}', space=vmem, size = 0x12000, scoped, tag = 'internal scratch']
  %s0 = inlined_call_operand.vmem [shape: bf16[32,288], index: 0, kind: input, shape index: {}]
  %s1 = inlined_call_operand.vmem [shape: bf16[288,128], index: 1, kind: input, shape index: {}]
  %s2 = inlined_call_operand.vmem [shape: f32[1,128], index: 2, kind: input, shape index: {}]
  %s3 = inlined_call_operand.vmem [shape: f32[32,128], index: 3, kind: output, shape index: {}]
  %s4 = sld [smem:[#allocation0]]
  $region22: #{raft_stereo_human_forward.26} parent=0
    _
  %s6 = ssub.s32 1, %s4
  %s7 = scalar_select 0, %s6, %s4
  // Predicated region
  $region2: #{raft_stereo_human_forward.26} parent=0 // pred_check
    _
  $region3: #{raft_stereo_human_forward.26} parent=0 // pred_check_branch
    %9 = sbr.rel (0) target = $region5
  $region4: #{raft_stereo_human_forward.26} parent=0 // pred_region
    _
  $region5: #{raft_stereo_human_forward.26} parent=0 // pred_fallthru
    _
  // Predicated region
  $region6: #{raft_stereo_human_forward.26} parent=0 // pred_check
    _
  $region7: #{raft_stereo_human_forward.26} parent=0 // pred_check_branch
    %11 = sbr.rel (0) target = $region9
  $region8: #{raft_stereo_human_forward.26} parent=0 // pred_region
    _
  $region9: #{raft_stereo_human_forward.26} parent=0 // pred_fallthru
    _
  // Predicated region
  $region10: #{raft_stereo_human_forward.26} parent=0 // pred_check
    _
  $region11: #{raft_stereo_human_forward.26} parent=0 // pred_check_branch
    %13 = sbr.rel (0) target = $region13
  $region12: #{raft_stereo_human_forward.26} parent=0 // pred_region
    _
  $region13: #{raft_stereo_human_forward.26} parent=0 // pred_fallthru
    _
  %v15 = vld [vmem:[%s0] sm:$0xff]
  %v16 = vld [vmem:[%s0 + $0x8] sm:$0xf]
  %v17 = vld [vmem:[%s0 + $0xc] sm:$0xff]
  %v18 = vld [vmem:[%s0 + $0x14] sm:$0xf]
  %v19 = vld [vmem:[%s0 + $0x18] sm:$0xff]
  %v20 = vld [vmem:[%s0 + $0x20] sm:$0xf]
  %v21 = vld [vmem:[%s0 + $0x24] sm:$0xff]
  %v22 = vld [vmem:[%s0 + $0x2c] sm:$0xf]
  %v23 = vld [vmem:[%s1] sm:$0xf]
  %v24 = vld [vmem:[%s1 + $0x4] sm:$0xf]
  %v25 = vld [vmem:[%s1 + $0x8] sm:$0xf]
  %v26 = vld [vmem:[%s1 + $0xc] sm:$0xf]
  %v27 = vld [vmem:[%s1 + $0x10] sm:$0xf]
  %v28 = vld [vmem:[%s1 + $0x14] sm:$0xf]
  %v29 = vld [vmem:[%s1 + $0x18] sm:$0xf]
  %v30 = vld [vmem:[%s1 + $0x1c] sm:$0xf]
  %v31 = vld [vmem:[%s1 + $0x20] sm:$0xf]
  %v32 = vld [vmem:[%s1 + $0x24] sm:$0xf]
  %v33 = vld [vmem:[%s1 + $0x28] sm:$0xf]
  %v34 = vld [vmem:[%s1 + $0x2c] sm:$0xf]
  %v35 = vld [vmem:[%s1 + $0x30] sm:$0xf]
  %v36 = vld [vmem:[%s1 + $0x34] sm:$0xf]
  %v37 = vld [vmem:[%s1 + $0x38] sm:$0xf]
  %v38 = vld [vmem:[%s1 + $0x3c] sm:$0xf]
  %v39 = vld [vmem:[%s1 + $0x40] sm:$0xf]
  %v40 = vld [vmem:[%s1 + $0x44] sm:$0xf]
  %v41 = vld [vmem:[%s1 + $0x48] sm:$0xf]
  %v42 = vld [vmem:[%s1 + $0x4c] sm:$0xf]
  %v43 = vld [vmem:[%s1 + $0x50] sm:$0xf]
  %v44 = vld [vmem:[%s1 + $0x54] sm:$0xf]
  %v45 = vld [vmem:[%s1 + $0x58] sm:$0xf]
  %v46 = vld [vmem:[%s1 + $0x5c] sm:$0xf]
  %v47 = vld [vmem:[%s1 + $0x60] sm:$0xf]
  %v48 = vld [vmem:[%s1 + $0x64] sm:$0xf]
  %v49 = vld [vmem:[%s1 + $0x68] sm:$0xf]
  %v50 = vld [vmem:[%s1 + $0x6c] sm:$0xf]
  %v51 = vld [vmem:[%s1 + $0x70] sm:$0xf]
  %v52 = vld [vmem:[%s1 + $0x74] sm:$0xf]
  %v53 = vld [vmem:[%s1 + $0x78] sm:$0xf]
  %v54 = vld [vmem:[%s1 + $0x7c] sm:$0xf]
  %v55 = vld [vmem:[%s1 + $0x80] sm:$0xf]
  %v56 = vld [vmem:[%s1 + $0x84] sm:$0xf]
  %v57 = vld [vmem:[%s1 + $0x88] sm:$0xf]
  %v58 = vld [vmem:[%s1 + $0x8c] sm:$0xf]
  %v59 = vld [vmem:[%s2] sm:$0x1]
  %v61 = vlaneseq
  %v62 = vshrl.u32 %v61, 7
  %v63 = vsub.s32 0, %v62
  %v64 = vrot.slane %v59, %v63
  %v74 = vunpack.c.l.b16 %v15
  %v75 = vunpack.c.h.b16 %v15
  %v76 = vunpack.c.l.b16 %v16
  %v77 = vunpack.c.l.b16 %v17
  %v78 = vunpack.c.h.b16 %v17
  %v79 = vunpack.c.l.b16 %v18
  %v80 = vunpack.c.l.b16 %v19
  %v81 = vunpack.c.h.b16 %v19
  %v82 = vunpack.c.l.b16 %v20
  %v83 = vunpack.c.l.b16 %v21
  %v84 = vunpack.c.h.b16 %v21
  %v85 = vunpack.c.l.b16 %v22
  %v86 = vpack.c.b16 %v77, %v74
  %v87 = vpack.c.b16 %v78, %v75
  %v88 = vpack.c.b16 %v79, %v76
  %v89 = vpack.c.b16 %v83, %v80
  %v90 = vpack.c.b16 %v84, %v81
  %v91 = vpack.c.b16 %v85, %v82
  %v132 = vunpack.c.l.b16 %v23
  %v133 = vunpack.c.l.b16 %v24
  %v134 = vunpack.c.l.b16 %v25
  %v135 = vunpack.c.l.b16 %v26
  %v136 = vunpack.c.l.b16 %v27
  %v137 = vunpack.c.l.b16 %v28
  %v138 = vunpack.c.l.b16 %v29
  %v139 = vunpack.c.l.b16 %v30
  %v140 = vunpack.c.l.b16 %v31
  %v141 = vunpack.c.l.b16 %v32
  %v142 = vunpack.c.l.b16 %v33
  %v143 = vunpack.c.l.b16 %v34
  %v144 = vunpack.c.l.b16 %v35
  %v145 = vunpack.c.l.b16 %v36
  %v146 = vunpack.c.l.b16 %v37
  %v147 = vunpack.c.l.b16 %v38
  %v148 = vunpack.c.l.b16 %v39
  %v149 = vunpack.c.l.b16 %v40
  %v150 = vunpack.c.l.b16 %v41
  %v151 = vunpack.c.l.b16 %v42
  %v152 = vunpack.c.l.b16 %v43
  %v153 = vunpack.c.l.b16 %v44
  %v154 = vunpack.c.l.b16 %v45
  %v155 = vunpack.c.l.b16 %v46
  %v156 = vunpack.c.l.b16 %v47
  %v157 = vunpack.c.l.b16 %v48
  %v158 = vunpack.c.l.b16 %v49
  %v159 = vunpack.c.l.b16 %v50
  %v160 = vunpack.c.l.b16 %v51
  %v161 = vunpack.c.l.b16 %v52
  %v162 = vunpack.c.l.b16 %v53
  %v163 = vunpack.c.l.b16 %v54
  %v164 = vunpack.c.l.b16 %v55
  %v165 = vunpack.c.l.b16 %v56
  %v166 = vunpack.c.l.b16 %v57
  %v167 = vunpack.c.l.b16 %v58
  %v168 = vpack.c.b16 %v133, %v132
  %v169 = vpack.c.b16 %v135, %v134
  %v170 = vpack.c.b16 %v137, %v136
  %v171 = vpack.c.b16 %v139, %v138
  %v172 = vpack.c.b16 %v141, %v140
  %v173 = vpack.c.b16 %v143, %v142
  %v174 = vpack.c.b16 %v145, %v144
  %v175 = vpack.c.b16 %v147, %v146
  %v176 = vpack.c.b16 %v149, %v148
  %v177 = vpack.c.b16 %v151, %v150
  %v178 = vpack.c.b16 %v153, %v152
  %v179 = vpack.c.b16 %v155, %v154
  %v180 = vpack.c.b16 %v157, %v156
  %v181 = vpack.c.b16 %v159, %v158
  %v182 = vpack.c.b16 %v161, %v160
  %v183 = vpack.c.b16 %v163, %v162
  %v184 = vpack.c.b16 %v165, %v164
  %v185 = vpack.c.b16 %v167, %v166
  %vm204 = vcmask 261120
  %v206 = vsel %vm204, %v88, 0
  %v209 = vsel %vm204, %v91, 0
  %211 = vmatprep.subr.bf16.mxu0 0
  %212 = vmatpush1.bf16.msra.mxu0 %v168
  %213 = vmatprep.subr.bf16.mxu0 0
  %214 = vmatpush1.bf16.msra.mxu0 %v169
  %215 = vmatprep.subr.bf16.mxu0 0
  %216 = vmatpush1.bf16.msra.mxu0 %v170
  %217 = vmatprep.subr.bf16.mxu0 0
  %218 = vmatpush1.bf16.msra.mxu0 %v171
  %219 = vmatprep.subr.bf16.mxu0 0
  %220 = vmatpush1.bf16.msra.mxu0 %v172
  %221 = vmatprep.subr.bf16.mxu0 0
  %222 = vmatpush1.bf16.msra.mxu0 %v173
  %223 = vmatprep.subr.bf16.mxu0 0
  %224 = vmatpush1.bf16.msra.mxu0 %v174
  %225 = vmatprep.subr.bf16.mxu0 0
  %226 = vmatpush1.bf16.msra.mxu0 %v175
  %227 = vmatprep.subr.bf16.mxu0 0
  %228 = vmatpush1.bf16.msra.mxu0 %v176
  %229 = vmatprep.subr.bf16.mxu0 0
  %230 = vmatpush1.bf16.msra.mxu0 %v177
  %231 = vmatprep.subr.bf16.mxu0 0
  %232 = vmatpush1.bf16.msra.mxu0 %v178
  %233 = vmatprep.subr.bf16.mxu0 0
  %234 = vmatpush1.bf16.msra.mxu0 %v179
  %235 = vmatprep.subr.bf16.mxu0 0
  %236 = vmatpush1.bf16.msra.mxu0 %v180
  %237 = vmatprep.subr.bf16.mxu0 0
  %238 = vmatpush1.bf16.msra.mxu0 %v181
  %239 = vmatprep.subr.bf16.mxu0 0
  %240 = vmatpush1.bf16.msra.mxu0 %v182
  %241 = vmatprep.subr.bf16.mxu0 0
  %242 = vmatpush1.bf16.msra.mxu0 %v183
  %243 = vmatprep.mubr.bf16.mxu0 %v87
  %244 = vmatmul.mubr.bf16.gmra.mrb[0].mxu0 %v86
  %v245 = vpop.f32.mrb[0].mxu0
  %v246 = vadd.f32 %v64, %v245
  %v247 = vpop.f32.mrb[0].mxu0
  %v248 = vpop.f32.mrb[0].mxu0
  %v249 = vadd.f32 %v64, %v248
  %v250 = vpop.f32.mrb[0].mxu0
  %251 = vmatprep.mubr.bf16.mxu0 %v90
  %252 = vmatmul.mubr.bf16.gmra.mrb[0].mxu0 %v89
  %v253 = vpop.f32.mrb[0].mxu0
  %v254 = vadd.f32 %v64, %v253
  %v255 = vpop.f32.mrb[0].mxu0
  %v256 = vpop.f32.mrb[0].mxu0
  %v257 = vadd.f32 %v64, %v256
  %v258 = vpop.f32.mrb[0].mxu0
  %259 = vdwg.mxu0
  %260 = vmatprep.subr.bf16.mxu0 0
  %261 = vmatpush1.bf16.msra.mxu0 %v184
  %262 = vmatprep.subr.bf16.mxu0 0
  %263 = vmatpush1.bf16.msra.mxu0 %v185
  %264 = vmatprep.subr.bf16.mxu0 0
  %265 = vmatpush1.bf16.msra.mxu0 0
  %266 = vmatprep.subr.bf16.mxu0 0
  %267 = vmatpush1.bf16.msra.mxu0 0
  %268 = vmatprep.subr.bf16.mxu0 0
  %269 = vmatpush1.bf16.msra.mxu0 0
  %270 = vmatprep.subr.bf16.mxu0 0
  %271 = vmatpush1.bf16.msra.mxu0 0
  %272 = vmatprep.subr.bf16.mxu0 0
  %273 = vmatpush1.bf16.msra.mxu0 0
  %274 = vmatprep.subr.bf16.mxu0 0
  %275 = vmatpush1.bf16.msra.mxu0 0
  %276 = vmatprep.subr.bf16.mxu0 0
  %277 = vmatpush1.bf16.msra.mxu0 0
  %278 = vmatprep.subr.bf16.mxu0 0
  %279 = vmatpush1.bf16.msra.mxu0 0
  %280 = vmatprep.subr.bf16.mxu0 0
  %281 = vmatpush1.bf16.msra.mxu0 0
  %282 = vmatprep.subr.bf16.mxu0 0
  %283 = vmatpush1.bf16.msra.mxu0 0
  %284 = vmatprep.subr.bf16.mxu0 0
  %285 = vmatpush1.bf16.msra.mxu0 0
  %286 = vmatprep.subr.bf16.mxu0 0
  %287 = vmatpush1.bf16.msra.mxu0 0
  %288 = vmatprep.subr.bf16.mxu0 0
  %289 = vmatpush1.bf16.msra.mxu0 0
  %290 = vmatprep.subr.bf16.mxu0 0
  %291 = vmatpush1.bf16.msra.mxu0 0
  %292 = vmatprep.mubr.bf16.mxu0 0
  %293 = vmatmul.mubr.bf16.gmra.mrb[0].mxu0 %v206
  %v294 = vpop.f32.mrb[0].mxu0
  %v295 = vadd.f32 %v246, %v294
  %v296 = vpop.f32.mrb[0].mxu0
  %v297 = vpop.f32.mrb[0].mxu0
  %v298 = vadd.f32 %v249, %v297
  %v299 = vpop.f32.mrb[0].mxu0
  %300 = vmatprep.mubr.bf16.mxu0 0
  %301 = vmatmul.mubr.bf16.gmra.mrb[0].mxu0 %v209
  %v302 = vpop.f32.mrb[0].mxu0
  %v303 = vadd.f32 %v254, %v302
  %v304 = vpop.f32.mrb[0].mxu0
  %v305 = vpop.f32.mrb[0].mxu0
  %v306 = vadd.f32 %v257, %v305
  %v307 = vpop.f32.mrb[0].mxu0
  %308 = vdwg.mxu0
  %309 = vst [vmem:[%s3] sm:$0xff] %v295
  %310 = vst [vmem:[%s3 + $0x8] sm:$0xff] %v298
  %311 = vst [vmem:[%s3 + $0x10] sm:$0xff] %v303
  %312 = vst [vmem:[%s3 + $0x18] sm:$0xff] %v306
  // Predicated region
  $region14: #{raft_stereo_human_forward.26} parent=0 // pred_check
    _
  $region15: #{raft_stereo_human_forward.26} parent=0 // pred_check_branch
    %314 = sbr.rel (0) target = $region17
  $region16: #{raft_stereo_human_forward.26} parent=0 // pred_region
    _
  $region17: #{raft_stereo_human_forward.26} parent=0 // pred_fallthru
    _
  // Predicated region
  $region18: #{raft_stereo_human_forward.26} parent=0 // pred_check
    _
  $region19: #{raft_stereo_human_forward.26} parent=0 // pred_check_branch
    %316 = sbr.rel (0) target = $region21
  $region20: #{raft_stereo_human_forward.26} parent=0 // pred_region
    _
  $region21: #{raft_stereo_human_forward.26} parent=0 // pred_fallthru
    _

// kernel: raft_stereo_human_forward.29
$region0: #{raft_stereo_human_forward.29}
  #allocation0 [shape = 'u32[]', space=smem, size = 0x4, offset = 0x4, fixed_abs, tag = 'smem constant byte address 0x4 - core index']
  #allocation1 [shape = 'u32[144,128]{1,0:T(1,128)}', space=vmem, size = 0x12000, scoped, tag = 'internal scratch']
  %s0 = inlined_call_operand.vmem [shape: bf16[32,98], index: 0, kind: input, shape index: {}]
  %s1 = inlined_call_operand.vmem [shape: bf16[98,32], index: 1, kind: input, shape index: {}]
  %s2 = inlined_call_operand.vmem [shape: f32[1,32], index: 2, kind: input, shape index: {}]
  %s3 = inlined_call_operand.vmem [shape: f32[32,32], index: 3, kind: output, shape index: {}]
  %s4 = sld [smem:[#allocation0]]
  $region22: #{raft_stereo_human_forward.29} parent=0
    _
  %s6 = ssub.s32 1, %s4
  %s7 = scalar_select 0, %s6, %s4
  // Predicated region
  $region2: #{raft_stereo_human_forward.29} parent=0 // pred_check
    _
  $region3: #{raft_stereo_human_forward.29} parent=0 // pred_check_branch
    %9 = sbr.rel (0) target = $region5
  $region4: #{raft_stereo_human_forward.29} parent=0 // pred_region
    _
  $region5: #{raft_stereo_human_forward.29} parent=0 // pred_fallthru
    _
  // Predicated region
  $region6: #{raft_stereo_human_forward.29} parent=0 // pred_check
    _
  $region7: #{raft_stereo_human_forward.29} parent=0 // pred_check_branch
    %11 = sbr.rel (0) target = $region9
  $region8: #{raft_stereo_human_forward.29} parent=0 // pred_region
    _
  $region9: #{raft_stereo_human_forward.29} parent=0 // pred_fallthru
    _
  // Predicated region
  $region10: #{raft_stereo_human_forward.29} parent=0 // pred_check
    _
  $region11: #{raft_stereo_human_forward.29} parent=0 // pred_check_branch
    %13 = sbr.rel (0) target = $region13
  $region12: #{raft_stereo_human_forward.29} parent=0 // pred_region
    _
  $region13: #{raft_stereo_human_forward.29} parent=0 // pred_fallthru
    _
  %v15 = vld [vmem:[%s0] sm:$0xf]
  %v16 = vld [vmem:[%s0 + $0x4] sm:$0xf]
  %v17 = vld [vmem:[%s0 + $0x8] sm:$0xf]
  %v18 = vld [vmem:[%s0 + $0xc] sm:$0xf]
  %v19 = vld [vmem:[%s1] sm:$0xf]
  %v20 = vld [vmem:[%s1 + $0x4] sm:$0xf]
  %v21 = vld [vmem:[%s1 + $0x8] sm:$0xf]
  %v22 = vld [vmem:[%s1 + $0xc] sm:$0xf]
  %v23 = vld [vmem:[%s1 + $0x10] sm:$0xf]
  %v24 = vld [vmem:[%s1 + $0x14] sm:$0xf]
  %v25 = vld [vmem:[%s1 + $0x18] sm:$0xf]
  %v26 = vld [vmem:[%s1 + $0x1c] sm:$0xf]
  %v27 = vld [vmem:[%s1 + $0x20] sm:$0xf]
  %v28 = vld [vmem:[%s1 + $0x24] sm:$0xf]
  %v29 = vld [vmem:[%s1 + $0x28] sm:$0xf]
  %v30 = vld [vmem:[%s1 + $0x2c] sm:$0xf]
  %v31 = vld [vmem:[%s1 + $0x30] sm:$0x1]
  %v32 = vld [vmem:[%s2] sm:$0x1]
  %v34 = vlaneseq
  %v35 = vshrl.u32 %v34, 7
  %v36 = vsub.s32 0, %v35
  %v37 = vrot.slane %v32, %v36
  %v43 = vunpack.c.l.b16 %v15
  %v44 = vunpack.c.l.b16 %v16
  %v45 = vunpack.c.l.b16 %v17
  %v46 = vunpack.c.l.b16 %v18
  %v47 = vpack.c.b16 %v44, %v43
  %v48 = vpack.c.b16 %v46, %v45
  %v62 = vunpack.c.l.b16 %v19
  %v63 = vunpack.c.l.b16 %v20
  %v64 = vunpack.c.l.b16 %v21
  %v65 = vunpack.c.l.b16 %v22
  %v66 = vunpack.c.l.b16 %v23
  %v67 = vunpack.c.l.b16 %v24
  %v68 = vunpack.c.l.b16 %v25
  %v69 = vunpack.c.l.b16 %v26
  %v70 = vunpack.c.l.b16 %v27
  %v71 = vunpack.c.l.b16 %v28
  %v72 = vunpack.c.l.b16 %v29
  %v73 = vunpack.c.l.b16 %v30
  %v74 = vunpack.c.l.b16 %v31
  %v75 = vpack.c.b16 %v63, %v62
  %v76 = vpack.c.b16 %v65, %v64
  %v77 = vpack.c.b16 %v67, %v66
  %v78 = vpack.c.b16 %v69, %v68
  %v79 = vpack.c.b16 %v71, %v70
  %v80 = vpack.c.b16 %v73, %v72
  %v81 = vpack.c.b16 %v74, %v74
  %vm88 = vcmask 801792
  %v90 = vsel %vm88, %v47, 0
  %v93 = vsel %vm88, %v48, 0
  %vm95 = vcmask 1040384
  %v97 = vsel %vm95, %v81, 0
  %99 = vmatprep.subr.bf16.mxu0 0
  %100 = vmatpush1.bf16.msra.mxu0 %v75
  %101 = vmatprep.subr.bf16.mxu0 0
  %102 = vmatpush1.bf16.msra.mxu0 %v76
  %103 = vmatprep.subr.bf16.mxu0 0
  %104 = vmatpush1.bf16.msra.mxu0 %v77
  %105 = vmatprep.subr.bf16.mxu0 0
  %106 = vmatpush1.bf16.msra.mxu0 %v78
  %107 = vmatprep.subr.bf16.mxu0 0
  %108 = vmatpush1.bf16.msra.mxu0 %v79
  %109 = vmatprep.subr.bf16.mxu0 0
  %110 = vmatpush1.bf16.msra.mxu0 %v80
  %111 = vmatprep.subr.bf16.mxu0 0
  %112 = vmatpush1.bf16.msra.mxu0 %v97
  %113 = vmatprep.subr.bf16.mxu0 0
  %114 = vmatpush1.bf16.msra.mxu0 0
  %115 = vmatprep.subr.bf16.mxu0 0
  %116 = vmatpush1.bf16.msra.mxu0 0
  %117 = vmatprep.subr.bf16.mxu0 0
  %118 = vmatpush1.bf16.msra.mxu0 0
  %119 = vmatprep.subr.bf16.mxu0 0
  %120 = vmatpush1.bf16.msra.mxu0 0
  %121 = vmatprep.subr.bf16.mxu0 0
  %122 = vmatpush1.bf16.msra.mxu0 0
  %123 = vmatprep.subr.bf16.mxu0 0
  %124 = vmatpush1.bf16.msra.mxu0 0
  %125 = vmatprep.subr.bf16.mxu0 0
  %126 = vmatpush1.bf16.msra.mxu0 0
  %127 = vmatprep.subr.bf16.mxu0 0
  %128 = vmatpush1.bf16.msra.mxu0 0
  %129 = vmatprep.subr.bf16.mxu0 0
  %130 = vmatpush1.bf16.msra.mxu0 0
  %131 = vmatprep.mubr.bf16.mxu0 0
  %132 = vmatmul.mubr.bf16.gmra.mrb[0].mxu0 %v90
  %v133 = vpop.f32.mrb[0].mxu0
  %v134 = vadd.f32 %v37, %v133
  %v135 = vpop.f32.mrb[0].mxu0
  %v136 = vpop.f32.mrb[0].mxu0
  %v137 = vadd.f32 %v37, %v136
  %v138 = vpop.f32.mrb[0].mxu0
  %139 = vmatprep.mubr.bf16.mxu0 0
  %140 = vmatmul.mubr.bf16.gmra.mrb[0].mxu0 %v93
  %v141 = vpop.f32.mrb[0].mxu0
  %v142 = vadd.f32 %v37, %v141
  %v143 = vpop.f32.mrb[0].mxu0
  %v144 = vpop.f32.mrb[0].mxu0
  %v145 = vadd.f32 %v37, %v144
  %v146 = vpop.f32.mrb[0].mxu0
  %147 = vdwg.mxu0
  %v148 = vmax.f32 %v134, 0.0
  %v149 = vmax.f32 %v137, 0.0
  %v150 = vmax.f32 %v142, 0.0
  %v151 = vmax.f32 %v145, 0.0
  %vm152 = vcmask 261120
  %153 = vst.msk [vmem:[%s3] sm:$0xff] %vm152, %v148
  %154 = vst.msk [vmem:[%s3 + $0x8] sm:$0xff] %vm152, %v149
  %155 = vst.msk [vmem:[%s3 + $0x10] sm:$0xff] %vm152, %v150
  %156 = vst.msk [vmem:[%s3 + $0x18] sm:$0xff] %vm152, %v151
  // Predicated region
  $region14: #{raft_stereo_human_forward.29} parent=0 // pred_check
    _
  $region15: #{raft_stereo_human_forward.29} parent=0 // pred_check_branch
    %158 = sbr.rel (0) target = $region17
  $region16: #{raft_stereo_human_forward.29} parent=0 // pred_region
    _
  $region17: #{raft_stereo_human_forward.29} parent=0 // pred_fallthru
    _
  // Predicated region
  $region18: #{raft_stereo_human_forward.29} parent=0 // pred_check
    _
  $region19: #{raft_stereo_human_forward.29} parent=0 // pred_check_branch
    %160 = sbr.rel (0) target = $region21
  $region20: #{raft_stereo_human_forward.29} parent=0 // pred_region
    _
  $region21: #{raft_stereo_human_forward.29} parent=0 // pred_fallthru
    _

// kernel: raft_stereo_human_forward.27
$region0: #{raft_stereo_human_forward.27}
  #allocation0 [shape = 'u32[]', space=smem, size = 0x4, offset = 0x4, fixed_abs, tag = 'smem constant byte address 0x4 - core index']
  #allocation1 [shape = 'u32[144,128]{1,0:T(1,128)}', space=vmem, size = 0x12000, scoped, tag = 'internal scratch']
  %s0 = inlined_call_operand.vmem [shape: bf16[8,4,32], index: 0, kind: input, shape index: {}]
  %s1 = inlined_call_operand.vmem [shape: bf16[8,4,32], index: 1, kind: input, shape index: {}]
  %s2 = inlined_call_operand.vmem [shape: bf16[8,2,32], index: 2, kind: input, shape index: {}]
  %s3 = inlined_call_operand.vmem [shape: f32[8,4,4], index: 3, kind: output, shape index: {0}]
  %s4 = inlined_call_operand.vmem [shape: f32[8,4,2], index: 4, kind: output, shape index: {1}]
  %5 = xla_tuple %s3, %s4
  %s6 = sld [smem:[#allocation0]]
  $region30: #{raft_stereo_human_forward.27} parent=0
    _
  %s8 = ssub.s32 1, %s6
  %s9 = scalar_select 0, %s8, %s6
  // Predicated region
  $region2: #{raft_stereo_human_forward.27} parent=0 // pred_check
    _
  $region3: #{raft_stereo_human_forward.27} parent=0 // pred_check_branch
    %11 = sbr.rel (0) target = $region5
  $region4: #{raft_stereo_human_forward.27} parent=0 // pred_region
    _
  $region5: #{raft_stereo_human_forward.27} parent=0 // pred_fallthru
    _
  // Predicated region
  $region6: #{raft_stereo_human_forward.27} parent=0 // pred_check
    _
  $region7: #{raft_stereo_human_forward.27} parent=0 // pred_check_branch
    %13 = sbr.rel (0) target = $region9
  $region8: #{raft_stereo_human_forward.27} parent=0 // pred_region
    _
  $region9: #{raft_stereo_human_forward.27} parent=0 // pred_fallthru
    _
  // Predicated region
  $region10: #{raft_stereo_human_forward.27} parent=0 // pred_check
    _
  $region11: #{raft_stereo_human_forward.27} parent=0 // pred_check_branch
    %15 = sbr.rel (0) target = $region13
  $region12: #{raft_stereo_human_forward.27} parent=0 // pred_region
    _
  $region13: #{raft_stereo_human_forward.27} parent=0 // pred_fallthru
    _
  %v17 = vld [vmem:[%s0] sm:$0x3]
  %v18 = vld [vmem:[%s0 + $0x2] sm:$0x3]
  %v19 = vld [vmem:[%s0 + $0x4] sm:$0x3]
  %v20 = vld [vmem:[%s0 + $0x6] sm:$0x3]
  %v21 = vld [vmem:[%s0 + $0x8] sm:$0x3]
  %v22 = vld [vmem:[%s0 + $0xa] sm:$0x3]
  %v23 = vld [vmem:[%s0 + $0xc] sm:$0x3]
  %v24 = vld [vmem:[%s0 + $0xe] sm:$0x3]
  %v25 = vld [vmem:[%s1] sm:$0x3]
  %v26 = vld [vmem:[%s1 + $0x2] sm:$0x3]
  %v27 = vld [vmem:[%s1 + $0x4] sm:$0x3]
  %v28 = vld [vmem:[%s1 + $0x6] sm:$0x3]
  %v29 = vld [vmem:[%s1 + $0x8] sm:$0x3]
  %v30 = vld [vmem:[%s1 + $0xa] sm:$0x3]
  %v31 = vld [vmem:[%s1 + $0xc] sm:$0x3]
  %v32 = vld [vmem:[%s1 + $0xe] sm:$0x3]
  %vm33 = vcmask 261120
  %v35 = vsel %vm33, %v17, 0
  %v38 = vsel %vm33, %v25, 0
  %40 = vmatprep.subr.bf16.mxu0 0
  %41 = vmatpush1.bf16.xpose.msra.mxu0 %v38
  %42 = vmatprep.subr.bf16.mxu0 0
  %43 = vmatpush1.bf16.xpose.msra.mxu0 0
  %44 = vmatprep.subr.bf16.mxu0 0
  %45 = vmatpush1.bf16.xpose.msra.mxu0 0
  %46 = vmatprep.subr.bf16.mxu0 0
  %47 = vmatpush1.bf16.xpose.msra.mxu0 0
  %48 = vmatprep.subr.bf16.mxu0 0
  %49 = vmatpush1.bf16.xpose.msra.mxu0 0
  %50 = vmatprep.subr.bf16.mxu0 0
  %51 = vmatpush1.bf16.xpose.msra.mxu0 0
  %52 = vmatprep.subr.bf16.mxu0 0
  %53 = vmatpush1.bf16.xpose.msra.mxu0 0
  %54 = vmatprep.subr.bf16.mxu0 0
  %55 = vmatpush1.bf16.xpose.msra.mxu0 0
  %56 = vmatprep.subr.bf16.mxu0 0
  %57 = vmatpush1.bf16.xpose.msra.mxu0 0
  %58 = vmatprep.subr.bf16.mxu0 0
  %59 = vmatpush1.bf16.xpose.msra.mxu0 0
  %60 = vmatprep.subr.bf16.mxu0 0
  %61 = vmatpush1.bf16.xpose.msra.mxu0 0
  %62 = vmatprep.subr.bf16.mxu0 0
  %63 = vmatpush1.bf16.xpose.msra.mxu0 0
  %64 = vmatprep.subr.bf16.mxu0 0
  %65 = vmatpush1.bf16.xpose.msra.mxu0 0
  %66 = vmatprep.subr.bf16.mxu0 0
  %67 = vmatpush1.bf16.xpose.msra.mxu0 0
  %68 = vmatprep.subr.bf16.mxu0 0
  %69 = vmatpush1.bf16.xpose.msra.mxu0 0
  %70 = vmatprep.subr.bf16.mxu0 0
  %71 = vmatpush1.bf16.xpose.msra.mxu0 0
  %72 = vmatprep.mubr.bf16.mxu0 0
  %73 = vmatmul.mubr.bf16.gmra.mrb[0].mxu0 %v35
  %v74 = vpop.f32.mrb[0].mxu0
  %v75 = vadd.f32 0.0, %v74
  %v76 = vpop.f32.mrb[0].mxu0
  %v77 = vpop.f32.mrb[0].mxu0
  %v78 = vpop.f32.mrb[0].mxu0
  %79 = vdwg.mxu0
  %v81 = vsel %vm33, %v18, 0
  %v84 = vsel %vm33, %v26, 0
  %86 = vmatprep.subr.bf16.mxu0 0
  %87 = vmatpush1.bf16.xpose.msra.mxu0 %v84
  %88 = vmatprep.subr.bf16.mxu0 0
  %89 = vmatpush1.bf16.xpose.msra.mxu0 0
  %90 = vmatprep.subr.bf16.mxu0 0
  %91 = vmatpush1.bf16.xpose.msra.mxu0 0
  %92 = vmatprep.subr.bf16.mxu0 0
  %93 = vmatpush1.bf16.xpose.msra.mxu0 0
  %94 = vmatprep.subr.bf16.mxu0 0
  %95 = vmatpush1.bf16.xpose.msra.mxu0 0
  %96 = vmatprep.subr.bf16.mxu0 0
  %97 = vmatpush1.bf16.xpose.msra.mxu0 0
  %98 = vmatprep.subr.bf16.mxu0 0
  %99 = vmatpush1.bf16.xpose.msra.mxu0 0
  %100 = vmatprep.subr.bf16.mxu0 0
  %101 = vmatpush1.bf16.xpose.msra.mxu0 0
  %102 = vmatprep.subr.bf16.mxu0 0
  %103 = vmatpush1.bf16.xpose.msra.mxu0 0
  %104 = vmatprep.subr.bf16.mxu0 0
  %105 = vmatpush1.bf16.xpose.msra.mxu0 0
  %106 = vmatprep.subr.bf16.mxu0 0
  %107 = vmatpush1.bf16.xpose.msra.mxu0 0
  %108 = vmatprep.subr.bf16.mxu0 0
  %109 = vmatpush1.bf16.xpose.msra.mxu0 0
  %110 = vmatprep.subr.bf16.mxu0 0
  %111 = vmatpush1.bf16.xpose.msra.mxu0 0
  %112 = vmatprep.subr.bf16.mxu0 0
  %113 = vmatpush1.bf16.xpose.msra.mxu0 0
  %114 = vmatprep.subr.bf16.mxu0 0
  %115 = vmatpush1.bf16.xpose.msra.mxu0 0
  %116 = vmatprep.subr.bf16.mxu0 0
  %117 = vmatpush1.bf16.xpose.msra.mxu0 0
  %118 = vmatprep.mubr.bf16.mxu0 0
  %119 = vmatmul.mubr.bf16.gmra.mrb[0].mxu0 %v81
  %v120 = vpop.f32.mrb[0].mxu0
  %v121 = vadd.f32 0.0, %v120
  %v122 = vpop.f32.mrb[0].mxu0
  %v123 = vpop.f32.mrb[0].mxu0
  %v124 = vpop.f32.mrb[0].mxu0
  %125 = vdwg.mxu0
  %v127 = vsel %vm33, %v19, 0
  %v130 = vsel %vm33, %v27, 0
  %132 = vmatprep.subr.bf16.mxu0 0
  %133 = vmatpush1.bf16.xpose.msra.mxu0 %v130
  %134 = vmatprep.subr.bf16.mxu0 0
  %135 = vmatpush1.bf16.xpose.msra.mxu0 0
  %136 = vmatprep.subr.bf16.mxu0 0
  %137 = vmatpush1.bf16.xpose.msra.mxu0 0
  %138 = vmatprep.subr.bf16.mxu0 0
  %139 = vmatpush1.bf16.xpose.msra.mxu0 0
  %140 = vmatprep.subr.bf16.mxu0 0
  %141 = vmatpush1.bf16.xpose.msra.mxu0 0
  %142 = vmatprep.subr.bf16.mxu0 0
  %143 = vmatpush1.bf16.xpose.msra.mxu0 0
  %144 = vmatprep.subr.bf16.mxu0 0
  %145 = vmatpush1.bf16.xpose.msra.mxu0 0
  %146 = vmatprep.subr.bf16.mxu0 0
  %147 = vmatpush1.bf16.xpose.msra.mxu0 0
  %148 = vmatprep.subr.bf16.mxu0 0
  %149 = vmatpush1.bf16.xpose.msra.mxu0 0
  %150 = vmatprep.subr.bf16.mxu0 0
  %151 = vmatpush1.bf16.xpose.msra.mxu0 0
  %152 = vmatprep.subr.bf16.mxu0 0
  %153 = vmatpush1.bf16.xpose.msra.mxu0 0
  %154 = vmatprep.subr.bf16.mxu0 0
  %155 = vmatpush1.bf16.xpose.msra.mxu0 0
  %156 = vmatprep.subr.bf16.mxu0 0
  %157 = vmatpush1.bf16.xpose.msra.mxu0 0
  %158 = vmatprep.subr.bf16.mxu0 0
  %159 = vmatpush1.bf16.xpose.msra.mxu0 0
  %160 = vmatprep.subr.bf16.mxu0 0
  %161 = vmatpush1.bf16.xpose.msra.mxu0 0
  %162 = vmatprep.subr.bf16.mxu0 0
  %163 = vmatpush1.bf16.xpose.msra.mxu0 0
  %164 = vmatprep.mubr.bf16.mxu0 0
  %165 = vmatmul.mubr.bf16.gmra.mrb[0].mxu0 %v127
  %v166 = vpop.f32.mrb[0].mxu0
  %v167 = vadd.f32 0.0, %v166
  %v168 = vpop.f32.mrb[0].mxu0
  %v169 = vpop.f32.mrb[0].mxu0
  %v170 = vpop.f32.mrb[0].mxu0
  %171 = vdwg.mxu0
  %v173 = vsel %vm33, %v20, 0
  %v176 = vsel %vm33, %v28, 0
  %178 = vmatprep.subr.bf16.mxu0 0
  %179 = vmatpush1.bf16.xpose.msra.mxu0 %v176
  %180 = vmatprep.subr.bf16.mxu0 0
  %181 = vmatpush1.bf16.xpose.msra.mxu0 0
  %182 = vmatprep.subr.bf16.mxu0 0
  %183 = vmatpush1.bf16.xpose.msra.mxu0 0
  %184 = vmatprep.subr.bf16.mxu0 0
  %185 = vmatpush1.bf16.xpose.msra.mxu0 0
  %186 = vmatprep.subr.bf16.mxu0 0
  %187 = vmatpush1.bf16.xpose.msra.mxu0 0
  %188 = vmatprep.subr.bf16.mxu0 0
  %189 = vmatpush1.bf16.xpose.msra.mxu0 0
  %190 = vmatprep.subr.bf16.mxu0 0
  %191 = vmatpush1.bf16.xpose.msra.mxu0 0
  %192 = vmatprep.subr.bf16.mxu0 0
  %193 = vmatpush1.bf16.xpose.msra.mxu0 0
  %194 = vmatprep.subr.bf16.mxu0 0
  %195 = vmatpush1.bf16.xpose.msra.mxu0 0
  %196 = vmatprep.subr.bf16.mxu0 0
  %197 = vmatpush1.bf16.xpose.msra.mxu0 0
  %198 = vmatprep.subr.bf16.mxu0 0
  %199 = vmatpush1.bf16.xpose.msra.mxu0 0
  %200 = vmatprep.subr.bf16.mxu0 0
  %201 = vmatpush1.bf16.xpose.msra.mxu0 0
  %202 = vmatprep.subr.bf16.mxu0 0
  %203 = vmatpush1.bf16.xpose.msra.mxu0 0
  %204 = vmatprep.subr.bf16.mxu0 0
  %205 = vmatpush1.bf16.xpose.msra.mxu0 0
  %206 = vmatprep.subr.bf16.mxu0 0
  %207 = vmatpush1.bf16.xpose.msra.mxu0 0
  %208 = vmatprep.subr.bf16.mxu0 0
  %209 = vmatpush1.bf16.xpose.msra.mxu0 0
  %210 = vmatprep.mubr.bf16.mxu0 0
  %211 = vmatmul.mubr.bf16.gmra.mrb[0].mxu0 %v173
  %v212 = vpop.f32.mrb[0].mxu0
  %v213 = vadd.f32 0.0, %v212
  %v214 = vpop.f32.mrb[0].mxu0
  %v215 = vpop.f32.mrb[0].mxu0
  %v216 = vpop.f32.mrb[0].mxu0
  %217 = vdwg.mxu0
  %v219 = vsel %vm33, %v21, 0
  %v222 = vsel %vm33, %v29, 0
  %224 = vmatprep.subr.bf16.mxu0 0
  %225 = vmatpush1.bf16.xpose.msra.mxu0 %v222
  %226 = vmatprep.subr.bf16.mxu0 0
  %227 = vmatpush1.bf16.xpose.msra.mxu0 0
  %228 = vmatprep.subr.bf16.mxu0 0
  %229 = vmatpush1.bf16.xpose.msra.mxu0 0
  %230 = vmatprep.subr.bf16.mxu0 0
  %231 = vmatpush1.bf16.xpose.msra.mxu0 0
  %232 = vmatprep.subr.bf16.mxu0 0
  %233 = vmatpush1.bf16.xpose.msra.mxu0 0
  %234 = vmatprep.subr.bf16.mxu0 0
  %235 = vmatpush1.bf16.xpose.msra.mxu0 0
  %236 = vmatprep.subr.bf16.mxu0 0
  %237 = vmatpush1.bf16.xpose.msra.mxu0 0
  %238 = vmatprep.subr.bf16.mxu0 0
  %239 = vmatpush1.bf16.xpose.msra.mxu0 0
  %240 = vmatprep.subr.bf16.mxu0 0
  %241 = vmatpush1.bf16.xpose.msra.mxu0 0
  %242 = vmatprep.subr.bf16.mxu0 0
  %243 = vmatpush1.bf16.xpose.msra.mxu0 0
  %244 = vmatprep.subr.bf16.mxu0 0
  %245 = vmatpush1.bf16.xpose.msra.mxu0 0
  %246 = vmatprep.subr.bf16.mxu0 0
  %247 = vmatpush1.bf16.xpose.msra.mxu0 0
  %248 = vmatprep.subr.bf16.mxu0 0
  %249 = vmatpush1.bf16.xpose.msra.mxu0 0
  %250 = vmatprep.subr.bf16.mxu0 0
  %251 = vmatpush1.bf16.xpose.msra.mxu0 0
  %252 = vmatprep.subr.bf16.mxu0 0
  %253 = vmatpush1.bf16.xpose.msra.mxu0 0
  %254 = vmatprep.subr.bf16.mxu0 0
  %255 = vmatpush1.bf16.xpose.msra.mxu0 0
  %256 = vmatprep.mubr.bf16.mxu0 0
  %257 = vmatmul.mubr.bf16.gmra.mrb[0].mxu0 %v219
  %v258 = vpop.f32.mrb[0].mxu0
  %v259 = vadd.f32 0.0, %v258
  %v260 = vpop.f32.mrb[0].mxu0
  %v261 = vpop.f32.mrb[0].mxu0
  %v262 = vpop.f32.mrb[0].mxu0
  %263 = vdwg.mxu0
  %v265 = vsel %vm33, %v22, 0
  %v268 = vsel %vm33, %v30, 0
  %270 = vmatprep.subr.bf16.mxu0 0
  %271 = vmatpush1.bf16.xpose.msra.mxu0 %v268
  %272 = vmatprep.subr.bf16.mxu0 0
  %273 = vmatpush1.bf16.xpose.msra.mxu0 0
  %274 = vmatprep.subr.bf16.mxu0 0
  %275 = vmatpush1.bf16.xpose.msra.mxu0 0
  %276 = vmatprep.subr.bf16.mxu0 0
  %277 = vmatpush1.bf16.xpose.msra.mxu0 0
  %278 = vmatprep.subr.bf16.mxu0 0
  %279 = vmatpush1.bf16.xpose.msra.mxu0 0
  %280 = vmatprep.subr.bf16.mxu0 0
  %281 = vmatpush1.bf16.xpose.msra.mxu0 0
  %282 = vmatprep.subr.bf16.mxu0 0
  %283 = vmatpush1.bf16.xpose.msra.mxu0 0
  %284 = vmatprep.subr.bf16.mxu0 0
  %285 = vmatpush1.bf16.xpose.msra.mxu0 0
  %286 = vmatprep.subr.bf16.mxu0 0
  %287 = vmatpush1.bf16.xpose.msra.mxu0 0
  %288 = vmatprep.subr.bf16.mxu0 0
  %289 = vmatpush1.bf16.xpose.msra.mxu0 0
  %290 = vmatprep.subr.bf16.mxu0 0
  %291 = vmatpush1.bf16.xpose.msra.mxu0 0
  %292 = vmatprep.subr.bf16.mxu0 0
  %293 = vmatpush1.bf16.xpose.msra.mxu0 0
  %294 = vmatprep.subr.bf16.mxu0 0
  %295 = vmatpush1.bf16.xpose.msra.mxu0 0
  %296 = vmatprep.subr.bf16.mxu0 0
  %297 = vmatpush1.bf16.xpose.msra.mxu0 0
  %298 = vmatprep.subr.bf16.mxu0 0
  %299 = vmatpush1.bf16.xpose.msra.mxu0 0
  %300 = vmatprep.subr.bf16.mxu0 0
  %301 = vmatpush1.bf16.xpose.msra.mxu0 0
  %302 = vmatprep.mubr.bf16.mxu0 0
  %303 = vmatmul.mubr.bf16.gmra.mrb[0].mxu0 %v265
  %v304 = vpop.f32.mrb[0].mxu0
  %v305 = vadd.f32 0.0, %v304
  %v306 = vpop.f32.mrb[0].mxu0
  %v307 = vpop.f32.mrb[0].mxu0
  %v308 = vpop.f32.mrb[0].mxu0
  %309 = vdwg.mxu0
  %v311 = vsel %vm33, %v23, 0
  %v314 = vsel %vm33, %v31, 0
  %316 = vmatprep.subr.bf16.mxu0 0
  %317 = vmatpush1.bf16.xpose.msra.mxu0 %v314
  %318 = vmatprep.subr.bf16.mxu0 0
  %319 = vmatpush1.bf16.xpose.msra.mxu0 0
  %320 = vmatprep.subr.bf16.mxu0 0
  %321 = vmatpush1.bf16.xpose.msra.mxu0 0
  %322 = vmatprep.subr.bf16.mxu0 0
  %323 = vmatpush1.bf16.xpose.msra.mxu0 0
  %324 = vmatprep.subr.bf16.mxu0 0
  %325 = vmatpush1.bf16.xpose.msra.mxu0 0
  %326 = vmatprep.subr.bf16.mxu0 0
  %327 = vmatpush1.bf16.xpose.msra.mxu0 0
  %328 = vmatprep.subr.bf16.mxu0 0
  %329 = vmatpush1.bf16.xpose.msra.mxu0 0
  %330 = vmatprep.subr.bf16.mxu0 0
  %331 = vmatpush1.bf16.xpose.msra.mxu0 0
  %332 = vmatprep.subr.bf16.mxu0 0
  %333 = vmatpush1.bf16.xpose.msra.mxu0 0
  %334 = vmatprep.subr.bf16.mxu0 0
  %335 = vmatpush1.bf16.xpose.msra.mxu0 0
  %336 = vmatprep.subr.bf16.mxu0 0
  %337 = vmatpush1.bf16.xpose.msra.mxu0 0
  %338 = vmatprep.subr.bf16.mxu0 0
  %339 = vmatpush1.bf16.xpose.msra.mxu0 0
  %340 = vmatprep.subr.bf16.mxu0 0
  %341 = vmatpush1.bf16.xpose.msra.mxu0 0
  %342 = vmatprep.subr.bf16.mxu0 0
  %343 = vmatpush1.bf16.xpose.msra.mxu0 0
  %344 = vmatprep.subr.bf16.mxu0 0
  %345 = vmatpush1.bf16.xpose.msra.mxu0 0
  %346 = vmatprep.subr.bf16.mxu0 0
  %347 = vmatpush1.bf16.xpose.msra.mxu0 0
  %348 = vmatprep.mubr.bf16.mxu0 0
  %349 = vmatmul.mubr.bf16.gmra.mrb[0].mxu0 %v311
  %v350 = vpop.f32.mrb[0].mxu0
  %v351 = vadd.f32 0.0, %v350
  %v352 = vpop.f32.mrb[0].mxu0
  %v353 = vpop.f32.mrb[0].mxu0
  %v354 = vpop.f32.mrb[0].mxu0
  %355 = vdwg.mxu0
  %v357 = vsel %vm33, %v24, 0
  %v360 = vsel %vm33, %v32, 0
  %362 = vmatprep.subr.bf16.mxu0 0
  %363 = vmatpush1.bf16.xpose.msra.mxu0 %v360
  %364 = vmatprep.subr.bf16.mxu0 0
  %365 = vmatpush1.bf16.xpose.msra.mxu0 0
  %366 = vmatprep.subr.bf16.mxu0 0
  %367 = vmatpush1.bf16.xpose.msra.mxu0 0
  %368 = vmatprep.subr.bf16.mxu0 0
  %369 = vmatpush1.bf16.xpose.msra.mxu0 0
  %370 = vmatprep.subr.bf16.mxu0 0
  %371 = vmatpush1.bf16.xpose.msra.mxu0 0
  %372 = vmatprep.subr.bf16.mxu0 0
  %373 = vmatpush1.bf16.xpose.msra.mxu0 0
  %374 = vmatprep.subr.bf16.mxu0 0
  %375 = vmatpush1.bf16.xpose.msra.mxu0 0
  %376 = vmatprep.subr.bf16.mxu0 0
  %377 = vmatpush1.bf16.xpose.msra.mxu0 0
  %378 = vmatprep.subr.bf16.mxu0 0
  %379 = vmatpush1.bf16.xpose.msra.mxu0 0
  %380 = vmatprep.subr.bf16.mxu0 0
  %381 = vmatpush1.bf16.xpose.msra.mxu0 0
  %382 = vmatprep.subr.bf16.mxu0 0
  %383 = vmatpush1.bf16.xpose.msra.mxu0 0
  %384 = vmatprep.subr.bf16.mxu0 0
  %385 = vmatpush1.bf16.xpose.msra.mxu0 0
  %386 = vmatprep.subr.bf16.mxu0 0
  %387 = vmatpush1.bf16.xpose.msra.mxu0 0
  %388 = vmatprep.subr.bf16.mxu0 0
  %389 = vmatpush1.bf16.xpose.msra.mxu0 0
  %390 = vmatprep.subr.bf16.mxu0 0
  %391 = vmatpush1.bf16.xpose.msra.mxu0 0
  %392 = vmatprep.subr.bf16.mxu0 0
  %393 = vmatpush1.bf16.xpose.msra.mxu0 0
  %394 = vmatprep.mubr.bf16.mxu0 0
  %395 = vmatmul.mubr.bf16.gmra.mrb[0].mxu0 %v357
  %v396 = vpop.f32.mrb[0].mxu0
  %v397 = vadd.f32 0.0, %v396
  %v398 = vpop.f32.mrb[0].mxu0
  %v399 = vpop.f32.mrb[0].mxu0
  %v400 = vpop.f32.mrb[0].mxu0
  %401 = vdwg.mxu0
  %v402 = vmul.f32 %v75, 0.17677669
  %v403 = vmul.f32 %v121, 0.17677669
  %v404 = vmul.f32 %v167, 0.17677669
  %v405 = vmul.f32 %v213, 0.17677669
  %v406 = vmul.f32 %v259, 0.17677669
  %v407 = vmul.f32 %v305, 0.17677669
  %v408 = vmul.f32 %v351, 0.17677669
  %v409 = vmul.f32 %v397, 0.17677669
  %vm410 = vcmask 27648
  %411 = vst.msk [vmem:[%s3] sm:$0xf] %vm410, %v402
  %412 = vst.msk [vmem:[%s3 + $0x4] sm:$0xf] %vm410, %v403
  %413 = vst.msk [vmem:[%s3 + $0x8] sm:$0xf] %vm410, %v404
  %414 = vst.msk [vmem:[%s3 + $0xc] sm:$0xf] %vm410, %v405
  %415 = vst.msk [vmem:[%s3 + $0x10] sm:$0xf] %vm410, %v406
  %416 = vst.msk [vmem:[%s3 + $0x14] sm:$0xf] %vm410, %v407
  %417 = vst.msk [vmem:[%s3 + $0x18] sm:$0xf] %vm410, %v408
  %418 = vst.msk [vmem:[%s3 + $0x1c] sm:$0xf] %vm410, %v409
  %v419 = vld [vmem:[%s2] sm:$0x1]
  %v420 = vld [vmem:[%s2 + $0x1] sm:$0x1]
  %v421 = vld [vmem:[%s2 + $0x2] sm:$0x1]
  %v422 = vld [vmem:[%s2 + $0x3] sm:$0x1]
  %v423 = vld [vmem:[%s2 + $0x4] sm:$0x1]
  %v424 = vld [vmem:[%s2 + $0x5] sm:$0x1]
  %v425 = vld [vmem:[%s2 + $0x6] sm:$0x1]
  %v426 = vld [vmem:[%s2 + $0x7] sm:$0x1]
  %v428 = vsel %vm33, %v419, 0
  %430 = vmatprep.subr.bf16.mxu0 0
  %431 = vmatpush1.bf16.xpose.msra.mxu0 %v428
  %432 = vmatprep.subr.bf16.mxu0 0
  %433 = vmatpush1.bf16.xpose.msra.mxu0 0
  %434 = vmatprep.subr.bf16.mxu0 0
  %435 = vmatpush1.bf16.xpose.msra.mxu0 0
  %436 = vmatprep.subr.bf16.mxu0 0
  %437 = vmatpush1.bf16.xpose.msra.mxu0 0
  %438 = vmatprep.subr.bf16.mxu0 0
  %439 = vmatpush1.bf16.xpose.msra.mxu0 0
  %440 = vmatprep.subr.bf16.mxu0 0
  %441 = vmatpush1.bf16.xpose.msra.mxu0 0
  %442 = vmatprep.subr.bf16.mxu0 0
  %443 = vmatpush1.bf16.xpose.msra.mxu0 0
  %444 = vmatprep.subr.bf16.mxu0 0
  %445 = vmatpush1.bf16.xpose.msra.mxu0 0
  %446 = vmatprep.subr.bf16.mxu0 0
  %447 = vmatpush1.bf16.xpose.msra.mxu0 0
  %448 = vmatprep.subr.bf16.mxu0 0
  %449 = vmatpush1.bf16.xpose.msra.mxu0 0
  %450 = vmatprep.subr.bf16.mxu0 0
  %451 = vmatpush1.bf16.xpose.msra.mxu0 0
  %452 = vmatprep.subr.bf16.mxu0 0
  %453 = vmatpush1.bf16.xpose.msra.mxu0 0
  %454 = vmatprep.subr.bf16.mxu0 0
  %455 = vmatpush1.bf16.xpose.msra.mxu0 0
  %456 = vmatprep.subr.bf16.mxu0 0
  %457 = vmatpush1.bf16.xpose.msra.mxu0 0
  %458 = vmatprep.subr.bf16.mxu0 0
  %459 = vmatpush1.bf16.xpose.msra.mxu0 0
  %460 = vmatprep.subr.bf16.mxu0 0
  %461 = vmatpush1.bf16.xpose.msra.mxu0 0
  %462 = vmatprep.mubr.bf16.mxu0 0
  %463 = vmatmul.mubr.bf16.gmra.mrb[0].mxu0 %v35
  %v464 = vpop.f32.mrb[0].mxu0
  %v465 = vadd.f32 0.0, %v464
  %v466 = vpop.f32.mrb[0].mxu0
  %v467 = vpop.f32.mrb[0].mxu0
  %v468 = vpop.f32.mrb[0].mxu0
  %469 = vdwg.mxu0
  %v471 = vsel %vm33, %v420, 0
  %473 = vmatprep.subr.bf16.mxu0 0
  %474 = vmatpush1.bf16.xpose.msra.mxu0 %v471
  %475 = vmatprep.subr.bf16.mxu0 0
  %476 = vmatpush1.bf16.xpose.msra.mxu0 0
  %477 = vmatprep.subr.bf16.mxu0 0
  %478 = vmatpush1.bf16.xpose.msra.mxu0 0
  %479 = vmatprep.subr.bf16.mxu0 0
  %480 = vmatpush1.bf16.xpose.msra.mxu0 0
  %481 = vmatprep.subr.bf16.mxu0 0
  %482 = vmatpush1.bf16.xpose.msra.mxu0 0
  %483 = vmatprep.subr.bf16.mxu0 0
  %484 = vmatpush1.bf16.xpose.msra.mxu0 0
  %485 = vmatprep.subr.bf16.mxu0 0
  %486 = vmatpush1.bf16.xpose.msra.mxu0 0
  %487 = vmatprep.subr.bf16.mxu0 0
  %488 = vmatpush1.bf16.xpose.msra.mxu0 0
  %489 = vmatprep.subr.bf16.mxu0 0
  %490 = vmatpush1.bf16.xpose.msra.mxu0 0
  %491 = vmatprep.subr.bf16.mxu0 0
  %492 = vmatpush1.bf16.xpose.msra.mxu0 0
  %493 = vmatprep.subr.bf16.mxu0 0
  %494 = vmatpush1.bf16.xpose.msra.mxu0 0
  %495 = vmatprep.subr.bf16.mxu0 0
  %496 = vmatpush1.bf16.xpose.msra.mxu0 0
  %497 = vmatprep.subr.bf16.mxu0 0
  %498 = vmatpush1.bf16.xpose.msra.mxu0 0
  %499 = vmatprep.subr.bf16.mxu0 0
  %500 = vmatpush1.bf16.xpose.msra.mxu0 0
  %501 = vmatprep.subr.bf16.mxu0 0
  %502 = vmatpush1.bf16.xpose.msra.mxu0 0
  %503 = vmatprep.subr.bf16.mxu0 0
  %504 = vmatpush1.bf16.xpose.msra.mxu0 0
  %505 = vmatprep.mubr.bf16.mxu0 0
  %506 = vmatmul.mubr.bf16.gmra.mrb[0].mxu0 %v81
  %v507 = vpop.f32.mrb[0].mxu0
  %v508 = vadd.f32 0.0, %v507
  %v509 = vpop.f32.mrb[0].mxu0
  %v510 = vpop.f32.mrb[0].mxu0
  %v511 = vpop.f32.mrb[0].mxu0
  %512 = vdwg.mxu0
  %v514 = vsel %vm33, %v421, 0
  %516 = vmatprep.subr.bf16.mxu0 0
  %517 = vmatpush1.bf16.xpose.msra.mxu0 %v514
  %518 = vmatprep.subr.bf16.mxu0 0
  %519 = vmatpush1.bf16.xpose.msra.mxu0 0
  %520 = vmatprep.subr.bf16.mxu0 0
  %521 = vmatpush1.bf16.xpose.msra.mxu0 0
  %522 = vmatprep.subr.bf16.mxu0 0
  %523 = vmatpush1.bf16.xpose.msra.mxu0 0
  %524 = vmatprep.subr.bf16.mxu0 0
  %525 = vmatpush1.bf16.xpose.msra.mxu0 0
  %526 = vmatprep.subr.bf16.mxu0 0
  %527 = vmatpush1.bf16.xpose.msra.mxu0 0
  %528 = vmatprep.subr.bf16.mxu0 0
  %529 = vmatpush1.bf16.xpose.msra.mxu0 0
  %530 = vmatprep.subr.bf16.mxu0 0
  %531 = vmatpush1.bf16.xpose.msra.mxu0 0
  %532 = vmatprep.subr.bf16.mxu0 0
  %533 = vmatpush1.bf16.xpose.msra.mxu0 0
  %534 = vmatprep.subr.bf16.mxu0 0
  %535 = vmatpush1.bf16.xpose.msra.mxu0 0
  %536 = vmatprep.subr.bf16.mxu0 0
  %537 = vmatpush1.bf16.xpose.msra.mxu0 0
  %538 = vmatprep.subr.bf16.mxu0 0
  %539 = vmatpush1.bf16.xpose.msra.mxu0 0
  %540 = vmatprep.subr.bf16.mxu0 0
  %541 = vmatpush1.bf16.xpose.msra.mxu0 0
  %542 = vmatprep.subr.bf16.mxu0 0
  %543 = vmatpush1.bf16.xpose.msra.mxu0 0
  %544 = vmatprep.subr.bf16.mxu0 0
  %545 = vmatpush1.bf16.xpose.msra.mxu0 0
  %546 = vmatprep.subr.bf16.mxu0 0
  %547 = vmatpush1.bf16.xpose.msra.mxu0 0
  %548 = vmatprep.mubr.bf16.mxu0 0
  %549 = vmatmul.mubr.bf16.gmra.mrb[0].mxu0 %v127
  %v550 = vpop.f32.mrb[0].mxu0
  %v551 = vadd.f32 0.0, %v550
  %v552 = vpop.f32.mrb[0].mxu0
  %v553 = vpop.f32.mrb[0].mxu0
  %v554 = vpop.f32.mrb[0].mxu0
  %555 = vdwg.mxu0
  %v557 = vsel %vm33, %v422, 0
  %559 = vmatprep.subr.bf16.mxu0 0
  %560 = vmatpush1.bf16.xpose.msra.mxu0 %v557
  %561 = vmatprep.subr.bf16.mxu0 0
  %562 = vmatpush1.bf16.xpose.msra.mxu0 0
  %563 = vmatprep.subr.bf16.mxu0 0
  %564 = vmatpush1.bf16.xpose.msra.mxu0 0
  %565 = vmatprep.subr.bf16.mxu0 0
  %566 = vmatpush1.bf16.xpose.msra.mxu0 0
  %567 = vmatprep.subr.bf16.mxu0 0
  %568 = vmatpush1.bf16.xpose.msra.mxu0 0
  %569 = vmatprep.subr.bf16.mxu0 0
  %570 = vmatpush1.bf16.xpose.msra.mxu0 0
  %571 = vmatprep.subr.bf16.mxu0 0
  %572 = vmatpush1.bf16.xpose.msra.mxu0 0
  %573 = vmatprep.subr.bf16.mxu0 0
  %574 = vmatpush1.bf16.xpose.msra.mxu0 0
  %575 = vmatprep.subr.bf16.mxu0 0
  %576 = vmatpush1.bf16.xpose.msra.mxu0 0
  %577 = vmatprep.subr.bf16.mxu0 0
  %578 = vmatpush1.bf16.xpose.msra.mxu0 0
  %579 = vmatprep.subr.bf16.mxu0 0
  %580 = vmatpush1.bf16.xpose.msra.mxu0 0
  %581 = vmatprep.subr.bf16.mxu0 0
  %582 = vmatpush1.bf16.xpose.msra.mxu0 0
  %583 = vmatprep.subr.bf16.mxu0 0
  %584 = vmatpush1.bf16.xpose.msra.mxu0 0
  %585 = vmatprep.subr.bf16.mxu0 0
  %586 = vmatpush1.bf16.xpose.msra.mxu0 0
  %587 = vmatprep.subr.bf16.mxu0 0
  %588 = vmatpush1.bf16.xpose.msra.mxu0 0
  %589 = vmatprep.subr.bf16.mxu0 0
  %590 = vmatpush1.bf16.xpose.msra.mxu0 0
  %591 = vmatprep.mubr.bf16.mxu0 0
  %592 = vmatmul.mubr.bf16.gmra.mrb[0].mxu0 %v173
  %v593 = vpop.f32.mrb[0].mxu0
  %v594 = vadd.f32 0.0, %v593
  %v595 = vpop.f32.mrb[0].mxu0
  %v596 = vpop.f32.mrb[0].mxu0
  %v597 = vpop.f32.mrb[0].mxu0
  %598 = vdwg.mxu0
  %v600 = vsel %vm33, %v423, 0
  %602 = vmatprep.subr.bf16.mxu0 0
  %603 = vmatpush1.bf16.xpose.msra.mxu0 %v600
  %604 = vmatprep.subr.bf16.mxu0 0
  %605 = vmatpush1.bf16.xpose.msra.mxu0 0
  %606 = vmatprep.subr.bf16.mxu0 0
  %607 = vmatpush1.bf16.xpose.msra.mxu0 0
  %608 = vmatprep.subr.bf16.mxu0 0
  %609 = vmatpush1.bf16.xpose.msra.mxu0 0
  %610 = vmatprep.subr.bf16.mxu0 0
  %611 = vmatpush1.bf16.xpose.msra.mxu0 0
  %612 = vmatprep.subr.bf16.mxu0 0
  %613 = vmatpush1.bf16.xpose.msra.mxu0 0
  %614 = vmatprep.subr.bf16.mxu0 0
  %615 = vmatpush1.bf16.xpose.msra.mxu0 0
  %616 = vmatprep.subr.bf16.mxu0 0
  %617 = vmatpush1.bf16.xpose.msra.mxu0 0
  %618 = vmatprep.subr.bf16.mxu0 0
  %619 = vmatpush1.bf16.xpose.msra.mxu0 0
  %620 = vmatprep.subr.bf16.mxu0 0
  %621 = vmatpush1.bf16.xpose.msra.mxu0 0
  %622 = vmatprep.subr.bf16.mxu0 0
  %623 = vmatpush1.bf16.xpose.msra.mxu0 0
  %624 = vmatprep.subr.bf16.mxu0 0
  %625 = vmatpush1.bf16.xpose.msra.mxu0 0
  %626 = vmatprep.subr.bf16.mxu0 0
  %627 = vmatpush1.bf16.xpose.msra.mxu0 0
  %628 = vmatprep.subr.bf16.mxu0 0
  %629 = vmatpush1.bf16.xpose.msra.mxu0 0
  %630 = vmatprep.subr.bf16.mxu0 0
  %631 = vmatpush1.bf16.xpose.msra.mxu0 0
  %632 = vmatprep.subr.bf16.mxu0 0
  %633 = vmatpush1.bf16.xpose.msra.mxu0 0
  %634 = vmatprep.mubr.bf16.mxu0 0
  %635 = vmatmul.mubr.bf16.gmra.mrb[0].mxu0 %v219
  %v636 = vpop.f32.mrb[0].mxu0
  %v637 = vadd.f32 0.0, %v636
  %v638 = vpop.f32.mrb[0].mxu0
  %v639 = vpop.f32.mrb[0].mxu0
  %v640 = vpop.f32.mrb[0].mxu0
  %641 = vdwg.mxu0
  %v643 = vsel %vm33, %v424, 0
  %645 = vmatprep.subr.bf16.mxu0 0
  %646 = vmatpush1.bf16.xpose.msra.mxu0 %v643
  %647 = vmatprep.subr.bf16.mxu0 0
  %648 = vmatpush1.bf16.xpose.msra.mxu0 0
  %649 = vmatprep.subr.bf16.mxu0 0
  %650 = vmatpush1.bf16.xpose.msra.mxu0 0
  %651 = vmatprep.subr.bf16.mxu0 0
  %652 = vmatpush1.bf16.xpose.msra.mxu0 0
  %653 = vmatprep.subr.bf16.mxu0 0
  %654 = vmatpush1.bf16.xpose.msra.mxu0 0
  %655 = vmatprep.subr.bf16.mxu0 0
  %656 = vmatpush1.bf16.xpose.msra.mxu0 0
  %657 = vmatprep.subr.bf16.mxu0 0
  %658 = vmatpush1.bf16.xpose.msra.mxu0 0
  %659 = vmatprep.subr.bf16.mxu0 0
  %660 = vmatpush1.bf16.xpose.msra.mxu0 0
  %661 = vmatprep.subr.bf16.mxu0 0
  %662 = vmatpush1.bf16.xpose.msra.mxu0 0
  %663 = vmatprep.subr.bf16.mxu0 0
  %664 = vmatpush1.bf16.xpose.msra.mxu0 0
  %665 = vmatprep.subr.bf16.mxu0 0
  %666 = vmatpush1.bf16.xpose.msra.mxu0 0
  %667 = vmatprep.subr.bf16.mxu0 0
  %668 = vmatpush1.bf16.xpose.msra.mxu0 0
  %669 = vmatprep.subr.bf16.mxu0 0
  %670 = vmatpush1.bf16.xpose.msra.mxu0 0
  %671 = vmatprep.subr.bf16.mxu0 0
  %672 = vmatpush1.bf16.xpose.msra.mxu0 0
  %673 = vmatprep.subr.bf16.mxu0 0
  %674 = vmatpush1.bf16.xpose.msra.mxu0 0
  %675 = vmatprep.subr.bf16.mxu0 0
  %676 = vmatpush1.bf16.xpose.msra.mxu0 0
  %677 = vmatprep.mubr.bf16.mxu0 0
  %678 = vmatmul.mubr.bf16.gmra.mrb[0].mxu0 %v265
  %v679 = vpop.f32.mrb[0].mxu0
  %v680 = vadd.f32 0.0, %v679
  %v681 = vpop.f32.mrb[0].mxu0
  %v682 = vpop.f32.mrb[0].mxu0
  %v683 = vpop.f32.mrb[0].mxu0
  %684 = vdwg.mxu0
  %v686 = vsel %vm33, %v425, 0
  %688 = vmatprep.subr.bf16.mxu0 0
  %689 = vmatpush1.bf16.xpose.msra.mxu0 %v686
  %690 = vmatprep.subr.bf16.mxu0 0
  %691 = vmatpush1.bf16.xpose.msra.mxu0 0
  %692 = vmatprep.subr.bf16.mxu0 0
  %693 = vmatpush1.bf16.xpose.msra.mxu0 0
  %694 = vmatprep.subr.bf16.mxu0 0
  %695 = vmatpush1.bf16.xpose.msra.mxu0 0
  %696 = vmatprep.subr.bf16.mxu0 0
  %697 = vmatpush1.bf16.xpose.msra.mxu0 0
  %698 = vmatprep.subr.bf16.mxu0 0
  %699 = vmatpush1.bf16.xpose.msra.mxu0 0
  %700 = vmatprep.subr.bf16.mxu0 0
  %701 = vmatpush1.bf16.xpose.msra.mxu0 0
  %702 = vmatprep.subr.bf16.mxu0 0
  %703 = vmatpush1.bf16.xpose.msra.mxu0 0
  %704 = vmatprep.subr.bf16.mxu0 0
  %705 = vmatpush1.bf16.xpose.msra.mxu0 0
  %706 = vmatprep.subr.bf16.mxu0 0
  %707 = vmatpush1.bf16.xpose.msra.mxu0 0
  %708 = vmatprep.subr.bf16.mxu0 0
  %709 = vmatpush1.bf16.xpose.msra.mxu0 0
  %710 = vmatprep.subr.bf16.mxu0 0
  %711 = vmatpush1.bf16.xpose.msra.mxu0 0
  %712 = vmatprep.subr.bf16.mxu0 0
  %713 = vmatpush1.bf16.xpose.msra.mxu0 0
  %714 = vmatprep.subr.bf16.mxu0 0
  %715 = vmatpush1.bf16.xpose.msra.mxu0 0
  %716 = vmatprep.subr.bf16.mxu0 0
  %717 = vmatpush1.bf16.xpose.msra.mxu0 0
  %718 = vmatprep.subr.bf16.mxu0 0
  %719 = vmatpush1.bf16.xpose.msra.mxu0 0
  %720 = vmatprep.mubr.bf16.mxu0 0
  %721 = vmatmul.mubr.bf16.gmra.mrb[0].mxu0 %v311
  %v722 = vpop.f32.mrb[0].mxu0
  %v723 = vadd.f32 0.0, %v722
  %v724 = vpop.f32.mrb[0].mxu0
  %v725 = vpop.f32.mrb[0].mxu0
  %v726 = vpop.f32.mrb[0].mxu0
  %727 = vdwg.mxu0
  %v729 = vsel %vm33, %v426, 0
  %731 = vmatprep.subr.bf16.mxu0 0
  %732 = vmatpush1.bf16.xpose.msra.mxu0 %v729
  %733 = vmatprep.subr.bf16.mxu0 0
  %734 = vmatpush1.bf16.xpose.msra.mxu0 0
  %735 = vmatprep.subr.bf16.mxu0 0
  %736 = vmatpush1.bf16.xpose.msra.mxu0 0
  %737 = vmatprep.subr.bf16.mxu0 0
  %738 = vmatpush1.bf16.xpose.msra.mxu0 0
  %739 = vmatprep.subr.bf16.mxu0 0
  %740 = vmatpush1.bf16.xpose.msra.mxu0 0
  %741 = vmatprep.subr.bf16.mxu0 0
  %742 = vmatpush1.bf16.xpose.msra.mxu0 0
  %743 = vmatprep.subr.bf16.mxu0 0
  %744 = vmatpush1.bf16.xpose.msra.mxu0 0
  %745 = vmatprep.subr.bf16.mxu0 0
  %746 = vmatpush1.bf16.xpose.msra.mxu0 0
  %747 = vmatprep.subr.bf16.mxu0 0
  %748 = vmatpush1.bf16.xpose.msra.mxu0 0
  %749 = vmatprep.subr.bf16.mxu0 0
  %750 = vmatpush1.bf16.xpose.msra.mxu0 0
  %751 = vmatprep.subr.bf16.mxu0 0
  %752 = vmatpush1.bf16.xpose.msra.mxu0 0
  %753 = vmatprep.subr.bf16.mxu0 0
  %754 = vmatpush1.bf16.xpose.msra.mxu0 0
  %755 = vmatprep.subr.bf16.mxu0 0
  %756 = vmatpush1.bf16.xpose.msra.mxu0 0
  %757 = vmatprep.subr.bf16.mxu0 0
  %758 = vmatpush1.bf16.xpose.msra.mxu0 0
  %759 = vmatprep.subr.bf16.mxu0 0
  %760 = vmatpush1.bf16.xpose.msra.mxu0 0
  %761 = vmatprep.subr.bf16.mxu0 0
  %762 = vmatpush1.bf16.xpose.msra.mxu0 0
  %763 = vmatprep.mubr.bf16.mxu0 0
  %764 = vmatmul.mubr.bf16.gmra.mrb[0].mxu0 %v357
  %v765 = vpop.f32.mrb[0].mxu0
  %v766 = vadd.f32 0.0, %v765
  %v767 = vpop.f32.mrb[0].mxu0
  %v768 = vpop.f32.mrb[0].mxu0
  %v769 = vpop.f32.mrb[0].mxu0
  %770 = vdwg.mxu0
  %v771 = vmul.f32 %v465, 0.17677669
  %v772 = vmul.f32 %v508, 0.17677669
  %v773 = vmul.f32 %v551, 0.17677669
  %v774 = vmul.f32 %v594, 0.17677669
  %v775 = vmul.f32 %v637, 0.17677669
  %v776 = vmul.f32 %v680, 0.17677669
  %v777 = vmul.f32 %v723, 0.17677669
  %v778 = vmul.f32 %v766, 0.17677669
  %vm779 = vcmask 11264
  %780 = vst.msk [vmem:[%s4] sm:$0xf] %vm779, %v771
  %781 = vst.msk [vmem:[%s4 + $0x4] sm:$0xf] %vm779, %v772
  %782 = vst.msk [vmem:[%s4 + $0x8] sm:$0xf] %vm779, %v773
  %783 = vst.msk [vmem:[%s4 + $0xc] sm:$0xf] %vm779, %v774
  %784 = vst.msk [vmem:[%s4 + $0x10] sm:$0xf] %vm779, %v775
  %785 = vst.msk [vmem:[%s4 + $0x14] sm:$0xf] %vm779, %v776
  %786 = vst.msk [vmem:[%s4 + $0x18] sm:$0xf] %vm779, %v777
  %787 = vst.msk [vmem:[%s4 + $0x1c] sm:$0xf] %vm779, %v778
  // Predicated region
  $region14: #{raft_stereo_human_forward.27} parent=0 // pred_check
    _
  $region15: #{raft_stereo_human_forward.27} parent=0 // pred_check_branch
    %789 = sbr.rel (0) target = $region17
  $region16: #{raft_stereo_human_forward.27} parent=0 // pred_region
    _
  $region17: #{raft_stereo_human_forward.27} parent=0 // pred_fallthru
    _
  // Predicated region
  $region18: #{raft_stereo_human_forward.27} parent=0 // pred_check
    _
  $region19: #{raft_stereo_human_forward.27} parent=0 // pred_check_branch
    %791 = sbr.rel (0) target = $region21
  $region20: #{raft_stereo_human_forward.27} parent=0 // pred_region
    _
  $region21: #{raft_stereo_human_forward.27} parent=0 // pred_fallthru
    _
  // Predicated region
  $region22: #{raft_stereo_human_forward.27} parent=0 // pred_check
    _
  $region23: #{raft_stereo_human_forward.27} parent=0 // pred_check_branch
    %793 = sbr.rel (0) target = $region25
  $region24: #{raft_stereo_human_forward.27} parent=0 // pred_region
    _
  $region25: #{raft_stereo_human_forward.27} parent=0 // pred_fallthru
    _
  // Predicated region
  $region26: #{raft_stereo_human_forward.27} parent=0 // pred_check
    _
  $region27: #{raft_stereo_human_forward.27} parent=0 // pred_check_branch
    %795 = sbr.rel (0) target = $region29
  $region28: #{raft_stereo_human_forward.27} parent=0 // pred_region
    _
  $region29: #{raft_stereo_human_forward.27} parent=0 // pred_fallthru
    _

// kernel: raft_stereo_human_forward.30
$region0: #{raft_stereo_human_forward.30}
  #allocation0 [shape = 'u32[]', space=smem, size = 0x4, offset = 0x4, fixed_abs, tag = 'smem constant byte address 0x4 - core index']
  #allocation1 [shape = 'u32[144,128]{1,0:T(1,128)}', space=vmem, size = 0x12000, scoped, tag = 'internal scratch']
  %s0 = inlined_call_operand.vmem [shape: bf16[32,288], index: 0, kind: input, shape index: {}]
  %s1 = inlined_call_operand.vmem [shape: bf16[32,288], index: 1, kind: input, shape index: {}]
  %s2 = inlined_call_operand.vmem [shape: bf16[288,64], index: 2, kind: input, shape index: {}]
  %s3 = inlined_call_operand.vmem [shape: bf16[288,64], index: 3, kind: input, shape index: {}]
  %s4 = inlined_call_operand.vmem [shape: f32[1,64], index: 4, kind: input, shape index: {}]
  %s5 = inlined_call_operand.vmem [shape: f32[32,64], index: 5, kind: output, shape index: {}]
  %s6 = sld [smem:[#allocation0]]
  $region30: #{raft_stereo_human_forward.30} parent=0
    _
  %s8 = ssub.s32 1, %s6
  %s9 = scalar_select 0, %s8, %s6
  // Predicated region
  $region2: #{raft_stereo_human_forward.30} parent=0 // pred_check
    _
  $region3: #{raft_stereo_human_forward.30} parent=0 // pred_check_branch
    %11 = sbr.rel (0) target = $region5
  $region4: #{raft_stereo_human_forward.30} parent=0 // pred_region
    _
  $region5: #{raft_stereo_human_forward.30} parent=0 // pred_fallthru
    _
  // Predicated region
  $region6: #{raft_stereo_human_forward.30} parent=0 // pred_check
    _
  $region7: #{raft_stereo_human_forward.30} parent=0 // pred_check_branch
    %13 = sbr.rel (0) target = $region9
  $region8: #{raft_stereo_human_forward.30} parent=0 // pred_region
    _
  $region9: #{raft_stereo_human_forward.30} parent=0 // pred_fallthru
    _
  // Predicated region
  $region10: #{raft_stereo_human_forward.30} parent=0 // pred_check
    _
  $region11: #{raft_stereo_human_forward.30} parent=0 // pred_check_branch
    %15 = sbr.rel (0) target = $region13
  $region12: #{raft_stereo_human_forward.30} parent=0 // pred_region
    _
  $region13: #{raft_stereo_human_forward.30} parent=0 // pred_fallthru
    _
  // Predicated region
  $region14: #{raft_stereo_human_forward.30} parent=0 // pred_check
    _
  $region15: #{raft_stereo_human_forward.30} parent=0 // pred_check_branch
    %17 = sbr.rel (0) target = $region17
  $region16: #{raft_stereo_human_forward.30} parent=0 // pred_region
    _
  $region17: #{raft_stereo_human_forward.30} parent=0 // pred_fallthru
    _
  // Predicated region
  $region18: #{raft_stereo_human_forward.30} parent=0 // pred_check
    _
  $region19: #{raft_stereo_human_forward.30} parent=0 // pred_check_branch
    %19 = sbr.rel (0) target = $region21
  $region20: #{raft_stereo_human_forward.30} parent=0 // pred_region
    _
  $region21: #{raft_stereo_human_forward.30} parent=0 // pred_fallthru
    _
  %v21 = vld [vmem:[%s0] sm:$0xff]
  %v22 = vld [vmem:[%s0 + $0x8] sm:$0xf]
  %v23 = vld [vmem:[%s0 + $0xc] sm:$0xff]
  %v24 = vld [vmem:[%s0 + $0x14] sm:$0xf]
  %v25 = vld [vmem:[%s0 + $0x18] sm:$0xff]
  %v26 = vld [vmem:[%s0 + $0x20] sm:$0xf]
  %v27 = vld [vmem:[%s0 + $0x24] sm:$0xff]
  %v28 = vld [vmem:[%s0 + $0x2c] sm:$0xf]
  %v29 = vld [vmem:[%s2] sm:$0xf]
  %v30 = vld [vmem:[%s2 + $0x4] sm:$0xf]
  %v31 = vld [vmem:[%s2 + $0x8] sm:$0xf]
  %v32 = vld [vmem:[%s2 + $0xc] sm:$0xf]
  %v33 = vld [vmem:[%s2 + $0x10] sm:$0xf]
  %v34 = vld [vmem:[%s2 + $0x14] sm:$0xf]
  %v35 = vld [vmem:[%s2 + $0x18] sm:$0xf]
  %v36 = vld [vmem:[%s2 + $0x1c] sm:$0xf]
  %v37 = vld [vmem:[%s2 + $0x20] sm:$0xf]
  %v38 = vld [vmem:[%s2 + $0x24] sm:$0xf]
  %v39 = vld [vmem:[%s2 + $0x28] sm:$0xf]
  %v40 = vld [vmem:[%s2 + $0x2c] sm:$0xf]
  %v41 = vld [vmem:[%s2 + $0x30] sm:$0xf]
  %v42 = vld [vmem:[%s2 + $0x34] sm:$0xf]
  %v43 = vld [vmem:[%s2 + $0x38] sm:$0xf]
  %v44 = vld [vmem:[%s2 + $0x3c] sm:$0xf]
  %v45 = vld [vmem:[%s2 + $0x40] sm:$0xf]
  %v46 = vld [vmem:[%s2 + $0x44] sm:$0xf]
  %v47 = vld [vmem:[%s2 + $0x48] sm:$0xf]
  %v48 = vld [vmem:[%s2 + $0x4c] sm:$0xf]
  %v49 = vld [vmem:[%s2 + $0x50] sm:$0xf]
  %v50 = vld [vmem:[%s2 + $0x54] sm:$0xf]
  %v51 = vld [vmem:[%s2 + $0x58] sm:$0xf]
  %v52 = vld [vmem:[%s2 + $0x5c] sm:$0xf]
  %v53 = vld [vmem:[%s2 + $0x60] sm:$0xf]
  %v54 = vld [vmem:[%s2 + $0x64] sm:$0xf]
  %v55 = vld [vmem:[%s2 + $0x68] sm:$0xf]
  %v56 = vld [vmem:[%s2 + $0x6c] sm:$0xf]
  %v57 = vld [vmem:[%s2 + $0x70] sm:$0xf]
  %v58 = vld [vmem:[%s2 + $0x74] sm:$0xf]
  %v59 = vld [vmem:[%s2 + $0x78] sm:$0xf]
  %v60 = vld [vmem:[%s2 + $0x7c] sm:$0xf]
  %v61 = vld [vmem:[%s2 + $0x80] sm:$0xf]
  %v62 = vld [vmem:[%s2 + $0x84] sm:$0xf]
  %v63 = vld [vmem:[%s2 + $0x88] sm:$0xf]
  %v64 = vld [vmem:[%s2 + $0x8c] sm:$0xf]
  %v65 = vld [vmem:[%s1] sm:$0xff]
  %v66 = vld [vmem:[%s1 + $0x8] sm:$0xf]
  %v67 = vld [vmem:[%s1 + $0xc] sm:$0xff]
  %v68 = vld [vmem:[%s1 + $0x14] sm:$0xf]
  %v69 = vld [vmem:[%s1 + $0x18] sm:$0xff]
  %v70 = vld [vmem:[%s1 + $0x20] sm:$0xf]
  %v71 = vld [vmem:[%s1 + $0x24] sm:$0xff]
  %v72 = vld [vmem:[%s1 + $0x2c] sm:$0xf]
  %v73 = vld [vmem:[%s3] sm:$0xf]
  %v74 = vld [vmem:[%s3 + $0x4] sm:$0xf]
  %v75 = vld [vmem:[%s3 + $0x8] sm:$0xf]
  %v76 = vld [vmem:[%s3 + $0xc] sm:$0xf]
  %v77 = vld [vmem:[%s3 + $0x10] sm:$0xf]
  %v78 = vld [vmem:[%s3 + $0x14] sm:$0xf]
  %v79 = vld [vmem:[%s3 + $0x18] sm:$0xf]
  %v80 = vld [vmem:[%s3 + $0x1c] sm:$0xf]
  %v81 = vld [vmem:[%s3 + $0x20] sm:$0xf]
  %v82 = vld [vmem:[%s3 + $0x24] sm:$0xf]
  %v83 = vld [vmem:[%s3 + $0x28] sm:$0xf]
  %v84 = vld [vmem:[%s3 + $0x2c] sm:$0xf]
  %v85 = vld [vmem:[%s3 + $0x30] sm:$0xf]
  %v86 = vld [vmem:[%s3 + $0x34] sm:$0xf]
  %v87 = vld [vmem:[%s3 + $0x38] sm:$0xf]
  %v88 = vld [vmem:[%s3 + $0x3c] sm:$0xf]
  %v89 = vld [vmem:[%s3 + $0x40] sm:$0xf]
  %v90 = vld [vmem:[%s3 + $0x44] sm:$0xf]
  %v91 = vld [vmem:[%s3 + $0x48] sm:$0xf]
  %v92 = vld [vmem:[%s3 + $0x4c] sm:$0xf]
  %v93 = vld [vmem:[%s3 + $0x50] sm:$0xf]
  %v94 = vld [vmem:[%s3 + $0x54] sm:$0xf]
  %v95 = vld [vmem:[%s3 + $0x58] sm:$0xf]
  %v96 = vld [vmem:[%s3 + $0x5c] sm:$0xf]
  %v97 = vld [vmem:[%s3 + $0x60] sm:$0xf]
  %v98 = vld [vmem:[%s3 + $0x64] sm:$0xf]
  %v99 = vld [vmem:[%s3 + $0x68] sm:$0xf]
  %v100 = vld [vmem:[%s3 + $0x6c] sm:$0xf]
  %v101 = vld [vmem:[%s3 + $0x70] sm:$0xf]
  %v102 = vld [vmem:[%s3 + $0x74] sm:$0xf]
  %v103 = vld [vmem:[%s3 + $0x78] sm:$0xf]
  %v104 = vld [vmem:[%s3 + $0x7c] sm:$0xf]
  %v105 = vld [vmem:[%s3 + $0x80] sm:$0xf]
  %v106 = vld [vmem:[%s3 + $0x84] sm:$0xf]
  %v107 = vld [vmem:[%s3 + $0x88] sm:$0xf]
  %v108 = vld [vmem:[%s3 + $0x8c] sm:$0xf]
  %v117 = vunpack.c.l.b16 %v65
  %v118 = vunpack.c.h.b16 %v65
  %v119 = vunpack.c.l.b16 %v66
  %v120 = vunpack.c.l.b16 %v67
  %v121 = vunpack.c.h.b16 %v67
  %v122 = vunpack.c.l.b16 %v68
  %v123 = vunpack.c.l.b16 %v69
  %v124 = vunpack.c.h.b16 %v69
  %v125 = vunpack.c.l.b16 %v70
  %v126 = vunpack.c.l.b16 %v71
  %v127 = vunpack.c.h.b16 %v71
  %v128 = vunpack.c.l.b16 %v72
  %v129 = vpack.c.b16 %v120, %v117
  %v130 = vpack.c.b16 %v121, %v118
  %v131 = vpack.c.b16 %v122, %v119
  %v132 = vpack.c.b16 %v126, %v123
  %v133 = vpack.c.b16 %v127, %v124
  %v134 = vpack.c.b16 %v128, %v125
  %v175 = vunpack.c.l.b16 %v73
  %v176 = vunpack.c.l.b16 %v74
  %v177 = vunpack.c.l.b16 %v75
  %v178 = vunpack.c.l.b16 %v76
  %v179 = vunpack.c.l.b16 %v77
  %v180 = vunpack.c.l.b16 %v78
  %v181 = vunpack.c.l.b16 %v79
  %v182 = vunpack.c.l.b16 %v80
  %v183 = vunpack.c.l.b16 %v81
  %v184 = vunpack.c.l.b16 %v82
  %v185 = vunpack.c.l.b16 %v83
  %v186 = vunpack.c.l.b16 %v84
  %v187 = vunpack.c.l.b16 %v85
  %v188 = vunpack.c.l.b16 %v86
  %v189 = vunpack.c.l.b16 %v87
  %v190 = vunpack.c.l.b16 %v88
  %v191 = vunpack.c.l.b16 %v89
  %v192 = vunpack.c.l.b16 %v90
  %v193 = vunpack.c.l.b16 %v91
  %v194 = vunpack.c.l.b16 %v92
  %v195 = vunpack.c.l.b16 %v93
  %v196 = vunpack.c.l.b16 %v94
  %v197 = vunpack.c.l.b16 %v95
  %v198 = vunpack.c.l.b16 %v96
  %v199 = vunpack.c.l.b16 %v97
  %v200 = vunpack.c.l.b16 %v98
  %v201 = vunpack.c.l.b16 %v99
  %v202 = vunpack.c.l.b16 %v100
  %v203 = vunpack.c.l.b16 %v101
  %v204 = vunpack.c.l.b16 %v102
  %v205 = vunpack.c.l.b16 %v103
  %v206 = vunpack.c.l.b16 %v104
  %v207 = vunpack.c.l.b16 %v105
  %v208 = vunpack.c.l.b16 %v106
  %v209 = vunpack.c.l.b16 %v107
  %v210 = vunpack.c.l.b16 %v108
  %v211 = vpack.c.b16 %v176, %v175
  %v212 = vpack.c.b16 %v178, %v177
  %v213 = vpack.c.b16 %v180, %v179
  %v214 = vpack.c.b16 %v182, %v181
  %v215 = vpack.c.b16 %v184, %v183
  %v216 = vpack.c.b16 %v186, %v185
  %v217 = vpack.c.b16 %v188, %v187
  %v218 = vpack.c.b16 %v190, %v189
  %v219 = vpack.c.b16 %v192, %v191
  %v220 = vpack.c.b16 %v194, %v193
  %v221 = vpack.c.b16 %v196, %v195
  %v222 = vpack.c.b16 %v198, %v197
  %v223 = vpack.c.b16 %v200, %v199
  %v224 = vpack.c.b16 %v202, %v201
  %v225 = vpack.c.b16 %v204, %v203
  %v226 = vpack.c.b16 %v206, %v205
  %v227 = vpack.c.b16 %v208, %v207
  %v228 = vpack.c.b16 %v210, %v209
  %vm247 = vcmask 261120
  %v249 = vsel %vm247, %v131, 0
  %v252 = vsel %vm247, %v134, 0
  %254 = vmatprep.subr.bf16.mxu0 0
  %255 = vmatpush1.bf16.msra.mxu0 %v211
  %256 = vmatprep.subr.bf16.mxu0 0
  %257 = vmatpush1.bf16.msra.mxu0 %v212
  %258 = vmatprep.subr.bf16.mxu0 0
  %259 = vmatpush1.bf16.msra.mxu0 %v213
  %260 = vmatprep.subr.bf16.mxu0 0
  %261 = vmatpush1.bf16.msra.mxu0 %v214
  %262 = vmatprep.subr.bf16.mxu0 0
  %263 = vmatpush1.bf16.msra.mxu0 %v215
  %264 = vmatprep.subr.bf16.mxu0 0
  %265 = vmatpush1.bf16.msra.mxu0 %v216
  %266 = vmatprep.subr.bf16.mxu0 0
  %267 = vmatpush1.bf16.msra.mxu0 %v217
  %268 = vmatprep.subr.bf16.mxu0 0
  %269 = vmatpush1.bf16.msra.mxu0 %v218
  %270 = vmatprep.subr.bf16.mxu0 0
  %271 = vmatpush1.bf16.msra.mxu0 %v219
  %272 = vmatprep.subr.bf16.mxu0 0
  %273 = vmatpush1.bf16.msra.mxu0 %v220
  %274 = vmatprep.subr.bf16.mxu0 0
  %275 = vmatpush1.bf16.msra.mxu0 %v221
  %276 = vmatprep.subr.bf16.mxu0 0
  %277 = vmatpush1.bf16.msra.mxu0 %v222
  %278 = vmatprep.subr.bf16.mxu0 0
  %279 = vmatpush1.bf16.msra.mxu0 %v223
  %280 = vmatprep.subr.bf16.mxu0 0
  %281 = vmatpush1.bf16.msra.mxu0 %v224
  %282 = vmatprep.subr.bf16.mxu0 0
  %283 = vmatpush1.bf16.msra.mxu0 %v225
  %284 = vmatprep.subr.bf16.mxu0 0
  %285 = vmatpush1.bf16.msra.mxu0 %v226
  %286 = vmatprep.mubr.bf16.mxu0 %v130
  %287 = vmatmul.mubr.bf16.gmra.mrb[0].mxu0 %v129
  %v288 = vpop.f32.mrb[0].mxu0
  %v289 = vadd.f32 0.0, %v288
  %v290 = vpop.f32.mrb[0].mxu0
  %v291 = vpop.f32.mrb[0].mxu0
  %v292 = vadd.f32 0.0, %v291
  %v293 = vpop.f32.mrb[0].mxu0
  %294 = vmatprep.mubr.bf16.mxu0 %v133
  %295 = vmatmul.mubr.bf16.gmra.mrb[0].mxu0 %v132
  %v296 = vpop.f32.mrb[0].mxu0
  %v297 = vadd.f32 0.0, %v296
  %v298 = vpop.f32.mrb[0].mxu0
  %v299 = vpop.f32.mrb[0].mxu0
  %v300 = vadd.f32 0.0, %v299
  %v301 = vpop.f32.mrb[0].mxu0
  %302 = vdwg.mxu0
  %303 = vmatprep.subr.bf16.mxu0 0
  %304 = vmatpush1.bf16.msra.mxu0 %v227
  %305 = vmatprep.subr.bf16.mxu0 0
  %306 = vmatpush1.bf16.msra.mxu0 %v228
  %307 = vmatprep.subr.bf16.mxu0 0
  %308 = vmatpush1.bf16.msra.mxu0 0
  %309 = vmatprep.subr.bf16.mxu0 0
  %310 = vmatpush1.bf16.msra.mxu0 0
  %311 = vmatprep.subr.bf16.mxu0 0
  %312 = vmatpush1.bf16.msra.mxu0 0
  %313 = vmatprep.subr.bf16.mxu0 0
  %314 = vmatpush1.bf16.msra.mxu0 0
  %315 = vmatprep.subr.bf16.mxu0 0
  %316 = vmatpush1.bf16.msra.mxu0 0
  %317 = vmatprep.subr.bf16.mxu0 0
  %318 = vmatpush1.bf16.msra.mxu0 0
  %319 = vmatprep.subr.bf16.mxu0 0
  %320 = vmatpush1.bf16.msra.mxu0 0
  %321 = vmatprep.subr.bf16.mxu0 0
  %322 = vmatpush1.bf16.msra.mxu0 0
  %323 = vmatprep.subr.bf16.mxu0 0
  %324 = vmatpush1.bf16.msra.mxu0 0
  %325 = vmatprep.subr.bf16.mxu0 0
  %326 = vmatpush1.bf16.msra.mxu0 0
  %327 = vmatprep.subr.bf16.mxu0 0
  %328 = vmatpush1.bf16.msra.mxu0 0
  %329 = vmatprep.subr.bf16.mxu0 0
  %330 = vmatpush1.bf16.msra.mxu0 0
  %331 = vmatprep.subr.bf16.mxu0 0
  %332 = vmatpush1.bf16.msra.mxu0 0
  %333 = vmatprep.subr.bf16.mxu0 0
  %334 = vmatpush1.bf16.msra.mxu0 0
  %335 = vmatprep.mubr.bf16.mxu0 0
  %336 = vmatmul.mubr.bf16.gmra.mrb[0].mxu0 %v249
  %v337 = vpop.f32.mrb[0].mxu0
  %v338 = vadd.f32 %v289, %v337
  %v339 = vpop.f32.mrb[0].mxu0
  %v340 = vpop.f32.mrb[0].mxu0
  %v341 = vadd.f32 %v292, %v340
  %v342 = vpop.f32.mrb[0].mxu0
  %343 = vmatprep.mubr.bf16.mxu0 0
  %344 = vmatmul.mubr.bf16.gmra.mrb[0].mxu0 %v252
  %v345 = vpop.f32.mrb[0].mxu0
  %v346 = vadd.f32 %v297, %v345
  %v347 = vpop.f32.mrb[0].mxu0
  %v348 = vpop.f32.mrb[0].mxu0
  %v349 = vadd.f32 %v300, %v348
  %v350 = vpop.f32.mrb[0].mxu0
  %351 = vdwg.mxu0
  %v360 = vunpack.c.l.b16 %v21
  %v361 = vunpack.c.h.b16 %v21
  %v362 = vunpack.c.l.b16 %v22
  %v363 = vunpack.c.l.b16 %v23
  %v364 = vunpack.c.h.b16 %v23
  %v365 = vunpack.c.l.b16 %v24
  %v366 = vunpack.c.l.b16 %v25
  %v367 = vunpack.c.h.b16 %v25
  %v368 = vunpack.c.l.b16 %v26
  %v369 = vunpack.c.l.b16 %v27
  %v370 = vunpack.c.h.b16 %v27
  %v371 = vunpack.c.l.b16 %v28
  %v372 = vpack.c.b16 %v363, %v360
  %v373 = vpack.c.b16 %v364, %v361
  %v374 = vpack.c.b16 %v365, %v362
  %v375 = vpack.c.b16 %v369, %v366
  %v376 = vpack.c.b16 %v370, %v367
  %v377 = vpack.c.b16 %v371, %v368
  %v418 = vunpack.c.l.b16 %v29
  %v419 = vunpack.c.l.b16 %v30
  %v420 = vunpack.c.l.b16 %v31
  %v421 = vunpack.c.l.b16 %v32
  %v422 = vunpack.c.l.b16 %v33
  %v423 = vunpack.c.l.b16 %v34
  %v424 = vunpack.c.l.b16 %v35
  %v425 = vunpack.c.l.b16 %v36
  %v426 = vunpack.c.l.b16 %v37
  %v427 = vunpack.c.l.b16 %v38
  %v428 = vunpack.c.l.b16 %v39
  %v429 = vunpack.c.l.b16 %v40
  %v430 = vunpack.c.l.b16 %v41
  %v431 = vunpack.c.l.b16 %v42
  %v432 = vunpack.c.l.b16 %v43
  %v433 = vunpack.c.l.b16 %v44
  %v434 = vunpack.c.l.b16 %v45
  %v435 = vunpack.c.l.b16 %v46
  %v436 = vunpack.c.l.b16 %v47
  %v437 = vunpack.c.l.b16 %v48
  %v438 = vunpack.c.l.b16 %v49
  %v439 = vunpack.c.l.b16 %v50
  %v440 = vunpack.c.l.b16 %v51
  %v441 = vunpack.c.l.b16 %v52
  %v442 = vunpack.c.l.b16 %v53
  %v443 = vunpack.c.l.b16 %v54
  %v444 = vunpack.c.l.b16 %v55
  %v445 = vunpack.c.l.b16 %v56
  %v446 = vunpack.c.l.b16 %v57
  %v447 = vunpack.c.l.b16 %v58
  %v448 = vunpack.c.l.b16 %v59
  %v449 = vunpack.c.l.b16 %v60
  %v450 = vunpack.c.l.b16 %v61
  %v451 = vunpack.c.l.b16 %v62
  %v452 = vunpack.c.l.b16 %v63
  %v453 = vunpack.c.l.b16 %v64
  %v454 = vpack.c.b16 %v419, %v418
  %v455 = vpack.c.b16 %v421, %v420
  %v456 = vpack.c.b16 %v423, %v422
  %v457 = vpack.c.b16 %v425, %v424
  %v458 = vpack.c.b16 %v427, %v426
  %v459 = vpack.c.b16 %v429, %v428
  %v460 = vpack.c.b16 %v431, %v430
  %v461 = vpack.c.b16 %v433, %v432
  %v462 = vpack.c.b16 %v435, %v434
  %v463 = vpack.c.b16 %v437, %v436
  %v464 = vpack.c.b16 %v439, %v438
  %v465 = vpack.c.b16 %v441, %v440
  %v466 = vpack.c.b16 %v443, %v442
  %v467 = vpack.c.b16 %v445, %v444
  %v468 = vpack.c.b16 %v447, %v446
  %v469 = vpack.c.b16 %v449, %v448
  %v470 = vpack.c.b16 %v451, %v450
  %v471 = vpack.c.b16 %v453, %v452
  %v491 = vsel %vm247, %v374, 0
  %v494 = vsel %vm247, %v377, 0
  %496 = vmatprep.subr.bf16.mxu0 0
  %497 = vmatpush1.bf16.msra.mxu0 %v454
  %498 = vmatprep.subr.bf16.mxu0 0
  %499 = vmatpush1.bf16.msra.mxu0 %v455
  %500 = vmatprep.subr.bf16.mxu0 0
  %501 = vmatpush1.bf16.msra.mxu0 %v456
  %502 = vmatprep.subr.bf16.mxu0 0
  %503 = vmatpush1.bf16.msra.mxu0 %v457
  %504 = vmatprep.subr.bf16.mxu0 0
  %505 = vmatpush1.bf16.msra.mxu0 %v458
  %506 = vmatprep.subr.bf16.mxu0 0
  %507 = vmatpush1.bf16.msra.mxu0 %v459
  %508 = vmatprep.subr.bf16.mxu0 0
  %509 = vmatpush1.bf16.msra.mxu0 %v460
  %510 = vmatprep.subr.bf16.mxu0 0
  %511 = vmatpush1.bf16.msra.mxu0 %v461
  %512 = vmatprep.subr.bf16.mxu0 0
  %513 = vmatpush1.bf16.msra.mxu0 %v462
  %514 = vmatprep.subr.bf16.mxu0 0
  %515 = vmatpush1.bf16.msra.mxu0 %v463
  %516 = vmatprep.subr.bf16.mxu0 0
  %517 = vmatpush1.bf16.msra.mxu0 %v464
  %518 = vmatprep.subr.bf16.mxu0 0
  %519 = vmatpush1.bf16.msra.mxu0 %v465
  %520 = vmatprep.subr.bf16.mxu0 0
  %521 = vmatpush1.bf16.msra.mxu0 %v466
  %522 = vmatprep.subr.bf16.mxu0 0
  %523 = vmatpush1.bf16.msra.mxu0 %v467
  %524 = vmatprep.subr.bf16.mxu0 0
  %525 = vmatpush1.bf16.msra.mxu0 %v468
  %526 = vmatprep.subr.bf16.mxu0 0
  %527 = vmatpush1.bf16.msra.mxu0 %v469
  %528 = vmatprep.mubr.bf16.mxu0 %v373
  %529 = vmatmul.mubr.bf16.gmra.mrb[0].mxu0 %v372
  %v530 = vpop.f32.mrb[0].mxu0
  %v531 = vadd.f32 %v338, %v530
  %v532 = vpop.f32.mrb[0].mxu0
  %v533 = vpop.f32.mrb[0].mxu0
  %v534 = vadd.f32 %v341, %v533
  %v535 = vpop.f32.mrb[0].mxu0
  %536 = vmatprep.mubr.bf16.mxu0 %v376
  %537 = vmatmul.mubr.bf16.gmra.mrb[0].mxu0 %v375
  %v538 = vpop.f32.mrb[0].mxu0
  %v539 = vadd.f32 %v346, %v538
  %v540 = vpop.f32.mrb[0].mxu0
  %v541 = vpop.f32.mrb[0].mxu0
  %v542 = vadd.f32 %v349, %v541
  %v543 = vpop.f32.mrb[0].mxu0
  %544 = vdwg.mxu0
  %545 = vmatprep.subr.bf16.mxu0 0
  %546 = vmatpush1.bf16.msra.mxu0 %v470
  %547 = vmatprep.subr.bf16.mxu0 0
  %548 = vmatpush1.bf16.msra.mxu0 %v471
  %549 = vmatprep.subr.bf16.mxu0 0
  %550 = vmatpush1.bf16.msra.mxu0 0
  %551 = vmatprep.subr.bf16.mxu0 0
  %552 = vmatpush1.bf16.msra.mxu0 0
  %553 = vmatprep.subr.bf16.mxu0 0
  %554 = vmatpush1.bf16.msra.mxu0 0
  %555 = vmatprep.subr.bf16.mxu0 0
  %556 = vmatpush1.bf16.msra.mxu0 0
  %557 = vmatprep.subr.bf16.mxu0 0
  %558 = vmatpush1.bf16.msra.mxu0 0
  %559 = vmatprep.subr.bf16.mxu0 0
  %560 = vmatpush1.bf16.msra.mxu0 0
  %561 = vmatprep.subr.bf16.mxu0 0
  %562 = vmatpush1.bf16.msra.mxu0 0
  %563 = vmatprep.subr.bf16.mxu0 0
  %564 = vmatpush1.bf16.msra.mxu0 0
  %565 = vmatprep.subr.bf16.mxu0 0
  %566 = vmatpush1.bf16.msra.mxu0 0
  %567 = vmatprep.subr.bf16.mxu0 0
  %568 = vmatpush1.bf16.msra.mxu0 0
  %569 = vmatprep.subr.bf16.mxu0 0
  %570 = vmatpush1.bf16.msra.mxu0 0
  %571 = vmatprep.subr.bf16.mxu0 0
  %572 = vmatpush1.bf16.msra.mxu0 0
  %573 = vmatprep.subr.bf16.mxu0 0
  %574 = vmatpush1.bf16.msra.mxu0 0
  %575 = vmatprep.subr.bf16.mxu0 0
  %576 = vmatpush1.bf16.msra.mxu0 0
  %577 = vmatprep.mubr.bf16.mxu0 0
  %578 = vmatmul.mubr.bf16.gmra.mrb[0].mxu0 %v491
  %v579 = vpop.f32.mrb[0].mxu0
  %v580 = vadd.f32 %v531, %v579
  %v581 = vpop.f32.mrb[0].mxu0
  %v582 = vpop.f32.mrb[0].mxu0
  %v583 = vadd.f32 %v534, %v582
  %v584 = vpop.f32.mrb[0].mxu0
  %585 = vmatprep.mubr.bf16.mxu0 0
  %586 = vmatmul.mubr.bf16.gmra.mrb[0].mxu0 %v494
  %v587 = vpop.f32.mrb[0].mxu0
  %v588 = vadd.f32 %v539, %v587
  %v589 = vpop.f32.mrb[0].mxu0
  %v590 = vpop.f32.mrb[0].mxu0
  %v591 = vadd.f32 %v542, %v590
  %v592 = vpop.f32.mrb[0].mxu0
  %593 = vdwg.mxu0
  %v594 = vld [vmem:[%s4] sm:$0x1]
  %v596 = vlaneseq
  %v597 = vshrl.u32 %v596, 7
  %v598 = vsub.s32 0, %v597
  %v599 = vrot.slane %v594, %v598
  %v601 = vadd.f32 %v580, %v599
  %v602 = vadd.f32 %v583, %v599
  %v603 = vadd.f32 %v588, %v599
  %v604 = vadd.f32 %v591, %v599
  %v605 = vmax.f32 %v601, 0.0
  %v606 = vmax.f32 %v602, 0.0
  %v607 = vmax.f32 %v603, 0.0
  %v608 = vmax.f32 %v604, 0.0
  %vm609 = vcmask 523264
  %610 = vst.msk [vmem:[%s5] sm:$0xff] %vm609, %v605
  %611 = vst.msk [vmem:[%s5 + $0x8] sm:$0xff] %vm609, %v606
  %612 = vst.msk [vmem:[%s5 + $0x10] sm:$0xff] %vm609, %v607
  %613 = vst.msk [vmem:[%s5 + $0x18] sm:$0xff] %vm609, %v608
  // Predicated region
  $region22: #{raft_stereo_human_forward.30} parent=0 // pred_check
    _
  $region23: #{raft_stereo_human_forward.30} parent=0 // pred_check_branch
    %615 = sbr.rel (0) target = $region25
  $region24: #{raft_stereo_human_forward.30} parent=0 // pred_region
    _
  $region25: #{raft_stereo_human_forward.30} parent=0 // pred_fallthru
    _
  // Predicated region
  $region26: #{raft_stereo_human_forward.30} parent=0 // pred_check
    _
  $region27: #{raft_stereo_human_forward.30} parent=0 // pred_check_branch
    %617 = sbr.rel (0) target = $region29
  $region28: #{raft_stereo_human_forward.30} parent=0 // pred_region
    _
  $region29: #{raft_stereo_human_forward.30} parent=0 // pred_fallthru
    _

// kernel: raft_stereo_human_forward.28
$region0: #{raft_stereo_human_forward.28}
  #allocation0 [shape = 'u32[]', space=smem, size = 0x4, offset = 0x4, fixed_abs, tag = 'smem constant byte address 0x4 - core index']
  #allocation1 [shape = 'u32[144,128]{1,0:T(1,128)}', space=vmem, size = 0x12000, scoped, tag = 'internal scratch']
  %s0 = inlined_call_operand.vmem [shape: f32[8,4,4], index: 0, kind: input, shape index: {}]
  %s1 = inlined_call_operand.vmem [shape: f32[8,4,2], index: 1, kind: input, shape index: {}]
  %s2 = inlined_call_operand.vmem [shape: f32[8,4,1], index: 2, kind: input, shape index: {}]
  %s3 = inlined_call_operand.vmem [shape: f32[10,32], index: 3, kind: input, shape index: {}]
  %s4 = inlined_call_operand.vmem [shape: f32[1,32], index: 4, kind: input, shape index: {}]
  %s5 = inlined_call_operand.vmem [shape: f32[8,4,32], index: 5, kind: output, shape index: {}]
  %s6 = sld [smem:[#allocation0]]
  $region30: #{raft_stereo_human_forward.28} parent=0
    _
  %s8 = ssub.s32 1, %s6
  %s9 = scalar_select 0, %s8, %s6
  // Predicated region
  $region2: #{raft_stereo_human_forward.28} parent=0 // pred_check
    _
  $region3: #{raft_stereo_human_forward.28} parent=0 // pred_check_branch
    %11 = sbr.rel (0) target = $region5
  $region4: #{raft_stereo_human_forward.28} parent=0 // pred_region
    _
  $region5: #{raft_stereo_human_forward.28} parent=0 // pred_fallthru
    _
  // Predicated region
  $region6: #{raft_stereo_human_forward.28} parent=0 // pred_check
    _
  $region7: #{raft_stereo_human_forward.28} parent=0 // pred_check_branch
    %13 = sbr.rel (0) target = $region9
  $region8: #{raft_stereo_human_forward.28} parent=0 // pred_region
    _
  $region9: #{raft_stereo_human_forward.28} parent=0 // pred_fallthru
    _
  // Predicated region
  $region10: #{raft_stereo_human_forward.28} parent=0 // pred_check
    _
  $region11: #{raft_stereo_human_forward.28} parent=0 // pred_check_branch
    %15 = sbr.rel (0) target = $region13
  $region12: #{raft_stereo_human_forward.28} parent=0 // pred_region
    _
  $region13: #{raft_stereo_human_forward.28} parent=0 // pred_fallthru
    _
  // Predicated region
  $region14: #{raft_stereo_human_forward.28} parent=0 // pred_check
    _
  $region15: #{raft_stereo_human_forward.28} parent=0 // pred_check_branch
    %17 = sbr.rel (0) target = $region17
  $region16: #{raft_stereo_human_forward.28} parent=0 // pred_region
    _
  $region17: #{raft_stereo_human_forward.28} parent=0 // pred_fallthru
    _
  // Predicated region
  $region18: #{raft_stereo_human_forward.28} parent=0 // pred_check
    _
  $region19: #{raft_stereo_human_forward.28} parent=0 // pred_check_branch
    %19 = sbr.rel (0) target = $region21
  $region20: #{raft_stereo_human_forward.28} parent=0 // pred_region
    _
  $region21: #{raft_stereo_human_forward.28} parent=0 // pred_fallthru
    _
  %v20 = vld [vmem:[%s2] sm:$0xf]
  %v21 = vld [vmem:[%s2 + $0x4] sm:$0xf]
  %v22 = vld [vmem:[%s2 + $0x8] sm:$0xf]
  %v23 = vld [vmem:[%s2 + $0xc] sm:$0xf]
  %v24 = vld [vmem:[%s2 + $0x10] sm:$0xf]
  %v25 = vld [vmem:[%s2 + $0x14] sm:$0xf]
  %v26 = vld [vmem:[%s2 + $0x18] sm:$0xf]
  %v27 = vld [vmem:[%s2 + $0x1c] sm:$0xf]
  %v28 = vld [vmem:[%s3] sm:$0xff]
  %v29 = vld [vmem:[%s3 + $0x8] sm:$0x3]
  %v30 = vld [vmem:[%s0] sm:$0xf]
  %v31 = vld [vmem:[%s0 + $0x4] sm:$0xf]
  %v32 = vld [vmem:[%s0 + $0x8] sm:$0xf]
  %v33 = vld [vmem:[%s0 + $0xc] sm:$0xf]
  %v34 = vld [vmem:[%s0 + $0x10] sm:$0xf]
  %v35 = vld [vmem:[%s0 + $0x14] sm:$0xf]
  %v36 = vld [vmem:[%s0 + $0x18] sm:$0xf]
  %v37 = vld [vmem:[%s0 + $0x1c] sm:$0xf]
  %v38 = vlaneseq
  %v39 = vand.u32 %v38, 127
  %v40 = vfloor.f32 %v20
  %v41 = vfloor.f32 %v21
  %v42 = vfloor.f32 %v22
  %v43 = vfloor.f32 %v23
  %v44 = vfloor.f32 %v24
  %v45 = vfloor.f32 %v25
  %v46 = vfloor.f32 %v26
  %v47 = vfloor.f32 %v27
  %v48 = vsub.f32 %v20, %v40
  %v49 = vsub.f32 %v21, %v41
  %v50 = vsub.f32 %v22, %v42
  %v51 = vsub.f32 %v23, %v43
  %v52 = vsub.f32 %v24, %v44
  %v53 = vsub.f32 %v25, %v45
  %v54 = vsub.f32 %v26, %v46
  %v55 = vsub.f32 %v27, %v47
  %v56 = vcvt.f32.s32.to.zero.pseudo %v40
  %v57 = vcvt.f32.s32.to.zero.pseudo %v41
  %v58 = vcvt.f32.s32.to.zero.pseudo %v42
  %v59 = vcvt.f32.s32.to.zero.pseudo %v43
  %v60 = vcvt.f32.s32.to.zero.pseudo %v44
  %v61 = vcvt.f32.s32.to.zero.pseudo %v45
  %v62 = vcvt.f32.s32.to.zero.pseudo %v46
  %v63 = vcvt.f32.s32.to.zero.pseudo %v47
  %v64 = vadd.s32 %v56, 4294967294
  %v65 = vadd.s32 %v57, 4294967294
  %v66 = vadd.s32 %v58, 4294967294
  %v67 = vadd.s32 %v59, 4294967294
  %v68 = vadd.s32 %v60, 4294967294
  %v69 = vadd.s32 %v61, 4294967294
  %v70 = vadd.s32 %v62, 4294967294
  %v71 = vadd.s32 %v63, 4294967294
  %72 = vset.pattern.permute.xlu0 0
  %73 = vperm.xlu0 %72, %v64
  %v74 = vpop.permute.xlu0 %73
  %75 = vset.pattern.permute.xlu0 0
  %76 = vperm.xlu0 %75, %v65
  %v77 = vpop.permute.xlu0 %76
  %78 = vset.pattern.permute.xlu0 0
  %79 = vperm.xlu0 %78, %v66
  %v80 = vpop.permute.xlu0 %79
  %81 = vset.pattern.permute.xlu0 0
  %82 = vperm.xlu0 %81, %v67
  %v83 = vpop.permute.xlu0 %82
  %84 = vset.pattern.permute.xlu0 0
  %85 = vperm.xlu0 %84, %v68
  %v86 = vpop.permute.xlu0 %85
  %87 = vset.pattern.permute.xlu0 0
  %88 = vperm.xlu0 %87, %v69
  %v89 = vpop.permute.xlu0 %88
  %90 = vset.pattern.permute.xlu0 0
  %91 = vperm.xlu0 %90, %v70
  %v92 = vpop.permute.xlu0 %91
  %93 = vset.pattern.permute.xlu0 0
  %94 = vperm.xlu0 %93, %v71
  %v95 = vpop.permute.xlu0 %94
  %vm96 = vcmp.eq.s32.totalorder %v39, %v74
  %vm97 = vcmp.eq.s32.totalorder %v39, %v77
  %vm98 = vcmp.eq.s32.totalorder %v39, %v80
  %vm99 = vcmp.eq.s32.totalorder %v39, %v83
  %vm100 = vcmp.eq.s32.totalorder %v39, %v86
  %vm101 = vcmp.eq.s32.totalorder %v39, %v89
  %vm102 = vcmp.eq.s32.totalorder %v39, %v92
  %vm103 = vcmp.eq.s32.totalorder %v39, %v95
  %v104 = vsel %vm96, 1, 0
  %v105 = vsel %vm97, 1, 0
  %v106 = vsel %vm98, 1, 0
  %v107 = vsel %vm99, 1, 0
  %v108 = vsel %vm100, 1, 0
  %v109 = vsel %vm101, 1, 0
  %v110 = vsel %vm102, 1, 0
  %v111 = vsel %vm103, 1, 0
  %v112 = vcvt.s32.f32 %v104
  %v113 = vcvt.s32.f32 %v105
  %v114 = vcvt.s32.f32 %v106
  %v115 = vcvt.s32.f32 %v107
  %v116 = vcvt.s32.f32 %v108
  %v117 = vcvt.s32.f32 %v109
  %v118 = vcvt.s32.f32 %v110
  %v119 = vcvt.s32.f32 %v111
  %v120 = vmul.f32 %v112, %v30
  %v121 = vmul.f32 %v113, %v31
  %v122 = vmul.f32 %v114, %v32
  %v123 = vmul.f32 %v115, %v33
  %v124 = vmul.f32 %v116, %v34
  %v125 = vmul.f32 %v117, %v35
  %v126 = vmul.f32 %v118, %v36
  %v127 = vmul.f32 %v119, %v37
  %vm128 = vcmask 27648
  %v129 = vsel %vm128, %v120, 0.0
  %130 = vadd.xlane.f32.xlu0 %v129
  %v131 = vpop.xlane.xlu0 %130
  %v132 = vsel %vm128, %v121, 0.0
  %133 = vadd.xlane.f32.xlu0 %v132
  %v134 = vpop.xlane.xlu0 %133
  %v135 = vsel %vm128, %v122, 0.0
  %136 = vadd.xlane.f32.xlu0 %v135
  %v137 = vpop.xlane.xlu0 %136
  %v138 = vsel %vm128, %v123, 0.0
  %139 = vadd.xlane.f32.xlu0 %v138
  %v140 = vpop.xlane.xlu0 %139
  %v141 = vsel %vm128, %v124, 0.0
  %142 = vadd.xlane.f32.xlu0 %v141
  %v143 = vpop.xlane.xlu0 %142
  %v144 = vsel %vm128, %v125, 0.0
  %145 = vadd.xlane.f32.xlu0 %v144
  %v146 = vpop.xlane.xlu0 %145
  %v147 = vsel %vm128, %v126, 0.0
  %148 = vadd.xlane.f32.xlu0 %v147
  %v149 = vpop.xlane.xlu0 %148
  %v150 = vsel %vm128, %v127, 0.0
  %151 = vadd.xlane.f32.xlu0 %v150
  %v152 = vpop.xlane.xlu0 %151
  %v153 = vadd.s32 %v56, 4294967295
  %v154 = vadd.s32 %v57, 4294967295
  %v155 = vadd.s32 %v58, 4294967295
  %v156 = vadd.s32 %v59, 4294967295
  %v157 = vadd.s32 %v60, 4294967295
  %v158 = vadd.s32 %v61, 4294967295
  %v159 = vadd.s32 %v62, 4294967295
  %v160 = vadd.s32 %v63, 4294967295
  %161 = vset.pattern.permute.xlu0 0
  %162 = vperm.xlu0 %161, %v153
  %v163 = vpop.permute.xlu0 %162
  %164 = vset.pattern.permute.xlu0 0
  %165 = vperm.xlu0 %164, %v154
  %v166 = vpop.permute.xlu0 %165
  %167 = vset.pattern.permute.xlu0 0
  %168 = vperm.xlu0 %167, %v155
  %v169 = vpop.permute.xlu0 %168
  %170 = vset.pattern.permute.xlu0 0
  %171 = vperm.xlu0 %170, %v156
  %v172 = vpop.permute.xlu0 %171
  %173 = vset.pattern.permute.xlu0 0
  %174 = vperm.xlu0 %173, %v157
  %v175 = vpop.permute.xlu0 %174
  %176 = vset.pattern.permute.xlu0 0
  %177 = vperm.xlu0 %176, %v158
  %v178 = vpop.permute.xlu0 %177
  %179 = vset.pattern.permute.xlu0 0
  %180 = vperm.xlu0 %179, %v159
  %v181 = vpop.permute.xlu0 %180
  %182 = vset.pattern.permute.xlu0 0
  %183 = vperm.xlu0 %182, %v160
  %v184 = vpop.permute.xlu0 %183
  %vm185 = vcmp.eq.s32.totalorder %v39, %v163
  %vm186 = vcmp.eq.s32.totalorder %v39, %v166
  %vm187 = vcmp.eq.s32.totalorder %v39, %v169
  %vm188 = vcmp.eq.s32.totalorder %v39, %v172
  %vm189 = vcmp.eq.s32.totalorder %v39, %v175
  %vm190 = vcmp.eq.s32.totalorder %v39, %v178
  %vm191 = vcmp.eq.s32.totalorder %v39, %v181
  %vm192 = vcmp.eq.s32.totalorder %v39, %v184
  %v193 = vsel %vm185, 1, 0
  %v194 = vsel %vm186, 1, 0
  %v195 = vsel %vm187, 1, 0
  %v196 = vsel %vm188, 1, 0
  %v197 = vsel %vm189, 1, 0
  %v198 = vsel %vm190, 1, 0
  %v199 = vsel %vm191, 1, 0
  %v200 = vsel %vm192, 1, 0
  %v201 = vcvt.s32.f32 %v193
  %v202 = vcvt.s32.f32 %v194
  %v203 = vcvt.s32.f32 %v195
  %v204 = vcvt.s32.f32 %v196
  %v205 = vcvt.s32.f32 %v197
  %v206 = vcvt.s32.f32 %v198
  %v207 = vcvt.s32.f32 %v199
  %v208 = vcvt.s32.f32 %v200
  %v209 = vmul.f32 %v201, %v30
  %v210 = vmul.f32 %v202, %v31
  %v211 = vmul.f32 %v203, %v32
  %v212 = vmul.f32 %v204, %v33
  %v213 = vmul.f32 %v205, %v34
  %v214 = vmul.f32 %v206, %v35
  %v215 = vmul.f32 %v207, %v36
  %v216 = vmul.f32 %v208, %v37
  %v217 = vsel %vm128, %v209, 0.0
  %218 = vadd.xlane.f32.xlu0 %v217
  %v219 = vpop.xlane.xlu0 %218
  %v220 = vsel %vm128, %v210, 0.0
  %221 = vadd.xlane.f32.xlu0 %v220
  %v222 = vpop.xlane.xlu0 %221
  %v223 = vsel %vm128, %v211, 0.0
  %224 = vadd.xlane.f32.xlu0 %v223
  %v225 = vpop.xlane.xlu0 %224
  %v226 = vsel %vm128, %v212, 0.0
  %227 = vadd.xlane.f32.xlu0 %v226
  %v228 = vpop.xlane.xlu0 %227
  %v229 = vsel %vm128, %v213, 0.0
  %230 = vadd.xlane.f32.xlu0 %v229
  %v231 = vpop.xlane.xlu0 %230
  %v232 = vsel %vm128, %v214, 0.0
  %233 = vadd.xlane.f32.xlu0 %v232
  %v234 = vpop.xlane.xlu0 %233
  %v235 = vsel %vm128, %v215, 0.0
  %236 = vadd.xlane.f32.xlu0 %v235
  %v237 = vpop.xlane.xlu0 %236
  %v238 = vsel %vm128, %v216, 0.0
  %239 = vadd.xlane.f32.xlu0 %v238
  %v240 = vpop.xlane.xlu0 %239
  %241 = vset.pattern.permute.xlu0 0
  %242 = vperm.xlu0 %241, %v56
  %v243 = vpop.permute.xlu0 %242
  %244 = vset.pattern.permute.xlu0 0
  %245 = vperm.xlu0 %244, %v57
  %v246 = vpop.permute.xlu0 %245
  %247 = vset.pattern.permute.xlu0 0
  %248 = vperm.xlu0 %247, %v58
  %v249 = vpop.permute.xlu0 %248
  %250 = vset.pattern.permute.xlu0 0
  %251 = vperm.xlu0 %250, %v59
  %v252 = vpop.permute.xlu0 %251
  %253 = vset.pattern.permute.xlu0 0
  %254 = vperm.xlu0 %253, %v60
  %v255 = vpop.permute.xlu0 %254
  %256 = vset.pattern.permute.xlu0 0
  %257 = vperm.xlu0 %256, %v61
  %v258 = vpop.permute.xlu0 %257
  %259 = vset.pattern.permute.xlu0 0
  %260 = vperm.xlu0 %259, %v62
  %v261 = vpop.permute.xlu0 %260
  %262 = vset.pattern.permute.xlu0 0
  %263 = vperm.xlu0 %262, %v63
  %v264 = vpop.permute.xlu0 %263
  %vm265 = vcmp.eq.s32.totalorder %v39, %v243
  %vm266 = vcmp.eq.s32.totalorder %v39, %v246
  %vm267 = vcmp.eq.s32.totalorder %v39, %v249
  %vm268 = vcmp.eq.s32.totalorder %v39, %v252
  %vm269 = vcmp.eq.s32.totalorder %v39, %v255
  %vm270 = vcmp.eq.s32.totalorder %v39, %v258
  %vm271 = vcmp.eq.s32.totalorder %v39, %v261
  %vm272 = vcmp.eq.s32.totalorder %v39, %v264
  %v273 = vsel %vm265, 1, 0
  %v274 = vsel %vm266, 1, 0
  %v275 = vsel %vm267, 1, 0
  %v276 = vsel %vm268, 1, 0
  %v277 = vsel %vm269, 1, 0
  %v278 = vsel %vm270, 1, 0
  %v279 = vsel %vm271, 1, 0
  %v280 = vsel %vm272, 1, 0
  %v281 = vcvt.s32.f32 %v273
  %v282 = vcvt.s32.f32 %v274
  %v283 = vcvt.s32.f32 %v275
  %v284 = vcvt.s32.f32 %v276
  %v285 = vcvt.s32.f32 %v277
  %v286 = vcvt.s32.f32 %v278
  %v287 = vcvt.s32.f32 %v279
  %v288 = vcvt.s32.f32 %v280
  %v289 = vmul.f32 %v281, %v30
  %v290 = vmul.f32 %v282, %v31
  %v291 = vmul.f32 %v283, %v32
  %v292 = vmul.f32 %v284, %v33
  %v293 = vmul.f32 %v285, %v34
  %v294 = vmul.f32 %v286, %v35
  %v295 = vmul.f32 %v287, %v36
  %v296 = vmul.f32 %v288, %v37
  %v297 = vsel %vm128, %v289, 0.0
  %298 = vadd.xlane.f32.xlu0 %v297
  %v299 = vpop.xlane.xlu0 %298
  %v300 = vsel %vm128, %v290, 0.0
  %301 = vadd.xlane.f32.xlu0 %v300
  %v302 = vpop.xlane.xlu0 %301
  %v303 = vsel %vm128, %v291, 0.0
  %304 = vadd.xlane.f32.xlu0 %v303
  %v305 = vpop.xlane.xlu0 %304
  %v306 = vsel %vm128, %v292, 0.0
  %307 = vadd.xlane.f32.xlu0 %v306
  %v308 = vpop.xlane.xlu0 %307
  %v309 = vsel %vm128, %v293, 0.0
  %310 = vadd.xlane.f32.xlu0 %v309
  %v311 = vpop.xlane.xlu0 %310
  %v312 = vsel %vm128, %v294, 0.0
  %313 = vadd.xlane.f32.xlu0 %v312
  %v314 = vpop.xlane.xlu0 %313
  %v315 = vsel %vm128, %v295, 0.0
  %316 = vadd.xlane.f32.xlu0 %v315
  %v317 = vpop.xlane.xlu0 %316
  %v318 = vsel %vm128, %v296, 0.0
  %319 = vadd.xlane.f32.xlu0 %v318
  %v320 = vpop.xlane.xlu0 %319
  %v321 = vadd.s32 %v56, 1
  %v322 = vadd.s32 %v57, 1
  %v323 = vadd.s32 %v58, 1
  %v324 = vadd.s32 %v59, 1
  %v325 = vadd.s32 %v60, 1
  %v326 = vadd.s32 %v61, 1
  %v327 = vadd.s32 %v62, 1
  %v328 = vadd.s32 %v63, 1
  %329 = vset.pattern.permute.xlu0 0
  %330 = vperm.xlu0 %329, %v321
  %v331 = vpop.permute.xlu0 %330
  %332 = vset.pattern.permute.xlu0 0
  %333 = vperm.xlu0 %332, %v322
  %v334 = vpop.permute.xlu0 %333
  %335 = vset.pattern.permute.xlu0 0
  %336 = vperm.xlu0 %335, %v323
  %v337 = vpop.permute.xlu0 %336
  %338 = vset.pattern.permute.xlu0 0
  %339 = vperm.xlu0 %338, %v324
  %v340 = vpop.permute.xlu0 %339
  %341 = vset.pattern.permute.xlu0 0
  %342 = vperm.xlu0 %341, %v325
  %v343 = vpop.permute.xlu0 %342
  %344 = vset.pattern.permute.xlu0 0
  %345 = vperm.xlu0 %344, %v326
  %v346 = vpop.permute.xlu0 %345
  %347 = vset.pattern.permute.xlu0 0
  %348 = vperm.xlu0 %347, %v327
  %v349 = vpop.permute.xlu0 %348
  %350 = vset.pattern.permute.xlu0 0
  %351 = vperm.xlu0 %350, %v328
  %v352 = vpop.permute.xlu0 %351
  %vm353 = vcmp.eq.s32.totalorder %v39, %v331
  %vm354 = vcmp.eq.s32.totalorder %v39, %v334
  %vm355 = vcmp.eq.s32.totalorder %v39, %v337
  %vm356 = vcmp.eq.s32.totalorder %v39, %v340
  %vm357 = vcmp.eq.s32.totalorder %v39, %v343
  %vm358 = vcmp.eq.s32.totalorder %v39, %v346
  %vm359 = vcmp.eq.s32.totalorder %v39, %v349
  %vm360 = vcmp.eq.s32.totalorder %v39, %v352
  %v361 = vsel %vm353, 1, 0
  %v362 = vsel %vm354, 1, 0
  %v363 = vsel %vm355, 1, 0
  %v364 = vsel %vm356, 1, 0
  %v365 = vsel %vm357, 1, 0
  %v366 = vsel %vm358, 1, 0
  %v367 = vsel %vm359, 1, 0
  %v368 = vsel %vm360, 1, 0
  %v369 = vcvt.s32.f32 %v361
  %v370 = vcvt.s32.f32 %v362
  %v371 = vcvt.s32.f32 %v363
  %v372 = vcvt.s32.f32 %v364
  %v373 = vcvt.s32.f32 %v365
  %v374 = vcvt.s32.f32 %v366
  %v375 = vcvt.s32.f32 %v367
  %v376 = vcvt.s32.f32 %v368
  %v377 = vmul.f32 %v369, %v30
  %v378 = vmul.f32 %v370, %v31
  %v379 = vmul.f32 %v371, %v32
  %v380 = vmul.f32 %v372, %v33
  %v381 = vmul.f32 %v373, %v34
  %v382 = vmul.f32 %v374, %v35
  %v383 = vmul.f32 %v375, %v36
  %v384 = vmul.f32 %v376, %v37
  %v385 = vsel %vm128, %v377, 0.0
  %386 = vadd.xlane.f32.xlu0 %v385
  %v387 = vpop.xlane.xlu0 %386
  %v388 = vsel %vm128, %v378, 0.0
  %389 = vadd.xlane.f32.xlu0 %v388
  %v390 = vpop.xlane.xlu0 %389
  %v391 = vsel %vm128, %v379, 0.0
  %392 = vadd.xlane.f32.xlu0 %v391
  %v393 = vpop.xlane.xlu0 %392
  %v394 = vsel %vm128, %v380, 0.0
  %395 = vadd.xlane.f32.xlu0 %v394
  %v396 = vpop.xlane.xlu0 %395
  %v397 = vsel %vm128, %v381, 0.0
  %398 = vadd.xlane.f32.xlu0 %v397
  %v399 = vpop.xlane.xlu0 %398
  %v400 = vsel %vm128, %v382, 0.0
  %401 = vadd.xlane.f32.xlu0 %v400
  %v402 = vpop.xlane.xlu0 %401
  %v403 = vsel %vm128, %v383, 0.0
  %404 = vadd.xlane.f32.xlu0 %v403
  %v405 = vpop.xlane.xlu0 %404
  %v406 = vsel %vm128, %v384, 0.0
  %407 = vadd.xlane.f32.xlu0 %v406
  %v408 = vpop.xlane.xlu0 %407
  %v409 = vadd.s32 %v56, 2
  %v410 = vadd.s32 %v57, 2
  %v411 = vadd.s32 %v58, 2
  %v412 = vadd.s32 %v59, 2
  %v413 = vadd.s32 %v60, 2
  %v414 = vadd.s32 %v61, 2
  %v415 = vadd.s32 %v62, 2
  %v416 = vadd.s32 %v63, 2
  %417 = vset.pattern.permute.xlu0 0
  %418 = vperm.xlu0 %417, %v409
  %v419 = vpop.permute.xlu0 %418
  %420 = vset.pattern.permute.xlu0 0
  %421 = vperm.xlu0 %420, %v410
  %v422 = vpop.permute.xlu0 %421
  %423 = vset.pattern.permute.xlu0 0
  %424 = vperm.xlu0 %423, %v411
  %v425 = vpop.permute.xlu0 %424
  %426 = vset.pattern.permute.xlu0 0
  %427 = vperm.xlu0 %426, %v412
  %v428 = vpop.permute.xlu0 %427
  %429 = vset.pattern.permute.xlu0 0
  %430 = vperm.xlu0 %429, %v413
  %v431 = vpop.permute.xlu0 %430
  %432 = vset.pattern.permute.xlu0 0
  %433 = vperm.xlu0 %432, %v414
  %v434 = vpop.permute.xlu0 %433
  %435 = vset.pattern.permute.xlu0 0
  %436 = vperm.xlu0 %435, %v415
  %v437 = vpop.permute.xlu0 %436
  %438 = vset.pattern.permute.xlu0 0
  %439 = vperm.xlu0 %438, %v416
  %v440 = vpop.permute.xlu0 %439
  %vm441 = vcmp.eq.s32.totalorder %v39, %v419
  %vm442 = vcmp.eq.s32.totalorder %v39, %v422
  %vm443 = vcmp.eq.s32.totalorder %v39, %v425
  %vm444 = vcmp.eq.s32.totalorder %v39, %v428
  %vm445 = vcmp.eq.s32.totalorder %v39, %v431
  %vm446 = vcmp.eq.s32.totalorder %v39, %v434
  %vm447 = vcmp.eq.s32.totalorder %v39, %v437
  %vm448 = vcmp.eq.s32.totalorder %v39, %v440
  %v449 = vsel %vm441, 1, 0
  %v450 = vsel %vm442, 1, 0
  %v451 = vsel %vm443, 1, 0
  %v452 = vsel %vm444, 1, 0
  %v453 = vsel %vm445, 1, 0
  %v454 = vsel %vm446, 1, 0
  %v455 = vsel %vm447, 1, 0
  %v456 = vsel %vm448, 1, 0
  %v457 = vcvt.s32.f32 %v449
  %v458 = vcvt.s32.f32 %v450
  %v459 = vcvt.s32.f32 %v451
  %v460 = vcvt.s32.f32 %v452
  %v461 = vcvt.s32.f32 %v453
  %v462 = vcvt.s32.f32 %v454
  %v463 = vcvt.s32.f32 %v455
  %v464 = vcvt.s32.f32 %v456
  %v465 = vmul.f32 %v457, %v30
  %v466 = vmul.f32 %v458, %v31
  %v467 = vmul.f32 %v459, %v32
  %v468 = vmul.f32 %v460, %v33
  %v469 = vmul.f32 %v461, %v34
  %v470 = vmul.f32 %v462, %v35
  %v471 = vmul.f32 %v463, %v36
  %v472 = vmul.f32 %v464, %v37
  %v473 = vsel %vm128, %v465, 0.0
  %474 = vadd.xlane.f32.xlu0 %v473
  %v475 = vpop.xlane.xlu0 %474
  %v476 = vsel %vm128, %v466, 0.0
  %477 = vadd.xlane.f32.xlu0 %v476
  %v478 = vpop.xlane.xlu0 %477
  %v479 = vsel %vm128, %v467, 0.0
  %480 = vadd.xlane.f32.xlu0 %v479
  %v481 = vpop.xlane.xlu0 %480
  %v482 = vsel %vm128, %v468, 0.0
  %483 = vadd.xlane.f32.xlu0 %v482
  %v484 = vpop.xlane.xlu0 %483
  %v485 = vsel %vm128, %v469, 0.0
  %486 = vadd.xlane.f32.xlu0 %v485
  %v487 = vpop.xlane.xlu0 %486
  %v488 = vsel %vm128, %v470, 0.0
  %489 = vadd.xlane.f32.xlu0 %v488
  %v490 = vpop.xlane.xlu0 %489
  %v491 = vsel %vm128, %v471, 0.0
  %492 = vadd.xlane.f32.xlu0 %v491
  %v493 = vpop.xlane.xlu0 %492
  %v494 = vsel %vm128, %v472, 0.0
  %495 = vadd.xlane.f32.xlu0 %v494
  %v496 = vpop.xlane.xlu0 %495
  %v497 = vadd.s32 %v56, 3
  %v498 = vadd.s32 %v57, 3
  %v499 = vadd.s32 %v58, 3
  %v500 = vadd.s32 %v59, 3
  %v501 = vadd.s32 %v60, 3
  %v502 = vadd.s32 %v61, 3
  %v503 = vadd.s32 %v62, 3
  %v504 = vadd.s32 %v63, 3
  %505 = vset.pattern.permute.xlu0 0
  %506 = vperm.xlu0 %505, %v497
  %v507 = vpop.permute.xlu0 %506
  %508 = vset.pattern.permute.xlu0 0
  %509 = vperm.xlu0 %508, %v498
  %v510 = vpop.permute.xlu0 %509
  %511 = vset.pattern.permute.xlu0 0
  %512 = vperm.xlu0 %511, %v499
  %v513 = vpop.permute.xlu0 %512
  %514 = vset.pattern.permute.xlu0 0
  %515 = vperm.xlu0 %514, %v500
  %v516 = vpop.permute.xlu0 %515
  %517 = vset.pattern.permute.xlu0 0
  %518 = vperm.xlu0 %517, %v501
  %v519 = vpop.permute.xlu0 %518
  %520 = vset.pattern.permute.xlu0 0
  %521 = vperm.xlu0 %520, %v502
  %v522 = vpop.permute.xlu0 %521
  %523 = vset.pattern.permute.xlu0 0
  %524 = vperm.xlu0 %523, %v503
  %v525 = vpop.permute.xlu0 %524
  %526 = vset.pattern.permute.xlu0 0
  %527 = vperm.xlu0 %526, %v504
  %v528 = vpop.permute.xlu0 %527
  %vm529 = vcmp.eq.s32.totalorder %v39, %v507
  %vm530 = vcmp.eq.s32.totalorder %v39, %v510
  %vm531 = vcmp.eq.s32.totalorder %v39, %v513
  %vm532 = vcmp.eq.s32.totalorder %v39, %v516
  %vm533 = vcmp.eq.s32.totalorder %v39, %v519
  %vm534 = vcmp.eq.s32.totalorder %v39, %v522
  %vm535 = vcmp.eq.s32.totalorder %v39, %v525
  %vm536 = vcmp.eq.s32.totalorder %v39, %v528
  %v537 = vsel %vm529, 1, 0
  %v538 = vsel %vm530, 1, 0
  %v539 = vsel %vm531, 1, 0
  %v540 = vsel %vm532, 1, 0
  %v541 = vsel %vm533, 1, 0
  %v542 = vsel %vm534, 1, 0
  %v543 = vsel %vm535, 1, 0
  %v544 = vsel %vm536, 1, 0
  %v545 = vcvt.s32.f32 %v537
  %v546 = vcvt.s32.f32 %v538
  %v547 = vcvt.s32.f32 %v539
  %v548 = vcvt.s32.f32 %v540
  %v549 = vcvt.s32.f32 %v541
  %v550 = vcvt.s32.f32 %v542
  %v551 = vcvt.s32.f32 %v543
  %v552 = vcvt.s32.f32 %v544
  %v553 = vmul.f32 %v545, %v30
  %v554 = vmul.f32 %v546, %v31
  %v555 = vmul.f32 %v547, %v32
  %v556 = vmul.f32 %v548, %v33
  %v557 = vmul.f32 %v549, %v34
  %v558 = vmul.f32 %v550, %v35
  %v559 = vmul.f32 %v551, %v36
  %v560 = vmul.f32 %v552, %v37
  %v561 = vsel %vm128, %v553, 0.0
  %562 = vadd.xlane.f32.xlu0 %v561
  %v563 = vpop.xlane.xlu0 %562
  %v564 = vsel %vm128, %v554, 0.0
  %565 = vadd.xlane.f32.xlu0 %v564
  %v566 = vpop.xlane.xlu0 %565
  %v567 = vsel %vm128, %v555, 0.0
  %568 = vadd.xlane.f32.xlu0 %v567
  %v569 = vpop.xlane.xlu0 %568
  %v570 = vsel %vm128, %v556, 0.0
  %571 = vadd.xlane.f32.xlu0 %v570
  %v572 = vpop.xlane.xlu0 %571
  %v573 = vsel %vm128, %v557, 0.0
  %574 = vadd.xlane.f32.xlu0 %v573
  %v575 = vpop.xlane.xlu0 %574
  %v576 = vsel %vm128, %v558, 0.0
  %577 = vadd.xlane.f32.xlu0 %v576
  %v578 = vpop.xlane.xlu0 %577
  %v579 = vsel %vm128, %v559, 0.0
  %580 = vadd.xlane.f32.xlu0 %v579
  %v581 = vpop.xlane.xlu0 %580
  %v582 = vsel %vm128, %v560, 0.0
  %583 = vadd.xlane.f32.xlu0 %v582
  %v584 = vpop.xlane.xlu0 %583
  %v585 = vsub.f32 1.0, %v48
  %v586 = vsub.f32 1.0, %v49
  %v587 = vsub.f32 1.0, %v50
  %v588 = vsub.f32 1.0, %v51
  %v589 = vsub.f32 1.0, %v52
  %v590 = vsub.f32 1.0, %v53
  %v591 = vsub.f32 1.0, %v54
  %v592 = vsub.f32 1.0, %v55
  %v593 = vmul.f32 %v131, %v585
  %v594 = vmul.f32 %v134, %v586
  %v595 = vmul.f32 %v137, %v587
  %v596 = vmul.f32 %v140, %v588
  %v597 = vmul.f32 %v143, %v589
  %v598 = vmul.f32 %v146, %v590
  %v599 = vmul.f32 %v149, %v591
  %v600 = vmul.f32 %v152, %v592
  %v601 = vmul.f32 %v219, %v48
  %v602 = vmul.f32 %v222, %v49
  %v603 = vmul.f32 %v225, %v50
  %v604 = vmul.f32 %v228, %v51
  %v605 = vmul.f32 %v231, %v52
  %v606 = vmul.f32 %v234, %v53
  %v607 = vmul.f32 %v237, %v54
  %v608 = vmul.f32 %v240, %v55
  %v609 = vadd.f32 %v593, %v601
  %v610 = vadd.f32 %v594, %v602
  %v611 = vadd.f32 %v595, %v603
  %v612 = vadd.f32 %v596, %v604
  %v613 = vadd.f32 %v597, %v605
  %v614 = vadd.f32 %v598, %v606
  %v615 = vadd.f32 %v599, %v607
  %v616 = vadd.f32 %v600, %v608
  %v617 = vmul.f32 %v219, %v585
  %v618 = vmul.f32 %v222, %v586
  %v619 = vmul.f32 %v225, %v587
  %v620 = vmul.f32 %v228, %v588
  %v621 = vmul.f32 %v231, %v589
  %v622 = vmul.f32 %v234, %v590
  %v623 = vmul.f32 %v237, %v591
  %v624 = vmul.f32 %v240, %v592
  %v625 = vmul.f32 %v299, %v48
  %v626 = vmul.f32 %v302, %v49
  %v627 = vmul.f32 %v305, %v50
  %v628 = vmul.f32 %v308, %v51
  %v629 = vmul.f32 %v311, %v52
  %v630 = vmul.f32 %v314, %v53
  %v631 = vmul.f32 %v317, %v54
  %v632 = vmul.f32 %v320, %v55
  %v633 = vadd.f32 %v617, %v625
  %v634 = vadd.f32 %v618, %v626
  %v635 = vadd.f32 %v619, %v627
  %v636 = vadd.f32 %v620, %v628
  %v637 = vadd.f32 %v621, %v629
  %v638 = vadd.f32 %v622, %v630
  %v639 = vadd.f32 %v623, %v631
  %v640 = vadd.f32 %v624, %v632
  %v641 = vmul.f32 %v299, %v585
  %v642 = vmul.f32 %v302, %v586
  %v643 = vmul.f32 %v305, %v587
  %v644 = vmul.f32 %v308, %v588
  %v645 = vmul.f32 %v311, %v589
  %v646 = vmul.f32 %v314, %v590
  %v647 = vmul.f32 %v317, %v591
  %v648 = vmul.f32 %v320, %v592
  %v649 = vmul.f32 %v387, %v48
  %v650 = vmul.f32 %v390, %v49
  %v651 = vmul.f32 %v393, %v50
  %v652 = vmul.f32 %v396, %v51
  %v653 = vmul.f32 %v399, %v52
  %v654 = vmul.f32 %v402, %v53
  %v655 = vmul.f32 %v405, %v54
  %v656 = vmul.f32 %v408, %v55
  %v657 = vadd.f32 %v641, %v649
  %v658 = vadd.f32 %v642, %v650
  %v659 = vadd.f32 %v643, %v651
  %v660 = vadd.f32 %v644, %v652
  %v661 = vadd.f32 %v645, %v653
  %v662 = vadd.f32 %v646, %v654
  %v663 = vadd.f32 %v647, %v655
  %v664 = vadd.f32 %v648, %v656
  %v665 = vmul.f32 %v387, %v585
  %v666 = vmul.f32 %v390, %v586
  %v667 = vmul.f32 %v393, %v587
  %v668 = vmul.f32 %v396, %v588
  %v669 = vmul.f32 %v399, %v589
  %v670 = vmul.f32 %v402, %v590
  %v671 = vmul.f32 %v405, %v591
  %v672 = vmul.f32 %v408, %v592
  %v673 = vmul.f32 %v475, %v48
  %v674 = vmul.f32 %v478, %v49
  %v675 = vmul.f32 %v481, %v50
  %v676 = vmul.f32 %v484, %v51
  %v677 = vmul.f32 %v487, %v52
  %v678 = vmul.f32 %v490, %v53
  %v679 = vmul.f32 %v493, %v54
  %v680 = vmul.f32 %v496, %v55
  %v681 = vadd.f32 %v665, %v673
  %v682 = vadd.f32 %v666, %v674
  %v683 = vadd.f32 %v667, %v675
  %v684 = vadd.f32 %v668, %v676
  %v685 = vadd.f32 %v669, %v677
  %v686 = vadd.f32 %v670, %v678
  %v687 = vadd.f32 %v671, %v679
  %v688 = vadd.f32 %v672, %v680
  %v689 = vmul.f32 %v475, %v585
  %v690 = vmul.f32 %v478, %v586
  %v691 = vmul.f32 %v481, %v587
  %v692 = vmul.f32 %v484, %v588
  %v693 = vmul.f32 %v487, %v589
  %v694 = vmul.f32 %v490, %v590
  %v695 = vmul.f32 %v493, %v591
  %v696 = vmul.f32 %v496, %v592
  %v697 = vmul.f32 %v563, %v48
  %v698 = vmul.f32 %v566, %v49
  %v699 = vmul.f32 %v569, %v50
  %v700 = vmul.f32 %v572, %v51
  %v701 = vmul.f32 %v575, %v52
  %v702 = vmul.f32 %v578, %v53
  %v703 = vmul.f32 %v581, %v54
  %v704 = vmul.f32 %v584, %v55
  %v705 = vadd.f32 %v689, %v697
  %v706 = vadd.f32 %v690, %v698
  %v707 = vadd.f32 %v691, %v699
  %v708 = vadd.f32 %v692, %v700
  %v709 = vadd.f32 %v693, %v701
  %v710 = vadd.f32 %v694, %v702
  %v711 = vadd.f32 %v695, %v703
  %v712 = vadd.f32 %v696, %v704
  %v713 = vld [vmem:[%s1] sm:$0xf]
  %v714 = vld [vmem:[%s1 + $0x4] sm:$0xf]
  %v715 = vld [vmem:[%s1 + $0x8] sm:$0xf]
  %v716 = vld [vmem:[%s1 + $0xc] sm:$0xf]
  %v717 = vld [vmem:[%s1 + $0x10] sm:$0xf]
  %v718 = vld [vmem:[%s1 + $0x14] sm:$0xf]
  %v719 = vld [vmem:[%s1 + $0x18] sm:$0xf]
  %v720 = vld [vmem:[%s1 + $0x1c] sm:$0xf]
  %v721 = vmul.f32 %v20, 0.5
  %v722 = vmul.f32 %v21, 0.5
  %v723 = vmul.f32 %v22, 0.5
  %v724 = vmul.f32 %v23, 0.5
  %v725 = vmul.f32 %v24, 0.5
  %v726 = vmul.f32 %v25, 0.5
  %v727 = vmul.f32 %v26, 0.5
  %v728 = vmul.f32 %v27, 0.5
  %v729 = vfloor.f32 %v721
  %v730 = vfloor.f32 %v722
  %v731 = vfloor.f32 %v723
  %v732 = vfloor.f32 %v724
  %v733 = vfloor.f32 %v725
  %v734 = vfloor.f32 %v726
  %v735 = vfloor.f32 %v727
  %v736 = vfloor.f32 %v728
  %v737 = vsub.f32 %v721, %v729
  %v738 = vsub.f32 %v722, %v730
  %v739 = vsub.f32 %v723, %v731
  %v740 = vsub.f32 %v724, %v732
  %v741 = vsub.f32 %v725, %v733
  %v742 = vsub.f32 %v726, %v734
  %v743 = vsub.f32 %v727, %v735
  %v744 = vsub.f32 %v728, %v736
  %v745 = vcvt.f32.s32.to.zero.pseudo %v729
  %v746 = vcvt.f32.s32.to.zero.pseudo %v730
  %v747 = vcvt.f32.s32.to.zero.pseudo %v731
  %v748 = vcvt.f32.s32.to.zero.pseudo %v732
  %v749 = vcvt.f32.s32.to.zero.pseudo %v733
  %v750 = vcvt.f32.s32.to.zero.pseudo %v734
  %v751 = vcvt.f32.s32.to.zero.pseudo %v735
  %v752 = vcvt.f32.s32.to.zero.pseudo %v736
  %v753 = vadd.s32 %v745, 4294967294
  %v754 = vadd.s32 %v746, 4294967294
  %v755 = vadd.s32 %v747, 4294967294
  %v756 = vadd.s32 %v748, 4294967294
  %v757 = vadd.s32 %v749, 4294967294
  %v758 = vadd.s32 %v750, 4294967294
  %v759 = vadd.s32 %v751, 4294967294
  %v760 = vadd.s32 %v752, 4294967294
  %761 = vset.pattern.permute.xlu0 0
  %762 = vperm.xlu0 %761, %v753
  %v763 = vpop.permute.xlu0 %762
  %764 = vset.pattern.permute.xlu0 0
  %765 = vperm.xlu0 %764, %v754
  %v766 = vpop.permute.xlu0 %765
  %767 = vset.pattern.permute.xlu0 0
  %768 = vperm.xlu0 %767, %v755
  %v769 = vpop.permute.xlu0 %768
  %770 = vset.pattern.permute.xlu0 0
  %771 = vperm.xlu0 %770, %v756
  %v772 = vpop.permute.xlu0 %771
  %773 = vset.pattern.permute.xlu0 0
  %774 = vperm.xlu0 %773, %v757
  %v775 = vpop.permute.xlu0 %774
  %776 = vset.pattern.permute.xlu0 0
  %777 = vperm.xlu0 %776, %v758
  %v778 = vpop.permute.xlu0 %777
  %779 = vset.pattern.permute.xlu0 0
  %780 = vperm.xlu0 %779, %v759
  %v781 = vpop.permute.xlu0 %780
  %782 = vset.pattern.permute.xlu0 0
  %783 = vperm.xlu0 %782, %v760
  %v784 = vpop.permute.xlu0 %783
  %vm785 = vcmp.eq.s32.totalorder %v39, %v763
  %vm786 = vcmp.eq.s32.totalorder %v39, %v766
  %vm787 = vcmp.eq.s32.totalorder %v39, %v769
  %vm788 = vcmp.eq.s32.totalorder %v39, %v772
  %vm789 = vcmp.eq.s32.totalorder %v39, %v775
  %vm790 = vcmp.eq.s32.totalorder %v39, %v778
  %vm791 = vcmp.eq.s32.totalorder %v39, %v781
  %vm792 = vcmp.eq.s32.totalorder %v39, %v784
  %v793 = vsel %vm785, 1, 0
  %v794 = vsel %vm786, 1, 0
  %v795 = vsel %vm787, 1, 0
  %v796 = vsel %vm788, 1, 0
  %v797 = vsel %vm789, 1, 0
  %v798 = vsel %vm790, 1, 0
  %v799 = vsel %vm791, 1, 0
  %v800 = vsel %vm792, 1, 0
  %v801 = vcvt.s32.f32 %v793
  %v802 = vcvt.s32.f32 %v794
  %v803 = vcvt.s32.f32 %v795
  %v804 = vcvt.s32.f32 %v796
  %v805 = vcvt.s32.f32 %v797
  %v806 = vcvt.s32.f32 %v798
  %v807 = vcvt.s32.f32 %v799
  %v808 = vcvt.s32.f32 %v800
  %v809 = vmul.f32 %v801, %v713
  %v810 = vmul.f32 %v802, %v714
  %v811 = vmul.f32 %v803, %v715
  %v812 = vmul.f32 %v804, %v716
  %v813 = vmul.f32 %v805, %v717
  %v814 = vmul.f32 %v806, %v718
  %v815 = vmul.f32 %v807, %v719
  %v816 = vmul.f32 %v808, %v720
  %vm817 = vcmask 11264
  %v818 = vsel %vm817, %v809, 0.0
  %819 = vadd.xlane.f32.xlu0 %v818
  %v820 = vpop.xlane.xlu0 %819
  %v821 = vsel %vm817, %v810, 0.0
  %822 = vadd.xlane.f32.xlu0 %v821
  %v823 = vpop.xlane.xlu0 %822
  %v824 = vsel %vm817, %v811, 0.0
  %825 = vadd.xlane.f32.xlu0 %v824
  %v826 = vpop.xlane.xlu0 %825
  %v827 = vsel %vm817, %v812, 0.0
  %828 = vadd.xlane.f32.xlu0 %v827
  %v829 = vpop.xlane.xlu0 %828
  %v830 = vsel %vm817, %v813, 0.0
  %831 = vadd.xlane.f32.xlu0 %v830
  %v832 = vpop.xlane.xlu0 %831
  %v833 = vsel %vm817, %v814, 0.0
  %834 = vadd.xlane.f32.xlu0 %v833
  %v835 = vpop.xlane.xlu0 %834
  %v836 = vsel %vm817, %v815, 0.0
  %837 = vadd.xlane.f32.xlu0 %v836
  %v838 = vpop.xlane.xlu0 %837
  %v839 = vsel %vm817, %v816, 0.0
  %840 = vadd.xlane.f32.xlu0 %v839
  %v841 = vpop.xlane.xlu0 %840
  %v842 = vadd.s32 %v745, 4294967295
  %v843 = vadd.s32 %v746, 4294967295
  %v844 = vadd.s32 %v747, 4294967295
  %v845 = vadd.s32 %v748, 4294967295
  %v846 = vadd.s32 %v749, 4294967295
  %v847 = vadd.s32 %v750, 4294967295
  %v848 = vadd.s32 %v751, 4294967295
  %v849 = vadd.s32 %v752, 4294967295
  %850 = vset.pattern.permute.xlu0 0
  %851 = vperm.xlu0 %850, %v842
  %v852 = vpop.permute.xlu0 %851
  %853 = vset.pattern.permute.xlu0 0
  %854 = vperm.xlu0 %853, %v843
  %v855 = vpop.permute.xlu0 %854
  %856 = vset.pattern.permute.xlu0 0
  %857 = vperm.xlu0 %856, %v844
  %v858 = vpop.permute.xlu0 %857
  %859 = vset.pattern.permute.xlu0 0
  %860 = vperm.xlu0 %859, %v845
  %v861 = vpop.permute.xlu0 %860
  %862 = vset.pattern.permute.xlu0 0
  %863 = vperm.xlu0 %862, %v846
  %v864 = vpop.permute.xlu0 %863
  %865 = vset.pattern.permute.xlu0 0
  %866 = vperm.xlu0 %865, %v847
  %v867 = vpop.permute.xlu0 %866
  %868 = vset.pattern.permute.xlu0 0
  %869 = vperm.xlu0 %868, %v848
  %v870 = vpop.permute.xlu0 %869
  %871 = vset.pattern.permute.xlu0 0
  %872 = vperm.xlu0 %871, %v849
  %v873 = vpop.permute.xlu0 %872
  %vm874 = vcmp.eq.s32.totalorder %v39, %v852
  %vm875 = vcmp.eq.s32.totalorder %v39, %v855
  %vm876 = vcmp.eq.s32.totalorder %v39, %v858
  %vm877 = vcmp.eq.s32.totalorder %v39, %v861
  %vm878 = vcmp.eq.s32.totalorder %v39, %v864
  %vm879 = vcmp.eq.s32.totalorder %v39, %v867
  %vm880 = vcmp.eq.s32.totalorder %v39, %v870
  %vm881 = vcmp.eq.s32.totalorder %v39, %v873
  %v882 = vsel %vm874, 1, 0
  %v883 = vsel %vm875, 1, 0
  %v884 = vsel %vm876, 1, 0
  %v885 = vsel %vm877, 1, 0
  %v886 = vsel %vm878, 1, 0
  %v887 = vsel %vm879, 1, 0
  %v888 = vsel %vm880, 1, 0
  %v889 = vsel %vm881, 1, 0
  %v890 = vcvt.s32.f32 %v882
  %v891 = vcvt.s32.f32 %v883
  %v892 = vcvt.s32.f32 %v884
  %v893 = vcvt.s32.f32 %v885
  %v894 = vcvt.s32.f32 %v886
  %v895 = vcvt.s32.f32 %v887
  %v896 = vcvt.s32.f32 %v888
  %v897 = vcvt.s32.f32 %v889
  %v898 = vmul.f32 %v890, %v713
  %v899 = vmul.f32 %v891, %v714
  %v900 = vmul.f32 %v892, %v715
  %v901 = vmul.f32 %v893, %v716
  %v902 = vmul.f32 %v894, %v717
  %v903 = vmul.f32 %v895, %v718
  %v904 = vmul.f32 %v896, %v719
  %v905 = vmul.f32 %v897, %v720
  %v906 = vsel %vm817, %v898, 0.0
  %907 = vadd.xlane.f32.xlu0 %v906
  %v908 = vpop.xlane.xlu0 %907
  %v909 = vsel %vm817, %v899, 0.0
  %910 = vadd.xlane.f32.xlu0 %v909
  %v911 = vpop.xlane.xlu0 %910
  %v912 = vsel %vm817, %v900, 0.0
  %913 = vadd.xlane.f32.xlu0 %v912
  %v914 = vpop.xlane.xlu0 %913
  %v915 = vsel %vm817, %v901, 0.0
  %916 = vadd.xlane.f32.xlu0 %v915
  %v917 = vpop.xlane.xlu0 %916
  %v918 = vsel %vm817, %v902, 0.0
  %919 = vadd.xlane.f32.xlu0 %v918
  %v920 = vpop.xlane.xlu0 %919
  %v921 = vsel %vm817, %v903, 0.0
  %922 = vadd.xlane.f32.xlu0 %v921
  %v923 = vpop.xlane.xlu0 %922
  %v924 = vsel %vm817, %v904, 0.0
  %925 = vadd.xlane.f32.xlu0 %v924
  %v926 = vpop.xlane.xlu0 %925
  %v927 = vsel %vm817, %v905, 0.0
  %928 = vadd.xlane.f32.xlu0 %v927
  %v929 = vpop.xlane.xlu0 %928
  %930 = vset.pattern.permute.xlu0 0
  %931 = vperm.xlu0 %930, %v745
  %v932 = vpop.permute.xlu0 %931
  %933 = vset.pattern.permute.xlu0 0
  %934 = vperm.xlu0 %933, %v746
  %v935 = vpop.permute.xlu0 %934
  %936 = vset.pattern.permute.xlu0 0
  %937 = vperm.xlu0 %936, %v747
  %v938 = vpop.permute.xlu0 %937
  %939 = vset.pattern.permute.xlu0 0
  %940 = vperm.xlu0 %939, %v748
  %v941 = vpop.permute.xlu0 %940
  %942 = vset.pattern.permute.xlu0 0
  %943 = vperm.xlu0 %942, %v749
  %v944 = vpop.permute.xlu0 %943
  %945 = vset.pattern.permute.xlu0 0
  %946 = vperm.xlu0 %945, %v750
  %v947 = vpop.permute.xlu0 %946
  %948 = vset.pattern.permute.xlu0 0
  %949 = vperm.xlu0 %948, %v751
  %v950 = vpop.permute.xlu0 %949
  %951 = vset.pattern.permute.xlu0 0
  %952 = vperm.xlu0 %951, %v752
  %v953 = vpop.permute.xlu0 %952
  %vm954 = vcmp.eq.s32.totalorder %v39, %v932
  %vm955 = vcmp.eq.s32.totalorder %v39, %v935
  %vm956 = vcmp.eq.s32.totalorder %v39, %v938
  %vm957 = vcmp.eq.s32.totalorder %v39, %v941
  %vm958 = vcmp.eq.s32.totalorder %v39, %v944
  %vm959 = vcmp.eq.s32.totalorder %v39, %v947
  %vm960 = vcmp.eq.s32.totalorder %v39, %v950
  %vm961 = vcmp.eq.s32.totalorder %v39, %v953
  %v962 = vsel %vm954, 1, 0
  %v963 = vsel %vm955, 1, 0
  %v964 = vsel %vm956, 1, 0
  %v965 = vsel %vm957, 1, 0
  %v966 = vsel %vm958, 1, 0
  %v967 = vsel %vm959, 1, 0
  %v968 = vsel %vm960, 1, 0
  %v969 = vsel %vm961, 1, 0
  %v970 = vcvt.s32.f32 %v962
  %v971 = vcvt.s32.f32 %v963
  %v972 = vcvt.s32.f32 %v964
  %v973 = vcvt.s32.f32 %v965
  %v974 = vcvt.s32.f32 %v966
  %v975 = vcvt.s32.f32 %v967
  %v976 = vcvt.s32.f32 %v968
  %v977 = vcvt.s32.f32 %v969
  %v978 = vmul.f32 %v970, %v713
  %v979 = vmul.f32 %v971, %v714
  %v980 = vmul.f32 %v972, %v715
  %v981 = vmul.f32 %v973, %v716
  %v982 = vmul.f32 %v974, %v717
  %v983 = vmul.f32 %v975, %v718
  %v984 = vmul.f32 %v976, %v719
  %v985 = vmul.f32 %v977, %v720
  %v986 = vsel %vm817, %v978, 0.0
  %987 = vadd.xlane.f32.xlu0 %v986
  %v988 = vpop.xlane.xlu0 %987
  %v989 = vsel %vm817, %v979, 0.0
  %990 = vadd.xlane.f32.xlu0 %v989
  %v991 = vpop.xlane.xlu0 %990
  %v992 = vsel %vm817, %v980, 0.0
  %993 = vadd.xlane.f32.xlu0 %v992
  %v994 = vpop.xlane.xlu0 %993
  %v995 = vsel %vm817, %v981, 0.0
  %996 = vadd.xlane.f32.xlu0 %v995
  %v997 = vpop.xlane.xlu0 %996
  %v998 = vsel %vm817, %v982, 0.0
  %999 = vadd.xlane.f32.xlu0 %v998
  %v1000 = vpop.xlane.xlu0 %999
  %v1001 = vsel %vm817, %v983, 0.0
  %1002 = vadd.xlane.f32.xlu0 %v1001
  %v1003 = vpop.xlane.xlu0 %1002
  %v1004 = vsel %vm817, %v984, 0.0
  %1005 = vadd.xlane.f32.xlu0 %v1004
  %v1006 = vpop.xlane.xlu0 %1005
  %v1007 = vsel %vm817, %v985, 0.0
  %1008 = vadd.xlane.f32.xlu0 %v1007
  %v1009 = vpop.xlane.xlu0 %1008
  %v1010 = vadd.s32 %v745, 1
  %v1011 = vadd.s32 %v746, 1
  %v1012 = vadd.s32 %v747, 1
  %v1013 = vadd.s32 %v748, 1
  %v1014 = vadd.s32 %v749, 1
  %v1015 = vadd.s32 %v750, 1
  %v1016 = vadd.s32 %v751, 1
  %v1017 = vadd.s32 %v752, 1
  %1018 = vset.pattern.permute.xlu0 0
  %1019 = vperm.xlu0 %1018, %v1010
  %v1020 = vpop.permute.xlu0 %1019
  %1021 = vset.pattern.permute.xlu0 0
  %1022 = vperm.xlu0 %1021, %v1011
  %v1023 = vpop.permute.xlu0 %1022
  %1024 = vset.pattern.permute.xlu0 0
  %1025 = vperm.xlu0 %1024, %v1012
  %v1026 = vpop.permute.xlu0 %1025
  %1027 = vset.pattern.permute.xlu0 0
  %1028 = vperm.xlu0 %1027, %v1013
  %v1029 = vpop.permute.xlu0 %1028
  %1030 = vset.pattern.permute.xlu0 0
  %1031 = vperm.xlu0 %1030, %v1014
  %v1032 = vpop.permute.xlu0 %1031
  %1033 = vset.pattern.permute.xlu0 0
  %1034 = vperm.xlu0 %1033, %v1015
  %v1035 = vpop.permute.xlu0 %1034
  %1036 = vset.pattern.permute.xlu0 0
  %1037 = vperm.xlu0 %1036, %v1016
  %v1038 = vpop.permute.xlu0 %1037
  %1039 = vset.pattern.permute.xlu0 0
  %1040 = vperm.xlu0 %1039, %v1017
  %v1041 = vpop.permute.xlu0 %1040
  %vm1042 = vcmp.eq.s32.totalorder %v39, %v1020
  %vm1043 = vcmp.eq.s32.totalorder %v39, %v1023
  %vm1044 = vcmp.eq.s32.totalorder %v39, %v1026
  %vm1045 = vcmp.eq.s32.totalorder %v39, %v1029
  %vm1046 = vcmp.eq.s32.totalorder %v39, %v1032
  %vm1047 = vcmp.eq.s32.totalorder %v39, %v1035
  %vm1048 = vcmp.eq.s32.totalorder %v39, %v1038
  %vm1049 = vcmp.eq.s32.totalorder %v39, %v1041
  %v1050 = vsel %vm1042, 1, 0
  %v1051 = vsel %vm1043, 1, 0
  %v1052 = vsel %vm1044, 1, 0
  %v1053 = vsel %vm1045, 1, 0
  %v1054 = vsel %vm1046, 1, 0
  %v1055 = vsel %vm1047, 1, 0
  %v1056 = vsel %vm1048, 1, 0
  %v1057 = vsel %vm1049, 1, 0
  %v1058 = vcvt.s32.f32 %v1050
  %v1059 = vcvt.s32.f32 %v1051
  %v1060 = vcvt.s32.f32 %v1052
  %v1061 = vcvt.s32.f32 %v1053
  %v1062 = vcvt.s32.f32 %v1054
  %v1063 = vcvt.s32.f32 %v1055
  %v1064 = vcvt.s32.f32 %v1056
  %v1065 = vcvt.s32.f32 %v1057
  %v1066 = vmul.f32 %v1058, %v713
  %v1067 = vmul.f32 %v1059, %v714
  %v1068 = vmul.f32 %v1060, %v715
  %v1069 = vmul.f32 %v1061, %v716
  %v1070 = vmul.f32 %v1062, %v717
  %v1071 = vmul.f32 %v1063, %v718
  %v1072 = vmul.f32 %v1064, %v719
  %v1073 = vmul.f32 %v1065, %v720
  %v1074 = vsel %vm817, %v1066, 0.0
  %1075 = vadd.xlane.f32.xlu0 %v1074
  %v1076 = vpop.xlane.xlu0 %1075
  %v1077 = vsel %vm817, %v1067, 0.0
  %1078 = vadd.xlane.f32.xlu0 %v1077
  %v1079 = vpop.xlane.xlu0 %1078
  %v1080 = vsel %vm817, %v1068, 0.0
  %1081 = vadd.xlane.f32.xlu0 %v1080
  %v1082 = vpop.xlane.xlu0 %1081
  %v1083 = vsel %vm817, %v1069, 0.0
  %1084 = vadd.xlane.f32.xlu0 %v1083
  %v1085 = vpop.xlane.xlu0 %1084
  %v1086 = vsel %vm817, %v1070, 0.0
  %1087 = vadd.xlane.f32.xlu0 %v1086
  %v1088 = vpop.xlane.xlu0 %1087
  %v1089 = vsel %vm817, %v1071, 0.0
  %1090 = vadd.xlane.f32.xlu0 %v1089
  %v1091 = vpop.xlane.xlu0 %1090
  %v1092 = vsel %vm817, %v1072, 0.0
  %1093 = vadd.xlane.f32.xlu0 %v1092
  %v1094 = vpop.xlane.xlu0 %1093
  %v1095 = vsel %vm817, %v1073, 0.0
  %1096 = vadd.xlane.f32.xlu0 %v1095
  %v1097 = vpop.xlane.xlu0 %1096
  %v1098 = vadd.s32 %v745, 2
  %v1099 = vadd.s32 %v746, 2
  %v1100 = vadd.s32 %v747, 2
  %v1101 = vadd.s32 %v748, 2
  %v1102 = vadd.s32 %v749, 2
  %v1103 = vadd.s32 %v750, 2
  %v1104 = vadd.s32 %v751, 2
  %v1105 = vadd.s32 %v752, 2
  %1106 = vset.pattern.permute.xlu0 0
  %1107 = vperm.xlu0 %1106, %v1098
  %v1108 = vpop.permute.xlu0 %1107
  %1109 = vset.pattern.permute.xlu0 0
  %1110 = vperm.xlu0 %1109, %v1099
  %v1111 = vpop.permute.xlu0 %1110
  %1112 = vset.pattern.permute.xlu0 0
  %1113 = vperm.xlu0 %1112, %v1100
  %v1114 = vpop.permute.xlu0 %1113
  %1115 = vset.pattern.permute.xlu0 0
  %1116 = vperm.xlu0 %1115, %v1101
  %v1117 = vpop.permute.xlu0 %1116
  %1118 = vset.pattern.permute.xlu0 0
  %1119 = vperm.xlu0 %1118, %v1102
  %v1120 = vpop.permute.xlu0 %1119
  %1121 = vset.pattern.permute.xlu0 0
  %1122 = vperm.xlu0 %1121, %v1103
  %v1123 = vpop.permute.xlu0 %1122
  %1124 = vset.pattern.permute.xlu0 0
  %1125 = vperm.xlu0 %1124, %v1104
  %v1126 = vpop.permute.xlu0 %1125
  %1127 = vset.pattern.permute.xlu0 0
  %1128 = vperm.xlu0 %1127, %v1105
  %v1129 = vpop.permute.xlu0 %1128
  %vm1130 = vcmp.eq.s32.totalorder %v39, %v1108
  %vm1131 = vcmp.eq.s32.totalorder %v39, %v1111
  %vm1132 = vcmp.eq.s32.totalorder %v39, %v1114
  %vm1133 = vcmp.eq.s32.totalorder %v39, %v1117
  %vm1134 = vcmp.eq.s32.totalorder %v39, %v1120
  %vm1135 = vcmp.eq.s32.totalorder %v39, %v1123
  %vm1136 = vcmp.eq.s32.totalorder %v39, %v1126
  %vm1137 = vcmp.eq.s32.totalorder %v39, %v1129
  %v1138 = vsel %vm1130, 1, 0
  %v1139 = vsel %vm1131, 1, 0
  %v1140 = vsel %vm1132, 1, 0
  %v1141 = vsel %vm1133, 1, 0
  %v1142 = vsel %vm1134, 1, 0
  %v1143 = vsel %vm1135, 1, 0
  %v1144 = vsel %vm1136, 1, 0
  %v1145 = vsel %vm1137, 1, 0
  %v1146 = vcvt.s32.f32 %v1138
  %v1147 = vcvt.s32.f32 %v1139
  %v1148 = vcvt.s32.f32 %v1140
  %v1149 = vcvt.s32.f32 %v1141
  %v1150 = vcvt.s32.f32 %v1142
  %v1151 = vcvt.s32.f32 %v1143
  %v1152 = vcvt.s32.f32 %v1144
  %v1153 = vcvt.s32.f32 %v1145
  %v1154 = vmul.f32 %v1146, %v713
  %v1155 = vmul.f32 %v1147, %v714
  %v1156 = vmul.f32 %v1148, %v715
  %v1157 = vmul.f32 %v1149, %v716
  %v1158 = vmul.f32 %v1150, %v717
  %v1159 = vmul.f32 %v1151, %v718
  %v1160 = vmul.f32 %v1152, %v719
  %v1161 = vmul.f32 %v1153, %v720
  %v1162 = vsel %vm817, %v1154, 0.0
  %1163 = vadd.xlane.f32.xlu0 %v1162
  %v1164 = vpop.xlane.xlu0 %1163
  %v1165 = vsel %vm817, %v1155, 0.0
  %1166 = vadd.xlane.f32.xlu0 %v1165
  %v1167 = vpop.xlane.xlu0 %1166
  %v1168 = vsel %vm817, %v1156, 0.0
  %1169 = vadd.xlane.f32.xlu0 %v1168
  %v1170 = vpop.xlane.xlu0 %1169
  %v1171 = vsel %vm817, %v1157, 0.0
  %1172 = vadd.xlane.f32.xlu0 %v1171
  %v1173 = vpop.xlane.xlu0 %1172
  %v1174 = vsel %vm817, %v1158, 0.0
  %1175 = vadd.xlane.f32.xlu0 %v1174
  %v1176 = vpop.xlane.xlu0 %1175
  %v1177 = vsel %vm817, %v1159, 0.0
  %1178 = vadd.xlane.f32.xlu0 %v1177
  %v1179 = vpop.xlane.xlu0 %1178
  %v1180 = vsel %vm817, %v1160, 0.0
  %1181 = vadd.xlane.f32.xlu0 %v1180
  %v1182 = vpop.xlane.xlu0 %1181
  %v1183 = vsel %vm817, %v1161, 0.0
  %1184 = vadd.xlane.f32.xlu0 %v1183
  %v1185 = vpop.xlane.xlu0 %1184
  %v1186 = vadd.s32 %v745, 3
  %v1187 = vadd.s32 %v746, 3
  %v1188 = vadd.s32 %v747, 3
  %v1189 = vadd.s32 %v748, 3
  %v1190 = vadd.s32 %v749, 3
  %v1191 = vadd.s32 %v750, 3
  %v1192 = vadd.s32 %v751, 3
  %v1193 = vadd.s32 %v752, 3
  %1194 = vset.pattern.permute.xlu0 0
  %1195 = vperm.xlu0 %1194, %v1186
  %v1196 = vpop.permute.xlu0 %1195
  %1197 = vset.pattern.permute.xlu0 0
  %1198 = vperm.xlu0 %1197, %v1187
  %v1199 = vpop.permute.xlu0 %1198
  %1200 = vset.pattern.permute.xlu0 0
  %1201 = vperm.xlu0 %1200, %v1188
  %v1202 = vpop.permute.xlu0 %1201
  %1203 = vset.pattern.permute.xlu0 0
  %1204 = vperm.xlu0 %1203, %v1189
  %v1205 = vpop.permute.xlu0 %1204
  %1206 = vset.pattern.permute.xlu0 0
  %1207 = vperm.xlu0 %1206, %v1190
  %v1208 = vpop.permute.xlu0 %1207
  %1209 = vset.pattern.permute.xlu0 0
  %1210 = vperm.xlu0 %1209, %v1191
  %v1211 = vpop.permute.xlu0 %1210
  %1212 = vset.pattern.permute.xlu0 0
  %1213 = vperm.xlu0 %1212, %v1192
  %v1214 = vpop.permute.xlu0 %1213
  %1215 = vset.pattern.permute.xlu0 0
  %1216 = vperm.xlu0 %1215, %v1193
  %v1217 = vpop.permute.xlu0 %1216
  %vm1218 = vcmp.eq.s32.totalorder %v39, %v1196
  %vm1219 = vcmp.eq.s32.totalorder %v39, %v1199
  %vm1220 = vcmp.eq.s32.totalorder %v39, %v1202
  %vm1221 = vcmp.eq.s32.totalorder %v39, %v1205
  %vm1222 = vcmp.eq.s32.totalorder %v39, %v1208
  %vm1223 = vcmp.eq.s32.totalorder %v39, %v1211
  %vm1224 = vcmp.eq.s32.totalorder %v39, %v1214
  %vm1225 = vcmp.eq.s32.totalorder %v39, %v1217
  %v1226 = vsel %vm1218, 1, 0
  %v1227 = vsel %vm1219, 1, 0
  %v1228 = vsel %vm1220, 1, 0
  %v1229 = vsel %vm1221, 1, 0
  %v1230 = vsel %vm1222, 1, 0
  %v1231 = vsel %vm1223, 1, 0
  %v1232 = vsel %vm1224, 1, 0
  %v1233 = vsel %vm1225, 1, 0
  %v1234 = vcvt.s32.f32 %v1226
  %v1235 = vcvt.s32.f32 %v1227
  %v1236 = vcvt.s32.f32 %v1228
  %v1237 = vcvt.s32.f32 %v1229
  %v1238 = vcvt.s32.f32 %v1230
  %v1239 = vcvt.s32.f32 %v1231
  %v1240 = vcvt.s32.f32 %v1232
  %v1241 = vcvt.s32.f32 %v1233
  %v1242 = vmul.f32 %v1234, %v713
  %v1243 = vmul.f32 %v1235, %v714
  %v1244 = vmul.f32 %v1236, %v715
  %v1245 = vmul.f32 %v1237, %v716
  %v1246 = vmul.f32 %v1238, %v717
  %v1247 = vmul.f32 %v1239, %v718
  %v1248 = vmul.f32 %v1240, %v719
  %v1249 = vmul.f32 %v1241, %v720
  %v1250 = vsel %vm817, %v1242, 0.0
  %1251 = vadd.xlane.f32.xlu0 %v1250
  %v1252 = vpop.xlane.xlu0 %1251
  %v1253 = vsel %vm817, %v1243, 0.0
  %1254 = vadd.xlane.f32.xlu0 %v1253
  %v1255 = vpop.xlane.xlu0 %1254
  %v1256 = vsel %vm817, %v1244, 0.0
  %1257 = vadd.xlane.f32.xlu0 %v1256
  %v1258 = vpop.xlane.xlu0 %1257
  %v1259 = vsel %vm817, %v1245, 0.0
  %1260 = vadd.xlane.f32.xlu0 %v1259
  %v1261 = vpop.xlane.xlu0 %1260
  %v1262 = vsel %vm817, %v1246, 0.0
  %1263 = vadd.xlane.f32.xlu0 %v1262
  %v1264 = vpop.xlane.xlu0 %1263
  %v1265 = vsel %vm817, %v1247, 0.0
  %1266 = vadd.xlane.f32.xlu0 %v1265
  %v1267 = vpop.xlane.xlu0 %1266
  %v1268 = vsel %vm817, %v1248, 0.0
  %1269 = vadd.xlane.f32.xlu0 %v1268
  %v1270 = vpop.xlane.xlu0 %1269
  %v1271 = vsel %vm817, %v1249, 0.0
  %1272 = vadd.xlane.f32.xlu0 %v1271
  %v1273 = vpop.xlane.xlu0 %1272
  %v1274 = vsub.f32 1.0, %v737
  %v1275 = vsub.f32 1.0, %v738
  %v1276 = vsub.f32 1.0, %v739
  %v1277 = vsub.f32 1.0, %v740
  %v1278 = vsub.f32 1.0, %v741
  %v1279 = vsub.f32 1.0, %v742
  %v1280 = vsub.f32 1.0, %v743
  %v1281 = vsub.f32 1.0, %v744
  %v1282 = vmul.f32 %v820, %v1274
  %v1283 = vmul.f32 %v823, %v1275
  %v1284 = vmul.f32 %v826, %v1276
  %v1285 = vmul.f32 %v829, %v1277
  %v1286 = vmul.f32 %v832, %v1278
  %v1287 = vmul.f32 %v835, %v1279
  %v1288 = vmul.f32 %v838, %v1280
  %v1289 = vmul.f32 %v841, %v1281
  %v1290 = vmul.f32 %v908, %v737
  %v1291 = vmul.f32 %v911, %v738
  %v1292 = vmul.f32 %v914, %v739
  %v1293 = vmul.f32 %v917, %v740
  %v1294 = vmul.f32 %v920, %v741
  %v1295 = vmul.f32 %v923, %v742
  %v1296 = vmul.f32 %v926, %v743
  %v1297 = vmul.f32 %v929, %v744
  %v1298 = vadd.f32 %v1282, %v1290
  %v1299 = vadd.f32 %v1283, %v1291
  %v1300 = vadd.f32 %v1284, %v1292
  %v1301 = vadd.f32 %v1285, %v1293
  %v1302 = vadd.f32 %v1286, %v1294
  %v1303 = vadd.f32 %v1287, %v1295
  %v1304 = vadd.f32 %v1288, %v1296
  %v1305 = vadd.f32 %v1289, %v1297
  %v1306 = vmul.f32 %v908, %v1274
  %v1307 = vmul.f32 %v911, %v1275
  %v1308 = vmul.f32 %v914, %v1276
  %v1309 = vmul.f32 %v917, %v1277
  %v1310 = vmul.f32 %v920, %v1278
  %v1311 = vmul.f32 %v923, %v1279
  %v1312 = vmul.f32 %v926, %v1280
  %v1313 = vmul.f32 %v929, %v1281
  %v1314 = vmul.f32 %v988, %v737
  %v1315 = vmul.f32 %v991, %v738
  %v1316 = vmul.f32 %v994, %v739
  %v1317 = vmul.f32 %v997, %v740
  %v1318 = vmul.f32 %v1000, %v741
  %v1319 = vmul.f32 %v1003, %v742
  %v1320 = vmul.f32 %v1006, %v743
  %v1321 = vmul.f32 %v1009, %v744
  %v1322 = vadd.f32 %v1306, %v1314
  %v1323 = vadd.f32 %v1307, %v1315
  %v1324 = vadd.f32 %v1308, %v1316
  %v1325 = vadd.f32 %v1309, %v1317
  %v1326 = vadd.f32 %v1310, %v1318
  %v1327 = vadd.f32 %v1311, %v1319
  %v1328 = vadd.f32 %v1312, %v1320
  %v1329 = vadd.f32 %v1313, %v1321
  %v1330 = vmul.f32 %v988, %v1274
  %v1331 = vmul.f32 %v991, %v1275
  %v1332 = vmul.f32 %v994, %v1276
  %v1333 = vmul.f32 %v997, %v1277
  %v1334 = vmul.f32 %v1000, %v1278
  %v1335 = vmul.f32 %v1003, %v1279
  %v1336 = vmul.f32 %v1006, %v1280
  %v1337 = vmul.f32 %v1009, %v1281
  %v1338 = vmul.f32 %v1076, %v737
  %v1339 = vmul.f32 %v1079, %v738
  %v1340 = vmul.f32 %v1082, %v739
  %v1341 = vmul.f32 %v1085, %v740
  %v1342 = vmul.f32 %v1088, %v741
  %v1343 = vmul.f32 %v1091, %v742
  %v1344 = vmul.f32 %v1094, %v743
  %v1345 = vmul.f32 %v1097, %v744
  %v1346 = vadd.f32 %v1330, %v1338
  %v1347 = vadd.f32 %v1331, %v1339
  %v1348 = vadd.f32 %v1332, %v1340
  %v1349 = vadd.f32 %v1333, %v1341
  %v1350 = vadd.f32 %v1334, %v1342
  %v1351 = vadd.f32 %v1335, %v1343
  %v1352 = vadd.f32 %v1336, %v1344
  %v1353 = vadd.f32 %v1337, %v1345
  %v1354 = vmul.f32 %v1076, %v1274
  %v1355 = vmul.f32 %v1079, %v1275
  %v1356 = vmul.f32 %v1082, %v1276
  %v1357 = vmul.f32 %v1085, %v1277
  %v1358 = vmul.f32 %v1088, %v1278
  %v1359 = vmul.f32 %v1091, %v1279
  %v1360 = vmul.f32 %v1094, %v1280
  %v1361 = vmul.f32 %v1097, %v1281
  %v1362 = vmul.f32 %v1164, %v737
  %v1363 = vmul.f32 %v1167, %v738
  %v1364 = vmul.f32 %v1170, %v739
  %v1365 = vmul.f32 %v1173, %v740
  %v1366 = vmul.f32 %v1176, %v741
  %v1367 = vmul.f32 %v1179, %v742
  %v1368 = vmul.f32 %v1182, %v743
  %v1369 = vmul.f32 %v1185, %v744
  %v1370 = vadd.f32 %v1354, %v1362
  %v1371 = vadd.f32 %v1355, %v1363
  %v1372 = vadd.f32 %v1356, %v1364
  %v1373 = vadd.f32 %v1357, %v1365
  %v1374 = vadd.f32 %v1358, %v1366
  %v1375 = vadd.f32 %v1359, %v1367
  %v1376 = vadd.f32 %v1360, %v1368
  %v1377 = vadd.f32 %v1361, %v1369
  %v1378 = vmul.f32 %v1164, %v1274
  %v1379 = vmul.f32 %v1167, %v1275
  %v1380 = vmul.f32 %v1170, %v1276
  %v1381 = vmul.f32 %v1173, %v1277
  %v1382 = vmul.f32 %v1176, %v1278
  %v1383 = vmul.f32 %v1179, %v1279
  %v1384 = vmul.f32 %v1182, %v1280
  %v1385 = vmul.f32 %v1185, %v1281
  %v1386 = vmul.f32 %v1252, %v737
  %v1387 = vmul.f32 %v1255, %v738
  %v1388 = vmul.f32 %v1258, %v739
  %v1389 = vmul.f32 %v1261, %v740
  %v1390 = vmul.f32 %v1264, %v741
  %v1391 = vmul.f32 %v1267, %v742
  %v1392 = vmul.f32 %v1270, %v743
  %v1393 = vmul.f32 %v1273, %v744
  %v1394 = vadd.f32 %v1378, %v1386
  %v1395 = vadd.f32 %v1379, %v1387
  %v1396 = vadd.f32 %v1380, %v1388
  %v1397 = vadd.f32 %v1381, %v1389
  %v1398 = vadd.f32 %v1382, %v1390
  %v1399 = vadd.f32 %v1383, %v1391
  %v1400 = vadd.f32 %v1384, %v1392
  %v1401 = vadd.f32 %v1385, %v1393
  %1403 = vset.pattern.permute.xlu0 0
  %1404 = vperm.xlu0 %1403, %v609
  %v1405 = vpop.permute.xlu0 %1404
  %1408 = vset.pattern.permute.xlu0 0
  %1409 = vperm.xlu0 %1408, %v610
  %v1410 = vpop.permute.xlu0 %1409
  %1413 = vset.pattern.permute.xlu0 0
  %1414 = vperm.xlu0 %1413, %v611
  %v1415 = vpop.permute.xlu0 %1414
  %1418 = vset.pattern.permute.xlu0 0
  %1419 = vperm.xlu0 %1418, %v612
  %v1420 = vpop.permute.xlu0 %1419
  %1423 = vset.pattern.permute.xlu0 0
  %1424 = vperm.xlu0 %1423, %v613
  %v1425 = vpop.permute.xlu0 %1424
  %1428 = vset.pattern.permute.xlu0 0
  %1429 = vperm.xlu0 %1428, %v614
  %v1430 = vpop.permute.xlu0 %1429
  %1433 = vset.pattern.permute.xlu0 0
  %1434 = vperm.xlu0 %1433, %v615
  %v1435 = vpop.permute.xlu0 %1434
  %1438 = vset.pattern.permute.xlu0 0
  %1439 = vperm.xlu0 %1438, %v616
  %v1440 = vpop.permute.xlu0 %1439
  %v1442 = vlaneseq
  %v1443 = vshrl.u32 %v1442, 7
  %v1444 = vsub.s32 0, %v1443
  %v1445 = vrot.slane %v28, %v1444
  %v1446 = vmul.f32 %v1405, %v1445
  %v1447 = vmul.f32 %v1410, %v1445
  %v1448 = vmul.f32 %v1415, %v1445
  %v1449 = vmul.f32 %v1420, %v1445
  %v1450 = vmul.f32 %v1425, %v1445
  %v1451 = vmul.f32 %v1430, %v1445
  %v1452 = vmul.f32 %v1435, %v1445
  %v1453 = vmul.f32 %v1440, %v1445
  %1455 = vset.pattern.permute.xlu0 0
  %1456 = vperm.xlu0 %1455, %v633
  %v1457 = vpop.permute.xlu0 %1456
  %1460 = vset.pattern.permute.xlu0 0
  %1461 = vperm.xlu0 %1460, %v634
  %v1462 = vpop.permute.xlu0 %1461
  %1465 = vset.pattern.permute.xlu0 0
  %1466 = vperm.xlu0 %1465, %v635
  %v1467 = vpop.permute.xlu0 %1466
  %1470 = vset.pattern.permute.xlu0 0
  %1471 = vperm.xlu0 %1470, %v636
  %v1472 = vpop.permute.xlu0 %1471
  %1475 = vset.pattern.permute.xlu0 0
  %1476 = vperm.xlu0 %1475, %v637
  %v1477 = vpop.permute.xlu0 %1476
  %1480 = vset.pattern.permute.xlu0 0
  %1481 = vperm.xlu0 %1480, %v638
  %v1482 = vpop.permute.xlu0 %1481
  %1485 = vset.pattern.permute.xlu0 0
  %1486 = vperm.xlu0 %1485, %v639
  %v1487 = vpop.permute.xlu0 %1486
  %1490 = vset.pattern.permute.xlu0 0
  %1491 = vperm.xlu0 %1490, %v640
  %v1492 = vpop.permute.xlu0 %1491
  %v1494 = vlaneseq
  %v1495 = vshrl.u32 %v1494, 7
  %v1496 = vsub.s32 1, %v1495
  %v1497 = vrot.slane %v28, %v1496
  %v1498 = vmul.f32 %v1457, %v1497
  %v1499 = vmul.f32 %v1462, %v1497
  %v1500 = vmul.f32 %v1467, %v1497
  %v1501 = vmul.f32 %v1472, %v1497
  %v1502 = vmul.f32 %v1477, %v1497
  %v1503 = vmul.f32 %v1482, %v1497
  %v1504 = vmul.f32 %v1487, %v1497
  %v1505 = vmul.f32 %v1492, %v1497
  %v1506 = vadd.f32 %v1446, %v1498
  %v1507 = vadd.f32 %v1447, %v1499
  %v1508 = vadd.f32 %v1448, %v1500
  %v1509 = vadd.f32 %v1449, %v1501
  %v1510 = vadd.f32 %v1450, %v1502
  %v1511 = vadd.f32 %v1451, %v1503
  %v1512 = vadd.f32 %v1452, %v1504
  %v1513 = vadd.f32 %v1453, %v1505
  %1515 = vset.pattern.permute.xlu0 0
  %1516 = vperm.xlu0 %1515, %v657
  %v1517 = vpop.permute.xlu0 %1516
  %1520 = vset.pattern.permute.xlu0 0
  %1521 = vperm.xlu0 %1520, %v658
  %v1522 = vpop.permute.xlu0 %1521
  %1525 = vset.pattern.permute.xlu0 0
  %1526 = vperm.xlu0 %1525, %v659
  %v1527 = vpop.permute.xlu0 %1526
  %1530 = vset.pattern.permute.xlu0 0
  %1531 = vperm.xlu0 %1530, %v660
  %v1532 = vpop.permute.xlu0 %1531
  %1535 = vset.pattern.permute.xlu0 0
  %1536 = vperm.xlu0 %1535, %v661
  %v1537 = vpop.permute.xlu0 %1536
  %1540 = vset.pattern.permute.xlu0 0
  %1541 = vperm.xlu0 %1540, %v662
  %v1542 = vpop.permute.xlu0 %1541
  %1545 = vset.pattern.permute.xlu0 0
  %1546 = vperm.xlu0 %1545, %v663
  %v1547 = vpop.permute.xlu0 %1546
  %1550 = vset.pattern.permute.xlu0 0
  %1551 = vperm.xlu0 %1550, %v664
  %v1552 = vpop.permute.xlu0 %1551
  %v1554 = vlaneseq
  %v1555 = vshrl.u32 %v1554, 7
  %v1556 = vsub.s32 2, %v1555
  %v1557 = vrot.slane %v28, %v1556
  %v1558 = vmul.f32 %v1517, %v1557
  %v1559 = vmul.f32 %v1522, %v1557
  %v1560 = vmul.f32 %v1527, %v1557
  %v1561 = vmul.f32 %v1532, %v1557
  %v1562 = vmul.f32 %v1537, %v1557
  %v1563 = vmul.f32 %v1542, %v1557
  %v1564 = vmul.f32 %v1547, %v1557
  %v1565 = vmul.f32 %v1552, %v1557
  %v1566 = vadd.f32 %v1506, %v1558
  %v1567 = vadd.f32 %v1507, %v1559
  %v1568 = vadd.f32 %v1508, %v1560
  %v1569 = vadd.f32 %v1509, %v1561
  %v1570 = vadd.f32 %v1510, %v1562
  %v1571 = vadd.f32 %v1511, %v1563
  %v1572 = vadd.f32 %v1512, %v1564
  %v1573 = vadd.f32 %v1513, %v1565
  %1575 = vset.pattern.permute.xlu0 0
  %1576 = vperm.xlu0 %1575, %v681
  %v1577 = vpop.permute.xlu0 %1576
  %1580 = vset.pattern.permute.xlu0 0
  %1581 = vperm.xlu0 %1580, %v682
  %v1582 = vpop.permute.xlu0 %1581
  %1585 = vset.pattern.permute.xlu0 0
  %1586 = vperm.xlu0 %1585, %v683
  %v1587 = vpop.permute.xlu0 %1586
  %1590 = vset.pattern.permute.xlu0 0
  %1591 = vperm.xlu0 %1590, %v684
  %v1592 = vpop.permute.xlu0 %1591
  %1595 = vset.pattern.permute.xlu0 0
  %1596 = vperm.xlu0 %1595, %v685
  %v1597 = vpop.permute.xlu0 %1596
  %1600 = vset.pattern.permute.xlu0 0
  %1601 = vperm.xlu0 %1600, %v686
  %v1602 = vpop.permute.xlu0 %1601
  %1605 = vset.pattern.permute.xlu0 0
  %1606 = vperm.xlu0 %1605, %v687
  %v1607 = vpop.permute.xlu0 %1606
  %1610 = vset.pattern.permute.xlu0 0
  %1611 = vperm.xlu0 %1610, %v688
  %v1612 = vpop.permute.xlu0 %1611
  %v1614 = vlaneseq
  %v1615 = vshrl.u32 %v1614, 7
  %v1616 = vsub.s32 3, %v1615
  %v1617 = vrot.slane %v28, %v1616
  %v1618 = vmul.f32 %v1577, %v1617
  %v1619 = vmul.f32 %v1582, %v1617
  %v1620 = vmul.f32 %v1587, %v1617
  %v1621 = vmul.f32 %v1592, %v1617
  %v1622 = vmul.f32 %v1597, %v1617
  %v1623 = vmul.f32 %v1602, %v1617
  %v1624 = vmul.f32 %v1607, %v1617
  %v1625 = vmul.f32 %v1612, %v1617
  %v1626 = vadd.f32 %v1566, %v1618
  %v1627 = vadd.f32 %v1567, %v1619
  %v1628 = vadd.f32 %v1568, %v1620
  %v1629 = vadd.f32 %v1569, %v1621
  %v1630 = vadd.f32 %v1570, %v1622
  %v1631 = vadd.f32 %v1571, %v1623
  %v1632 = vadd.f32 %v1572, %v1624
  %v1633 = vadd.f32 %v1573, %v1625
  %1635 = vset.pattern.permute.xlu0 0
  %1636 = vperm.xlu0 %1635, %v705
  %v1637 = vpop.permute.xlu0 %1636
  %1640 = vset.pattern.permute.xlu0 0
  %1641 = vperm.xlu0 %1640, %v706
  %v1642 = vpop.permute.xlu0 %1641
  %1645 = vset.pattern.permute.xlu0 0
  %1646 = vperm.xlu0 %1645, %v707
  %v1647 = vpop.permute.xlu0 %1646
  %1650 = vset.pattern.permute.xlu0 0
  %1651 = vperm.xlu0 %1650, %v708
  %v1652 = vpop.permute.xlu0 %1651
  %1655 = vset.pattern.permute.xlu0 0
  %1656 = vperm.xlu0 %1655, %v709
  %v1657 = vpop.permute.xlu0 %1656
  %1660 = vset.pattern.permute.xlu0 0
  %1661 = vperm.xlu0 %1660, %v710
  %v1662 = vpop.permute.xlu0 %1661
  %1665 = vset.pattern.permute.xlu0 0
  %1666 = vperm.xlu0 %1665, %v711
  %v1667 = vpop.permute.xlu0 %1666
  %1670 = vset.pattern.permute.xlu0 0
  %1671 = vperm.xlu0 %1670, %v712
  %v1672 = vpop.permute.xlu0 %1671
  %v1674 = vlaneseq
  %v1675 = vshrl.u32 %v1674, 7
  %v1676 = vsub.s32 4, %v1675
  %v1677 = vrot.slane %v28, %v1676
  %v1678 = vmul.f32 %v1637, %v1677
  %v1679 = vmul.f32 %v1642, %v1677
  %v1680 = vmul.f32 %v1647, %v1677
  %v1681 = vmul.f32 %v1652, %v1677
  %v1682 = vmul.f32 %v1657, %v1677
  %v1683 = vmul.f32 %v1662, %v1677
  %v1684 = vmul.f32 %v1667, %v1677
  %v1685 = vmul.f32 %v1672, %v1677
  %v1686 = vadd.f32 %v1626, %v1678
  %v1687 = vadd.f32 %v1627, %v1679
  %v1688 = vadd.f32 %v1628, %v1680
  %v1689 = vadd.f32 %v1629, %v1681
  %v1690 = vadd.f32 %v1630, %v1682
  %v1691 = vadd.f32 %v1631, %v1683
  %v1692 = vadd.f32 %v1632, %v1684
  %v1693 = vadd.f32 %v1633, %v1685
  %1695 = vset.pattern.permute.xlu0 0
  %1696 = vperm.xlu0 %1695, %v1298
  %v1697 = vpop.permute.xlu0 %1696
  %1700 = vset.pattern.permute.xlu0 0
  %1701 = vperm.xlu0 %1700, %v1299
  %v1702 = vpop.permute.xlu0 %1701
  %1705 = vset.pattern.permute.xlu0 0
  %1706 = vperm.xlu0 %1705, %v1300
  %v1707 = vpop.permute.xlu0 %1706
  %1710 = vset.pattern.permute.xlu0 0
  %1711 = vperm.xlu0 %1710, %v1301
  %v1712 = vpop.permute.xlu0 %1711
  %1715 = vset.pattern.permute.xlu0 0
  %1716 = vperm.xlu0 %1715, %v1302
  %v1717 = vpop.permute.xlu0 %1716
  %1720 = vset.pattern.permute.xlu0 0
  %1721 = vperm.xlu0 %1720, %v1303
  %v1722 = vpop.permute.xlu0 %1721
  %1725 = vset.pattern.permute.xlu0 0
  %1726 = vperm.xlu0 %1725, %v1304
  %v1727 = vpop.permute.xlu0 %1726
  %1730 = vset.pattern.permute.xlu0 0
  %1731 = vperm.xlu0 %1730, %v1305
  %v1732 = vpop.permute.xlu0 %1731
  %v1734 = vlaneseq
  %v1735 = vshrl.u32 %v1734, 7
  %v1736 = vsub.s32 5, %v1735
  %v1737 = vrot.slane %v28, %v1736
  %v1738 = vmul.f32 %v1697, %v1737
  %v1739 = vmul.f32 %v1702, %v1737
  %v1740 = vmul.f32 %v1707, %v1737
  %v1741 = vmul.f32 %v1712, %v1737
  %v1742 = vmul.f32 %v1717, %v1737
  %v1743 = vmul.f32 %v1722, %v1737
  %v1744 = vmul.f32 %v1727, %v1737
  %v1745 = vmul.f32 %v1732, %v1737
  %v1746 = vadd.f32 %v1686, %v1738
  %v1747 = vadd.f32 %v1687, %v1739
  %v1748 = vadd.f32 %v1688, %v1740
  %v1749 = vadd.f32 %v1689, %v1741
  %v1750 = vadd.f32 %v1690, %v1742
  %v1751 = vadd.f32 %v1691, %v1743
  %v1752 = vadd.f32 %v1692, %v1744
  %v1753 = vadd.f32 %v1693, %v1745
  %1755 = vset.pattern.permute.xlu0 0
  %1756 = vperm.xlu0 %1755, %v1322
  %v1757 = vpop.permute.xlu0 %1756
  %1760 = vset.pattern.permute.xlu0 0
  %1761 = vperm.xlu0 %1760, %v1323
  %v1762 = vpop.permute.xlu0 %1761
  %1765 = vset.pattern.permute.xlu0 0
  %1766 = vperm.xlu0 %1765, %v1324
  %v1767 = vpop.permute.xlu0 %1766
  %1770 = vset.pattern.permute.xlu0 0
  %1771 = vperm.xlu0 %1770, %v1325
  %v1772 = vpop.permute.xlu0 %1771
  %1775 = vset.pattern.permute.xlu0 0
  %1776 = vperm.xlu0 %1775, %v1326
  %v1777 = vpop.permute.xlu0 %1776
  %1780 = vset.pattern.permute.xlu0 0
  %1781 = vperm.xlu0 %1780, %v1327
  %v1782 = vpop.permute.xlu0 %1781
  %1785 = vset.pattern.permute.xlu0 0
  %1786 = vperm.xlu0 %1785, %v1328
  %v1787 = vpop.permute.xlu0 %1786
  %1790 = vset.pattern.permute.xlu0 0
  %1791 = vperm.xlu0 %1790, %v1329
  %v1792 = vpop.permute.xlu0 %1791
  %v1794 = vlaneseq
  %v1795 = vshrl.u32 %v1794, 7
  %v1796 = vsub.s32 6, %v1795
  %v1797 = vrot.slane %v28, %v1796
  %v1798 = vmul.f32 %v1757, %v1797
  %v1799 = vmul.f32 %v1762, %v1797
  %v1800 = vmul.f32 %v1767, %v1797
  %v1801 = vmul.f32 %v1772, %v1797
  %v1802 = vmul.f32 %v1777, %v1797
  %v1803 = vmul.f32 %v1782, %v1797
  %v1804 = vmul.f32 %v1787, %v1797
  %v1805 = vmul.f32 %v1792, %v1797
  %v1806 = vadd.f32 %v1746, %v1798
  %v1807 = vadd.f32 %v1747, %v1799
  %v1808 = vadd.f32 %v1748, %v1800
  %v1809 = vadd.f32 %v1749, %v1801
  %v1810 = vadd.f32 %v1750, %v1802
  %v1811 = vadd.f32 %v1751, %v1803
  %v1812 = vadd.f32 %v1752, %v1804
  %v1813 = vadd.f32 %v1753, %v1805
  %1815 = vset.pattern.permute.xlu0 0
  %1816 = vperm.xlu0 %1815, %v1346
  %v1817 = vpop.permute.xlu0 %1816
  %1820 = vset.pattern.permute.xlu0 0
  %1821 = vperm.xlu0 %1820, %v1347
  %v1822 = vpop.permute.xlu0 %1821
  %1825 = vset.pattern.permute.xlu0 0
  %1826 = vperm.xlu0 %1825, %v1348
  %v1827 = vpop.permute.xlu0 %1826
  %1830 = vset.pattern.permute.xlu0 0
  %1831 = vperm.xlu0 %1830, %v1349
  %v1832 = vpop.permute.xlu0 %1831
  %1835 = vset.pattern.permute.xlu0 0
  %1836 = vperm.xlu0 %1835, %v1350
  %v1837 = vpop.permute.xlu0 %1836
  %1840 = vset.pattern.permute.xlu0 0
  %1841 = vperm.xlu0 %1840, %v1351
  %v1842 = vpop.permute.xlu0 %1841
  %1845 = vset.pattern.permute.xlu0 0
  %1846 = vperm.xlu0 %1845, %v1352
  %v1847 = vpop.permute.xlu0 %1846
  %1850 = vset.pattern.permute.xlu0 0
  %1851 = vperm.xlu0 %1850, %v1353
  %v1852 = vpop.permute.xlu0 %1851
  %v1854 = vlaneseq
  %v1855 = vshrl.u32 %v1854, 7
  %v1856 = vsub.s32 7, %v1855
  %v1857 = vrot.slane %v28, %v1856
  %v1858 = vmul.f32 %v1817, %v1857
  %v1859 = vmul.f32 %v1822, %v1857
  %v1860 = vmul.f32 %v1827, %v1857
  %v1861 = vmul.f32 %v1832, %v1857
  %v1862 = vmul.f32 %v1837, %v1857
  %v1863 = vmul.f32 %v1842, %v1857
  %v1864 = vmul.f32 %v1847, %v1857
  %v1865 = vmul.f32 %v1852, %v1857
  %v1866 = vadd.f32 %v1806, %v1858
  %v1867 = vadd.f32 %v1807, %v1859
  %v1868 = vadd.f32 %v1808, %v1860
  %v1869 = vadd.f32 %v1809, %v1861
  %v1870 = vadd.f32 %v1810, %v1862
  %v1871 = vadd.f32 %v1811, %v1863
  %v1872 = vadd.f32 %v1812, %v1864
  %v1873 = vadd.f32 %v1813, %v1865
  %1875 = vset.pattern.permute.xlu0 0
  %1876 = vperm.xlu0 %1875, %v1370
  %v1877 = vpop.permute.xlu0 %1876
  %1880 = vset.pattern.permute.xlu0 0
  %1881 = vperm.xlu0 %1880, %v1371
  %v1882 = vpop.permute.xlu0 %1881
  %1885 = vset.pattern.permute.xlu0 0
  %1886 = vperm.xlu0 %1885, %v1372
  %v1887 = vpop.permute.xlu0 %1886
  %1890 = vset.pattern.permute.xlu0 0
  %1891 = vperm.xlu0 %1890, %v1373
  %v1892 = vpop.permute.xlu0 %1891
  %1895 = vset.pattern.permute.xlu0 0
  %1896 = vperm.xlu0 %1895, %v1374
  %v1897 = vpop.permute.xlu0 %1896
  %1900 = vset.pattern.permute.xlu0 0
  %1901 = vperm.xlu0 %1900, %v1375
  %v1902 = vpop.permute.xlu0 %1901
  %1905 = vset.pattern.permute.xlu0 0
  %1906 = vperm.xlu0 %1905, %v1376
  %v1907 = vpop.permute.xlu0 %1906
  %1910 = vset.pattern.permute.xlu0 0
  %1911 = vperm.xlu0 %1910, %v1377
  %v1912 = vpop.permute.xlu0 %1911
  %v1914 = vlaneseq
  %v1915 = vshrl.u32 %v1914, 7
  %v1916 = vsub.s32 0, %v1915
  %v1917 = vrot.slane %v29, %v1916
  %v1918 = vmul.f32 %v1877, %v1917
  %v1919 = vmul.f32 %v1882, %v1917
  %v1920 = vmul.f32 %v1887, %v1917
  %v1921 = vmul.f32 %v1892, %v1917
  %v1922 = vmul.f32 %v1897, %v1917
  %v1923 = vmul.f32 %v1902, %v1917
  %v1924 = vmul.f32 %v1907, %v1917
  %v1925 = vmul.f32 %v1912, %v1917
  %v1926 = vadd.f32 %v1866, %v1918
  %v1927 = vadd.f32 %v1867, %v1919
  %v1928 = vadd.f32 %v1868, %v1920
  %v1929 = vadd.f32 %v1869, %v1921
  %v1930 = vadd.f32 %v1870, %v1922
  %v1931 = vadd.f32 %v1871, %v1923
  %v1932 = vadd.f32 %v1872, %v1924
  %v1933 = vadd.f32 %v1873, %v1925
  %1935 = vset.pattern.permute.xlu0 0
  %1936 = vperm.xlu0 %1935, %v1394
  %v1937 = vpop.permute.xlu0 %1936
  %1940 = vset.pattern.permute.xlu0 0
  %1941 = vperm.xlu0 %1940, %v1395
  %v1942 = vpop.permute.xlu0 %1941
  %1945 = vset.pattern.permute.xlu0 0
  %1946 = vperm.xlu0 %1945, %v1396
  %v1947 = vpop.permute.xlu0 %1946
  %1950 = vset.pattern.permute.xlu0 0
  %1951 = vperm.xlu0 %1950, %v1397
  %v1952 = vpop.permute.xlu0 %1951
  %1955 = vset.pattern.permute.xlu0 0
  %1956 = vperm.xlu0 %1955, %v1398
  %v1957 = vpop.permute.xlu0 %1956
  %1960 = vset.pattern.permute.xlu0 0
  %1961 = vperm.xlu0 %1960, %v1399
  %v1962 = vpop.permute.xlu0 %1961
  %1965 = vset.pattern.permute.xlu0 0
  %1966 = vperm.xlu0 %1965, %v1400
  %v1967 = vpop.permute.xlu0 %1966
  %1970 = vset.pattern.permute.xlu0 0
  %1971 = vperm.xlu0 %1970, %v1401
  %v1972 = vpop.permute.xlu0 %1971
  %v1974 = vlaneseq
  %v1975 = vshrl.u32 %v1974, 7
  %v1976 = vsub.s32 1, %v1975
  %v1977 = vrot.slane %v29, %v1976
  %v1978 = vmul.f32 %v1937, %v1977
  %v1979 = vmul.f32 %v1942, %v1977
  %v1980 = vmul.f32 %v1947, %v1977
  %v1981 = vmul.f32 %v1952, %v1977
  %v1982 = vmul.f32 %v1957, %v1977
  %v1983 = vmul.f32 %v1962, %v1977
  %v1984 = vmul.f32 %v1967, %v1977
  %v1985 = vmul.f32 %v1972, %v1977
  %v1986 = vadd.f32 %v1926, %v1978
  %v1987 = vadd.f32 %v1927, %v1979
  %v1988 = vadd.f32 %v1928, %v1980
  %v1989 = vadd.f32 %v1929, %v1981
  %v1990 = vadd.f32 %v1930, %v1982
  %v1991 = vadd.f32 %v1931, %v1983
  %v1992 = vadd.f32 %v1932, %v1984
  %v1993 = vadd.f32 %v1933, %v1985
  %v1994 = vld [vmem:[%s4] sm:$0x1]
  %v1996 = vlaneseq
  %v1997 = vshrl.u32 %v1996, 7
  %v1998 = vsub.s32 0, %v1997
  %v1999 = vrot.slane %v1994, %v1998
  %v2001 = vadd.f32 %v1986, %v1999
  %v2002 = vadd.f32 %v1987, %v1999
  %v2003 = vadd.f32 %v1988, %v1999
  %v2004 = vadd.f32 %v1989, %v1999
  %v2005 = vadd.f32 %v1990, %v1999
  %v2006 = vadd.f32 %v1991, %v1999
  %v2007 = vadd.f32 %v1992, %v1999
  %v2008 = vadd.f32 %v1993, %v1999
  %v2009 = vmax.f32 %v2001, 0.0
  %v2010 = vmax.f32 %v2002, 0.0
  %v2011 = vmax.f32 %v2003, 0.0
  %v2012 = vmax.f32 %v2004, 0.0
  %v2013 = vmax.f32 %v2005, 0.0
  %v2014 = vmax.f32 %v2006, 0.0
  %v2015 = vmax.f32 %v2007, 0.0
  %v2016 = vmax.f32 %v2008, 0.0
  %vm2017 = vcmask 257024
  %2018 = vst.msk [vmem:[%s5] sm:$0xf] %vm2017, %v2009
  %2019 = vst.msk [vmem:[%s5 + $0x4] sm:$0xf] %vm2017, %v2010
  %2020 = vst.msk [vmem:[%s5 + $0x8] sm:$0xf] %vm2017, %v2011
  %2021 = vst.msk [vmem:[%s5 + $0xc] sm:$0xf] %vm2017, %v2012
  %2022 = vst.msk [vmem:[%s5 + $0x10] sm:$0xf] %vm2017, %v2013
  %2023 = vst.msk [vmem:[%s5 + $0x14] sm:$0xf] %vm2017, %v2014
  %2024 = vst.msk [vmem:[%s5 + $0x18] sm:$0xf] %vm2017, %v2015
  %2025 = vst.msk [vmem:[%s5 + $0x1c] sm:$0xf] %vm2017, %v2016
  // Predicated region
  $region22: #{raft_stereo_human_forward.28} parent=0 // pred_check
    _
  $region23: #{raft_stereo_human_forward.28} parent=0 // pred_check_branch
    %2027 = sbr.rel (0) target = $region25
  $region24: #{raft_stereo_human_forward.28} parent=0 // pred_region
    _
  $region25: #{raft_stereo_human_forward.28} parent=0 // pred_fallthru
    _
  // Predicated region
  $region26: #{raft_stereo_human_forward.28} parent=0 // pred_check
    _
  $region27: #{raft_stereo_human_forward.28} parent=0 // pred_check_branch
    %2029 = sbr.rel (0) target = $region29
  $region28: #{raft_stereo_human_forward.28} parent=0 // pred_region
    _
  $region29: #{raft_stereo_human_forward.28} parent=0 // pred_fallthru
    _

// kernel: raft_stereo_human_forward.31
$region0: #{raft_stereo_human_forward.31}
  #allocation0 [shape = 'u32[]', space=smem, size = 0x4, offset = 0x4, fixed_abs, tag = 'smem constant byte address 0x4 - core index']
  #allocation1 [shape = 'u32[144,128]{1,0:T(1,128)}', space=vmem, size = 0x12000, scoped, tag = 'internal scratch']
  %s0 = inlined_call_operand.vmem [shape: bf16[32,576], index: 0, kind: input, shape index: {}]
  %s1 = inlined_call_operand.vmem [shape: bf16[576,62], index: 1, kind: input, shape index: {}]
  %s2 = inlined_call_operand.vmem [shape: f32[1,62], index: 2, kind: input, shape index: {}]
  %s3 = inlined_call_operand.vmem [shape: f32[32,62], index: 3, kind: output, shape index: {}]
  %s4 = sld [smem:[#allocation0]]
  $region22: #{raft_stereo_human_forward.31} parent=0
    _
  %s6 = ssub.s32 1, %s4
  %s7 = scalar_select 0, %s6, %s4
  // Predicated region
  $region2: #{raft_stereo_human_forward.31} parent=0 // pred_check
    _
  $region3: #{raft_stereo_human_forward.31} parent=0 // pred_check_branch
    %9 = sbr.rel (0) target = $region5
  $region4: #{raft_stereo_human_forward.31} parent=0 // pred_region
    _
  $region5: #{raft_stereo_human_forward.31} parent=0 // pred_fallthru
    _
  // Predicated region
  $region6: #{raft_stereo_human_forward.31} parent=0 // pred_check
    _
  $region7: #{raft_stereo_human_forward.31} parent=0 // pred_check_branch
    %11 = sbr.rel (0) target = $region9
  $region8: #{raft_stereo_human_forward.31} parent=0 // pred_region
    _
  $region9: #{raft_stereo_human_forward.31} parent=0 // pred_fallthru
    _
  // Predicated region
  $region10: #{raft_stereo_human_forward.31} parent=0 // pred_check
    _
  $region11: #{raft_stereo_human_forward.31} parent=0 // pred_check_branch
    %13 = sbr.rel (0) target = $region13
  $region12: #{raft_stereo_human_forward.31} parent=0 // pred_region
    _
  $region13: #{raft_stereo_human_forward.31} parent=0 // pred_fallthru
    _
  %v15 = vld [vmem:[%s0] sm:$0xff]
  %v16 = vld [vmem:[%s0 + $0x8] sm:$0xff]
  %v17 = vld [vmem:[%s0 + $0x10] sm:$0xf]
  %v18 = vld [vmem:[%s0 + $0x14] sm:$0xff]
  %v19 = vld [vmem:[%s0 + $0x1c] sm:$0xff]
  %v20 = vld [vmem:[%s0 + $0x24] sm:$0xf]
  %v21 = vld [vmem:[%s0 + $0x28] sm:$0xff]
  %v22 = vld [vmem:[%s0 + $0x30] sm:$0xff]
  %v23 = vld [vmem:[%s0 + $0x38] sm:$0xf]
  %v24 = vld [vmem:[%s0 + $0x3c] sm:$0xff]
  %v25 = vld [vmem:[%s0 + $0x44] sm:$0xff]
  %v26 = vld [vmem:[%s0 + $0x4c] sm:$0xf]
  %v27 = vld [vmem:[%s1] sm:$0xf]
  %v28 = vld [vmem:[%s1 + $0x4] sm:$0xf]
  %v29 = vld [vmem:[%s1 + $0x8] sm:$0xf]
  %v30 = vld [vmem:[%s1 + $0xc] sm:$0xf]
  %v31 = vld [vmem:[%s1 + $0x10] sm:$0xf]
  %v32 = vld [vmem:[%s1 + $0x14] sm:$0xf]
  %v33 = vld [vmem:[%s1 + $0x18] sm:$0xf]
  %v34 = vld [vmem:[%s1 + $0x1c] sm:$0xf]
  %v35 = vld [vmem:[%s1 + $0x20] sm:$0xf]
  %v36 = vld [vmem:[%s1 + $0x24] sm:$0xf]
  %v37 = vld [vmem:[%s1 + $0x28] sm:$0xf]
  %v38 = vld [vmem:[%s1 + $0x2c] sm:$0xf]
  %v39 = vld [vmem:[%s1 + $0x30] sm:$0xf]
  %v40 = vld [vmem:[%s1 + $0x34] sm:$0xf]
  %v41 = vld [vmem:[%s1 + $0x38] sm:$0xf]
  %v42 = vld [vmem:[%s1 + $0x3c] sm:$0xf]
  %v43 = vld [vmem:[%s1 + $0x40] sm:$0xf]
  %v44 = vld [vmem:[%s1 + $0x44] sm:$0xf]
  %v45 = vld [vmem:[%s1 + $0x48] sm:$0xf]
  %v46 = vld [vmem:[%s1 + $0x4c] sm:$0xf]
  %v47 = vld [vmem:[%s1 + $0x50] sm:$0xf]
  %v48 = vld [vmem:[%s1 + $0x54] sm:$0xf]
  %v49 = vld [vmem:[%s1 + $0x58] sm:$0xf]
  %v50 = vld [vmem:[%s1 + $0x5c] sm:$0xf]
  %v51 = vld [vmem:[%s1 + $0x60] sm:$0xf]
  %v52 = vld [vmem:[%s1 + $0x64] sm:$0xf]
  %v53 = vld [vmem:[%s1 + $0x68] sm:$0xf]
  %v54 = vld [vmem:[%s1 + $0x6c] sm:$0xf]
  %v55 = vld [vmem:[%s1 + $0x70] sm:$0xf]
  %v56 = vld [vmem:[%s1 + $0x74] sm:$0xf]
  %v57 = vld [vmem:[%s1 + $0x78] sm:$0xf]
  %v58 = vld [vmem:[%s1 + $0x7c] sm:$0xf]
  %v59 = vld [vmem:[%s1 + $0x80] sm:$0xf]
  %v60 = vld [vmem:[%s1 + $0x84] sm:$0xf]
  %v61 = vld [vmem:[%s1 + $0x88] sm:$0xf]
  %v62 = vld [vmem:[%s1 + $0x8c] sm:$0xf]
  %v63 = vld [vmem:[%s1 + $0x90] sm:$0xf]
  %v64 = vld [vmem:[%s1 + $0x94] sm:$0xf]
  %v65 = vld [vmem:[%s1 + $0x98] sm:$0xf]
  %v66 = vld [vmem:[%s1 + $0x9c] sm:$0xf]
  %v67 = vld [vmem:[%s1 + $0xa0] sm:$0xf]
  %v68 = vld [vmem:[%s1 + $0xa4] sm:$0xf]
  %v69 = vld [vmem:[%s1 + $0xa8] sm:$0xf]
  %v70 = vld [vmem:[%s1 + $0xac] sm:$0xf]
  %v71 = vld [vmem:[%s1 + $0xb0] sm:$0xf]
  %v72 = vld [vmem:[%s1 + $0xb4] sm:$0xf]
  %v73 = vld [vmem:[%s1 + $0xb8] sm:$0xf]
  %v74 = vld [vmem:[%s1 + $0xbc] sm:$0xf]
  %v75 = vld [vmem:[%s1 + $0xc0] sm:$0xf]
  %v76 = vld [vmem:[%s1 + $0xc4] sm:$0xf]
  %v77 = vld [vmem:[%s1 + $0xc8] sm:$0xf]
  %v78 = vld [vmem:[%s1 + $0xcc] sm:$0xf]
  %v79 = vld [vmem:[%s1 + $0xd0] sm:$0xf]
  %v80 = vld [vmem:[%s1 + $0xd4] sm:$0xf]
  %v81 = vld [vmem:[%s1 + $0xd8] sm:$0xf]
  %v82 = vld [vmem:[%s1 + $0xdc] sm:$0xf]
  %v83 = vld [vmem:[%s1 + $0xe0] sm:$0xf]
  %v84 = vld [vmem:[%s1 + $0xe4] sm:$0xf]
  %v85 = vld [vmem:[%s1 + $0xe8] sm:$0xf]
  %v86 = vld [vmem:[%s1 + $0xec] sm:$0xf]
  %v87 = vld [vmem:[%s1 + $0xf0] sm:$0xf]
  %v88 = vld [vmem:[%s1 + $0xf4] sm:$0xf]
  %v89 = vld [vmem:[%s1 + $0xf8] sm:$0xf]
  %v90 = vld [vmem:[%s1 + $0xfc] sm:$0xf]
  %v91 = vld [vmem:[%s1 + $0x100] sm:$0xf]
  %v92 = vld [vmem:[%s1 + $0x104] sm:$0xf]
  %v93 = vld [vmem:[%s1 + $0x108] sm:$0xf]
  %v94 = vld [vmem:[%s1 + $0x10c] sm:$0xf]
  %v95 = vld [vmem:[%s1 + $0x110] sm:$0xf]
  %v96 = vld [vmem:[%s1 + $0x114] sm:$0xf]
  %v97 = vld [vmem:[%s1 + $0x118] sm:$0xf]
  %v98 = vld [vmem:[%s1 + $0x11c] sm:$0xf]
  %v99 = vld [vmem:[%s2] sm:$0x1]
  %v101 = vlaneseq
  %v102 = vshrl.u32 %v101, 7
  %v103 = vsub.s32 0, %v102
  %v104 = vrot.slane %v99, %v103
  %v118 = vunpack.c.l.b16 %v15
  %v119 = vunpack.c.h.b16 %v15
  %v120 = vunpack.c.l.b16 %v16
  %v121 = vunpack.c.h.b16 %v16
  %v122 = vunpack.c.l.b16 %v17
  %v123 = vunpack.c.l.b16 %v18
  %v124 = vunpack.c.h.b16 %v18
  %v125 = vunpack.c.l.b16 %v19
  %v126 = vunpack.c.h.b16 %v19
  %v127 = vunpack.c.l.b16 %v20
  %v128 = vunpack.c.l.b16 %v21
  %v129 = vunpack.c.h.b16 %v21
  %v130 = vunpack.c.l.b16 %v22
  %v131 = vunpack.c.h.b16 %v22
  %v132 = vunpack.c.l.b16 %v23
  %v133 = vunpack.c.l.b16 %v24
  %v134 = vunpack.c.h.b16 %v24
  %v135 = vunpack.c.l.b16 %v25
  %v136 = vunpack.c.h.b16 %v25
  %v137 = vunpack.c.l.b16 %v26
  %v138 = vpack.c.b16 %v123, %v118
  %v139 = vpack.c.b16 %v124, %v119
  %v140 = vpack.c.b16 %v125, %v120
  %v141 = vpack.c.b16 %v126, %v121
  %v142 = vpack.c.b16 %v127, %v122
  %v143 = vpack.c.b16 %v133, %v128
  %v144 = vpack.c.b16 %v134, %v129
  %v145 = vpack.c.b16 %v135, %v130
  %v146 = vpack.c.b16 %v136, %v131
  %v147 = vpack.c.b16 %v137, %v132
  %v228 = vunpack.c.l.b16 %v27
  %v229 = vunpack.c.l.b16 %v28
  %v230 = vunpack.c.l.b16 %v29
  %v231 = vunpack.c.l.b16 %v30
  %v232 = vunpack.c.l.b16 %v31
  %v233 = vunpack.c.l.b16 %v32
  %v234 = vunpack.c.l.b16 %v33
  %v235 = vunpack.c.l.b16 %v34
  %v236 = vunpack.c.l.b16 %v35
  %v237 = vunpack.c.l.b16 %v36
  %v238 = vunpack.c.l.b16 %v37
  %v239 = vunpack.c.l.b16 %v38
  %v240 = vunpack.c.l.b16 %v39
  %v241 = vunpack.c.l.b16 %v40
  %v242 = vunpack.c.l.b16 %v41
  %v243 = vunpack.c.l.b16 %v42
  %v244 = vunpack.c.l.b16 %v43
  %v245 = vunpack.c.l.b16 %v44
  %v246 = vunpack.c.l.b16 %v45
  %v247 = vunpack.c.l.b16 %v46
  %v248 = vunpack.c.l.b16 %v47
  %v249 = vunpack.c.l.b16 %v48
  %v250 = vunpack.c.l.b16 %v49
  %v251 = vunpack.c.l.b16 %v50
  %v252 = vunpack.c.l.b16 %v51
  %v253 = vunpack.c.l.b16 %v52
  %v254 = vunpack.c.l.b16 %v53
  %v255 = vunpack.c.l.b16 %v54
  %v256 = vunpack.c.l.b16 %v55
  %v257 = vunpack.c.l.b16 %v56
  %v258 = vunpack.c.l.b16 %v57
  %v259 = vunpack.c.l.b16 %v58
  %v260 = vunpack.c.l.b16 %v59
  %v261 = vunpack.c.l.b16 %v60
  %v262 = vunpack.c.l.b16 %v61
  %v263 = vunpack.c.l.b16 %v62
  %v264 = vunpack.c.l.b16 %v63
  %v265 = vunpack.c.l.b16 %v64
  %v266 = vunpack.c.l.b16 %v65
  %v267 = vunpack.c.l.b16 %v66
  %v268 = vunpack.c.l.b16 %v67
  %v269 = vunpack.c.l.b16 %v68
  %v270 = vunpack.c.l.b16 %v69
  %v271 = vunpack.c.l.b16 %v70
  %v272 = vunpack.c.l.b16 %v71
  %v273 = vunpack.c.l.b16 %v72
  %v274 = vunpack.c.l.b16 %v73
  %v275 = vunpack.c.l.b16 %v74
  %v276 = vunpack.c.l.b16 %v75
  %v277 = vunpack.c.l.b16 %v76
  %v278 = vunpack.c.l.b16 %v77
  %v279 = vunpack.c.l.b16 %v78
  %v280 = vunpack.c.l.b16 %v79
  %v281 = vunpack.c.l.b16 %v80
  %v282 = vunpack.c.l.b16 %v81
  %v283 = vunpack.c.l.b16 %v82
  %v284 = vunpack.c.l.b16 %v83
  %v285 = vunpack.c.l.b16 %v84
  %v286 = vunpack.c.l.b16 %v85
  %v287 = vunpack.c.l.b16 %v86
  %v288 = vunpack.c.l.b16 %v87
  %v289 = vunpack.c.l.b16 %v88
  %v290 = vunpack.c.l.b16 %v89
  %v291 = vunpack.c.l.b16 %v90
  %v292 = vunpack.c.l.b16 %v91
  %v293 = vunpack.c.l.b16 %v92
  %v294 = vunpack.c.l.b16 %v93
  %v295 = vunpack.c.l.b16 %v94
  %v296 = vunpack.c.l.b16 %v95
  %v297 = vunpack.c.l.b16 %v96
  %v298 = vunpack.c.l.b16 %v97
  %v299 = vunpack.c.l.b16 %v98
  %v300 = vpack.c.b16 %v229, %v228
  %v301 = vpack.c.b16 %v231, %v230
  %v302 = vpack.c.b16 %v233, %v232
  %v303 = vpack.c.b16 %v235, %v234
  %v304 = vpack.c.b16 %v237, %v236
  %v305 = vpack.c.b16 %v239, %v238
  %v306 = vpack.c.b16 %v241, %v240
  %v307 = vpack.c.b16 %v243, %v242
  %v308 = vpack.c.b16 %v245, %v244
  %v309 = vpack.c.b16 %v247, %v246
  %v310 = vpack.c.b16 %v249, %v248
  %v311 = vpack.c.b16 %v251, %v250
  %v312 = vpack.c.b16 %v253, %v252
  %v313 = vpack.c.b16 %v255, %v254
  %v314 = vpack.c.b16 %v257, %v256
  %v315 = vpack.c.b16 %v259, %v258
  %v316 = vpack.c.b16 %v261, %v260
  %v317 = vpack.c.b16 %v263, %v262
  %v318 = vpack.c.b16 %v265, %v264
  %v319 = vpack.c.b16 %v267, %v266
  %v320 = vpack.c.b16 %v269, %v268
  %v321 = vpack.c.b16 %v271, %v270
  %v322 = vpack.c.b16 %v273, %v272
  %v323 = vpack.c.b16 %v275, %v274
  %v324 = vpack.c.b16 %v277, %v276
  %v325 = vpack.c.b16 %v279, %v278
  %v326 = vpack.c.b16 %v281, %v280
  %v327 = vpack.c.b16 %v283, %v282
  %v328 = vpack.c.b16 %v285, %v284
  %v329 = vpack.c.b16 %v287, %v286
  %v330 = vpack.c.b16 %v289, %v288
  %v331 = vpack.c.b16 %v291, %v290
  %v332 = vpack.c.b16 %v293, %v292
  %v333 = vpack.c.b16 %v295, %v294
  %v334 = vpack.c.b16 %v297, %v296
  %v335 = vpack.c.b16 %v299, %v298
  %vm372 = vcmask 523264
  %v374 = vsel %vm372, %v142, 0
  %v377 = vsel %vm372, %v147, 0
  %379 = vmatprep.subr.bf16.mxu0 0
  %380 = vmatpush1.bf16.msra.mxu0 %v300
  %381 = vmatprep.subr.bf16.mxu0 0
  %382 = vmatpush1.bf16.msra.mxu0 %v301
  %383 = vmatprep.subr.bf16.mxu0 0
  %384 = vmatpush1.bf16.msra.mxu0 %v302
  %385 = vmatprep.subr.bf16.mxu0 0
  %386 = vmatpush1.bf16.msra.mxu0 %v303
  %387 = vmatprep.subr.bf16.mxu0 0
  %388 = vmatpush1.bf16.msra.mxu0 %v304
  %389 = vmatprep.subr.bf16.mxu0 0
  %390 = vmatpush1.bf16.msra.mxu0 %v305
  %391 = vmatprep.subr.bf16.mxu0 0
  %392 = vmatpush1.bf16.msra.mxu0 %v306
  %393 = vmatprep.subr.bf16.mxu0 0
  %394 = vmatpush1.bf16.msra.mxu0 %v307
  %395 = vmatprep.subr.bf16.mxu0 0
  %396 = vmatpush1.bf16.msra.mxu0 %v308
  %397 = vmatprep.subr.bf16.mxu0 0
  %398 = vmatpush1.bf16.msra.mxu0 %v309
  %399 = vmatprep.subr.bf16.mxu0 0
  %400 = vmatpush1.bf16.msra.mxu0 %v310
  %401 = vmatprep.subr.bf16.mxu0 0
  %402 = vmatpush1.bf16.msra.mxu0 %v311
  %403 = vmatprep.subr.bf16.mxu0 0
  %404 = vmatpush1.bf16.msra.mxu0 %v312
  %405 = vmatprep.subr.bf16.mxu0 0
  %406 = vmatpush1.bf16.msra.mxu0 %v313
  %407 = vmatprep.subr.bf16.mxu0 0
  %408 = vmatpush1.bf16.msra.mxu0 %v314
  %409 = vmatprep.subr.bf16.mxu0 0
  %410 = vmatpush1.bf16.msra.mxu0 %v315
  %411 = vmatprep.mubr.bf16.mxu0 %v139
  %412 = vmatmul.mubr.bf16.gmra.mrb[0].mxu0 %v138
  %v413 = vpop.f32.mrb[0].mxu0
  %v414 = vadd.f32 %v104, %v413
  %v415 = vpop.f32.mrb[0].mxu0
  %v416 = vpop.f32.mrb[0].mxu0
  %v417 = vadd.f32 %v104, %v416
  %v418 = vpop.f32.mrb[0].mxu0
  %419 = vmatprep.mubr.bf16.mxu0 %v144
  %420 = vmatmul.mubr.bf16.gmra.mrb[0].mxu0 %v143
  %v421 = vpop.f32.mrb[0].mxu0
  %v422 = vadd.f32 %v104, %v421
  %v423 = vpop.f32.mrb[0].mxu0
  %v424 = vpop.f32.mrb[0].mxu0
  %v425 = vadd.f32 %v104, %v424
  %v426 = vpop.f32.mrb[0].mxu0
  %427 = vdwg.mxu0
  %428 = vmatprep.subr.bf16.mxu0 0
  %429 = vmatpush1.bf16.msra.mxu0 %v316
  %430 = vmatprep.subr.bf16.mxu0 0
  %431 = vmatpush1.bf16.msra.mxu0 %v317
  %432 = vmatprep.subr.bf16.mxu0 0
  %433 = vmatpush1.bf16.msra.mxu0 %v318
  %434 = vmatprep.subr.bf16.mxu0 0
  %435 = vmatpush1.bf16.msra.mxu0 %v319
  %436 = vmatprep.subr.bf16.mxu0 0
  %437 = vmatpush1.bf16.msra.mxu0 %v320
  %438 = vmatprep.subr.bf16.mxu0 0
  %439 = vmatpush1.bf16.msra.mxu0 %v321
  %440 = vmatprep.subr.bf16.mxu0 0
  %441 = vmatpush1.bf16.msra.mxu0 %v322
  %442 = vmatprep.subr.bf16.mxu0 0
  %443 = vmatpush1.bf16.msra.mxu0 %v323
  %444 = vmatprep.subr.bf16.mxu0 0
  %445 = vmatpush1.bf16.msra.mxu0 %v324
  %446 = vmatprep.subr.bf16.mxu0 0
  %447 = vmatpush1.bf16.msra.mxu0 %v325
  %448 = vmatprep.subr.bf16.mxu0 0
  %449 = vmatpush1.bf16.msra.mxu0 %v326
  %450 = vmatprep.subr.bf16.mxu0 0
  %451 = vmatpush1.bf16.msra.mxu0 %v327
  %452 = vmatprep.subr.bf16.mxu0 0
  %453 = vmatpush1.bf16.msra.mxu0 %v328
  %454 = vmatprep.subr.bf16.mxu0 0
  %455 = vmatpush1.bf16.msra.mxu0 %v329
  %456 = vmatprep.subr.bf16.mxu0 0
  %457 = vmatpush1.bf16.msra.mxu0 %v330
  %458 = vmatprep.subr.bf16.mxu0 0
  %459 = vmatpush1.bf16.msra.mxu0 %v331
  %460 = vmatprep.mubr.bf16.mxu0 %v141
  %461 = vmatmul.mubr.bf16.gmra.mrb[0].mxu0 %v140
  %v462 = vpop.f32.mrb[0].mxu0
  %v463 = vadd.f32 %v414, %v462
  %v464 = vpop.f32.mrb[0].mxu0
  %v465 = vpop.f32.mrb[0].mxu0
  %v466 = vadd.f32 %v417, %v465
  %v467 = vpop.f32.mrb[0].mxu0
  %468 = vmatprep.mubr.bf16.mxu0 %v146
  %469 = vmatmul.mubr.bf16.gmra.mrb[0].mxu0 %v145
  %v470 = vpop.f32.mrb[0].mxu0
  %v471 = vadd.f32 %v422, %v470
  %v472 = vpop.f32.mrb[0].mxu0
  %v473 = vpop.f32.mrb[0].mxu0
  %v474 = vadd.f32 %v425, %v473
  %v475 = vpop.f32.mrb[0].mxu0
  %476 = vdwg.mxu0
  %477 = vmatprep.subr.bf16.mxu0 0
  %478 = vmatpush1.bf16.msra.mxu0 %v332
  %479 = vmatprep.subr.bf16.mxu0 0
  %480 = vmatpush1.bf16.msra.mxu0 %v333
  %481 = vmatprep.subr.bf16.mxu0 0
  %482 = vmatpush1.bf16.msra.mxu0 %v334
  %483 = vmatprep.subr.bf16.mxu0 0
  %484 = vmatpush1.bf16.msra.mxu0 %v335
  %485 = vmatprep.subr.bf16.mxu0 0
  %486 = vmatpush1.bf16.msra.mxu0 0
  %487 = vmatprep.subr.bf16.mxu0 0
  %488 = vmatpush1.bf16.msra.mxu0 0
  %489 = vmatprep.subr.bf16.mxu0 0
  %490 = vmatpush1.bf16.msra.mxu0 0
  %491 = vmatprep.subr.bf16.mxu0 0
  %492 = vmatpush1.bf16.msra.mxu0 0
  %493 = vmatprep.subr.bf16.mxu0 0
  %494 = vmatpush1.bf16.msra.mxu0 0
  %495 = vmatprep.subr.bf16.mxu0 0
  %496 = vmatpush1.bf16.msra.mxu0 0
  %497 = vmatprep.subr.bf16.mxu0 0
  %498 = vmatpush1.bf16.msra.mxu0 0
  %499 = vmatprep.subr.bf16.mxu0 0
  %500 = vmatpush1.bf16.msra.mxu0 0
  %501 = vmatprep.subr.bf16.mxu0 0
  %502 = vmatpush1.bf16.msra.mxu0 0
  %503 = vmatprep.subr.bf16.mxu0 0
  %504 = vmatpush1.bf16.msra.mxu0 0
  %505 = vmatprep.subr.bf16.mxu0 0
  %506 = vmatpush1.bf16.msra.mxu0 0
  %507 = vmatprep.subr.bf16.mxu0 0
  %508 = vmatpush1.bf16.msra.mxu0 0
  %509 = vmatprep.mubr.bf16.mxu0 0
  %510 = vmatmul.mubr.bf16.gmra.mrb[0].mxu0 %v374
  %v511 = vpop.f32.mrb[0].mxu0
  %v512 = vadd.f32 %v463, %v511
  %v513 = vpop.f32.mrb[0].mxu0
  %v514 = vpop.f32.mrb[0].mxu0
  %v515 = vadd.f32 %v466, %v514
  %v516 = vpop.f32.mrb[0].mxu0
  %517 = vmatprep.mubr.bf16.mxu0 0
  %518 = vmatmul.mubr.bf16.gmra.mrb[0].mxu0 %v377
  %v519 = vpop.f32.mrb[0].mxu0
  %v520 = vadd.f32 %v471, %v519
  %v521 = vpop.f32.mrb[0].mxu0
  %v522 = vpop.f32.mrb[0].mxu0
  %v523 = vadd.f32 %v474, %v522
  %v524 = vpop.f32.mrb[0].mxu0
  %525 = vdwg.mxu0
  %v526 = vmax.f32 %v512, 0.0
  %v527 = vmax.f32 %v515, 0.0
  %v528 = vmax.f32 %v520, 0.0
  %v529 = vmax.f32 %v523, 0.0
  %vm530 = vcmask 506880
  %531 = vst.msk [vmem:[%s3] sm:$0xff] %vm530, %v526
  %532 = vst.msk [vmem:[%s3 + $0x8] sm:$0xff] %vm530, %v527
  %533 = vst.msk [vmem:[%s3 + $0x10] sm:$0xff] %vm530, %v528
  %534 = vst.msk [vmem:[%s3 + $0x18] sm:$0xff] %vm530, %v529
  // Predicated region
  $region14: #{raft_stereo_human_forward.31} parent=0 // pred_check
    _
  $region15: #{raft_stereo_human_forward.31} parent=0 // pred_check_branch
    %536 = sbr.rel (0) target = $region17
  $region16: #{raft_stereo_human_forward.31} parent=0 // pred_region
    _
  $region17: #{raft_stereo_human_forward.31} parent=0 // pred_fallthru
    _
  // Predicated region
  $region18: #{raft_stereo_human_forward.31} parent=0 // pred_check
    _
  $region19: #{raft_stereo_human_forward.31} parent=0 // pred_check_branch
    %538 = sbr.rel (0) target = $region21
  $region20: #{raft_stereo_human_forward.31} parent=0 // pred_region
    _
  $region21: #{raft_stereo_human_forward.31} parent=0 // pred_fallthru
    _

// kernel: raft_stereo_human_forward.33
$region0: #{raft_stereo_human_forward.33}
  #allocation0 [shape = 'u32[]', space=smem, size = 0x4, offset = 0x4, fixed_abs, tag = 'smem constant byte address 0x4 - core index']
  #allocation1 [shape = 'u32[144,128]{1,0:T(1,128)}', space=vmem, size = 0x12000, scoped, tag = 'internal scratch']
  %s0 = inlined_call_operand.vmem [shape: bf16[32,288], index: 0, kind: input, shape index: {}]
  %s1 = inlined_call_operand.vmem [shape: bf16[288,32], index: 1, kind: input, shape index: {}]
  %s2 = inlined_call_operand.vmem [shape: bf16[32,576], index: 2, kind: input, shape index: {}]
  %s3 = inlined_call_operand.vmem [shape: bf16[576,32], index: 3, kind: input, shape index: {}]
  %s4 = inlined_call_operand.vmem [shape: f32[1,32], index: 4, kind: input, shape index: {}]
  %s5 = inlined_call_operand.vmem [shape: f32[32,32], index: 5, kind: input, shape index: {}]
  %s6 = inlined_call_operand.vmem [shape: f32[32,32], index: 6, kind: input, shape index: {}]
  %s7 = inlined_call_operand.vmem [shape: f32[32,32], index: 7, kind: input, shape index: {}]
  %s8 = inlined_call_operand.vmem [shape: f32[32,32], index: 8, kind: output, shape index: {}]
  %s9 = sld [smem:[#allocation0]]
  $region42: #{raft_stereo_human_forward.33} parent=0
    _
  %s11 = ssub.s32 1, %s9
  %s12 = scalar_select 0, %s11, %s9
  // Predicated region
  $region2: #{raft_stereo_human_forward.33} parent=0 // pred_check
    _
  $region3: #{raft_stereo_human_forward.33} parent=0 // pred_check_branch
    %14 = sbr.rel (0) target = $region5
  $region4: #{raft_stereo_human_forward.33} parent=0 // pred_region
    _
  $region5: #{raft_stereo_human_forward.33} parent=0 // pred_fallthru
    _
  // Predicated region
  $region6: #{raft_stereo_human_forward.33} parent=0 // pred_check
    _
  $region7: #{raft_stereo_human_forward.33} parent=0 // pred_check_branch
    %16 = sbr.rel (0) target = $region9
  $region8: #{raft_stereo_human_forward.33} parent=0 // pred_region
    _
  $region9: #{raft_stereo_human_forward.33} parent=0 // pred_fallthru
    _
  // Predicated region
  $region10: #{raft_stereo_human_forward.33} parent=0 // pred_check
    _
  $region11: #{raft_stereo_human_forward.33} parent=0 // pred_check_branch
    %18 = sbr.rel (0) target = $region13
  $region12: #{raft_stereo_human_forward.33} parent=0 // pred_region
    _
  $region13: #{raft_stereo_human_forward.33} parent=0 // pred_fallthru
    _
  // Predicated region
  $region14: #{raft_stereo_human_forward.33} parent=0 // pred_check
    _
  $region15: #{raft_stereo_human_forward.33} parent=0 // pred_check_branch
    %20 = sbr.rel (0) target = $region17
  $region16: #{raft_stereo_human_forward.33} parent=0 // pred_region
    _
  $region17: #{raft_stereo_human_forward.33} parent=0 // pred_fallthru
    _
  // Predicated region
  $region18: #{raft_stereo_human_forward.33} parent=0 // pred_check
    _
  $region19: #{raft_stereo_human_forward.33} parent=0 // pred_check_branch
    %22 = sbr.rel (0) target = $region21
  $region20: #{raft_stereo_human_forward.33} parent=0 // pred_region
    _
  $region21: #{raft_stereo_human_forward.33} parent=0 // pred_fallthru
    _
  // Predicated region
  $region22: #{raft_stereo_human_forward.33} parent=0 // pred_check
    _
  $region23: #{raft_stereo_human_forward.33} parent=0 // pred_check_branch
    %24 = sbr.rel (0) target = $region25
  $region24: #{raft_stereo_human_forward.33} parent=0 // pred_region
    _
  $region25: #{raft_stereo_human_forward.33} parent=0 // pred_fallthru
    _
  // Predicated region
  $region26: #{raft_stereo_human_forward.33} parent=0 // pred_check
    _
  $region27: #{raft_stereo_human_forward.33} parent=0 // pred_check_branch
    %26 = sbr.rel (0) target = $region29
  $region28: #{raft_stereo_human_forward.33} parent=0 // pred_region
    _
  $region29: #{raft_stereo_human_forward.33} parent=0 // pred_fallthru
    _
  // Predicated region
  $region30: #{raft_stereo_human_forward.33} parent=0 // pred_check
    _
  $region31: #{raft_stereo_human_forward.33} parent=0 // pred_check_branch
    %28 = sbr.rel (0) target = $region33
  $region32: #{raft_stereo_human_forward.33} parent=0 // pred_region
    _
  $region33: #{raft_stereo_human_forward.33} parent=0 // pred_fallthru
    _
  %v30 = vld [vmem:[%s0] sm:$0xff]
  %v31 = vld [vmem:[%s0 + $0x8] sm:$0xf]
  %v32 = vld [vmem:[%s0 + $0xc] sm:$0xff]
  %v33 = vld [vmem:[%s0 + $0x14] sm:$0xf]
  %v34 = vld [vmem:[%s0 + $0x18] sm:$0xff]
  %v35 = vld [vmem:[%s0 + $0x20] sm:$0xf]
  %v36 = vld [vmem:[%s0 + $0x24] sm:$0xff]
  %v37 = vld [vmem:[%s0 + $0x2c] sm:$0xf]
  %v38 = vld [vmem:[%s1] sm:$0xf]
  %v39 = vld [vmem:[%s1 + $0x4] sm:$0xf]
  %v40 = vld [vmem:[%s1 + $0x8] sm:$0xf]
  %v41 = vld [vmem:[%s1 + $0xc] sm:$0xf]
  %v42 = vld [vmem:[%s1 + $0x10] sm:$0xf]
  %v43 = vld [vmem:[%s1 + $0x14] sm:$0xf]
  %v44 = vld [vmem:[%s1 + $0x18] sm:$0xf]
  %v45 = vld [vmem:[%s1 + $0x1c] sm:$0xf]
  %v46 = vld [vmem:[%s1 + $0x20] sm:$0xf]
  %v47 = vld [vmem:[%s1 + $0x24] sm:$0xf]
  %v48 = vld [vmem:[%s1 + $0x28] sm:$0xf]
  %v49 = vld [vmem:[%s1 + $0x2c] sm:$0xf]
  %v50 = vld [vmem:[%s1 + $0x30] sm:$0xf]
  %v51 = vld [vmem:[%s1 + $0x34] sm:$0xf]
  %v52 = vld [vmem:[%s1 + $0x38] sm:$0xf]
  %v53 = vld [vmem:[%s1 + $0x3c] sm:$0xf]
  %v54 = vld [vmem:[%s1 + $0x40] sm:$0xf]
  %v55 = vld [vmem:[%s1 + $0x44] sm:$0xf]
  %v56 = vld [vmem:[%s1 + $0x48] sm:$0xf]
  %v57 = vld [vmem:[%s1 + $0x4c] sm:$0xf]
  %v58 = vld [vmem:[%s1 + $0x50] sm:$0xf]
  %v59 = vld [vmem:[%s1 + $0x54] sm:$0xf]
  %v60 = vld [vmem:[%s1 + $0x58] sm:$0xf]
  %v61 = vld [vmem:[%s1 + $0x5c] sm:$0xf]
  %v62 = vld [vmem:[%s1 + $0x60] sm:$0xf]
  %v63 = vld [vmem:[%s1 + $0x64] sm:$0xf]
  %v64 = vld [vmem:[%s1 + $0x68] sm:$0xf]
  %v65 = vld [vmem:[%s1 + $0x6c] sm:$0xf]
  %v66 = vld [vmem:[%s1 + $0x70] sm:$0xf]
  %v67 = vld [vmem:[%s1 + $0x74] sm:$0xf]
  %v68 = vld [vmem:[%s1 + $0x78] sm:$0xf]
  %v69 = vld [vmem:[%s1 + $0x7c] sm:$0xf]
  %v70 = vld [vmem:[%s1 + $0x80] sm:$0xf]
  %v71 = vld [vmem:[%s1 + $0x84] sm:$0xf]
  %v72 = vld [vmem:[%s1 + $0x88] sm:$0xf]
  %v73 = vld [vmem:[%s1 + $0x8c] sm:$0xf]
  %v74 = vld [vmem:[%s2] sm:$0xff]
  %v75 = vld [vmem:[%s2 + $0x8] sm:$0xff]
  %v76 = vld [vmem:[%s2 + $0x10] sm:$0xf]
  %v77 = vld [vmem:[%s2 + $0x14] sm:$0xff]
  %v78 = vld [vmem:[%s2 + $0x1c] sm:$0xff]
  %v79 = vld [vmem:[%s2 + $0x24] sm:$0xf]
  %v80 = vld [vmem:[%s2 + $0x28] sm:$0xff]
  %v81 = vld [vmem:[%s2 + $0x30] sm:$0xff]
  %v82 = vld [vmem:[%s2 + $0x38] sm:$0xf]
  %v83 = vld [vmem:[%s2 + $0x3c] sm:$0xff]
  %v84 = vld [vmem:[%s2 + $0x44] sm:$0xff]
  %v85 = vld [vmem:[%s2 + $0x4c] sm:$0xf]
  %v86 = vld [vmem:[%s3] sm:$0xf]
  %v87 = vld [vmem:[%s3 + $0x4] sm:$0xf]
  %v88 = vld [vmem:[%s3 + $0x8] sm:$0xf]
  %v89 = vld [vmem:[%s3 + $0xc] sm:$0xf]
  %v90 = vld [vmem:[%s3 + $0x10] sm:$0xf]
  %v91 = vld [vmem:[%s3 + $0x14] sm:$0xf]
  %v92 = vld [vmem:[%s3 + $0x18] sm:$0xf]
  %v93 = vld [vmem:[%s3 + $0x1c] sm:$0xf]
  %v94 = vld [vmem:[%s3 + $0x20] sm:$0xf]
  %v95 = vld [vmem:[%s3 + $0x24] sm:$0xf]
  %v96 = vld [vmem:[%s3 + $0x28] sm:$0xf]
  %v97 = vld [vmem:[%s3 + $0x2c] sm:$0xf]
  %v98 = vld [vmem:[%s3 + $0x30] sm:$0xf]
  %v99 = vld [vmem:[%s3 + $0x34] sm:$0xf]
  %v100 = vld [vmem:[%s3 + $0x38] sm:$0xf]
  %v101 = vld [vmem:[%s3 + $0x3c] sm:$0xf]
  %v102 = vld [vmem:[%s3 + $0x40] sm:$0xf]
  %v103 = vld [vmem:[%s3 + $0x44] sm:$0xf]
  %v104 = vld [vmem:[%s3 + $0x48] sm:$0xf]
  %v105 = vld [vmem:[%s3 + $0x4c] sm:$0xf]
  %v106 = vld [vmem:[%s3 + $0x50] sm:$0xf]
  %v107 = vld [vmem:[%s3 + $0x54] sm:$0xf]
  %v108 = vld [vmem:[%s3 + $0x58] sm:$0xf]
  %v109 = vld [vmem:[%s3 + $0x5c] sm:$0xf]
  %v110 = vld [vmem:[%s3 + $0x60] sm:$0xf]
  %v111 = vld [vmem:[%s3 + $0x64] sm:$0xf]
  %v112 = vld [vmem:[%s3 + $0x68] sm:$0xf]
  %v113 = vld [vmem:[%s3 + $0x6c] sm:$0xf]
  %v114 = vld [vmem:[%s3 + $0x70] sm:$0xf]
  %v115 = vld [vmem:[%s3 + $0x74] sm:$0xf]
  %v116 = vld [vmem:[%s3 + $0x78] sm:$0xf]
  %v117 = vld [vmem:[%s3 + $0x7c] sm:$0xf]
  %v118 = vld [vmem:[%s3 + $0x80] sm:$0xf]
  %v119 = vld [vmem:[%s3 + $0x84] sm:$0xf]
  %v120 = vld [vmem:[%s3 + $0x88] sm:$0xf]
  %v121 = vld [vmem:[%s3 + $0x8c] sm:$0xf]
  %v122 = vld [vmem:[%s3 + $0x90] sm:$0xf]
  %v123 = vld [vmem:[%s3 + $0x94] sm:$0xf]
  %v124 = vld [vmem:[%s3 + $0x98] sm:$0xf]
  %v125 = vld [vmem:[%s3 + $0x9c] sm:$0xf]
  %v126 = vld [vmem:[%s3 + $0xa0] sm:$0xf]
  %v127 = vld [vmem:[%s3 + $0xa4] sm:$0xf]
  %v128 = vld [vmem:[%s3 + $0xa8] sm:$0xf]
  %v129 = vld [vmem:[%s3 + $0xac] sm:$0xf]
  %v130 = vld [vmem:[%s3 + $0xb0] sm:$0xf]
  %v131 = vld [vmem:[%s3 + $0xb4] sm:$0xf]
  %v132 = vld [vmem:[%s3 + $0xb8] sm:$0xf]
  %v133 = vld [vmem:[%s3 + $0xbc] sm:$0xf]
  %v134 = vld [vmem:[%s3 + $0xc0] sm:$0xf]
  %v135 = vld [vmem:[%s3 + $0xc4] sm:$0xf]
  %v136 = vld [vmem:[%s3 + $0xc8] sm:$0xf]
  %v137 = vld [vmem:[%s3 + $0xcc] sm:$0xf]
  %v138 = vld [vmem:[%s3 + $0xd0] sm:$0xf]
  %v139 = vld [vmem:[%s3 + $0xd4] sm:$0xf]
  %v140 = vld [vmem:[%s3 + $0xd8] sm:$0xf]
  %v141 = vld [vmem:[%s3 + $0xdc] sm:$0xf]
  %v142 = vld [vmem:[%s3 + $0xe0] sm:$0xf]
  %v143 = vld [vmem:[%s3 + $0xe4] sm:$0xf]
  %v144 = vld [vmem:[%s3 + $0xe8] sm:$0xf]
  %v145 = vld [vmem:[%s3 + $0xec] sm:$0xf]
  %v146 = vld [vmem:[%s3 + $0xf0] sm:$0xf]
  %v147 = vld [vmem:[%s3 + $0xf4] sm:$0xf]
  %v148 = vld [vmem:[%s3 + $0xf8] sm:$0xf]
  %v149 = vld [vmem:[%s3 + $0xfc] sm:$0xf]
  %v150 = vld [vmem:[%s3 + $0x100] sm:$0xf]
  %v151 = vld [vmem:[%s3 + $0x104] sm:$0xf]
  %v152 = vld [vmem:[%s3 + $0x108] sm:$0xf]
  %v153 = vld [vmem:[%s3 + $0x10c] sm:$0xf]
  %v154 = vld [vmem:[%s3 + $0x110] sm:$0xf]
  %v155 = vld [vmem:[%s3 + $0x114] sm:$0xf]
  %v156 = vld [vmem:[%s3 + $0x118] sm:$0xf]
  %v157 = vld [vmem:[%s3 + $0x11c] sm:$0xf]
  %v170 = vunpack.c.l.b16 %v74
  %v171 = vunpack.c.h.b16 %v74
  %v172 = vunpack.c.l.b16 %v75
  %v173 = vunpack.c.h.b16 %v75
  %v174 = vunpack.c.l.b16 %v76
  %v175 = vunpack.c.l.b16 %v77
  %v176 = vunpack.c.h.b16 %v77
  %v177 = vunpack.c.l.b16 %v78
  %v178 = vunpack.c.h.b16 %v78
  %v179 = vunpack.c.l.b16 %v79
  %v180 = vunpack.c.l.b16 %v80
  %v181 = vunpack.c.h.b16 %v80
  %v182 = vunpack.c.l.b16 %v81
  %v183 = vunpack.c.h.b16 %v81
  %v184 = vunpack.c.l.b16 %v82
  %v185 = vunpack.c.l.b16 %v83
  %v186 = vunpack.c.h.b16 %v83
  %v187 = vunpack.c.l.b16 %v84
  %v188 = vunpack.c.h.b16 %v84
  %v189 = vunpack.c.l.b16 %v85
  %v190 = vpack.c.b16 %v175, %v170
  %v191 = vpack.c.b16 %v176, %v171
  %v192 = vpack.c.b16 %v177, %v172
  %v193 = vpack.c.b16 %v178, %v173
  %v194 = vpack.c.b16 %v179, %v174
  %v195 = vpack.c.b16 %v185, %v180
  %v196 = vpack.c.b16 %v186, %v181
  %v197 = vpack.c.b16 %v187, %v182
  %v198 = vpack.c.b16 %v188, %v183
  %v199 = vpack.c.b16 %v189, %v184
  %v280 = vunpack.c.l.b16 %v86
  %v281 = vunpack.c.l.b16 %v87
  %v282 = vunpack.c.l.b16 %v88
  %v283 = vunpack.c.l.b16 %v89
  %v284 = vunpack.c.l.b16 %v90
  %v285 = vunpack.c.l.b16 %v91
  %v286 = vunpack.c.l.b16 %v92
  %v287 = vunpack.c.l.b16 %v93
  %v288 = vunpack.c.l.b16 %v94
  %v289 = vunpack.c.l.b16 %v95
  %v290 = vunpack.c.l.b16 %v96
  %v291 = vunpack.c.l.b16 %v97
  %v292 = vunpack.c.l.b16 %v98
  %v293 = vunpack.c.l.b16 %v99
  %v294 = vunpack.c.l.b16 %v100
  %v295 = vunpack.c.l.b16 %v101
  %v296 = vunpack.c.l.b16 %v102
  %v297 = vunpack.c.l.b16 %v103
  %v298 = vunpack.c.l.b16 %v104
  %v299 = vunpack.c.l.b16 %v105
  %v300 = vunpack.c.l.b16 %v106
  %v301 = vunpack.c.l.b16 %v107
  %v302 = vunpack.c.l.b16 %v108
  %v303 = vunpack.c.l.b16 %v109
  %v304 = vunpack.c.l.b16 %v110
  %v305 = vunpack.c.l.b16 %v111
  %v306 = vunpack.c.l.b16 %v112
  %v307 = vunpack.c.l.b16 %v113
  %v308 = vunpack.c.l.b16 %v114
  %v309 = vunpack.c.l.b16 %v115
  %v310 = vunpack.c.l.b16 %v116
  %v311 = vunpack.c.l.b16 %v117
  %v312 = vunpack.c.l.b16 %v118
  %v313 = vunpack.c.l.b16 %v119
  %v314 = vunpack.c.l.b16 %v120
  %v315 = vunpack.c.l.b16 %v121
  %v316 = vunpack.c.l.b16 %v122
  %v317 = vunpack.c.l.b16 %v123
  %v318 = vunpack.c.l.b16 %v124
  %v319 = vunpack.c.l.b16 %v125
  %v320 = vunpack.c.l.b16 %v126
  %v321 = vunpack.c.l.b16 %v127
  %v322 = vunpack.c.l.b16 %v128
  %v323 = vunpack.c.l.b16 %v129
  %v324 = vunpack.c.l.b16 %v130
  %v325 = vunpack.c.l.b16 %v131
  %v326 = vunpack.c.l.b16 %v132
  %v327 = vunpack.c.l.b16 %v133
  %v328 = vunpack.c.l.b16 %v134
  %v329 = vunpack.c.l.b16 %v135
  %v330 = vunpack.c.l.b16 %v136
  %v331 = vunpack.c.l.b16 %v137
  %v332 = vunpack.c.l.b16 %v138
  %v333 = vunpack.c.l.b16 %v139
  %v334 = vunpack.c.l.b16 %v140
  %v335 = vunpack.c.l.b16 %v141
  %v336 = vunpack.c.l.b16 %v142
  %v337 = vunpack.c.l.b16 %v143
  %v338 = vunpack.c.l.b16 %v144
  %v339 = vunpack.c.l.b16 %v145
  %v340 = vunpack.c.l.b16 %v146
  %v341 = vunpack.c.l.b16 %v147
  %v342 = vunpack.c.l.b16 %v148
  %v343 = vunpack.c.l.b16 %v149
  %v344 = vunpack.c.l.b16 %v150
  %v345 = vunpack.c.l.b16 %v151
  %v346 = vunpack.c.l.b16 %v152
  %v347 = vunpack.c.l.b16 %v153
  %v348 = vunpack.c.l.b16 %v154
  %v349 = vunpack.c.l.b16 %v155
  %v350 = vunpack.c.l.b16 %v156
  %v351 = vunpack.c.l.b16 %v157
  %v352 = vpack.c.b16 %v281, %v280
  %v353 = vpack.c.b16 %v283, %v282
  %v354 = vpack.c.b16 %v285, %v284
  %v355 = vpack.c.b16 %v287, %v286
  %v356 = vpack.c.b16 %v289, %v288
  %v357 = vpack.c.b16 %v291, %v290
  %v358 = vpack.c.b16 %v293, %v292
  %v359 = vpack.c.b16 %v295, %v294
  %v360 = vpack.c.b16 %v297, %v296
  %v361 = vpack.c.b16 %v299, %v298
  %v362 = vpack.c.b16 %v301, %v300
  %v363 = vpack.c.b16 %v303, %v302
  %v364 = vpack.c.b16 %v305, %v304
  %v365 = vpack.c.b16 %v307, %v306
  %v366 = vpack.c.b16 %v309, %v308
  %v367 = vpack.c.b16 %v311, %v310
  %v368 = vpack.c.b16 %v313, %v312
  %v369 = vpack.c.b16 %v315, %v314
  %v370 = vpack.c.b16 %v317, %v316
  %v371 = vpack.c.b16 %v319, %v318
  %v372 = vpack.c.b16 %v321, %v320
  %v373 = vpack.c.b16 %v323, %v322
  %v374 = vpack.c.b16 %v325, %v324
  %v375 = vpack.c.b16 %v327, %v326
  %v376 = vpack.c.b16 %v329, %v328
  %v377 = vpack.c.b16 %v331, %v330
  %v378 = vpack.c.b16 %v333, %v332
  %v379 = vpack.c.b16 %v335, %v334
  %v380 = vpack.c.b16 %v337, %v336
  %v381 = vpack.c.b16 %v339, %v338
  %v382 = vpack.c.b16 %v341, %v340
  %v383 = vpack.c.b16 %v343, %v342
  %v384 = vpack.c.b16 %v345, %v344
  %v385 = vpack.c.b16 %v347, %v346
  %v386 = vpack.c.b16 %v349, %v348
  %v387 = vpack.c.b16 %v351, %v350
  %vm424 = vcmask 523264
  %v426 = vsel %vm424, %v194, 0
  %v429 = vsel %vm424, %v199, 0
  %431 = vmatprep.subr.bf16.mxu0 0
  %432 = vmatpush1.bf16.msra.mxu0 %v352
  %433 = vmatprep.subr.bf16.mxu0 0
  %434 = vmatpush1.bf16.msra.mxu0 %v353
  %435 = vmatprep.subr.bf16.mxu0 0
  %436 = vmatpush1.bf16.msra.mxu0 %v354
  %437 = vmatprep.subr.bf16.mxu0 0
  %438 = vmatpush1.bf16.msra.mxu0 %v355
  %439 = vmatprep.subr.bf16.mxu0 0
  %440 = vmatpush1.bf16.msra.mxu0 %v356
  %441 = vmatprep.subr.bf16.mxu0 0
  %442 = vmatpush1.bf16.msra.mxu0 %v357
  %443 = vmatprep.subr.bf16.mxu0 0
  %444 = vmatpush1.bf16.msra.mxu0 %v358
  %445 = vmatprep.subr.bf16.mxu0 0
  %446 = vmatpush1.bf16.msra.mxu0 %v359
  %447 = vmatprep.subr.bf16.mxu0 0
  %448 = vmatpush1.bf16.msra.mxu0 %v360
  %449 = vmatprep.subr.bf16.mxu0 0
  %450 = vmatpush1.bf16.msra.mxu0 %v361
  %451 = vmatprep.subr.bf16.mxu0 0
  %452 = vmatpush1.bf16.msra.mxu0 %v362
  %453 = vmatprep.subr.bf16.mxu0 0
  %454 = vmatpush1.bf16.msra.mxu0 %v363
  %455 = vmatprep.subr.bf16.mxu0 0
  %456 = vmatpush1.bf16.msra.mxu0 %v364
  %457 = vmatprep.subr.bf16.mxu0 0
  %458 = vmatpush1.bf16.msra.mxu0 %v365
  %459 = vmatprep.subr.bf16.mxu0 0
  %460 = vmatpush1.bf16.msra.mxu0 %v366
  %461 = vmatprep.subr.bf16.mxu0 0
  %462 = vmatpush1.bf16.msra.mxu0 %v367
  %463 = vmatprep.mubr.bf16.mxu0 %v191
  %464 = vmatmul.mubr.bf16.gmra.mrb[0].mxu0 %v190
  %v465 = vpop.f32.mrb[0].mxu0
  %v466 = vadd.f32 0.0, %v465
  %v467 = vpop.f32.mrb[0].mxu0
  %v468 = vpop.f32.mrb[0].mxu0
  %v469 = vadd.f32 0.0, %v468
  %v470 = vpop.f32.mrb[0].mxu0
  %471 = vmatprep.mubr.bf16.mxu0 %v196
  %472 = vmatmul.mubr.bf16.gmra.mrb[0].mxu0 %v195
  %v473 = vpop.f32.mrb[0].mxu0
  %v474 = vadd.f32 0.0, %v473
  %v475 = vpop.f32.mrb[0].mxu0
  %v476 = vpop.f32.mrb[0].mxu0
  %v477 = vadd.f32 0.0, %v476
  %v478 = vpop.f32.mrb[0].mxu0
  %479 = vdwg.mxu0
  %480 = vmatprep.subr.bf16.mxu0 0
  %481 = vmatpush1.bf16.msra.mxu0 %v368
  %482 = vmatprep.subr.bf16.mxu0 0
  %483 = vmatpush1.bf16.msra.mxu0 %v369
  %484 = vmatprep.subr.bf16.mxu0 0
  %485 = vmatpush1.bf16.msra.mxu0 %v370
  %486 = vmatprep.subr.bf16.mxu0 0
  %487 = vmatpush1.bf16.msra.mxu0 %v371
  %488 = vmatprep.subr.bf16.mxu0 0
  %489 = vmatpush1.bf16.msra.mxu0 %v372
  %490 = vmatprep.subr.bf16.mxu0 0
  %491 = vmatpush1.bf16.msra.mxu0 %v373
  %492 = vmatprep.subr.bf16.mxu0 0
  %493 = vmatpush1.bf16.msra.mxu0 %v374
  %494 = vmatprep.subr.bf16.mxu0 0
  %495 = vmatpush1.bf16.msra.mxu0 %v375
  %496 = vmatprep.subr.bf16.mxu0 0
  %497 = vmatpush1.bf16.msra.mxu0 %v376
  %498 = vmatprep.subr.bf16.mxu0 0
  %499 = vmatpush1.bf16.msra.mxu0 %v377
  %500 = vmatprep.subr.bf16.mxu0 0
  %501 = vmatpush1.bf16.msra.mxu0 %v378
  %502 = vmatprep.subr.bf16.mxu0 0
  %503 = vmatpush1.bf16.msra.mxu0 %v379
  %504 = vmatprep.subr.bf16.mxu0 0
  %505 = vmatpush1.bf16.msra.mxu0 %v380
  %506 = vmatprep.subr.bf16.mxu0 0
  %507 = vmatpush1.bf16.msra.mxu0 %v381
  %508 = vmatprep.subr.bf16.mxu0 0
  %509 = vmatpush1.bf16.msra.mxu0 %v382
  %510 = vmatprep.subr.bf16.mxu0 0
  %511 = vmatpush1.bf16.msra.mxu0 %v383
  %512 = vmatprep.mubr.bf16.mxu0 %v193
  %513 = vmatmul.mubr.bf16.gmra.mrb[0].mxu0 %v192
  %v514 = vpop.f32.mrb[0].mxu0
  %v515 = vadd.f32 %v466, %v514
  %v516 = vpop.f32.mrb[0].mxu0
  %v517 = vpop.f32.mrb[0].mxu0
  %v518 = vadd.f32 %v469, %v517
  %v519 = vpop.f32.mrb[0].mxu0
  %520 = vmatprep.mubr.bf16.mxu0 %v198
  %521 = vmatmul.mubr.bf16.gmra.mrb[0].mxu0 %v197
  %v522 = vpop.f32.mrb[0].mxu0
  %v523 = vadd.f32 %v474, %v522
  %v524 = vpop.f32.mrb[0].mxu0
  %v525 = vpop.f32.mrb[0].mxu0
  %v526 = vadd.f32 %v477, %v525
  %v527 = vpop.f32.mrb[0].mxu0
  %528 = vdwg.mxu0
  %529 = vmatprep.subr.bf16.mxu0 0
  %530 = vmatpush1.bf16.msra.mxu0 %v384
  %531 = vmatprep.subr.bf16.mxu0 0
  %532 = vmatpush1.bf16.msra.mxu0 %v385
  %533 = vmatprep.subr.bf16.mxu0 0
  %534 = vmatpush1.bf16.msra.mxu0 %v386
  %535 = vmatprep.subr.bf16.mxu0 0
  %536 = vmatpush1.bf16.msra.mxu0 %v387
  %537 = vmatprep.subr.bf16.mxu0 0
  %538 = vmatpush1.bf16.msra.mxu0 0
  %539 = vmatprep.subr.bf16.mxu0 0
  %540 = vmatpush1.bf16.msra.mxu0 0
  %541 = vmatprep.subr.bf16.mxu0 0
  %542 = vmatpush1.bf16.msra.mxu0 0
  %543 = vmatprep.subr.bf16.mxu0 0
  %544 = vmatpush1.bf16.msra.mxu0 0
  %545 = vmatprep.subr.bf16.mxu0 0
  %546 = vmatpush1.bf16.msra.mxu0 0
  %547 = vmatprep.subr.bf16.mxu0 0
  %548 = vmatpush1.bf16.msra.mxu0 0
  %549 = vmatprep.subr.bf16.mxu0 0
  %550 = vmatpush1.bf16.msra.mxu0 0
  %551 = vmatprep.subr.bf16.mxu0 0
  %552 = vmatpush1.bf16.msra.mxu0 0
  %553 = vmatprep.subr.bf16.mxu0 0
  %554 = vmatpush1.bf16.msra.mxu0 0
  %555 = vmatprep.subr.bf16.mxu0 0
  %556 = vmatpush1.bf16.msra.mxu0 0
  %557 = vmatprep.subr.bf16.mxu0 0
  %558 = vmatpush1.bf16.msra.mxu0 0
  %559 = vmatprep.subr.bf16.mxu0 0
  %560 = vmatpush1.bf16.msra.mxu0 0
  %561 = vmatprep.mubr.bf16.mxu0 0
  %562 = vmatmul.mubr.bf16.gmra.mrb[0].mxu0 %v426
  %v563 = vpop.f32.mrb[0].mxu0
  %v564 = vadd.f32 %v515, %v563
  %v565 = vpop.f32.mrb[0].mxu0
  %v566 = vpop.f32.mrb[0].mxu0
  %v567 = vadd.f32 %v518, %v566
  %v568 = vpop.f32.mrb[0].mxu0
  %569 = vmatprep.mubr.bf16.mxu0 0
  %570 = vmatmul.mubr.bf16.gmra.mrb[0].mxu0 %v429
  %v571 = vpop.f32.mrb[0].mxu0
  %v572 = vadd.f32 %v523, %v571
  %v573 = vpop.f32.mrb[0].mxu0
  %v574 = vpop.f32.mrb[0].mxu0
  %v575 = vadd.f32 %v526, %v574
  %v576 = vpop.f32.mrb[0].mxu0
  %577 = vdwg.mxu0
  %v586 = vunpack.c.l.b16 %v30
  %v587 = vunpack.c.h.b16 %v30
  %v588 = vunpack.c.l.b16 %v31
  %v589 = vunpack.c.l.b16 %v32
  %v590 = vunpack.c.h.b16 %v32
  %v591 = vunpack.c.l.b16 %v33
  %v592 = vunpack.c.l.b16 %v34
  %v593 = vunpack.c.h.b16 %v34
  %v594 = vunpack.c.l.b16 %v35
  %v595 = vunpack.c.l.b16 %v36
  %v596 = vunpack.c.h.b16 %v36
  %v597 = vunpack.c.l.b16 %v37
  %v598 = vpack.c.b16 %v589, %v586
  %v599 = vpack.c.b16 %v590, %v587
  %v600 = vpack.c.b16 %v591, %v588
  %v601 = vpack.c.b16 %v595, %v592
  %v602 = vpack.c.b16 %v596, %v593
  %v603 = vpack.c.b16 %v597, %v594
  %v644 = vunpack.c.l.b16 %v38
  %v645 = vunpack.c.l.b16 %v39
  %v646 = vunpack.c.l.b16 %v40
  %v647 = vunpack.c.l.b16 %v41
  %v648 = vunpack.c.l.b16 %v42
  %v649 = vunpack.c.l.b16 %v43
  %v650 = vunpack.c.l.b16 %v44
  %v651 = vunpack.c.l.b16 %v45
  %v652 = vunpack.c.l.b16 %v46
  %v653 = vunpack.c.l.b16 %v47
  %v654 = vunpack.c.l.b16 %v48
  %v655 = vunpack.c.l.b16 %v49
  %v656 = vunpack.c.l.b16 %v50
  %v657 = vunpack.c.l.b16 %v51
  %v658 = vunpack.c.l.b16 %v52
  %v659 = vunpack.c.l.b16 %v53
  %v660 = vunpack.c.l.b16 %v54
  %v661 = vunpack.c.l.b16 %v55
  %v662 = vunpack.c.l.b16 %v56
  %v663 = vunpack.c.l.b16 %v57
  %v664 = vunpack.c.l.b16 %v58
  %v665 = vunpack.c.l.b16 %v59
  %v666 = vunpack.c.l.b16 %v60
  %v667 = vunpack.c.l.b16 %v61
  %v668 = vunpack.c.l.b16 %v62
  %v669 = vunpack.c.l.b16 %v63
  %v670 = vunpack.c.l.b16 %v64
  %v671 = vunpack.c.l.b16 %v65
  %v672 = vunpack.c.l.b16 %v66
  %v673 = vunpack.c.l.b16 %v67
  %v674 = vunpack.c.l.b16 %v68
  %v675 = vunpack.c.l.b16 %v69
  %v676 = vunpack.c.l.b16 %v70
  %v677 = vunpack.c.l.b16 %v71
  %v678 = vunpack.c.l.b16 %v72
  %v679 = vunpack.c.l.b16 %v73
  %v680 = vpack.c.b16 %v645, %v644
  %v681 = vpack.c.b16 %v647, %v646
  %v682 = vpack.c.b16 %v649, %v648
  %v683 = vpack.c.b16 %v651, %v650
  %v684 = vpack.c.b16 %v653, %v652
  %v685 = vpack.c.b16 %v655, %v654
  %v686 = vpack.c.b16 %v657, %v656
  %v687 = vpack.c.b16 %v659, %v658
  %v688 = vpack.c.b16 %v661, %v660
  %v689 = vpack.c.b16 %v663, %v662
  %v690 = vpack.c.b16 %v665, %v664
  %v691 = vpack.c.b16 %v667, %v666
  %v692 = vpack.c.b16 %v669, %v668
  %v693 = vpack.c.b16 %v671, %v670
  %v694 = vpack.c.b16 %v673, %v672
  %v695 = vpack.c.b16 %v675, %v674
  %v696 = vpack.c.b16 %v677, %v676
  %v697 = vpack.c.b16 %v679, %v678
  %vm716 = vcmask 261120
  %v718 = vsel %vm716, %v600, 0
  %v721 = vsel %vm716, %v603, 0
  %723 = vmatprep.subr.bf16.mxu0 0
  %724 = vmatpush1.bf16.msra.mxu0 %v680
  %725 = vmatprep.subr.bf16.mxu0 0
  %726 = vmatpush1.bf16.msra.mxu0 %v681
  %727 = vmatprep.subr.bf16.mxu0 0
  %728 = vmatpush1.bf16.msra.mxu0 %v682
  %729 = vmatprep.subr.bf16.mxu0 0
  %730 = vmatpush1.bf16.msra.mxu0 %v683
  %731 = vmatprep.subr.bf16.mxu0 0
  %732 = vmatpush1.bf16.msra.mxu0 %v684
  %733 = vmatprep.subr.bf16.mxu0 0
  %734 = vmatpush1.bf16.msra.mxu0 %v685
  %735 = vmatprep.subr.bf16.mxu0 0
  %736 = vmatpush1.bf16.msra.mxu0 %v686
  %737 = vmatprep.subr.bf16.mxu0 0
  %738 = vmatpush1.bf16.msra.mxu0 %v687
  %739 = vmatprep.subr.bf16.mxu0 0
  %740 = vmatpush1.bf16.msra.mxu0 %v688
  %741 = vmatprep.subr.bf16.mxu0 0
  %742 = vmatpush1.bf16.msra.mxu0 %v689
  %743 = vmatprep.subr.bf16.mxu0 0
  %744 = vmatpush1.bf16.msra.mxu0 %v690
  %745 = vmatprep.subr.bf16.mxu0 0
  %746 = vmatpush1.bf16.msra.mxu0 %v691
  %747 = vmatprep.subr.bf16.mxu0 0
  %748 = vmatpush1.bf16.msra.mxu0 %v692
  %749 = vmatprep.subr.bf16.mxu0 0
  %750 = vmatpush1.bf16.msra.mxu0 %v693
  %751 = vmatprep.subr.bf16.mxu0 0
  %752 = vmatpush1.bf16.msra.mxu0 %v694
  %753 = vmatprep.subr.bf16.mxu0 0
  %754 = vmatpush1.bf16.msra.mxu0 %v695
  %755 = vmatprep.mubr.bf16.mxu0 %v599
  %756 = vmatmul.mubr.bf16.gmra.mrb[0].mxu0 %v598
  %v757 = vpop.f32.mrb[0].mxu0
  %v758 = vadd.f32 %v564, %v757
  %v759 = vpop.f32.mrb[0].mxu0
  %v760 = vpop.f32.mrb[0].mxu0
  %v761 = vadd.f32 %v567, %v760
  %v762 = vpop.f32.mrb[0].mxu0
  %763 = vmatprep.mubr.bf16.mxu0 %v602
  %764 = vmatmul.mubr.bf16.gmra.mrb[0].mxu0 %v601
  %v765 = vpop.f32.mrb[0].mxu0
  %v766 = vadd.f32 %v572, %v765
  %v767 = vpop.f32.mrb[0].mxu0
  %v768 = vpop.f32.mrb[0].mxu0
  %v769 = vadd.f32 %v575, %v768
  %v770 = vpop.f32.mrb[0].mxu0
  %771 = vdwg.mxu0
  %772 = vmatprep.subr.bf16.mxu0 0
  %773 = vmatpush1.bf16.msra.mxu0 %v696
  %774 = vmatprep.subr.bf16.mxu0 0
  %775 = vmatpush1.bf16.msra.mxu0 %v697
  %776 = vmatprep.subr.bf16.mxu0 0
  %777 = vmatpush1.bf16.msra.mxu0 0
  %778 = vmatprep.subr.bf16.mxu0 0
  %779 = vmatpush1.bf16.msra.mxu0 0
  %780 = vmatprep.subr.bf16.mxu0 0
  %781 = vmatpush1.bf16.msra.mxu0 0
  %782 = vmatprep.subr.bf16.mxu0 0
  %783 = vmatpush1.bf16.msra.mxu0 0
  %784 = vmatprep.subr.bf16.mxu0 0
  %785 = vmatpush1.bf16.msra.mxu0 0
  %786 = vmatprep.subr.bf16.mxu0 0
  %787 = vmatpush1.bf16.msra.mxu0 0
  %788 = vmatprep.subr.bf16.mxu0 0
  %789 = vmatpush1.bf16.msra.mxu0 0
  %790 = vmatprep.subr.bf16.mxu0 0
  %791 = vmatpush1.bf16.msra.mxu0 0
  %792 = vmatprep.subr.bf16.mxu0 0
  %793 = vmatpush1.bf16.msra.mxu0 0
  %794 = vmatprep.subr.bf16.mxu0 0
  %795 = vmatpush1.bf16.msra.mxu0 0
  %796 = vmatprep.subr.bf16.mxu0 0
  %797 = vmatpush1.bf16.msra.mxu0 0
  %798 = vmatprep.subr.bf16.mxu0 0
  %799 = vmatpush1.bf16.msra.mxu0 0
  %800 = vmatprep.subr.bf16.mxu0 0
  %801 = vmatpush1.bf16.msra.mxu0 0
  %802 = vmatprep.subr.bf16.mxu0 0
  %803 = vmatpush1.bf16.msra.mxu0 0
  %804 = vmatprep.mubr.bf16.mxu0 0
  %805 = vmatmul.mubr.bf16.gmra.mrb[0].mxu0 %v718
  %v806 = vpop.f32.mrb[0].mxu0
  %v807 = vadd.f32 %v758, %v806
  %v808 = vpop.f32.mrb[0].mxu0
  %v809 = vpop.f32.mrb[0].mxu0
  %v810 = vadd.f32 %v761, %v809
  %v811 = vpop.f32.mrb[0].mxu0
  %812 = vmatprep.mubr.bf16.mxu0 0
  %813 = vmatmul.mubr.bf16.gmra.mrb[0].mxu0 %v721
  %v814 = vpop.f32.mrb[0].mxu0
  %v815 = vadd.f32 %v766, %v814
  %v816 = vpop.f32.mrb[0].mxu0
  %v817 = vpop.f32.mrb[0].mxu0
  %v818 = vadd.f32 %v769, %v817
  %v819 = vpop.f32.mrb[0].mxu0
  %820 = vdwg.mxu0
  %v821 = vld [vmem:[%s4] sm:$0x1]
  %v823 = vlaneseq
  %v824 = vshrl.u32 %v823, 7
  %v825 = vsub.s32 0, %v824
  %v826 = vrot.slane %v821, %v825
  %v828 = vadd.f32 %v807, %v826
  %v829 = vadd.f32 %v810, %v826
  %v830 = vadd.f32 %v815, %v826
  %v831 = vadd.f32 %v818, %v826
  %v832 = vld [vmem:[%s5] sm:$0xff]
  %v833 = vld [vmem:[%s5 + $0x8] sm:$0xff]
  %v834 = vld [vmem:[%s5 + $0x10] sm:$0xff]
  %v835 = vld [vmem:[%s5 + $0x18] sm:$0xff]
  %v836 = vadd.f32 %v828, %v832
  %v837 = vadd.f32 %v829, %v833
  %v838 = vadd.f32 %v830, %v834
  %v839 = vadd.f32 %v831, %v835
  %v840 = vtanh.pop %v836
  %v841 = vtanh.pop %v837
  %v842 = vtanh.pop %v838
  %v843 = vtanh.pop %v839
  %v844 = vld [vmem:[%s6] sm:$0xff]
  %v845 = vld [vmem:[%s6 + $0x8] sm:$0xff]
  %v846 = vld [vmem:[%s6 + $0x10] sm:$0xff]
  %v847 = vld [vmem:[%s6 + $0x18] sm:$0xff]
  %v848 = vsub.f32 1.0, %v844
  %v849 = vsub.f32 1.0, %v845
  %v850 = vsub.f32 1.0, %v846
  %v851 = vsub.f32 1.0, %v847
  %v852 = vld [vmem:[%s7] sm:$0xff]
  %v853 = vld [vmem:[%s7 + $0x8] sm:$0xff]
  %v854 = vld [vmem:[%s7 + $0x10] sm:$0xff]
  %v855 = vld [vmem:[%s7 + $0x18] sm:$0xff]
  %v856 = vmul.f32 %v848, %v852
  %v857 = vmul.f32 %v849, %v853
  %v858 = vmul.f32 %v850, %v854
  %v859 = vmul.f32 %v851, %v855
  %v860 = vmul.f32 %v844, %v840
  %v861 = vmul.f32 %v845, %v841
  %v862 = vmul.f32 %v846, %v842
  %v863 = vmul.f32 %v847, %v843
  %v864 = vadd.f32 %v856, %v860
  %v865 = vadd.f32 %v857, %v861
  %v866 = vadd.f32 %v858, %v862
  %v867 = vadd.f32 %v859, %v863
  %868 = vst.msk [vmem:[%s8] sm:$0xff] %vm716, %v864
  %869 = vst.msk [vmem:[%s8 + $0x8] sm:$0xff] %vm716, %v865
  %870 = vst.msk [vmem:[%s8 + $0x10] sm:$0xff] %vm716, %v866
  %871 = vst.msk [vmem:[%s8 + $0x18] sm:$0xff] %vm716, %v867
  // Predicated region
  $region34: #{raft_stereo_human_forward.33} parent=0 // pred_check
    _
  $region35: #{raft_stereo_human_forward.33} parent=0 // pred_check_branch
    %873 = sbr.rel (0) target = $region37
  $region36: #{raft_stereo_human_forward.33} parent=0 // pred_region
    _
  $region37: #{raft_stereo_human_forward.33} parent=0 // pred_fallthru
    _
  // Predicated region
  $region38: #{raft_stereo_human_forward.33} parent=0 // pred_check
    _
  $region39: #{raft_stereo_human_forward.33} parent=0 // pred_check_branch
    %875 = sbr.rel (0) target = $region41
  $region40: #{raft_stereo_human_forward.33} parent=0 // pred_region
    _
  $region41: #{raft_stereo_human_forward.33} parent=0 // pred_fallthru
    _

// kernel: raft_stereo_human_forward.34
$region0: #{raft_stereo_human_forward.34}
  #allocation0 [shape = 'u32[]', space=smem, size = 0x4, offset = 0x4, fixed_abs, tag = 'smem constant byte address 0x4 - core index']
  #allocation1 [shape = 'u32[144,128]{1,0:T(1,128)}', space=vmem, size = 0x12000, scoped, tag = 'internal scratch']
  %s0 = inlined_call_operand.vmem [shape: bf16[32,288], index: 0, kind: input, shape index: {}]
  %s1 = inlined_call_operand.vmem [shape: bf16[288,128], index: 1, kind: input, shape index: {}]
  %s2 = inlined_call_operand.vmem [shape: f32[1,128], index: 2, kind: input, shape index: {}]
  %s3 = inlined_call_operand.vmem [shape: f32[32,128], index: 3, kind: output, shape index: {}]
  %s4 = sld [smem:[#allocation0]]
  $region22: #{raft_stereo_human_forward.34} parent=0
    _
  %s6 = ssub.s32 1, %s4
  %s7 = scalar_select 0, %s6, %s4
  // Predicated region
  $region2: #{raft_stereo_human_forward.34} parent=0 // pred_check
    _
  $region3: #{raft_stereo_human_forward.34} parent=0 // pred_check_branch
    %9 = sbr.rel (0) target = $region5
  $region4: #{raft_stereo_human_forward.34} parent=0 // pred_region
    _
  $region5: #{raft_stereo_human_forward.34} parent=0 // pred_fallthru
    _
  // Predicated region
  $region6: #{raft_stereo_human_forward.34} parent=0 // pred_check
    _
  $region7: #{raft_stereo_human_forward.34} parent=0 // pred_check_branch
    %11 = sbr.rel (0) target = $region9
  $region8: #{raft_stereo_human_forward.34} parent=0 // pred_region
    _
  $region9: #{raft_stereo_human_forward.34} parent=0 // pred_fallthru
    _
  // Predicated region
  $region10: #{raft_stereo_human_forward.34} parent=0 // pred_check
    _
  $region11: #{raft_stereo_human_forward.34} parent=0 // pred_check_branch
    %13 = sbr.rel (0) target = $region13
  $region12: #{raft_stereo_human_forward.34} parent=0 // pred_region
    _
  $region13: #{raft_stereo_human_forward.34} parent=0 // pred_fallthru
    _
  %v15 = vld [vmem:[%s0] sm:$0xff]
  %v16 = vld [vmem:[%s0 + $0x8] sm:$0xf]
  %v17 = vld [vmem:[%s0 + $0xc] sm:$0xff]
  %v18 = vld [vmem:[%s0 + $0x14] sm:$0xf]
  %v19 = vld [vmem:[%s0 + $0x18] sm:$0xff]
  %v20 = vld [vmem:[%s0 + $0x20] sm:$0xf]
  %v21 = vld [vmem:[%s0 + $0x24] sm:$0xff]
  %v22 = vld [vmem:[%s0 + $0x2c] sm:$0xf]
  %v23 = vld [vmem:[%s1] sm:$0xf]
  %v24 = vld [vmem:[%s1 + $0x4] sm:$0xf]
  %v25 = vld [vmem:[%s1 + $0x8] sm:$0xf]
  %v26 = vld [vmem:[%s1 + $0xc] sm:$0xf]
  %v27 = vld [vmem:[%s1 + $0x10] sm:$0xf]
  %v28 = vld [vmem:[%s1 + $0x14] sm:$0xf]
  %v29 = vld [vmem:[%s1 + $0x18] sm:$0xf]
  %v30 = vld [vmem:[%s1 + $0x1c] sm:$0xf]
  %v31 = vld [vmem:[%s1 + $0x20] sm:$0xf]
  %v32 = vld [vmem:[%s1 + $0x24] sm:$0xf]
  %v33 = vld [vmem:[%s1 + $0x28] sm:$0xf]
  %v34 = vld [vmem:[%s1 + $0x2c] sm:$0xf]
  %v35 = vld [vmem:[%s1 + $0x30] sm:$0xf]
  %v36 = vld [vmem:[%s1 + $0x34] sm:$0xf]
  %v37 = vld [vmem:[%s1 + $0x38] sm:$0xf]
  %v38 = vld [vmem:[%s1 + $0x3c] sm:$0xf]
  %v39 = vld [vmem:[%s1 + $0x40] sm:$0xf]
  %v40 = vld [vmem:[%s1 + $0x44] sm:$0xf]
  %v41 = vld [vmem:[%s1 + $0x48] sm:$0xf]
  %v42 = vld [vmem:[%s1 + $0x4c] sm:$0xf]
  %v43 = vld [vmem:[%s1 + $0x50] sm:$0xf]
  %v44 = vld [vmem:[%s1 + $0x54] sm:$0xf]
  %v45 = vld [vmem:[%s1 + $0x58] sm:$0xf]
  %v46 = vld [vmem:[%s1 + $0x5c] sm:$0xf]
  %v47 = vld [vmem:[%s1 + $0x60] sm:$0xf]
  %v48 = vld [vmem:[%s1 + $0x64] sm:$0xf]
  %v49 = vld [vmem:[%s1 + $0x68] sm:$0xf]
  %v50 = vld [vmem:[%s1 + $0x6c] sm:$0xf]
  %v51 = vld [vmem:[%s1 + $0x70] sm:$0xf]
  %v52 = vld [vmem:[%s1 + $0x74] sm:$0xf]
  %v53 = vld [vmem:[%s1 + $0x78] sm:$0xf]
  %v54 = vld [vmem:[%s1 + $0x7c] sm:$0xf]
  %v55 = vld [vmem:[%s1 + $0x80] sm:$0xf]
  %v56 = vld [vmem:[%s1 + $0x84] sm:$0xf]
  %v57 = vld [vmem:[%s1 + $0x88] sm:$0xf]
  %v58 = vld [vmem:[%s1 + $0x8c] sm:$0xf]
  %v59 = vld [vmem:[%s2] sm:$0x1]
  %v61 = vlaneseq
  %v62 = vshrl.u32 %v61, 7
  %v63 = vsub.s32 0, %v62
  %v64 = vrot.slane %v59, %v63
  %v74 = vunpack.c.l.b16 %v15
  %v75 = vunpack.c.h.b16 %v15
  %v76 = vunpack.c.l.b16 %v16
  %v77 = vunpack.c.l.b16 %v17
  %v78 = vunpack.c.h.b16 %v17
  %v79 = vunpack.c.l.b16 %v18
  %v80 = vunpack.c.l.b16 %v19
  %v81 = vunpack.c.h.b16 %v19
  %v82 = vunpack.c.l.b16 %v20
  %v83 = vunpack.c.l.b16 %v21
  %v84 = vunpack.c.h.b16 %v21
  %v85 = vunpack.c.l.b16 %v22
  %v86 = vpack.c.b16 %v77, %v74
  %v87 = vpack.c.b16 %v78, %v75
  %v88 = vpack.c.b16 %v79, %v76
  %v89 = vpack.c.b16 %v83, %v80
  %v90 = vpack.c.b16 %v84, %v81
  %v91 = vpack.c.b16 %v85, %v82
  %v132 = vunpack.c.l.b16 %v23
  %v133 = vunpack.c.l.b16 %v24
  %v134 = vunpack.c.l.b16 %v25
  %v135 = vunpack.c.l.b16 %v26
  %v136 = vunpack.c.l.b16 %v27
  %v137 = vunpack.c.l.b16 %v28
  %v138 = vunpack.c.l.b16 %v29
  %v139 = vunpack.c.l.b16 %v30
  %v140 = vunpack.c.l.b16 %v31
  %v141 = vunpack.c.l.b16 %v32
  %v142 = vunpack.c.l.b16 %v33
  %v143 = vunpack.c.l.b16 %v34
  %v144 = vunpack.c.l.b16 %v35
  %v145 = vunpack.c.l.b16 %v36
  %v146 = vunpack.c.l.b16 %v37
  %v147 = vunpack.c.l.b16 %v38
  %v148 = vunpack.c.l.b16 %v39
  %v149 = vunpack.c.l.b16 %v40
  %v150 = vunpack.c.l.b16 %v41
  %v151 = vunpack.c.l.b16 %v42
  %v152 = vunpack.c.l.b16 %v43
  %v153 = vunpack.c.l.b16 %v44
  %v154 = vunpack.c.l.b16 %v45
  %v155 = vunpack.c.l.b16 %v46
  %v156 = vunpack.c.l.b16 %v47
  %v157 = vunpack.c.l.b16 %v48
  %v158 = vunpack.c.l.b16 %v49
  %v159 = vunpack.c.l.b16 %v50
  %v160 = vunpack.c.l.b16 %v51
  %v161 = vunpack.c.l.b16 %v52
  %v162 = vunpack.c.l.b16 %v53
  %v163 = vunpack.c.l.b16 %v54
  %v164 = vunpack.c.l.b16 %v55
  %v165 = vunpack.c.l.b16 %v56
  %v166 = vunpack.c.l.b16 %v57
  %v167 = vunpack.c.l.b16 %v58
  %v168 = vpack.c.b16 %v133, %v132
  %v169 = vpack.c.b16 %v135, %v134
  %v170 = vpack.c.b16 %v137, %v136
  %v171 = vpack.c.b16 %v139, %v138
  %v172 = vpack.c.b16 %v141, %v140
  %v173 = vpack.c.b16 %v143, %v142
  %v174 = vpack.c.b16 %v145, %v144
  %v175 = vpack.c.b16 %v147, %v146
  %v176 = vpack.c.b16 %v149, %v148
  %v177 = vpack.c.b16 %v151, %v150
  %v178 = vpack.c.b16 %v153, %v152
  %v179 = vpack.c.b16 %v155, %v154
  %v180 = vpack.c.b16 %v157, %v156
  %v181 = vpack.c.b16 %v159, %v158
  %v182 = vpack.c.b16 %v161, %v160
  %v183 = vpack.c.b16 %v163, %v162
  %v184 = vpack.c.b16 %v165, %v164
  %v185 = vpack.c.b16 %v167, %v166
  %vm204 = vcmask 261120
  %v206 = vsel %vm204, %v88, 0
  %v209 = vsel %vm204, %v91, 0
  %211 = vmatprep.subr.bf16.mxu0 0
  %212 = vmatpush1.bf16.msra.mxu0 %v168
  %213 = vmatprep.subr.bf16.mxu0 0
  %214 = vmatpush1.bf16.msra.mxu0 %v169
  %215 = vmatprep.subr.bf16.mxu0 0
  %216 = vmatpush1.bf16.msra.mxu0 %v170
  %217 = vmatprep.subr.bf16.mxu0 0
  %218 = vmatpush1.bf16.msra.mxu0 %v171
  %219 = vmatprep.subr.bf16.mxu0 0
  %220 = vmatpush1.bf16.msra.mxu0 %v172
  %221 = vmatprep.subr.bf16.mxu0 0
  %222 = vmatpush1.bf16.msra.mxu0 %v173
  %223 = vmatprep.subr.bf16.mxu0 0
  %224 = vmatpush1.bf16.msra.mxu0 %v174
  %225 = vmatprep.subr.bf16.mxu0 0
  %226 = vmatpush1.bf16.msra.mxu0 %v175
  %227 = vmatprep.subr.bf16.mxu0 0
  %228 = vmatpush1.bf16.msra.mxu0 %v176
  %229 = vmatprep.subr.bf16.mxu0 0
  %230 = vmatpush1.bf16.msra.mxu0 %v177
  %231 = vmatprep.subr.bf16.mxu0 0
  %232 = vmatpush1.bf16.msra.mxu0 %v178
  %233 = vmatprep.subr.bf16.mxu0 0
  %234 = vmatpush1.bf16.msra.mxu0 %v179
  %235 = vmatprep.subr.bf16.mxu0 0
  %236 = vmatpush1.bf16.msra.mxu0 %v180
  %237 = vmatprep.subr.bf16.mxu0 0
  %238 = vmatpush1.bf16.msra.mxu0 %v181
  %239 = vmatprep.subr.bf16.mxu0 0
  %240 = vmatpush1.bf16.msra.mxu0 %v182
  %241 = vmatprep.subr.bf16.mxu0 0
  %242 = vmatpush1.bf16.msra.mxu0 %v183
  %243 = vmatprep.mubr.bf16.mxu0 %v87
  %244 = vmatmul.mubr.bf16.gmra.mrb[0].mxu0 %v86
  %v245 = vpop.f32.mrb[0].mxu0
  %v246 = vadd.f32 %v64, %v245
  %v247 = vpop.f32.mrb[0].mxu0
  %v248 = vpop.f32.mrb[0].mxu0
  %v249 = vadd.f32 %v64, %v248
  %v250 = vpop.f32.mrb[0].mxu0
  %251 = vmatprep.mubr.bf16.mxu0 %v90
  %252 = vmatmul.mubr.bf16.gmra.mrb[0].mxu0 %v89
  %v253 = vpop.f32.mrb[0].mxu0
  %v254 = vadd.f32 %v64, %v253
  %v255 = vpop.f32.mrb[0].mxu0
  %v256 = vpop.f32.mrb[0].mxu0
  %v257 = vadd.f32 %v64, %v256
  %v258 = vpop.f32.mrb[0].mxu0
  %259 = vdwg.mxu0
  %260 = vmatprep.subr.bf16.mxu0 0
  %261 = vmatpush1.bf16.msra.mxu0 %v184
  %262 = vmatprep.subr.bf16.mxu0 0
  %263 = vmatpush1.bf16.msra.mxu0 %v185
  %264 = vmatprep.subr.bf16.mxu0 0
  %265 = vmatpush1.bf16.msra.mxu0 0
  %266 = vmatprep.subr.bf16.mxu0 0
  %267 = vmatpush1.bf16.msra.mxu0 0
  %268 = vmatprep.subr.bf16.mxu0 0
  %269 = vmatpush1.bf16.msra.mxu0 0
  %270 = vmatprep.subr.bf16.mxu0 0
  %271 = vmatpush1.bf16.msra.mxu0 0
  %272 = vmatprep.subr.bf16.mxu0 0
  %273 = vmatpush1.bf16.msra.mxu0 0
  %274 = vmatprep.subr.bf16.mxu0 0
  %275 = vmatpush1.bf16.msra.mxu0 0
  %276 = vmatprep.subr.bf16.mxu0 0
  %277 = vmatpush1.bf16.msra.mxu0 0
  %278 = vmatprep.subr.bf16.mxu0 0
  %279 = vmatpush1.bf16.msra.mxu0 0
  %280 = vmatprep.subr.bf16.mxu0 0
  %281 = vmatpush1.bf16.msra.mxu0 0
  %282 = vmatprep.subr.bf16.mxu0 0
  %283 = vmatpush1.bf16.msra.mxu0 0
  %284 = vmatprep.subr.bf16.mxu0 0
  %285 = vmatpush1.bf16.msra.mxu0 0
  %286 = vmatprep.subr.bf16.mxu0 0
  %287 = vmatpush1.bf16.msra.mxu0 0
  %288 = vmatprep.subr.bf16.mxu0 0
  %289 = vmatpush1.bf16.msra.mxu0 0
  %290 = vmatprep.subr.bf16.mxu0 0
  %291 = vmatpush1.bf16.msra.mxu0 0
  %292 = vmatprep.mubr.bf16.mxu0 0
  %293 = vmatmul.mubr.bf16.gmra.mrb[0].mxu0 %v206
  %v294 = vpop.f32.mrb[0].mxu0
  %v295 = vadd.f32 %v246, %v294
  %v296 = vpop.f32.mrb[0].mxu0
  %v297 = vpop.f32.mrb[0].mxu0
  %v298 = vadd.f32 %v249, %v297
  %v299 = vpop.f32.mrb[0].mxu0
  %300 = vmatprep.mubr.bf16.mxu0 0
  %301 = vmatmul.mubr.bf16.gmra.mrb[0].mxu0 %v209
  %v302 = vpop.f32.mrb[0].mxu0
  %v303 = vadd.f32 %v254, %v302
  %v304 = vpop.f32.mrb[0].mxu0
  %v305 = vpop.f32.mrb[0].mxu0
  %v306 = vadd.f32 %v257, %v305
  %v307 = vpop.f32.mrb[0].mxu0
  %308 = vdwg.mxu0
  %v309 = vmax.f32 %v295, 0.0
  %v310 = vmax.f32 %v298, 0.0
  %v311 = vmax.f32 %v303, 0.0
  %v312 = vmax.f32 %v306, 0.0
  %313 = vst [vmem:[%s3] sm:$0xff] %v309
  %314 = vst [vmem:[%s3 + $0x8] sm:$0xff] %v310
  %315 = vst [vmem:[%s3 + $0x10] sm:$0xff] %v311
  %316 = vst [vmem:[%s3 + $0x18] sm:$0xff] %v312
  // Predicated region
  $region14: #{raft_stereo_human_forward.34} parent=0 // pred_check
    _
  $region15: #{raft_stereo_human_forward.34} parent=0 // pred_check_branch
    %318 = sbr.rel (0) target = $region17
  $region16: #{raft_stereo_human_forward.34} parent=0 // pred_region
    _
  $region17: #{raft_stereo_human_forward.34} parent=0 // pred_fallthru
    _
  // Predicated region
  $region18: #{raft_stereo_human_forward.34} parent=0 // pred_check
    _
  $region19: #{raft_stereo_human_forward.34} parent=0 // pred_check_branch
    %320 = sbr.rel (0) target = $region21
  $region20: #{raft_stereo_human_forward.34} parent=0 // pred_region
    _
  $region21: #{raft_stereo_human_forward.34} parent=0 // pred_fallthru
    _

// kernel: raft_stereo_human_forward.32
$region0: #{raft_stereo_human_forward.32}
  #allocation0 [shape = 'u32[]', space=smem, size = 0x4, offset = 0x4, fixed_abs, tag = 'smem constant byte address 0x4 - core index']
  #allocation1 [shape = 'u32[144,128]{1,0:T(1,128)}', space=vmem, size = 0x12000, scoped, tag = 'internal scratch']
  %s0 = inlined_call_operand.vmem [shape: bf16[32,288], index: 0, kind: input, shape index: {}]
  %s1 = inlined_call_operand.vmem [shape: bf16[288,64], index: 1, kind: input, shape index: {}]
  %s2 = inlined_call_operand.vmem [shape: bf16[32,576], index: 2, kind: input, shape index: {}]
  %s3 = inlined_call_operand.vmem [shape: bf16[576,64], index: 3, kind: input, shape index: {}]
  %s4 = inlined_call_operand.vmem [shape: f32[1,64], index: 4, kind: input, shape index: {}]
  %s5 = inlined_call_operand.vmem [shape: f32[32,32], index: 5, kind: input, shape index: {}]
  %s6 = inlined_call_operand.vmem [shape: f32[32,32], index: 6, kind: input, shape index: {}]
  %s7 = inlined_call_operand.vmem [shape: f32[32,32], index: 7, kind: input, shape index: {}]
  %s8 = inlined_call_operand.vmem [shape: f32[32,64], index: 8, kind: output, shape index: {}]
  %s9 = sld [smem:[#allocation0]]
  $region42: #{raft_stereo_human_forward.32} parent=0
    _
  %s11 = ssub.s32 1, %s9
  %s12 = scalar_select 0, %s11, %s9
  // Predicated region
  $region2: #{raft_stereo_human_forward.32} parent=0 // pred_check
    _
  $region3: #{raft_stereo_human_forward.32} parent=0 // pred_check_branch
    %14 = sbr.rel (0) target = $region5
  $region4: #{raft_stereo_human_forward.32} parent=0 // pred_region
    _
  $region5: #{raft_stereo_human_forward.32} parent=0 // pred_fallthru
    _
  // Predicated region
  $region6: #{raft_stereo_human_forward.32} parent=0 // pred_check
    _
  $region7: #{raft_stereo_human_forward.32} parent=0 // pred_check_branch
    %16 = sbr.rel (0) target = $region9
  $region8: #{raft_stereo_human_forward.32} parent=0 // pred_region
    _
  $region9: #{raft_stereo_human_forward.32} parent=0 // pred_fallthru
    _
  // Predicated region
  $region10: #{raft_stereo_human_forward.32} parent=0 // pred_check
    _
  $region11: #{raft_stereo_human_forward.32} parent=0 // pred_check_branch
    %18 = sbr.rel (0) target = $region13
  $region12: #{raft_stereo_human_forward.32} parent=0 // pred_region
    _
  $region13: #{raft_stereo_human_forward.32} parent=0 // pred_fallthru
    _
  // Predicated region
  $region14: #{raft_stereo_human_forward.32} parent=0 // pred_check
    _
  $region15: #{raft_stereo_human_forward.32} parent=0 // pred_check_branch
    %20 = sbr.rel (0) target = $region17
  $region16: #{raft_stereo_human_forward.32} parent=0 // pred_region
    _
  $region17: #{raft_stereo_human_forward.32} parent=0 // pred_fallthru
    _
  // Predicated region
  $region18: #{raft_stereo_human_forward.32} parent=0 // pred_check
    _
  $region19: #{raft_stereo_human_forward.32} parent=0 // pred_check_branch
    %22 = sbr.rel (0) target = $region21
  $region20: #{raft_stereo_human_forward.32} parent=0 // pred_region
    _
  $region21: #{raft_stereo_human_forward.32} parent=0 // pred_fallthru
    _
  // Predicated region
  $region22: #{raft_stereo_human_forward.32} parent=0 // pred_check
    _
  $region23: #{raft_stereo_human_forward.32} parent=0 // pred_check_branch
    %24 = sbr.rel (0) target = $region25
  $region24: #{raft_stereo_human_forward.32} parent=0 // pred_region
    _
  $region25: #{raft_stereo_human_forward.32} parent=0 // pred_fallthru
    _
  // Predicated region
  $region26: #{raft_stereo_human_forward.32} parent=0 // pred_check
    _
  $region27: #{raft_stereo_human_forward.32} parent=0 // pred_check_branch
    %26 = sbr.rel (0) target = $region29
  $region28: #{raft_stereo_human_forward.32} parent=0 // pred_region
    _
  $region29: #{raft_stereo_human_forward.32} parent=0 // pred_fallthru
    _
  // Predicated region
  $region30: #{raft_stereo_human_forward.32} parent=0 // pred_check
    _
  $region31: #{raft_stereo_human_forward.32} parent=0 // pred_check_branch
    %28 = sbr.rel (0) target = $region33
  $region32: #{raft_stereo_human_forward.32} parent=0 // pred_region
    _
  $region33: #{raft_stereo_human_forward.32} parent=0 // pred_fallthru
    _
  %v30 = vld [vmem:[%s0] sm:$0xff]
  %v31 = vld [vmem:[%s0 + $0x8] sm:$0xf]
  %v32 = vld [vmem:[%s0 + $0xc] sm:$0xff]
  %v33 = vld [vmem:[%s0 + $0x14] sm:$0xf]
  %v34 = vld [vmem:[%s0 + $0x18] sm:$0xff]
  %v35 = vld [vmem:[%s0 + $0x20] sm:$0xf]
  %v36 = vld [vmem:[%s0 + $0x24] sm:$0xff]
  %v37 = vld [vmem:[%s0 + $0x2c] sm:$0xf]
  %v38 = vld [vmem:[%s1] sm:$0xf]
  %v39 = vld [vmem:[%s1 + $0x4] sm:$0xf]
  %v40 = vld [vmem:[%s1 + $0x8] sm:$0xf]
  %v41 = vld [vmem:[%s1 + $0xc] sm:$0xf]
  %v42 = vld [vmem:[%s1 + $0x10] sm:$0xf]
  %v43 = vld [vmem:[%s1 + $0x14] sm:$0xf]
  %v44 = vld [vmem:[%s1 + $0x18] sm:$0xf]
  %v45 = vld [vmem:[%s1 + $0x1c] sm:$0xf]
  %v46 = vld [vmem:[%s1 + $0x20] sm:$0xf]
  %v47 = vld [vmem:[%s1 + $0x24] sm:$0xf]
  %v48 = vld [vmem:[%s1 + $0x28] sm:$0xf]
  %v49 = vld [vmem:[%s1 + $0x2c] sm:$0xf]
  %v50 = vld [vmem:[%s1 + $0x30] sm:$0xf]
  %v51 = vld [vmem:[%s1 + $0x34] sm:$0xf]
  %v52 = vld [vmem:[%s1 + $0x38] sm:$0xf]
  %v53 = vld [vmem:[%s1 + $0x3c] sm:$0xf]
  %v54 = vld [vmem:[%s1 + $0x40] sm:$0xf]
  %v55 = vld [vmem:[%s1 + $0x44] sm:$0xf]
  %v56 = vld [vmem:[%s1 + $0x48] sm:$0xf]
  %v57 = vld [vmem:[%s1 + $0x4c] sm:$0xf]
  %v58 = vld [vmem:[%s1 + $0x50] sm:$0xf]
  %v59 = vld [vmem:[%s1 + $0x54] sm:$0xf]
  %v60 = vld [vmem:[%s1 + $0x58] sm:$0xf]
  %v61 = vld [vmem:[%s1 + $0x5c] sm:$0xf]
  %v62 = vld [vmem:[%s1 + $0x60] sm:$0xf]
  %v63 = vld [vmem:[%s1 + $0x64] sm:$0xf]
  %v64 = vld [vmem:[%s1 + $0x68] sm:$0xf]
  %v65 = vld [vmem:[%s1 + $0x6c] sm:$0xf]
  %v66 = vld [vmem:[%s1 + $0x70] sm:$0xf]
  %v67 = vld [vmem:[%s1 + $0x74] sm:$0xf]
  %v68 = vld [vmem:[%s1 + $0x78] sm:$0xf]
  %v69 = vld [vmem:[%s1 + $0x7c] sm:$0xf]
  %v70 = vld [vmem:[%s1 + $0x80] sm:$0xf]
  %v71 = vld [vmem:[%s1 + $0x84] sm:$0xf]
  %v72 = vld [vmem:[%s1 + $0x88] sm:$0xf]
  %v73 = vld [vmem:[%s1 + $0x8c] sm:$0xf]
  %v74 = vld [vmem:[%s2] sm:$0xff]
  %v75 = vld [vmem:[%s2 + $0x8] sm:$0xff]
  %v76 = vld [vmem:[%s2 + $0x10] sm:$0xf]
  %v77 = vld [vmem:[%s2 + $0x14] sm:$0xff]
  %v78 = vld [vmem:[%s2 + $0x1c] sm:$0xff]
  %v79 = vld [vmem:[%s2 + $0x24] sm:$0xf]
  %v80 = vld [vmem:[%s2 + $0x28] sm:$0xff]
  %v81 = vld [vmem:[%s2 + $0x30] sm:$0xff]
  %v82 = vld [vmem:[%s2 + $0x38] sm:$0xf]
  %v83 = vld [vmem:[%s2 + $0x3c] sm:$0xff]
  %v84 = vld [vmem:[%s2 + $0x44] sm:$0xff]
  %v85 = vld [vmem:[%s2 + $0x4c] sm:$0xf]
  %v86 = vld [vmem:[%s3] sm:$0xf]
  %v87 = vld [vmem:[%s3 + $0x4] sm:$0xf]
  %v88 = vld [vmem:[%s3 + $0x8] sm:$0xf]
  %v89 = vld [vmem:[%s3 + $0xc] sm:$0xf]
  %v90 = vld [vmem:[%s3 + $0x10] sm:$0xf]
  %v91 = vld [vmem:[%s3 + $0x14] sm:$0xf]
  %v92 = vld [vmem:[%s3 + $0x18] sm:$0xf]
  %v93 = vld [vmem:[%s3 + $0x1c] sm:$0xf]
  %v94 = vld [vmem:[%s3 + $0x20] sm:$0xf]
  %v95 = vld [vmem:[%s3 + $0x24] sm:$0xf]
  %v96 = vld [vmem:[%s3 + $0x28] sm:$0xf]
  %v97 = vld [vmem:[%s3 + $0x2c] sm:$0xf]
  %v98 = vld [vmem:[%s3 + $0x30] sm:$0xf]
  %v99 = vld [vmem:[%s3 + $0x34] sm:$0xf]
  %v100 = vld [vmem:[%s3 + $0x38] sm:$0xf]
  %v101 = vld [vmem:[%s3 + $0x3c] sm:$0xf]
  %v102 = vld [vmem:[%s3 + $0x40] sm:$0xf]
  %v103 = vld [vmem:[%s3 + $0x44] sm:$0xf]
  %v104 = vld [vmem:[%s3 + $0x48] sm:$0xf]
  %v105 = vld [vmem:[%s3 + $0x4c] sm:$0xf]
  %v106 = vld [vmem:[%s3 + $0x50] sm:$0xf]
  %v107 = vld [vmem:[%s3 + $0x54] sm:$0xf]
  %v108 = vld [vmem:[%s3 + $0x58] sm:$0xf]
  %v109 = vld [vmem:[%s3 + $0x5c] sm:$0xf]
  %v110 = vld [vmem:[%s3 + $0x60] sm:$0xf]
  %v111 = vld [vmem:[%s3 + $0x64] sm:$0xf]
  %v112 = vld [vmem:[%s3 + $0x68] sm:$0xf]
  %v113 = vld [vmem:[%s3 + $0x6c] sm:$0xf]
  %v114 = vld [vmem:[%s3 + $0x70] sm:$0xf]
  %v115 = vld [vmem:[%s3 + $0x74] sm:$0xf]
  %v116 = vld [vmem:[%s3 + $0x78] sm:$0xf]
  %v117 = vld [vmem:[%s3 + $0x7c] sm:$0xf]
  %v118 = vld [vmem:[%s3 + $0x80] sm:$0xf]
  %v119 = vld [vmem:[%s3 + $0x84] sm:$0xf]
  %v120 = vld [vmem:[%s3 + $0x88] sm:$0xf]
  %v121 = vld [vmem:[%s3 + $0x8c] sm:$0xf]
  %v122 = vld [vmem:[%s3 + $0x90] sm:$0xf]
  %v123 = vld [vmem:[%s3 + $0x94] sm:$0xf]
  %v124 = vld [vmem:[%s3 + $0x98] sm:$0xf]
  %v125 = vld [vmem:[%s3 + $0x9c] sm:$0xf]
  %v126 = vld [vmem:[%s3 + $0xa0] sm:$0xf]
  %v127 = vld [vmem:[%s3 + $0xa4] sm:$0xf]
  %v128 = vld [vmem:[%s3 + $0xa8] sm:$0xf]
  %v129 = vld [vmem:[%s3 + $0xac] sm:$0xf]
  %v130 = vld [vmem:[%s3 + $0xb0] sm:$0xf]
  %v131 = vld [vmem:[%s3 + $0xb4] sm:$0xf]
  %v132 = vld [vmem:[%s3 + $0xb8] sm:$0xf]
  %v133 = vld [vmem:[%s3 + $0xbc] sm:$0xf]
  %v134 = vld [vmem:[%s3 + $0xc0] sm:$0xf]
  %v135 = vld [vmem:[%s3 + $0xc4] sm:$0xf]
  %v136 = vld [vmem:[%s3 + $0xc8] sm:$0xf]
  %v137 = vld [vmem:[%s3 + $0xcc] sm:$0xf]
  %v138 = vld [vmem:[%s3 + $0xd0] sm:$0xf]
  %v139 = vld [vmem:[%s3 + $0xd4] sm:$0xf]
  %v140 = vld [vmem:[%s3 + $0xd8] sm:$0xf]
  %v141 = vld [vmem:[%s3 + $0xdc] sm:$0xf]
  %v142 = vld [vmem:[%s3 + $0xe0] sm:$0xf]
  %v143 = vld [vmem:[%s3 + $0xe4] sm:$0xf]
  %v144 = vld [vmem:[%s3 + $0xe8] sm:$0xf]
  %v145 = vld [vmem:[%s3 + $0xec] sm:$0xf]
  %v146 = vld [vmem:[%s3 + $0xf0] sm:$0xf]
  %v147 = vld [vmem:[%s3 + $0xf4] sm:$0xf]
  %v148 = vld [vmem:[%s3 + $0xf8] sm:$0xf]
  %v149 = vld [vmem:[%s3 + $0xfc] sm:$0xf]
  %v150 = vld [vmem:[%s3 + $0x100] sm:$0xf]
  %v151 = vld [vmem:[%s3 + $0x104] sm:$0xf]
  %v152 = vld [vmem:[%s3 + $0x108] sm:$0xf]
  %v153 = vld [vmem:[%s3 + $0x10c] sm:$0xf]
  %v154 = vld [vmem:[%s3 + $0x110] sm:$0xf]
  %v155 = vld [vmem:[%s3 + $0x114] sm:$0xf]
  %v156 = vld [vmem:[%s3 + $0x118] sm:$0xf]
  %v157 = vld [vmem:[%s3 + $0x11c] sm:$0xf]
  %v170 = vunpack.c.l.b16 %v74
  %v171 = vunpack.c.h.b16 %v74
  %v172 = vunpack.c.l.b16 %v75
  %v173 = vunpack.c.h.b16 %v75
  %v174 = vunpack.c.l.b16 %v76
  %v175 = vunpack.c.l.b16 %v77
  %v176 = vunpack.c.h.b16 %v77
  %v177 = vunpack.c.l.b16 %v78
  %v178 = vunpack.c.h.b16 %v78
  %v179 = vunpack.c.l.b16 %v79
  %v180 = vunpack.c.l.b16 %v80
  %v181 = vunpack.c.h.b16 %v80
  %v182 = vunpack.c.l.b16 %v81
  %v183 = vunpack.c.h.b16 %v81
  %v184 = vunpack.c.l.b16 %v82
  %v185 = vunpack.c.l.b16 %v83
  %v186 = vunpack.c.h.b16 %v83
  %v187 = vunpack.c.l.b16 %v84
  %v188 = vunpack.c.h.b16 %v84
  %v189 = vunpack.c.l.b16 %v85
  %v190 = vpack.c.b16 %v175, %v170
  %v191 = vpack.c.b16 %v176, %v171
  %v192 = vpack.c.b16 %v177, %v172
  %v193 = vpack.c.b16 %v178, %v173
  %v194 = vpack.c.b16 %v179, %v174
  %v195 = vpack.c.b16 %v185, %v180
  %v196 = vpack.c.b16 %v186, %v181
  %v197 = vpack.c.b16 %v187, %v182
  %v198 = vpack.c.b16 %v188, %v183
  %v199 = vpack.c.b16 %v189, %v184
  %v280 = vunpack.c.l.b16 %v86
  %v281 = vunpack.c.l.b16 %v87
  %v282 = vunpack.c.l.b16 %v88
  %v283 = vunpack.c.l.b16 %v89
  %v284 = vunpack.c.l.b16 %v90
  %v285 = vunpack.c.l.b16 %v91
  %v286 = vunpack.c.l.b16 %v92
  %v287 = vunpack.c.l.b16 %v93
  %v288 = vunpack.c.l.b16 %v94
  %v289 = vunpack.c.l.b16 %v95
  %v290 = vunpack.c.l.b16 %v96
  %v291 = vunpack.c.l.b16 %v97
  %v292 = vunpack.c.l.b16 %v98
  %v293 = vunpack.c.l.b16 %v99
  %v294 = vunpack.c.l.b16 %v100
  %v295 = vunpack.c.l.b16 %v101
  %v296 = vunpack.c.l.b16 %v102
  %v297 = vunpack.c.l.b16 %v103
  %v298 = vunpack.c.l.b16 %v104
  %v299 = vunpack.c.l.b16 %v105
  %v300 = vunpack.c.l.b16 %v106
  %v301 = vunpack.c.l.b16 %v107
  %v302 = vunpack.c.l.b16 %v108
  %v303 = vunpack.c.l.b16 %v109
  %v304 = vunpack.c.l.b16 %v110
  %v305 = vunpack.c.l.b16 %v111
  %v306 = vunpack.c.l.b16 %v112
  %v307 = vunpack.c.l.b16 %v113
  %v308 = vunpack.c.l.b16 %v114
  %v309 = vunpack.c.l.b16 %v115
  %v310 = vunpack.c.l.b16 %v116
  %v311 = vunpack.c.l.b16 %v117
  %v312 = vunpack.c.l.b16 %v118
  %v313 = vunpack.c.l.b16 %v119
  %v314 = vunpack.c.l.b16 %v120
  %v315 = vunpack.c.l.b16 %v121
  %v316 = vunpack.c.l.b16 %v122
  %v317 = vunpack.c.l.b16 %v123
  %v318 = vunpack.c.l.b16 %v124
  %v319 = vunpack.c.l.b16 %v125
  %v320 = vunpack.c.l.b16 %v126
  %v321 = vunpack.c.l.b16 %v127
  %v322 = vunpack.c.l.b16 %v128
  %v323 = vunpack.c.l.b16 %v129
  %v324 = vunpack.c.l.b16 %v130
  %v325 = vunpack.c.l.b16 %v131
  %v326 = vunpack.c.l.b16 %v132
  %v327 = vunpack.c.l.b16 %v133
  %v328 = vunpack.c.l.b16 %v134
  %v329 = vunpack.c.l.b16 %v135
  %v330 = vunpack.c.l.b16 %v136
  %v331 = vunpack.c.l.b16 %v137
  %v332 = vunpack.c.l.b16 %v138
  %v333 = vunpack.c.l.b16 %v139
  %v334 = vunpack.c.l.b16 %v140
  %v335 = vunpack.c.l.b16 %v141
  %v336 = vunpack.c.l.b16 %v142
  %v337 = vunpack.c.l.b16 %v143
  %v338 = vunpack.c.l.b16 %v144
  %v339 = vunpack.c.l.b16 %v145
  %v340 = vunpack.c.l.b16 %v146
  %v341 = vunpack.c.l.b16 %v147
  %v342 = vunpack.c.l.b16 %v148
  %v343 = vunpack.c.l.b16 %v149
  %v344 = vunpack.c.l.b16 %v150
  %v345 = vunpack.c.l.b16 %v151
  %v346 = vunpack.c.l.b16 %v152
  %v347 = vunpack.c.l.b16 %v153
  %v348 = vunpack.c.l.b16 %v154
  %v349 = vunpack.c.l.b16 %v155
  %v350 = vunpack.c.l.b16 %v156
  %v351 = vunpack.c.l.b16 %v157
  %v352 = vpack.c.b16 %v281, %v280
  %v353 = vpack.c.b16 %v283, %v282
  %v354 = vpack.c.b16 %v285, %v284
  %v355 = vpack.c.b16 %v287, %v286
  %v356 = vpack.c.b16 %v289, %v288
  %v357 = vpack.c.b16 %v291, %v290
  %v358 = vpack.c.b16 %v293, %v292
  %v359 = vpack.c.b16 %v295, %v294
  %v360 = vpack.c.b16 %v297, %v296
  %v361 = vpack.c.b16 %v299, %v298
  %v362 = vpack.c.b16 %v301, %v300
  %v363 = vpack.c.b16 %v303, %v302
  %v364 = vpack.c.b16 %v305, %v304
  %v365 = vpack.c.b16 %v307, %v306
  %v366 = vpack.c.b16 %v309, %v308
  %v367 = vpack.c.b16 %v311, %v310
  %v368 = vpack.c.b16 %v313, %v312
  %v369 = vpack.c.b16 %v315, %v314
  %v370 = vpack.c.b16 %v317, %v316
  %v371 = vpack.c.b16 %v319, %v318
  %v372 = vpack.c.b16 %v321, %v320
  %v373 = vpack.c.b16 %v323, %v322
  %v374 = vpack.c.b16 %v325, %v324
  %v375 = vpack.c.b16 %v327, %v326
  %v376 = vpack.c.b16 %v329, %v328
  %v377 = vpack.c.b16 %v331, %v330
  %v378 = vpack.c.b16 %v333, %v332
  %v379 = vpack.c.b16 %v335, %v334
  %v380 = vpack.c.b16 %v337, %v336
  %v381 = vpack.c.b16 %v339, %v338
  %v382 = vpack.c.b16 %v341, %v340
  %v383 = vpack.c.b16 %v343, %v342
  %v384 = vpack.c.b16 %v345, %v344
  %v385 = vpack.c.b16 %v347, %v346
  %v386 = vpack.c.b16 %v349, %v348
  %v387 = vpack.c.b16 %v351, %v350
  %vm424 = vcmask 523264
  %v426 = vsel %vm424, %v194, 0
  %v429 = vsel %vm424, %v199, 0
  %431 = vmatprep.subr.bf16.mxu0 0
  %432 = vmatpush1.bf16.msra.mxu0 %v352
  %433 = vmatprep.subr.bf16.mxu0 0
  %434 = vmatpush1.bf16.msra.mxu0 %v353
  %435 = vmatprep.subr.bf16.mxu0 0
  %436 = vmatpush1.bf16.msra.mxu0 %v354
  %437 = vmatprep.subr.bf16.mxu0 0
  %438 = vmatpush1.bf16.msra.mxu0 %v355
  %439 = vmatprep.subr.bf16.mxu0 0
  %440 = vmatpush1.bf16.msra.mxu0 %v356
  %441 = vmatprep.subr.bf16.mxu0 0
  %442 = vmatpush1.bf16.msra.mxu0 %v357
  %443 = vmatprep.subr.bf16.mxu0 0
  %444 = vmatpush1.bf16.msra.mxu0 %v358
  %445 = vmatprep.subr.bf16.mxu0 0
  %446 = vmatpush1.bf16.msra.mxu0 %v359
  %447 = vmatprep.subr.bf16.mxu0 0
  %448 = vmatpush1.bf16.msra.mxu0 %v360
  %449 = vmatprep.subr.bf16.mxu0 0
  %450 = vmatpush1.bf16.msra.mxu0 %v361
  %451 = vmatprep.subr.bf16.mxu0 0
  %452 = vmatpush1.bf16.msra.mxu0 %v362
  %453 = vmatprep.subr.bf16.mxu0 0
  %454 = vmatpush1.bf16.msra.mxu0 %v363
  %455 = vmatprep.subr.bf16.mxu0 0
  %456 = vmatpush1.bf16.msra.mxu0 %v364
  %457 = vmatprep.subr.bf16.mxu0 0
  %458 = vmatpush1.bf16.msra.mxu0 %v365
  %459 = vmatprep.subr.bf16.mxu0 0
  %460 = vmatpush1.bf16.msra.mxu0 %v366
  %461 = vmatprep.subr.bf16.mxu0 0
  %462 = vmatpush1.bf16.msra.mxu0 %v367
  %463 = vmatprep.mubr.bf16.mxu0 %v191
  %464 = vmatmul.mubr.bf16.gmra.mrb[0].mxu0 %v190
  %v465 = vpop.f32.mrb[0].mxu0
  %v466 = vadd.f32 0.0, %v465
  %v467 = vpop.f32.mrb[0].mxu0
  %v468 = vpop.f32.mrb[0].mxu0
  %v469 = vadd.f32 0.0, %v468
  %v470 = vpop.f32.mrb[0].mxu0
  %471 = vmatprep.mubr.bf16.mxu0 %v196
  %472 = vmatmul.mubr.bf16.gmra.mrb[0].mxu0 %v195
  %v473 = vpop.f32.mrb[0].mxu0
  %v474 = vadd.f32 0.0, %v473
  %v475 = vpop.f32.mrb[0].mxu0
  %v476 = vpop.f32.mrb[0].mxu0
  %v477 = vadd.f32 0.0, %v476
  %v478 = vpop.f32.mrb[0].mxu0
  %479 = vdwg.mxu0
  %480 = vmatprep.subr.bf16.mxu0 0
  %481 = vmatpush1.bf16.msra.mxu0 %v368
  %482 = vmatprep.subr.bf16.mxu0 0
  %483 = vmatpush1.bf16.msra.mxu0 %v369
  %484 = vmatprep.subr.bf16.mxu0 0
  %485 = vmatpush1.bf16.msra.mxu0 %v370
  %486 = vmatprep.subr.bf16.mxu0 0
  %487 = vmatpush1.bf16.msra.mxu0 %v371
  %488 = vmatprep.subr.bf16.mxu0 0
  %489 = vmatpush1.bf16.msra.mxu0 %v372
  %490 = vmatprep.subr.bf16.mxu0 0
  %491 = vmatpush1.bf16.msra.mxu0 %v373
  %492 = vmatprep.subr.bf16.mxu0 0
  %493 = vmatpush1.bf16.msra.mxu0 %v374
  %494 = vmatprep.subr.bf16.mxu0 0
  %495 = vmatpush1.bf16.msra.mxu0 %v375
  %496 = vmatprep.subr.bf16.mxu0 0
  %497 = vmatpush1.bf16.msra.mxu0 %v376
  %498 = vmatprep.subr.bf16.mxu0 0
  %499 = vmatpush1.bf16.msra.mxu0 %v377
  %500 = vmatprep.subr.bf16.mxu0 0
  %501 = vmatpush1.bf16.msra.mxu0 %v378
  %502 = vmatprep.subr.bf16.mxu0 0
  %503 = vmatpush1.bf16.msra.mxu0 %v379
  %504 = vmatprep.subr.bf16.mxu0 0
  %505 = vmatpush1.bf16.msra.mxu0 %v380
  %506 = vmatprep.subr.bf16.mxu0 0
  %507 = vmatpush1.bf16.msra.mxu0 %v381
  %508 = vmatprep.subr.bf16.mxu0 0
  %509 = vmatpush1.bf16.msra.mxu0 %v382
  %510 = vmatprep.subr.bf16.mxu0 0
  %511 = vmatpush1.bf16.msra.mxu0 %v383
  %512 = vmatprep.mubr.bf16.mxu0 %v193
  %513 = vmatmul.mubr.bf16.gmra.mrb[0].mxu0 %v192
  %v514 = vpop.f32.mrb[0].mxu0
  %v515 = vadd.f32 %v466, %v514
  %v516 = vpop.f32.mrb[0].mxu0
  %v517 = vpop.f32.mrb[0].mxu0
  %v518 = vadd.f32 %v469, %v517
  %v519 = vpop.f32.mrb[0].mxu0
  %520 = vmatprep.mubr.bf16.mxu0 %v198
  %521 = vmatmul.mubr.bf16.gmra.mrb[0].mxu0 %v197
  %v522 = vpop.f32.mrb[0].mxu0
  %v523 = vadd.f32 %v474, %v522
  %v524 = vpop.f32.mrb[0].mxu0
  %v525 = vpop.f32.mrb[0].mxu0
  %v526 = vadd.f32 %v477, %v525
  %v527 = vpop.f32.mrb[0].mxu0
  %528 = vdwg.mxu0
  %529 = vmatprep.subr.bf16.mxu0 0
  %530 = vmatpush1.bf16.msra.mxu0 %v384
  %531 = vmatprep.subr.bf16.mxu0 0
  %532 = vmatpush1.bf16.msra.mxu0 %v385
  %533 = vmatprep.subr.bf16.mxu0 0
  %534 = vmatpush1.bf16.msra.mxu0 %v386
  %535 = vmatprep.subr.bf16.mxu0 0
  %536 = vmatpush1.bf16.msra.mxu0 %v387
  %537 = vmatprep.subr.bf16.mxu0 0
  %538 = vmatpush1.bf16.msra.mxu0 0
  %539 = vmatprep.subr.bf16.mxu0 0
  %540 = vmatpush1.bf16.msra.mxu0 0
  %541 = vmatprep.subr.bf16.mxu0 0
  %542 = vmatpush1.bf16.msra.mxu0 0
  %543 = vmatprep.subr.bf16.mxu0 0
  %544 = vmatpush1.bf16.msra.mxu0 0
  %545 = vmatprep.subr.bf16.mxu0 0
  %546 = vmatpush1.bf16.msra.mxu0 0
  %547 = vmatprep.subr.bf16.mxu0 0
  %548 = vmatpush1.bf16.msra.mxu0 0
  %549 = vmatprep.subr.bf16.mxu0 0
  %550 = vmatpush1.bf16.msra.mxu0 0
  %551 = vmatprep.subr.bf16.mxu0 0
  %552 = vmatpush1.bf16.msra.mxu0 0
  %553 = vmatprep.subr.bf16.mxu0 0
  %554 = vmatpush1.bf16.msra.mxu0 0
  %555 = vmatprep.subr.bf16.mxu0 0
  %556 = vmatpush1.bf16.msra.mxu0 0
  %557 = vmatprep.subr.bf16.mxu0 0
  %558 = vmatpush1.bf16.msra.mxu0 0
  %559 = vmatprep.subr.bf16.mxu0 0
  %560 = vmatpush1.bf16.msra.mxu0 0
  %561 = vmatprep.mubr.bf16.mxu0 0
  %562 = vmatmul.mubr.bf16.gmra.mrb[0].mxu0 %v426
  %v563 = vpop.f32.mrb[0].mxu0
  %v564 = vadd.f32 %v515, %v563
  %v565 = vpop.f32.mrb[0].mxu0
  %v566 = vpop.f32.mrb[0].mxu0
  %v567 = vadd.f32 %v518, %v566
  %v568 = vpop.f32.mrb[0].mxu0
  %569 = vmatprep.mubr.bf16.mxu0 0
  %570 = vmatmul.mubr.bf16.gmra.mrb[0].mxu0 %v429
  %v571 = vpop.f32.mrb[0].mxu0
  %v572 = vadd.f32 %v523, %v571
  %v573 = vpop.f32.mrb[0].mxu0
  %v574 = vpop.f32.mrb[0].mxu0
  %v575 = vadd.f32 %v526, %v574
  %v576 = vpop.f32.mrb[0].mxu0
  %577 = vdwg.mxu0
  %v586 = vunpack.c.l.b16 %v30
  %v587 = vunpack.c.h.b16 %v30
  %v588 = vunpack.c.l.b16 %v31
  %v589 = vunpack.c.l.b16 %v32
  %v590 = vunpack.c.h.b16 %v32
  %v591 = vunpack.c.l.b16 %v33
  %v592 = vunpack.c.l.b16 %v34
  %v593 = vunpack.c.h.b16 %v34
  %v594 = vunpack.c.l.b16 %v35
  %v595 = vunpack.c.l.b16 %v36
  %v596 = vunpack.c.h.b16 %v36
  %v597 = vunpack.c.l.b16 %v37
  %v598 = vpack.c.b16 %v589, %v586
  %v599 = vpack.c.b16 %v590, %v587
  %v600 = vpack.c.b16 %v591, %v588
  %v601 = vpack.c.b16 %v595, %v592
  %v602 = vpack.c.b16 %v596, %v593
  %v603 = vpack.c.b16 %v597, %v594
  %v644 = vunpack.c.l.b16 %v38
  %v645 = vunpack.c.l.b16 %v39
  %v646 = vunpack.c.l.b16 %v40
  %v647 = vunpack.c.l.b16 %v41
  %v648 = vunpack.c.l.b16 %v42
  %v649 = vunpack.c.l.b16 %v43
  %v650 = vunpack.c.l.b16 %v44
  %v651 = vunpack.c.l.b16 %v45
  %v652 = vunpack.c.l.b16 %v46
  %v653 = vunpack.c.l.b16 %v47
  %v654 = vunpack.c.l.b16 %v48
  %v655 = vunpack.c.l.b16 %v49
  %v656 = vunpack.c.l.b16 %v50
  %v657 = vunpack.c.l.b16 %v51
  %v658 = vunpack.c.l.b16 %v52
  %v659 = vunpack.c.l.b16 %v53
  %v660 = vunpack.c.l.b16 %v54
  %v661 = vunpack.c.l.b16 %v55
  %v662 = vunpack.c.l.b16 %v56
  %v663 = vunpack.c.l.b16 %v57
  %v664 = vunpack.c.l.b16 %v58
  %v665 = vunpack.c.l.b16 %v59
  %v666 = vunpack.c.l.b16 %v60
  %v667 = vunpack.c.l.b16 %v61
  %v668 = vunpack.c.l.b16 %v62
  %v669 = vunpack.c.l.b16 %v63
  %v670 = vunpack.c.l.b16 %v64
  %v671 = vunpack.c.l.b16 %v65
  %v672 = vunpack.c.l.b16 %v66
  %v673 = vunpack.c.l.b16 %v67
  %v674 = vunpack.c.l.b16 %v68
  %v675 = vunpack.c.l.b16 %v69
  %v676 = vunpack.c.l.b16 %v70
  %v677 = vunpack.c.l.b16 %v71
  %v678 = vunpack.c.l.b16 %v72
  %v679 = vunpack.c.l.b16 %v73
  %v680 = vpack.c.b16 %v645, %v644
  %v681 = vpack.c.b16 %v647, %v646
  %v682 = vpack.c.b16 %v649, %v648
  %v683 = vpack.c.b16 %v651, %v650
  %v684 = vpack.c.b16 %v653, %v652
  %v685 = vpack.c.b16 %v655, %v654
  %v686 = vpack.c.b16 %v657, %v656
  %v687 = vpack.c.b16 %v659, %v658
  %v688 = vpack.c.b16 %v661, %v660
  %v689 = vpack.c.b16 %v663, %v662
  %v690 = vpack.c.b16 %v665, %v664
  %v691 = vpack.c.b16 %v667, %v666
  %v692 = vpack.c.b16 %v669, %v668
  %v693 = vpack.c.b16 %v671, %v670
  %v694 = vpack.c.b16 %v673, %v672
  %v695 = vpack.c.b16 %v675, %v674
  %v696 = vpack.c.b16 %v677, %v676
  %v697 = vpack.c.b16 %v679, %v678
  %vm716 = vcmask 261120
  %v718 = vsel %vm716, %v600, 0
  %v721 = vsel %vm716, %v603, 0
  %723 = vmatprep.subr.bf16.mxu0 0
  %724 = vmatpush1.bf16.msra.mxu0 %v680
  %725 = vmatprep.subr.bf16.mxu0 0
  %726 = vmatpush1.bf16.msra.mxu0 %v681
  %727 = vmatprep.subr.bf16.mxu0 0
  %728 = vmatpush1.bf16.msra.mxu0 %v682
  %729 = vmatprep.subr.bf16.mxu0 0
  %730 = vmatpush1.bf16.msra.mxu0 %v683
  %731 = vmatprep.subr.bf16.mxu0 0
  %732 = vmatpush1.bf16.msra.mxu0 %v684
  %733 = vmatprep.subr.bf16.mxu0 0
  %734 = vmatpush1.bf16.msra.mxu0 %v685
  %735 = vmatprep.subr.bf16.mxu0 0
  %736 = vmatpush1.bf16.msra.mxu0 %v686
  %737 = vmatprep.subr.bf16.mxu0 0
  %738 = vmatpush1.bf16.msra.mxu0 %v687
  %739 = vmatprep.subr.bf16.mxu0 0
  %740 = vmatpush1.bf16.msra.mxu0 %v688
  %741 = vmatprep.subr.bf16.mxu0 0
  %742 = vmatpush1.bf16.msra.mxu0 %v689
  %743 = vmatprep.subr.bf16.mxu0 0
  %744 = vmatpush1.bf16.msra.mxu0 %v690
  %745 = vmatprep.subr.bf16.mxu0 0
  %746 = vmatpush1.bf16.msra.mxu0 %v691
  %747 = vmatprep.subr.bf16.mxu0 0
  %748 = vmatpush1.bf16.msra.mxu0 %v692
  %749 = vmatprep.subr.bf16.mxu0 0
  %750 = vmatpush1.bf16.msra.mxu0 %v693
  %751 = vmatprep.subr.bf16.mxu0 0
  %752 = vmatpush1.bf16.msra.mxu0 %v694
  %753 = vmatprep.subr.bf16.mxu0 0
  %754 = vmatpush1.bf16.msra.mxu0 %v695
  %755 = vmatprep.mubr.bf16.mxu0 %v599
  %756 = vmatmul.mubr.bf16.gmra.mrb[0].mxu0 %v598
  %v757 = vpop.f32.mrb[0].mxu0
  %v758 = vadd.f32 %v564, %v757
  %v759 = vpop.f32.mrb[0].mxu0
  %v760 = vpop.f32.mrb[0].mxu0
  %v761 = vadd.f32 %v567, %v760
  %v762 = vpop.f32.mrb[0].mxu0
  %763 = vmatprep.mubr.bf16.mxu0 %v602
  %764 = vmatmul.mubr.bf16.gmra.mrb[0].mxu0 %v601
  %v765 = vpop.f32.mrb[0].mxu0
  %v766 = vadd.f32 %v572, %v765
  %v767 = vpop.f32.mrb[0].mxu0
  %v768 = vpop.f32.mrb[0].mxu0
  %v769 = vadd.f32 %v575, %v768
  %v770 = vpop.f32.mrb[0].mxu0
  %771 = vdwg.mxu0
  %772 = vmatprep.subr.bf16.mxu0 0
  %773 = vmatpush1.bf16.msra.mxu0 %v696
  %774 = vmatprep.subr.bf16.mxu0 0
  %775 = vmatpush1.bf16.msra.mxu0 %v697
  %776 = vmatprep.subr.bf16.mxu0 0
  %777 = vmatpush1.bf16.msra.mxu0 0
  %778 = vmatprep.subr.bf16.mxu0 0
  %779 = vmatpush1.bf16.msra.mxu0 0
  %780 = vmatprep.subr.bf16.mxu0 0
  %781 = vmatpush1.bf16.msra.mxu0 0
  %782 = vmatprep.subr.bf16.mxu0 0
  %783 = vmatpush1.bf16.msra.mxu0 0
  %784 = vmatprep.subr.bf16.mxu0 0
  %785 = vmatpush1.bf16.msra.mxu0 0
  %786 = vmatprep.subr.bf16.mxu0 0
  %787 = vmatpush1.bf16.msra.mxu0 0
  %788 = vmatprep.subr.bf16.mxu0 0
  %789 = vmatpush1.bf16.msra.mxu0 0
  %790 = vmatprep.subr.bf16.mxu0 0
  %791 = vmatpush1.bf16.msra.mxu0 0
  %792 = vmatprep.subr.bf16.mxu0 0
  %793 = vmatpush1.bf16.msra.mxu0 0
  %794 = vmatprep.subr.bf16.mxu0 0
  %795 = vmatpush1.bf16.msra.mxu0 0
  %796 = vmatprep.subr.bf16.mxu0 0
  %797 = vmatpush1.bf16.msra.mxu0 0
  %798 = vmatprep.subr.bf16.mxu0 0
  %799 = vmatpush1.bf16.msra.mxu0 0
  %800 = vmatprep.subr.bf16.mxu0 0
  %801 = vmatpush1.bf16.msra.mxu0 0
  %802 = vmatprep.subr.bf16.mxu0 0
  %803 = vmatpush1.bf16.msra.mxu0 0
  %804 = vmatprep.mubr.bf16.mxu0 0
  %805 = vmatmul.mubr.bf16.gmra.mrb[0].mxu0 %v718
  %v806 = vpop.f32.mrb[0].mxu0
  %v807 = vadd.f32 %v758, %v806
  %v808 = vpop.f32.mrb[0].mxu0
  %v809 = vpop.f32.mrb[0].mxu0
  %v810 = vadd.f32 %v761, %v809
  %v811 = vpop.f32.mrb[0].mxu0
  %812 = vmatprep.mubr.bf16.mxu0 0
  %813 = vmatmul.mubr.bf16.gmra.mrb[0].mxu0 %v721
  %v814 = vpop.f32.mrb[0].mxu0
  %v815 = vadd.f32 %v766, %v814
  %v816 = vpop.f32.mrb[0].mxu0
  %v817 = vpop.f32.mrb[0].mxu0
  %v818 = vadd.f32 %v769, %v817
  %v819 = vpop.f32.mrb[0].mxu0
  %820 = vdwg.mxu0
  %v821 = vld [vmem:[%s4] sm:$0x1]
  %v823 = vlaneseq
  %v824 = vshrl.u32 %v823, 7
  %v825 = vsub.s32 0, %v824
  %v826 = vrot.slane %v821, %v825
  %v828 = vadd.f32 %v807, %v826
  %v829 = vadd.f32 %v810, %v826
  %v830 = vadd.f32 %v815, %v826
  %v831 = vadd.f32 %v818, %v826
  %v832 = vld [vmem:[%s5] sm:$0xff]
  %v833 = vld [vmem:[%s5 + $0x8] sm:$0xff]
  %v834 = vld [vmem:[%s5 + $0x10] sm:$0xff]
  %v835 = vld [vmem:[%s5 + $0x18] sm:$0xff]
  %v836 = vadd.f32 %v828, %v832
  %v837 = vadd.f32 %v829, %v833
  %v838 = vadd.f32 %v830, %v834
  %v839 = vadd.f32 %v831, %v835
  %v840 = vxor.u32 %v836, 2147483648
  %v841 = vxor.u32 %v837, 2147483648
  %v842 = vxor.u32 %v838, 2147483648
  %v843 = vxor.u32 %v839, 2147483648
  %v844 = vmul.f32 %v840, 1.442695
  %v845 = vpow.pop %v844
  %v846 = vmul.f32 %v841, 1.442695
  %v847 = vpow.pop %v846
  %v848 = vmul.f32 %v842, 1.442695
  %v849 = vpow.pop %v848
  %v850 = vmul.f32 %v843, 1.442695
  %v851 = vpow.pop %v850
  %v852 = vadd.f32 %v845, 1.0
  %v853 = vadd.f32 %v847, 1.0
  %v854 = vadd.f32 %v849, 1.0
  %v855 = vadd.f32 %v851, 1.0
  %v856 = vrcp.pop %v852
  %v857 = vmul.f32 1.0, %v856
  %v858 = vrcp.pop %v853
  %v859 = vmul.f32 1.0, %v858
  %v860 = vrcp.pop %v854
  %v861 = vmul.f32 1.0, %v860
  %v862 = vrcp.pop %v855
  %v863 = vmul.f32 1.0, %v862
  %v864 = vld [vmem:[%s6] sm:$0xff]
  %v865 = vld [vmem:[%s6 + $0x8] sm:$0xff]
  %v866 = vld [vmem:[%s6 + $0x10] sm:$0xff]
  %v867 = vld [vmem:[%s6 + $0x18] sm:$0xff]
  %872 = vrot.lane.b32.xlu0 %v864, 32
  %v873 = vpop.permute.xlu0 %872
  %874 = vrot.lane.b32.xlu0 %v865, 32
  %v875 = vpop.permute.xlu0 %874
  %876 = vrot.lane.b32.xlu0 %v866, 32
  %v877 = vpop.permute.xlu0 %876
  %878 = vrot.lane.b32.xlu0 %v867, 32
  %v879 = vpop.permute.xlu0 %878
  %v884 = vadd.f32 %v828, %v873
  %v885 = vadd.f32 %v829, %v875
  %v886 = vadd.f32 %v830, %v877
  %v887 = vadd.f32 %v831, %v879
  %v888 = vxor.u32 %v884, 2147483648
  %v889 = vxor.u32 %v885, 2147483648
  %v890 = vxor.u32 %v886, 2147483648
  %v891 = vxor.u32 %v887, 2147483648
  %v892 = vmul.f32 %v888, 1.442695
  %v893 = vpow.pop %v892
  %v894 = vmul.f32 %v889, 1.442695
  %v895 = vpow.pop %v894
  %v896 = vmul.f32 %v890, 1.442695
  %v897 = vpow.pop %v896
  %v898 = vmul.f32 %v891, 1.442695
  %v899 = vpow.pop %v898
  %v900 = vadd.f32 %v893, 1.0
  %v901 = vadd.f32 %v895, 1.0
  %v902 = vadd.f32 %v897, 1.0
  %v903 = vadd.f32 %v899, 1.0
  %v904 = vrcp.pop %v900
  %v905 = vmul.f32 1.0, %v904
  %v906 = vrcp.pop %v901
  %v907 = vmul.f32 1.0, %v906
  %v908 = vrcp.pop %v902
  %v909 = vmul.f32 1.0, %v908
  %v910 = vrcp.pop %v903
  %v911 = vmul.f32 1.0, %v910
  %912 = vst.msk [vmem:[%s8] sm:$0xff] %vm716, %v857
  %913 = vst.msk [vmem:[%s8 + $0x8] sm:$0xff] %vm716, %v859
  %914 = vst.msk [vmem:[%s8 + $0x10] sm:$0xff] %vm716, %v861
  %915 = vst.msk [vmem:[%s8 + $0x18] sm:$0xff] %vm716, %v863
  %v916 = vld [vmem:[%s7] sm:$0xff]
  %v917 = vld [vmem:[%s7 + $0x8] sm:$0xff]
  %v918 = vld [vmem:[%s7 + $0x10] sm:$0xff]
  %v919 = vld [vmem:[%s7 + $0x18] sm:$0xff]
  %924 = vrot.lane.b32.xlu0 %v916, 32
  %v925 = vpop.permute.xlu0 %924
  %926 = vrot.lane.b32.xlu0 %v917, 32
  %v927 = vpop.permute.xlu0 %926
  %928 = vrot.lane.b32.xlu0 %v918, 32
  %v929 = vpop.permute.xlu0 %928
  %930 = vrot.lane.b32.xlu0 %v919, 32
  %v931 = vpop.permute.xlu0 %930
  %v936 = vmul.f32 %v905, %v925
  %v937 = vmul.f32 %v907, %v927
  %v938 = vmul.f32 %v909, %v929
  %v939 = vmul.f32 %v911, %v931
  %vm940 = vcmask 523520
  %941 = vst.msk [vmem:[%s8] sm:$0xff] %vm940, %v936
  %942 = vst.msk [vmem:[%s8 + $0x8] sm:$0xff] %vm940, %v937
  %943 = vst.msk [vmem:[%s8 + $0x10] sm:$0xff] %vm940, %v938
  %944 = vst.msk [vmem:[%s8 + $0x18] sm:$0xff] %vm940, %v939
  // Predicated region
  $region34: #{raft_stereo_human_forward.32} parent=0 // pred_check
    _
  $region35: #{raft_stereo_human_forward.32} parent=0 // pred_check_branch
    %946 = sbr.rel (0) target = $region37
  $region36: #{raft_stereo_human_forward.32} parent=0 // pred_region
    _
  $region37: #{raft_stereo_human_forward.32} parent=0 // pred_fallthru
    _
  // Predicated region
  $region38: #{raft_stereo_human_forward.32} parent=0 // pred_check
    _
  $region39: #{raft_stereo_human_forward.32} parent=0 // pred_check_branch
    %948 = sbr.rel (0) target = $region41
  $region40: #{raft_stereo_human_forward.32} parent=0 // pred_region
    _
  $region41: #{raft_stereo_human_forward.32} parent=0 // pred_fallthru
    _

// kernel: raft_stereo_human_forward.35
$region0: #{raft_stereo_human_forward.35}
  #allocation0 [shape = 'u32[]', space=smem, size = 0x4, offset = 0x4, fixed_abs, tag = 'smem constant byte address 0x4 - core index']
  #allocation1 [shape = 'u32[144,128]{1,0:T(1,128)}', space=vmem, size = 0x12000, scoped, tag = 'internal scratch']
  %s0 = inlined_call_operand.vmem [shape: bf16[32,576], index: 0, kind: input, shape index: {}]
  %s1 = inlined_call_operand.vmem [shape: bf16[32,64], index: 1, kind: input, shape index: {}]
  %s2 = inlined_call_operand.vmem [shape: bf16[576,256], index: 2, kind: input, shape index: {}]
  %s3 = inlined_call_operand.vmem [shape: bf16[64,256], index: 3, kind: input, shape index: {}]
  %s4 = inlined_call_operand.vmem [shape: f32[1,256], index: 4, kind: input, shape index: {}]
  %s5 = inlined_call_operand.vmem [shape: f32[32,256], index: 5, kind: output, shape index: {}]
  %s6 = sld [smem:[#allocation0]]
  $region30: #{raft_stereo_human_forward.35} parent=0
    _
  %s8 = ssub.s32 1, %s6
  %s9 = scalar_select 0, %s8, %s6
  // Predicated region
  $region2: #{raft_stereo_human_forward.35} parent=0 // pred_check
    _
  $region3: #{raft_stereo_human_forward.35} parent=0 // pred_check_branch
    %11 = sbr.rel (0) target = $region5
  $region4: #{raft_stereo_human_forward.35} parent=0 // pred_region
    _
  $region5: #{raft_stereo_human_forward.35} parent=0 // pred_fallthru
    _
  // Predicated region
  $region6: #{raft_stereo_human_forward.35} parent=0 // pred_check
    _
  $region7: #{raft_stereo_human_forward.35} parent=0 // pred_check_branch
    %13 = sbr.rel (0) target = $region9
  $region8: #{raft_stereo_human_forward.35} parent=0 // pred_region
    _
  $region9: #{raft_stereo_human_forward.35} parent=0 // pred_fallthru
    _
  // Predicated region
  $region10: #{raft_stereo_human_forward.35} parent=0 // pred_check
    _
  $region11: #{raft_stereo_human_forward.35} parent=0 // pred_check_branch
    %15 = sbr.rel (0) target = $region13
  $region12: #{raft_stereo_human_forward.35} parent=0 // pred_region
    _
  $region13: #{raft_stereo_human_forward.35} parent=0 // pred_fallthru
    _
  // Predicated region
  $region14: #{raft_stereo_human_forward.35} parent=0 // pred_check
    _
  $region15: #{raft_stereo_human_forward.35} parent=0 // pred_check_branch
    %17 = sbr.rel (0) target = $region17
  $region16: #{raft_stereo_human_forward.35} parent=0 // pred_region
    _
  $region17: #{raft_stereo_human_forward.35} parent=0 // pred_fallthru
    _
  // Predicated region
  $region18: #{raft_stereo_human_forward.35} parent=0 // pred_check
    _
  $region19: #{raft_stereo_human_forward.35} parent=0 // pred_check_branch
    %19 = sbr.rel (0) target = $region21
  $region20: #{raft_stereo_human_forward.35} parent=0 // pred_region
    _
  $region21: #{raft_stereo_human_forward.35} parent=0 // pred_fallthru
    _
  %v21 = vld [vmem:[%s0] sm:$0xff]
  %v22 = vld [vmem:[%s0 + $0x8] sm:$0xff]
  %v23 = vld [vmem:[%s0 + $0x10] sm:$0xf]
  %v24 = vld [vmem:[%s0 + $0x14] sm:$0xff]
  %v25 = vld [vmem:[%s0 + $0x1c] sm:$0xff]
  %v26 = vld [vmem:[%s0 + $0x24] sm:$0xf]
  %v27 = vld [vmem:[%s0 + $0x28] sm:$0xff]
  %v28 = vld [vmem:[%s0 + $0x30] sm:$0xff]
  %v29 = vld [vmem:[%s0 + $0x38] sm:$0xf]
  %v30 = vld [vmem:[%s0 + $0x3c] sm:$0xff]
  %v31 = vld [vmem:[%s0 + $0x44] sm:$0xff]
  %v32 = vld [vmem:[%s0 + $0x4c] sm:$0xf]
  %v33 = vld [vmem:[%s2] sm:$0xff]
  %v34 = vld [vmem:[%s2 + $0x8] sm:$0xff]
  %v35 = vld [vmem:[%s2 + $0x10] sm:$0xff]
  %v36 = vld [vmem:[%s2 + $0x18] sm:$0xff]
  %v37 = vld [vmem:[%s2 + $0x20] sm:$0xff]
  %v38 = vld [vmem:[%s2 + $0x28] sm:$0xff]
  %v39 = vld [vmem:[%s2 + $0x30] sm:$0xff]
  %v40 = vld [vmem:[%s2 + $0x38] sm:$0xff]
  %v41 = vld [vmem:[%s2 + $0x40] sm:$0xff]
  %v42 = vld [vmem:[%s2 + $0x48] sm:$0xff]
  %v43 = vld [vmem:[%s2 + $0x50] sm:$0xff]
  %v44 = vld [vmem:[%s2 + $0x58] sm:$0xff]
  %v45 = vld [vmem:[%s2 + $0x60] sm:$0xff]
  %v46 = vld [vmem:[%s2 + $0x68] sm:$0xff]
  %v47 = vld [vmem:[%s2 + $0x70] sm:$0xff]
  %v48 = vld [vmem:[%s2 + $0x78] sm:$0xff]
  %v49 = vld [vmem:[%s2 + $0x80] sm:$0xff]
  %v50 = vld [vmem:[%s2 + $0x88] sm:$0xff]
  %v51 = vld [vmem:[%s2 + $0x90] sm:$0xff]
  %v52 = vld [vmem:[%s2 + $0x98] sm:$0xff]
  %v53 = vld [vmem:[%s2 + $0xa0] sm:$0xff]
  %v54 = vld [vmem:[%s2 + $0xa8] sm:$0xff]
  %v55 = vld [vmem:[%s2 + $0xb0] sm:$0xff]
  %v56 = vld [vmem:[%s2 + $0xb8] sm:$0xff]
  %v57 = vld [vmem:[%s2 + $0xc0] sm:$0xff]
  %v58 = vld [vmem:[%s2 + $0xc8] sm:$0xff]
  %v59 = vld [vmem:[%s2 + $0xd0] sm:$0xff]
  %v60 = vld [vmem:[%s2 + $0xd8] sm:$0xff]
  %v61 = vld [vmem:[%s2 + $0xe0] sm:$0xff]
  %v62 = vld [vmem:[%s2 + $0xe8] sm:$0xff]
  %v63 = vld [vmem:[%s2 + $0xf0] sm:$0xff]
  %v64 = vld [vmem:[%s2 + $0xf8] sm:$0xff]
  %v65 = vld [vmem:[%s2 + $0x100] sm:$0xff]
  %v66 = vld [vmem:[%s2 + $0x108] sm:$0xff]
  %v67 = vld [vmem:[%s2 + $0x110] sm:$0xff]
  %v68 = vld [vmem:[%s2 + $0x118] sm:$0xff]
  %v69 = vld [vmem:[%s2 + $0x120] sm:$0xff]
  %v70 = vld [vmem:[%s2 + $0x128] sm:$0xff]
  %v71 = vld [vmem:[%s2 + $0x130] sm:$0xff]
  %v72 = vld [vmem:[%s2 + $0x138] sm:$0xff]
  %v73 = vld [vmem:[%s2 + $0x140] sm:$0xff]
  %v74 = vld [vmem:[%s2 + $0x148] sm:$0xff]
  %v75 = vld [vmem:[%s2 + $0x150] sm:$0xff]
  %v76 = vld [vmem:[%s2 + $0x158] sm:$0xff]
  %v77 = vld [vmem:[%s2 + $0x160] sm:$0xff]
  %v78 = vld [vmem:[%s2 + $0x168] sm:$0xff]
  %v79 = vld [vmem:[%s2 + $0x170] sm:$0xff]
  %v80 = vld [vmem:[%s2 + $0x178] sm:$0xff]
  %v81 = vld [vmem:[%s2 + $0x180] sm:$0xff]
  %v82 = vld [vmem:[%s2 + $0x188] sm:$0xff]
  %v83 = vld [vmem:[%s2 + $0x190] sm:$0xff]
  %v84 = vld [vmem:[%s2 + $0x198] sm:$0xff]
  %v85 = vld [vmem:[%s2 + $0x1a0] sm:$0xff]
  %v86 = vld [vmem:[%s2 + $0x1a8] sm:$0xff]
  %v87 = vld [vmem:[%s2 + $0x1b0] sm:$0xff]
  %v88 = vld [vmem:[%s2 + $0x1b8] sm:$0xff]
  %v89 = vld [vmem:[%s2 + $0x1c0] sm:$0xff]
  %v90 = vld [vmem:[%s2 + $0x1c8] sm:$0xff]
  %v91 = vld [vmem:[%s2 + $0x1d0] sm:$0xff]
  %v92 = vld [vmem:[%s2 + $0x1d8] sm:$0xff]
  %v93 = vld [vmem:[%s2 + $0x1e0] sm:$0xff]
  %v94 = vld [vmem:[%s2 + $0x1e8] sm:$0xff]
  %v95 = vld [vmem:[%s2 + $0x1f0] sm:$0xff]
  %v96 = vld [vmem:[%s2 + $0x1f8] sm:$0xff]
  %v97 = vld [vmem:[%s2 + $0x200] sm:$0xff]
  %v98 = vld [vmem:[%s2 + $0x208] sm:$0xff]
  %v99 = vld [vmem:[%s2 + $0x210] sm:$0xff]
  %v100 = vld [vmem:[%s2 + $0x218] sm:$0xff]
  %v101 = vld [vmem:[%s2 + $0x220] sm:$0xff]
  %v102 = vld [vmem:[%s2 + $0x228] sm:$0xff]
  %v103 = vld [vmem:[%s2 + $0x230] sm:$0xff]
  %v104 = vld [vmem:[%s2 + $0x238] sm:$0xff]
  %v105 = vld [vmem:[%s1] sm:$0xf]
  %v106 = vld [vmem:[%s1 + $0x4] sm:$0xf]
  %v107 = vld [vmem:[%s1 + $0x8] sm:$0xf]
  %v108 = vld [vmem:[%s1 + $0xc] sm:$0xf]
  %v109 = vld [vmem:[%s3] sm:$0xff]
  %v110 = vld [vmem:[%s3 + $0x8] sm:$0xff]
  %v111 = vld [vmem:[%s3 + $0x10] sm:$0xff]
  %v112 = vld [vmem:[%s3 + $0x18] sm:$0xff]
  %v113 = vld [vmem:[%s3 + $0x20] sm:$0xff]
  %v114 = vld [vmem:[%s3 + $0x28] sm:$0xff]
  %v115 = vld [vmem:[%s3 + $0x30] sm:$0xff]
  %v116 = vld [vmem:[%s3 + $0x38] sm:$0xff]
  %v121 = vunpack.c.l.b16 %v105
  %v122 = vunpack.c.l.b16 %v106
  %v123 = vunpack.c.l.b16 %v107
  %v124 = vunpack.c.l.b16 %v108
  %v125 = vpack.c.b16 %v122, %v121
  %v126 = vpack.c.b16 %v124, %v123
  %v135 = vunpack.c.l.b16 %v109
  %v136 = vunpack.c.h.b16 %v109
  %v137 = vunpack.c.l.b16 %v110
  %v138 = vunpack.c.h.b16 %v110
  %v139 = vunpack.c.l.b16 %v111
  %v140 = vunpack.c.h.b16 %v111
  %v141 = vunpack.c.l.b16 %v112
  %v142 = vunpack.c.h.b16 %v112
  %v143 = vunpack.c.l.b16 %v113
  %v144 = vunpack.c.h.b16 %v113
  %v145 = vunpack.c.l.b16 %v114
  %v146 = vunpack.c.h.b16 %v114
  %v147 = vunpack.c.l.b16 %v115
  %v148 = vunpack.c.h.b16 %v115
  %v149 = vunpack.c.l.b16 %v116
  %v150 = vunpack.c.h.b16 %v116
  %v151 = vpack.c.b16 %v137, %v135
  %v152 = vpack.c.b16 %v138, %v136
  %v153 = vpack.c.b16 %v141, %v139
  %v154 = vpack.c.b16 %v142, %v140
  %v155 = vpack.c.b16 %v145, %v143
  %v156 = vpack.c.b16 %v146, %v144
  %v157 = vpack.c.b16 %v149, %v147
  %v158 = vpack.c.b16 %v150, %v148
  %vm167 = vcmask 523264
  %v169 = vsel %vm167, %v125, 0
  %v172 = vsel %vm167, %v126, 0
  %174 = vmatprep.subr.bf16.mxu0 %v152
  %175 = vmatpush1.bf16.msra.mxu0 %v151
  %176 = vmatprep.subr.bf16.mxu0 %v154
  %177 = vmatpush1.bf16.msra.mxu0 %v153
  %178 = vmatprep.subr.bf16.mxu0 %v156
  %179 = vmatpush1.bf16.msra.mxu0 %v155
  %180 = vmatprep.subr.bf16.mxu0 %v158
  %181 = vmatpush1.bf16.msra.mxu0 %v157
  %182 = vmatprep.subr.bf16.mxu0 0
  %183 = vmatpush1.bf16.msra.mxu0 0
  %184 = vmatprep.subr.bf16.mxu0 0
  %185 = vmatpush1.bf16.msra.mxu0 0
  %186 = vmatprep.subr.bf16.mxu0 0
  %187 = vmatpush1.bf16.msra.mxu0 0
  %188 = vmatprep.subr.bf16.mxu0 0
  %189 = vmatpush1.bf16.msra.mxu0 0
  %190 = vmatprep.subr.bf16.mxu0 0
  %191 = vmatpush1.bf16.msra.mxu0 0
  %192 = vmatprep.subr.bf16.mxu0 0
  %193 = vmatpush1.bf16.msra.mxu0 0
  %194 = vmatprep.subr.bf16.mxu0 0
  %195 = vmatpush1.bf16.msra.mxu0 0
  %196 = vmatprep.subr.bf16.mxu0 0
  %197 = vmatpush1.bf16.msra.mxu0 0
  %198 = vmatprep.subr.bf16.mxu0 0
  %199 = vmatpush1.bf16.msra.mxu0 0
  %200 = vmatprep.subr.bf16.mxu0 0
  %201 = vmatpush1.bf16.msra.mxu0 0
  %202 = vmatprep.subr.bf16.mxu0 0
  %203 = vmatpush1.bf16.msra.mxu0 0
  %204 = vmatprep.subr.bf16.mxu0 0
  %205 = vmatpush1.bf16.msra.mxu0 0
  %206 = vmatprep.mubr.bf16.mxu0 0
  %207 = vmatmul.mubr.bf16.gmra.mrb[0].mxu0 %v169
  %v208 = vpop.f32.mrb[0].mxu0
  %v209 = vadd.f32 0.0, %v208
  %v210 = vpop.f32.mrb[0].mxu0
  %v211 = vadd.f32 0.0, %v210
  %v212 = vpop.f32.mrb[0].mxu0
  %v213 = vadd.f32 0.0, %v212
  %v214 = vpop.f32.mrb[0].mxu0
  %v215 = vadd.f32 0.0, %v214
  %216 = vmatprep.mubr.bf16.mxu0 0
  %217 = vmatmul.mubr.bf16.gmra.mrb[0].mxu0 %v172
  %v218 = vpop.f32.mrb[0].mxu0
  %v219 = vadd.f32 0.0, %v218
  %v220 = vpop.f32.mrb[0].mxu0
  %v221 = vadd.f32 0.0, %v220
  %v222 = vpop.f32.mrb[0].mxu0
  %v223 = vadd.f32 0.0, %v222
  %v224 = vpop.f32.mrb[0].mxu0
  %v225 = vadd.f32 0.0, %v224
  %226 = vdwg.mxu0
  %v239 = vunpack.c.l.b16 %v21
  %v240 = vunpack.c.h.b16 %v21
  %v241 = vunpack.c.l.b16 %v22
  %v242 = vunpack.c.h.b16 %v22
  %v243 = vunpack.c.l.b16 %v23
  %v244 = vunpack.c.l.b16 %v24
  %v245 = vunpack.c.h.b16 %v24
  %v246 = vunpack.c.l.b16 %v25
  %v247 = vunpack.c.h.b16 %v25
  %v248 = vunpack.c.l.b16 %v26
  %v249 = vunpack.c.l.b16 %v27
  %v250 = vunpack.c.h.b16 %v27
  %v251 = vunpack.c.l.b16 %v28
  %v252 = vunpack.c.h.b16 %v28
  %v253 = vunpack.c.l.b16 %v29
  %v254 = vunpack.c.l.b16 %v30
  %v255 = vunpack.c.h.b16 %v30
  %v256 = vunpack.c.l.b16 %v31
  %v257 = vunpack.c.h.b16 %v31
  %v258 = vunpack.c.l.b16 %v32
  %v259 = vpack.c.b16 %v244, %v239
  %v260 = vpack.c.b16 %v245, %v240
  %v261 = vpack.c.b16 %v246, %v241
  %v262 = vpack.c.b16 %v247, %v242
  %v263 = vpack.c.b16 %v248, %v243
  %v264 = vpack.c.b16 %v254, %v249
  %v265 = vpack.c.b16 %v255, %v250
  %v266 = vpack.c.b16 %v256, %v251
  %v267 = vpack.c.b16 %v257, %v252
  %v268 = vpack.c.b16 %v258, %v253
  %v349 = vunpack.c.l.b16 %v33
  %v350 = vunpack.c.h.b16 %v33
  %v351 = vunpack.c.l.b16 %v34
  %v352 = vunpack.c.h.b16 %v34
  %v353 = vunpack.c.l.b16 %v35
  %v354 = vunpack.c.h.b16 %v35
  %v355 = vunpack.c.l.b16 %v36
  %v356 = vunpack.c.h.b16 %v36
  %v357 = vunpack.c.l.b16 %v37
  %v358 = vunpack.c.h.b16 %v37
  %v359 = vunpack.c.l.b16 %v38
  %v360 = vunpack.c.h.b16 %v38
  %v361 = vunpack.c.l.b16 %v39
  %v362 = vunpack.c.h.b16 %v39
  %v363 = vunpack.c.l.b16 %v40
  %v364 = vunpack.c.h.b16 %v40
  %v365 = vunpack.c.l.b16 %v41
  %v366 = vunpack.c.h.b16 %v41
  %v367 = vunpack.c.l.b16 %v42
  %v368 = vunpack.c.h.b16 %v42
  %v369 = vunpack.c.l.b16 %v43
  %v370 = vunpack.c.h.b16 %v43
  %v371 = vunpack.c.l.b16 %v44
  %v372 = vunpack.c.h.b16 %v44
  %v373 = vunpack.c.l.b16 %v45
  %v374 = vunpack.c.h.b16 %v45
  %v375 = vunpack.c.l.b16 %v46
  %v376 = vunpack.c.h.b16 %v46
  %v377 = vunpack.c.l.b16 %v47
  %v378 = vunpack.c.h.b16 %v47
  %v379 = vunpack.c.l.b16 %v48
  %v380 = vunpack.c.h.b16 %v48
  %v381 = vunpack.c.l.b16 %v49
  %v382 = vunpack.c.h.b16 %v49
  %v383 = vunpack.c.l.b16 %v50
  %v384 = vunpack.c.h.b16 %v50
  %v385 = vunpack.c.l.b16 %v51
  %v386 = vunpack.c.h.b16 %v51
  %v387 = vunpack.c.l.b16 %v52
  %v388 = vunpack.c.h.b16 %v52
  %v389 = vunpack.c.l.b16 %v53
  %v390 = vunpack.c.h.b16 %v53
  %v391 = vunpack.c.l.b16 %v54
  %v392 = vunpack.c.h.b16 %v54
  %v393 = vunpack.c.l.b16 %v55
  %v394 = vunpack.c.h.b16 %v55
  %v395 = vunpack.c.l.b16 %v56
  %v396 = vunpack.c.h.b16 %v56
  %v397 = vunpack.c.l.b16 %v57
  %v398 = vunpack.c.h.b16 %v57
  %v399 = vunpack.c.l.b16 %v58
  %v400 = vunpack.c.h.b16 %v58
  %v401 = vunpack.c.l.b16 %v59
  %v402 = vunpack.c.h.b16 %v59
  %v403 = vunpack.c.l.b16 %v60
  %v404 = vunpack.c.h.b16 %v60
  %v405 = vunpack.c.l.b16 %v61
  %v406 = vunpack.c.h.b16 %v61
  %v407 = vunpack.c.l.b16 %v62
  %v408 = vunpack.c.h.b16 %v62
  %v409 = vunpack.c.l.b16 %v63
  %v410 = vunpack.c.h.b16 %v63
  %v411 = vunpack.c.l.b16 %v64
  %v412 = vunpack.c.h.b16 %v64
  %v413 = vunpack.c.l.b16 %v65
  %v414 = vunpack.c.h.b16 %v65
  %v415 = vunpack.c.l.b16 %v66
  %v416 = vunpack.c.h.b16 %v66
  %v417 = vunpack.c.l.b16 %v67
  %v418 = vunpack.c.h.b16 %v67
  %v419 = vunpack.c.l.b16 %v68
  %v420 = vunpack.c.h.b16 %v68
  %v421 = vunpack.c.l.b16 %v69
  %v422 = vunpack.c.h.b16 %v69
  %v423 = vunpack.c.l.b16 %v70
  %v424 = vunpack.c.h.b16 %v70
  %v425 = vunpack.c.l.b16 %v71
  %v426 = vunpack.c.h.b16 %v71
  %v427 = vunpack.c.l.b16 %v72
  %v428 = vunpack.c.h.b16 %v72
  %v429 = vunpack.c.l.b16 %v73
  %v430 = vunpack.c.h.b16 %v73
  %v431 = vunpack.c.l.b16 %v74
  %v432 = vunpack.c.h.b16 %v74
  %v433 = vunpack.c.l.b16 %v75
  %v434 = vunpack.c.h.b16 %v75
  %v435 = vunpack.c.l.b16 %v76
  %v436 = vunpack.c.h.b16 %v76
  %v437 = vunpack.c.l.b16 %v77
  %v438 = vunpack.c.h.b16 %v77
  %v439 = vunpack.c.l.b16 %v78
  %v440 = vunpack.c.h.b16 %v78
  %v441 = vunpack.c.l.b16 %v79
  %v442 = vunpack.c.h.b16 %v79
  %v443 = vunpack.c.l.b16 %v80
  %v444 = vunpack.c.h.b16 %v80
  %v445 = vunpack.c.l.b16 %v81
  %v446 = vunpack.c.h.b16 %v81
  %v447 = vunpack.c.l.b16 %v82
  %v448 = vunpack.c.h.b16 %v82
  %v449 = vunpack.c.l.b16 %v83
  %v450 = vunpack.c.h.b16 %v83
  %v451 = vunpack.c.l.b16 %v84
  %v452 = vunpack.c.h.b16 %v84
  %v453 = vunpack.c.l.b16 %v85
  %v454 = vunpack.c.h.b16 %v85
  %v455 = vunpack.c.l.b16 %v86
  %v456 = vunpack.c.h.b16 %v86
  %v457 = vunpack.c.l.b16 %v87
  %v458 = vunpack.c.h.b16 %v87
  %v459 = vunpack.c.l.b16 %v88
  %v460 = vunpack.c.h.b16 %v88
  %v461 = vunpack.c.l.b16 %v89
  %v462 = vunpack.c.h.b16 %v89
  %v463 = vunpack.c.l.b16 %v90
  %v464 = vunpack.c.h.b16 %v90
  %v465 = vunpack.c.l.b16 %v91
  %v466 = vunpack.c.h.b16 %v91
  %v467 = vunpack.c.l.b16 %v92
  %v468 = vunpack.c.h.b16 %v92
  %v469 = vunpack.c.l.b16 %v93
  %v470 = vunpack.c.h.b16 %v93
  %v471 = vunpack.c.l.b16 %v94
  %v472 = vunpack.c.h.b16 %v94
  %v473 = vunpack.c.l.b16 %v95
  %v474 = vunpack.c.h.b16 %v95
  %v475 = vunpack.c.l.b16 %v96
  %v476 = vunpack.c.h.b16 %v96
  %v477 = vunpack.c.l.b16 %v97
  %v478 = vunpack.c.h.b16 %v97
  %v479 = vunpack.c.l.b16 %v98
  %v480 = vunpack.c.h.b16 %v98
  %v481 = vunpack.c.l.b16 %v99
  %v482 = vunpack.c.h.b16 %v99
  %v483 = vunpack.c.l.b16 %v100
  %v484 = vunpack.c.h.b16 %v100
  %v485 = vunpack.c.l.b16 %v101
  %v486 = vunpack.c.h.b16 %v101
  %v487 = vunpack.c.l.b16 %v102
  %v488 = vunpack.c.h.b16 %v102
  %v489 = vunpack.c.l.b16 %v103
  %v490 = vunpack.c.h.b16 %v103
  %v491 = vunpack.c.l.b16 %v104
  %v492 = vunpack.c.h.b16 %v104
  %v493 = vpack.c.b16 %v351, %v349
  %v494 = vpack.c.b16 %v352, %v350
  %v495 = vpack.c.b16 %v355, %v353
  %v496 = vpack.c.b16 %v356, %v354
  %v497 = vpack.c.b16 %v359, %v357
  %v498 = vpack.c.b16 %v360, %v358
  %v499 = vpack.c.b16 %v363, %v361
  %v500 = vpack.c.b16 %v364, %v362
  %v501 = vpack.c.b16 %v367, %v365
  %v502 = vpack.c.b16 %v368, %v366
  %v503 = vpack.c.b16 %v371, %v369
  %v504 = vpack.c.b16 %v372, %v370
  %v505 = vpack.c.b16 %v375, %v373
  %v506 = vpack.c.b16 %v376, %v374
  %v507 = vpack.c.b16 %v379, %v377
  %v508 = vpack.c.b16 %v380, %v378
  %v509 = vpack.c.b16 %v383, %v381
  %v510 = vpack.c.b16 %v384, %v382
  %v511 = vpack.c.b16 %v387, %v385
  %v512 = vpack.c.b16 %v388, %v386
  %v513 = vpack.c.b16 %v391, %v389
  %v514 = vpack.c.b16 %v392, %v390
  %v515 = vpack.c.b16 %v395, %v393
  %v516 = vpack.c.b16 %v396, %v394
  %v517 = vpack.c.b16 %v399, %v397
  %v518 = vpack.c.b16 %v400, %v398
  %v519 = vpack.c.b16 %v403, %v401
  %v520 = vpack.c.b16 %v404, %v402
  %v521 = vpack.c.b16 %v407, %v405
  %v522 = vpack.c.b16 %v408, %v406
  %v523 = vpack.c.b16 %v411, %v409
  %v524 = vpack.c.b16 %v412, %v410
  %v525 = vpack.c.b16 %v415, %v413
  %v526 = vpack.c.b16 %v416, %v414
  %v527 = vpack.c.b16 %v419, %v417
  %v528 = vpack.c.b16 %v420, %v418
  %v529 = vpack.c.b16 %v423, %v421
  %v530 = vpack.c.b16 %v424, %v422
  %v531 = vpack.c.b16 %v427, %v425
  %v532 = vpack.c.b16 %v428, %v426
  %v533 = vpack.c.b16 %v431, %v429
  %v534 = vpack.c.b16 %v432, %v430
  %v535 = vpack.c.b16 %v435, %v433
  %v536 = vpack.c.b16 %v436, %v434
  %v537 = vpack.c.b16 %v439, %v437
  %v538 = vpack.c.b16 %v440, %v438
  %v539 = vpack.c.b16 %v443, %v441
  %v540 = vpack.c.b16 %v444, %v442
  %v541 = vpack.c.b16 %v447, %v445
  %v542 = vpack.c.b16 %v448, %v446
  %v543 = vpack.c.b16 %v451, %v449
  %v544 = vpack.c.b16 %v452, %v450
  %v545 = vpack.c.b16 %v455, %v453
  %v546 = vpack.c.b16 %v456, %v454
  %v547 = vpack.c.b16 %v459, %v457
  %v548 = vpack.c.b16 %v460, %v458
  %v549 = vpack.c.b16 %v463, %v461
  %v550 = vpack.c.b16 %v464, %v462
  %v551 = vpack.c.b16 %v467, %v465
  %v552 = vpack.c.b16 %v468, %v466
  %v553 = vpack.c.b16 %v471, %v469
  %v554 = vpack.c.b16 %v472, %v470
  %v555 = vpack.c.b16 %v475, %v473
  %v556 = vpack.c.b16 %v476, %v474
  %v557 = vpack.c.b16 %v479, %v477
  %v558 = vpack.c.b16 %v480, %v478
  %v559 = vpack.c.b16 %v483, %v481
  %v560 = vpack.c.b16 %v484, %v482
  %v561 = vpack.c.b16 %v487, %v485
  %v562 = vpack.c.b16 %v488, %v486
  %v563 = vpack.c.b16 %v491, %v489
  %v564 = vpack.c.b16 %v492, %v490
  %v638 = vsel %vm167, %v263, 0
  %v641 = vsel %vm167, %v268, 0
  %643 = vmatprep.subr.bf16.mxu0 %v494
  %644 = vmatpush1.bf16.msra.mxu0 %v493
  %645 = vmatprep.subr.bf16.mxu0 %v496
  %646 = vmatpush1.bf16.msra.mxu0 %v495
  %647 = vmatprep.subr.bf16.mxu0 %v498
  %648 = vmatpush1.bf16.msra.mxu0 %v497
  %649 = vmatprep.subr.bf16.mxu0 %v500
  %650 = vmatpush1.bf16.msra.mxu0 %v499
  %651 = vmatprep.subr.bf16.mxu0 %v502
  %652 = vmatpush1.bf16.msra.mxu0 %v501
  %653 = vmatprep.subr.bf16.mxu0 %v504
  %654 = vmatpush1.bf16.msra.mxu0 %v503
  %655 = vmatprep.subr.bf16.mxu0 %v506
  %656 = vmatpush1.bf16.msra.mxu0 %v505
  %657 = vmatprep.subr.bf16.mxu0 %v508
  %658 = vmatpush1.bf16.msra.mxu0 %v507
  %659 = vmatprep.subr.bf16.mxu0 %v510
  %660 = vmatpush1.bf16.msra.mxu0 %v509
  %661 = vmatprep.subr.bf16.mxu0 %v512
  %662 = vmatpush1.bf16.msra.mxu0 %v511
  %663 = vmatprep.subr.bf16.mxu0 %v514
  %664 = vmatpush1.bf16.msra.mxu0 %v513
  %665 = vmatprep.subr.bf16.mxu0 %v516
  %666 = vmatpush1.bf16.msra.mxu0 %v515
  %667 = vmatprep.subr.bf16.mxu0 %v518
  %668 = vmatpush1.bf16.msra.mxu0 %v517
  %669 = vmatprep.subr.bf16.mxu0 %v520
  %670 = vmatpush1.bf16.msra.mxu0 %v519
  %671 = vmatprep.subr.bf16.mxu0 %v522
  %672 = vmatpush1.bf16.msra.mxu0 %v521
  %673 = vmatprep.subr.bf16.mxu0 %v524
  %674 = vmatpush1.bf16.msra.mxu0 %v523
  %675 = vmatprep.mubr.bf16.mxu0 %v260
  %676 = vmatmul.mubr.bf16.gmra.mrb[0].mxu0 %v259
  %v677 = vpop.f32.mrb[0].mxu0
  %v678 = vadd.f32 %v209, %v677
  %v679 = vpop.f32.mrb[0].mxu0
  %v680 = vadd.f32 %v211, %v679
  %v681 = vpop.f32.mrb[0].mxu0
  %v682 = vadd.f32 %v213, %v681
  %v683 = vpop.f32.mrb[0].mxu0
  %v684 = vadd.f32 %v215, %v683
  %685 = vmatprep.mubr.bf16.mxu0 %v265
  %686 = vmatmul.mubr.bf16.gmra.mrb[0].mxu0 %v264
  %v687 = vpop.f32.mrb[0].mxu0
  %v688 = vadd.f32 %v219, %v687
  %v689 = vpop.f32.mrb[0].mxu0
  %v690 = vadd.f32 %v221, %v689
  %v691 = vpop.f32.mrb[0].mxu0
  %v692 = vadd.f32 %v223, %v691
  %v693 = vpop.f32.mrb[0].mxu0
  %v694 = vadd.f32 %v225, %v693
  %695 = vdwg.mxu0
  %696 = vmatprep.subr.bf16.mxu0 %v526
  %697 = vmatpush1.bf16.msra.mxu0 %v525
  %698 = vmatprep.subr.bf16.mxu0 %v528
  %699 = vmatpush1.bf16.msra.mxu0 %v527
  %700 = vmatprep.subr.bf16.mxu0 %v530
  %701 = vmatpush1.bf16.msra.mxu0 %v529
  %702 = vmatprep.subr.bf16.mxu0 %v532
  %703 = vmatpush1.bf16.msra.mxu0 %v531
  %704 = vmatprep.subr.bf16.mxu0 %v534
  %705 = vmatpush1.bf16.msra.mxu0 %v533
  %706 = vmatprep.subr.bf16.mxu0 %v536
  %707 = vmatpush1.bf16.msra.mxu0 %v535
  %708 = vmatprep.subr.bf16.mxu0 %v538
  %709 = vmatpush1.bf16.msra.mxu0 %v537
  %710 = vmatprep.subr.bf16.mxu0 %v540
  %711 = vmatpush1.bf16.msra.mxu0 %v539
  %712 = vmatprep.subr.bf16.mxu0 %v542
  %713 = vmatpush1.bf16.msra.mxu0 %v541
  %714 = vmatprep.subr.bf16.mxu0 %v544
  %715 = vmatpush1.bf16.msra.mxu0 %v543
  %716 = vmatprep.subr.bf16.mxu0 %v546
  %717 = vmatpush1.bf16.msra.mxu0 %v545
  %718 = vmatprep.subr.bf16.mxu0 %v548
  %719 = vmatpush1.bf16.msra.mxu0 %v547
  %720 = vmatprep.subr.bf16.mxu0 %v550
  %721 = vmatpush1.bf16.msra.mxu0 %v549
  %722 = vmatprep.subr.bf16.mxu0 %v552
  %723 = vmatpush1.bf16.msra.mxu0 %v551
  %724 = vmatprep.subr.bf16.mxu0 %v554
  %725 = vmatpush1.bf16.msra.mxu0 %v553
  %726 = vmatprep.subr.bf16.mxu0 %v556
  %727 = vmatpush1.bf16.msra.mxu0 %v555
  %728 = vmatprep.mubr.bf16.mxu0 %v262
  %729 = vmatmul.mubr.bf16.gmra.mrb[0].mxu0 %v261
  %v730 = vpop.f32.mrb[0].mxu0
  %v731 = vadd.f32 %v678, %v730
  %v732 = vpop.f32.mrb[0].mxu0
  %v733 = vadd.f32 %v680, %v732
  %v734 = vpop.f32.mrb[0].mxu0
  %v735 = vadd.f32 %v682, %v734
  %v736 = vpop.f32.mrb[0].mxu0
  %v737 = vadd.f32 %v684, %v736
  %738 = vmatprep.mubr.bf16.mxu0 %v267
  %739 = vmatmul.mubr.bf16.gmra.mrb[0].mxu0 %v266
  %v740 = vpop.f32.mrb[0].mxu0
  %v741 = vadd.f32 %v688, %v740
  %v742 = vpop.f32.mrb[0].mxu0
  %v743 = vadd.f32 %v690, %v742
  %v744 = vpop.f32.mrb[0].mxu0
  %v745 = vadd.f32 %v692, %v744
  %v746 = vpop.f32.mrb[0].mxu0
  %v747 = vadd.f32 %v694, %v746
  %748 = vdwg.mxu0
  %749 = vmatprep.subr.bf16.mxu0 %v558
  %750 = vmatpush1.bf16.msra.mxu0 %v557
  %751 = vmatprep.subr.bf16.mxu0 %v560
  %752 = vmatpush1.bf16.msra.mxu0 %v559
  %753 = vmatprep.subr.bf16.mxu0 %v562
  %754 = vmatpush1.bf16.msra.mxu0 %v561
  %755 = vmatprep.subr.bf16.mxu0 %v564
  %756 = vmatpush1.bf16.msra.mxu0 %v563
  %757 = vmatprep.subr.bf16.mxu0 0
  %758 = vmatpush1.bf16.msra.mxu0 0
  %759 = vmatprep.subr.bf16.mxu0 0
  %760 = vmatpush1.bf16.msra.mxu0 0
  %761 = vmatprep.subr.bf16.mxu0 0
  %762 = vmatpush1.bf16.msra.mxu0 0
  %763 = vmatprep.subr.bf16.mxu0 0
  %764 = vmatpush1.bf16.msra.mxu0 0
  %765 = vmatprep.subr.bf16.mxu0 0
  %766 = vmatpush1.bf16.msra.mxu0 0
  %767 = vmatprep.subr.bf16.mxu0 0
  %768 = vmatpush1.bf16.msra.mxu0 0
  %769 = vmatprep.subr.bf16.mxu0 0
  %770 = vmatpush1.bf16.msra.mxu0 0
  %771 = vmatprep.subr.bf16.mxu0 0
  %772 = vmatpush1.bf16.msra.mxu0 0
  %773 = vmatprep.subr.bf16.mxu0 0
  %774 = vmatpush1.bf16.msra.mxu0 0
  %775 = vmatprep.subr.bf16.mxu0 0
  %776 = vmatpush1.bf16.msra.mxu0 0
  %777 = vmatprep.subr.bf16.mxu0 0
  %778 = vmatpush1.bf16.msra.mxu0 0
  %779 = vmatprep.subr.bf16.mxu0 0
  %780 = vmatpush1.bf16.msra.mxu0 0
  %781 = vmatprep.mubr.bf16.mxu0 0
  %782 = vmatmul.mubr.bf16.gmra.mrb[0].mxu0 %v638
  %v783 = vpop.f32.mrb[0].mxu0
  %v784 = vadd.f32 %v731, %v783
  %v785 = vpop.f32.mrb[0].mxu0
  %v786 = vadd.f32 %v733, %v785
  %v787 = vpop.f32.mrb[0].mxu0
  %v788 = vadd.f32 %v735, %v787
  %v789 = vpop.f32.mrb[0].mxu0
  %v790 = vadd.f32 %v737, %v789
  %791 = vmatprep.mubr.bf16.mxu0 0
  %792 = vmatmul.mubr.bf16.gmra.mrb[0].mxu0 %v641
  %v793 = vpop.f32.mrb[0].mxu0
  %v794 = vadd.f32 %v741, %v793
  %v795 = vpop.f32.mrb[0].mxu0
  %v796 = vadd.f32 %v743, %v795
  %v797 = vpop.f32.mrb[0].mxu0
  %v798 = vadd.f32 %v745, %v797
  %v799 = vpop.f32.mrb[0].mxu0
  %v800 = vadd.f32 %v747, %v799
  %801 = vdwg.mxu0
  %v802 = vld [vmem:[%s4] sm:$0x3]
  %v804 = vlaneseq
  %v805 = vshrl.u32 %v804, 7
  %v806 = vsub.s32 0, %v805
  %v807 = vrot.slane %v802, %v806
  %v808 = vlaneseq
  %v809 = vshrl.u32 %v808, 7
  %v810 = vsub.s32 1, %v809
  %v811 = vrot.slane %v802, %v810
  %v814 = vadd.f32 %v784, %v807
  %v815 = vadd.f32 %v786, %v811
  %v816 = vadd.f32 %v788, %v807
  %v817 = vadd.f32 %v790, %v811
  %v818 = vadd.f32 %v794, %v807
  %v819 = vadd.f32 %v796, %v811
  %v820 = vadd.f32 %v798, %v807
  %v821 = vadd.f32 %v800, %v811
  %822 = vst [vmem:[%s5] sm:$0xff] %v814
  %823 = vst [vmem:[%s5 + $0x8] sm:$0xff] %v815
  %824 = vst [vmem:[%s5 + $0x10] sm:$0xff] %v816
  %825 = vst [vmem:[%s5 + $0x18] sm:$0xff] %v817
  %826 = vst [vmem:[%s5 + $0x20] sm:$0xff] %v818
  %827 = vst [vmem:[%s5 + $0x28] sm:$0xff] %v819
  %828 = vst [vmem:[%s5 + $0x30] sm:$0xff] %v820
  %829 = vst [vmem:[%s5 + $0x38] sm:$0xff] %v821
  // Predicated region
  $region22: #{raft_stereo_human_forward.35} parent=0 // pred_check
    _
  $region23: #{raft_stereo_human_forward.35} parent=0 // pred_check_branch
    %831 = sbr.rel (0) target = $region25
  $region24: #{raft_stereo_human_forward.35} parent=0 // pred_region
    _
  $region25: #{raft_stereo_human_forward.35} parent=0 // pred_fallthru
    _
  // Predicated region
  $region26: #{raft_stereo_human_forward.35} parent=0 // pred_check
    _
  $region27: #{raft_stereo_human_forward.35} parent=0 // pred_check_branch
    %833 = sbr.rel (0) target = $region29
  $region28: #{raft_stereo_human_forward.35} parent=0 // pred_region
    _
  $region29: #{raft_stereo_human_forward.35} parent=0 // pred_fallthru
    _

// kernel: raft_stereo_human_forward.45
$region0: #{raft_stereo_human_forward.45}
  #allocation0 [shape = 'u32[]', space=smem, size = 0x4, offset = 0x4, fixed_abs, tag = 'smem constant byte address 0x4 - core index']
  #allocation1 [shape = 'u32[144,128]{1,0:T(1,128)}', space=vmem, size = 0x12000, scoped, tag = 'internal scratch']
  %s0 = inlined_call_operand.vmem [shape: f32[32,9,16], index: 0, kind: input, shape index: {}]
  %s1 = inlined_call_operand.vmem [shape: f32[32,9,2], index: 1, kind: input, shape index: {}]
  %s2 = inlined_call_operand.vmem [shape: f32[32,32], index: 2, kind: output, shape index: {}]
  %s3 = sld [smem:[#allocation0]]
  $region18: #{raft_stereo_human_forward.45} parent=0
    _
  %s5 = ssub.s32 1, %s3
  %s6 = scalar_select 0, %s5, %s3
  // Predicated region
  $region2: #{raft_stereo_human_forward.45} parent=0 // pred_check
    _
  $region3: #{raft_stereo_human_forward.45} parent=0 // pred_check_branch
    %8 = sbr.rel (0) target = $region5
  $region4: #{raft_stereo_human_forward.45} parent=0 // pred_region
    _
  $region5: #{raft_stereo_human_forward.45} parent=0 // pred_fallthru
    _
  // Predicated region
  $region6: #{raft_stereo_human_forward.45} parent=0 // pred_check
    _
  $region7: #{raft_stereo_human_forward.45} parent=0 // pred_check_branch
    %10 = sbr.rel (0) target = $region9
  $region8: #{raft_stereo_human_forward.45} parent=0 // pred_region
    _
  $region9: #{raft_stereo_human_forward.45} parent=0 // pred_fallthru
    _
  %v11 = vld [vmem:[%s0] sm:$0xff]
  %v12 = vld [vmem:[%s0 + $0x8] sm:$0x1]
  %v13 = vld [vmem:[%s0 + $0x10] sm:$0xff]
  %v14 = vld [vmem:[%s0 + $0x18] sm:$0x1]
  %v15 = vld [vmem:[%s0 + $0x20] sm:$0xff]
  %v16 = vld [vmem:[%s0 + $0x28] sm:$0x1]
  %v17 = vld [vmem:[%s0 + $0x30] sm:$0xff]
  %v18 = vld [vmem:[%s0 + $0x38] sm:$0x1]
  %v19 = vld [vmem:[%s0 + $0x40] sm:$0xff]
  %v20 = vld [vmem:[%s0 + $0x48] sm:$0x1]
  %v21 = vld [vmem:[%s0 + $0x50] sm:$0xff]
  %v22 = vld [vmem:[%s0 + $0x58] sm:$0x1]
  %v23 = vld [vmem:[%s0 + $0x60] sm:$0xff]
  %v24 = vld [vmem:[%s0 + $0x68] sm:$0x1]
  %v25 = vld [vmem:[%s0 + $0x70] sm:$0xff]
  %v26 = vld [vmem:[%s0 + $0x78] sm:$0x1]
  %v27 = vld [vmem:[%s0 + $0x80] sm:$0xff]
  %v28 = vld [vmem:[%s0 + $0x88] sm:$0x1]
  %v29 = vld [vmem:[%s0 + $0x90] sm:$0xff]
  %v30 = vld [vmem:[%s0 + $0x98] sm:$0x1]
  %v31 = vld [vmem:[%s0 + $0xa0] sm:$0xff]
  %v32 = vld [vmem:[%s0 + $0xa8] sm:$0x1]
  %v33 = vld [vmem:[%s0 + $0xb0] sm:$0xff]
  %v34 = vld [vmem:[%s0 + $0xb8] sm:$0x1]
  %v35 = vld [vmem:[%s0 + $0xc0] sm:$0xff]
  %v36 = vld [vmem:[%s0 + $0xc8] sm:$0x1]
  %v37 = vld [vmem:[%s0 + $0xd0] sm:$0xff]
  %v38 = vld [vmem:[%s0 + $0xd8] sm:$0x1]
  %v39 = vld [vmem:[%s0 + $0xe0] sm:$0xff]
  %v40 = vld [vmem:[%s0 + $0xe8] sm:$0x1]
  %v41 = vld [vmem:[%s0 + $0xf0] sm:$0xff]
  %v42 = vld [vmem:[%s0 + $0xf8] sm:$0x1]
  %v43 = vld [vmem:[%s0 + $0x100] sm:$0xff]
  %v44 = vld [vmem:[%s0 + $0x108] sm:$0x1]
  %v45 = vld [vmem:[%s0 + $0x110] sm:$0xff]
  %v46 = vld [vmem:[%s0 + $0x118] sm:$0x1]
  %v47 = vld [vmem:[%s0 + $0x120] sm:$0xff]
  %v48 = vld [vmem:[%s0 + $0x128] sm:$0x1]
  %v49 = vld [vmem:[%s0 + $0x130] sm:$0xff]
  %v50 = vld [vmem:[%s0 + $0x138] sm:$0x1]
  %v51 = vld [vmem:[%s0 + $0x140] sm:$0xff]
  %v52 = vld [vmem:[%s0 + $0x148] sm:$0x1]
  %v53 = vld [vmem:[%s0 + $0x150] sm:$0xff]
  %v54 = vld [vmem:[%s0 + $0x158] sm:$0x1]
  %v55 = vld [vmem:[%s0 + $0x160] sm:$0xff]
  %v56 = vld [vmem:[%s0 + $0x168] sm:$0x1]
  %v57 = vld [vmem:[%s0 + $0x170] sm:$0xff]
  %v58 = vld [vmem:[%s0 + $0x178] sm:$0x1]
  %v59 = vld [vmem:[%s0 + $0x180] sm:$0xff]
  %v60 = vld [vmem:[%s0 + $0x188] sm:$0x1]
  %v61 = vld [vmem:[%s0 + $0x190] sm:$0xff]
  %v62 = vld [vmem:[%s0 + $0x198] sm:$0x1]
  %v63 = vld [vmem:[%s0 + $0x1a0] sm:$0xff]
  %v64 = vld [vmem:[%s0 + $0x1a8] sm:$0x1]
  %v65 = vld [vmem:[%s0 + $0x1b0] sm:$0xff]
  %v66 = vld [vmem:[%s0 + $0x1b8] sm:$0x1]
  %v67 = vld [vmem:[%s0 + $0x1c0] sm:$0xff]
  %v68 = vld [vmem:[%s0 + $0x1c8] sm:$0x1]
  %v69 = vld [vmem:[%s0 + $0x1d0] sm:$0xff]
  %v70 = vld [vmem:[%s0 + $0x1d8] sm:$0x1]
  %v71 = vld [vmem:[%s0 + $0x1e0] sm:$0xff]
  %v72 = vld [vmem:[%s0 + $0x1e8] sm:$0x1]
  %v73 = vld [vmem:[%s0 + $0x1f0] sm:$0xff]
  %v74 = vld [vmem:[%s0 + $0x1f8] sm:$0x1]
  %v75 = vld [vmem:[%s1] sm:$0xff]
  %v76 = vld [vmem:[%s1 + $0x8] sm:$0x1]
  %v77 = vld [vmem:[%s1 + $0x10] sm:$0xff]
  %v78 = vld [vmem:[%s1 + $0x18] sm:$0x1]
  %v79 = vld [vmem:[%s1 + $0x20] sm:$0xff]
  %v80 = vld [vmem:[%s1 + $0x28] sm:$0x1]
  %v81 = vld [vmem:[%s1 + $0x30] sm:$0xff]
  %v82 = vld [vmem:[%s1 + $0x38] sm:$0x1]
  %v83 = vld [vmem:[%s1 + $0x40] sm:$0xff]
  %v84 = vld [vmem:[%s1 + $0x48] sm:$0x1]
  %v85 = vld [vmem:[%s1 + $0x50] sm:$0xff]
  %v86 = vld [vmem:[%s1 + $0x58] sm:$0x1]
  %v87 = vld [vmem:[%s1 + $0x60] sm:$0xff]
  %v88 = vld [vmem:[%s1 + $0x68] sm:$0x1]
  %v89 = vld [vmem:[%s1 + $0x70] sm:$0xff]
  %v90 = vld [vmem:[%s1 + $0x78] sm:$0x1]
  %v91 = vld [vmem:[%s1 + $0x80] sm:$0xff]
  %v92 = vld [vmem:[%s1 + $0x88] sm:$0x1]
  %v93 = vld [vmem:[%s1 + $0x90] sm:$0xff]
  %v94 = vld [vmem:[%s1 + $0x98] sm:$0x1]
  %v95 = vld [vmem:[%s1 + $0xa0] sm:$0xff]
  %v96 = vld [vmem:[%s1 + $0xa8] sm:$0x1]
  %v97 = vld [vmem:[%s1 + $0xb0] sm:$0xff]
  %v98 = vld [vmem:[%s1 + $0xb8] sm:$0x1]
  %v99 = vld [vmem:[%s1 + $0xc0] sm:$0xff]
  %v100 = vld [vmem:[%s1 + $0xc8] sm:$0x1]
  %v101 = vld [vmem:[%s1 + $0xd0] sm:$0xff]
  %v102 = vld [vmem:[%s1 + $0xd8] sm:$0x1]
  %v103 = vld [vmem:[%s1 + $0xe0] sm:$0xff]
  %v104 = vld [vmem:[%s1 + $0xe8] sm:$0x1]
  %v105 = vld [vmem:[%s1 + $0xf0] sm:$0xff]
  %v106 = vld [vmem:[%s1 + $0xf8] sm:$0x1]
  %v107 = vld [vmem:[%s1 + $0x100] sm:$0xff]
  %v108 = vld [vmem:[%s1 + $0x108] sm:$0x1]
  %v109 = vld [vmem:[%s1 + $0x110] sm:$0xff]
  %v110 = vld [vmem:[%s1 + $0x118] sm:$0x1]
  %v111 = vld [vmem:[%s1 + $0x120] sm:$0xff]
  %v112 = vld [vmem:[%s1 + $0x128] sm:$0x1]
  %v113 = vld [vmem:[%s1 + $0x130] sm:$0xff]
  %v114 = vld [vmem:[%s1 + $0x138] sm:$0x1]
  %v115 = vld [vmem:[%s1 + $0x140] sm:$0xff]
  %v116 = vld [vmem:[%s1 + $0x148] sm:$0x1]
  %v117 = vld [vmem:[%s1 + $0x150] sm:$0xff]
  %v118 = vld [vmem:[%s1 + $0x158] sm:$0x1]
  %v119 = vld [vmem:[%s1 + $0x160] sm:$0xff]
  %v120 = vld [vmem:[%s1 + $0x168] sm:$0x1]
  %v121 = vld [vmem:[%s1 + $0x170] sm:$0xff]
  %v122 = vld [vmem:[%s1 + $0x178] sm:$0x1]
  %v123 = vld [vmem:[%s1 + $0x180] sm:$0xff]
  %v124 = vld [vmem:[%s1 + $0x188] sm:$0x1]
  %v125 = vld [vmem:[%s1 + $0x190] sm:$0xff]
  %v126 = vld [vmem:[%s1 + $0x198] sm:$0x1]
  %v127 = vld [vmem:[%s1 + $0x1a0] sm:$0xff]
  %v128 = vld [vmem:[%s1 + $0x1a8] sm:$0x1]
  %v129 = vld [vmem:[%s1 + $0x1b0] sm:$0xff]
  %v130 = vld [vmem:[%s1 + $0x1b8] sm:$0x1]
  %v131 = vld [vmem:[%s1 + $0x1c0] sm:$0xff]
  %v132 = vld [vmem:[%s1 + $0x1c8] sm:$0x1]
  %v133 = vld [vmem:[%s1 + $0x1d0] sm:$0xff]
  %v134 = vld [vmem:[%s1 + $0x1d8] sm:$0x1]
  %v135 = vld [vmem:[%s1 + $0x1e0] sm:$0xff]
  %v136 = vld [vmem:[%s1 + $0x1e8] sm:$0x1]
  %v137 = vld [vmem:[%s1 + $0x1f0] sm:$0xff]
  %v138 = vld [vmem:[%s1 + $0x1f8] sm:$0x1]
  %vm139 = vcmask 130048
  %v140 = vsel %vm139, %v11, -inf
  %vm141 = vcmask 122880
  %v142 = vsel %vm141, %v12, -inf
  %v143 = vmax.f32 %v140, %v142
  %v144 = vrot.slane %v143, 4
  %v145 = vmax.f32 %v143, %v144
  %v146 = vrot.slane %v145, 2
  %v147 = vmax.f32 %v145, %v146
  %v148 = vrot.slane %v147, 1
  %v149 = vmax.f32 %v147, %v148
  %v150 = vsel %vm139, %v13, -inf
  %v151 = vsel %vm141, %v14, -inf
  %v152 = vmax.f32 %v150, %v151
  %v153 = vrot.slane %v152, 4
  %v154 = vmax.f32 %v152, %v153
  %v155 = vrot.slane %v154, 2
  %v156 = vmax.f32 %v154, %v155
  %v157 = vrot.slane %v156, 1
  %v158 = vmax.f32 %v156, %v157
  %v159 = vsel %vm139, %v15, -inf
  %v160 = vsel %vm141, %v16, -inf
  %v161 = vmax.f32 %v159, %v160
  %v162 = vrot.slane %v161, 4
  %v163 = vmax.f32 %v161, %v162
  %v164 = vrot.slane %v163, 2
  %v165 = vmax.f32 %v163, %v164
  %v166 = vrot.slane %v165, 1
  %v167 = vmax.f32 %v165, %v166
  %v168 = vsel %vm139, %v17, -inf
  %v169 = vsel %vm141, %v18, -inf
  %v170 = vmax.f32 %v168, %v169
  %v171 = vrot.slane %v170, 4
  %v172 = vmax.f32 %v170, %v171
  %v173 = vrot.slane %v172, 2
  %v174 = vmax.f32 %v172, %v173
  %v175 = vrot.slane %v174, 1
  %v176 = vmax.f32 %v174, %v175
  %v177 = vsel %vm139, %v19, -inf
  %v178 = vsel %vm141, %v20, -inf
  %v179 = vmax.f32 %v177, %v178
  %v180 = vrot.slane %v179, 4
  %v181 = vmax.f32 %v179, %v180
  %v182 = vrot.slane %v181, 2
  %v183 = vmax.f32 %v181, %v182
  %v184 = vrot.slane %v183, 1
  %v185 = vmax.f32 %v183, %v184
  %v186 = vsel %vm139, %v21, -inf
  %v187 = vsel %vm141, %v22, -inf
  %v188 = vmax.f32 %v186, %v187
  %v189 = vrot.slane %v188, 4
  %v190 = vmax.f32 %v188, %v189
  %v191 = vrot.slane %v190, 2
  %v192 = vmax.f32 %v190, %v191
  %v193 = vrot.slane %v192, 1
  %v194 = vmax.f32 %v192, %v193
  %v195 = vsel %vm139, %v23, -inf
  %v196 = vsel %vm141, %v24, -inf
  %v197 = vmax.f32 %v195, %v196
  %v198 = vrot.slane %v197, 4
  %v199 = vmax.f32 %v197, %v198
  %v200 = vrot.slane %v199, 2
  %v201 = vmax.f32 %v199, %v200
  %v202 = vrot.slane %v201, 1
  %v203 = vmax.f32 %v201, %v202
  %v204 = vsel %vm139, %v25, -inf
  %v205 = vsel %vm141, %v26, -inf
  %v206 = vmax.f32 %v204, %v205
  %v207 = vrot.slane %v206, 4
  %v208 = vmax.f32 %v206, %v207
  %v209 = vrot.slane %v208, 2
  %v210 = vmax.f32 %v208, %v209
  %v211 = vrot.slane %v210, 1
  %v212 = vmax.f32 %v210, %v211
  %v213 = vsel %vm139, %v27, -inf
  %v214 = vsel %vm141, %v28, -inf
  %v215 = vmax.f32 %v213, %v214
  %v216 = vrot.slane %v215, 4
  %v217 = vmax.f32 %v215, %v216
  %v218 = vrot.slane %v217, 2
  %v219 = vmax.f32 %v217, %v218
  %v220 = vrot.slane %v219, 1
  %v221 = vmax.f32 %v219, %v220
  %v222 = vsel %vm139, %v29, -inf
  %v223 = vsel %vm141, %v30, -inf
  %v224 = vmax.f32 %v222, %v223
  %v225 = vrot.slane %v224, 4
  %v226 = vmax.f32 %v224, %v225
  %v227 = vrot.slane %v226, 2
  %v228 = vmax.f32 %v226, %v227
  %v229 = vrot.slane %v228, 1
  %v230 = vmax.f32 %v228, %v229
  %v231 = vsel %vm139, %v31, -inf
  %v232 = vsel %vm141, %v32, -inf
  %v233 = vmax.f32 %v231, %v232
  %v234 = vrot.slane %v233, 4
  %v235 = vmax.f32 %v233, %v234
  %v236 = vrot.slane %v235, 2
  %v237 = vmax.f32 %v235, %v236
  %v238 = vrot.slane %v237, 1
  %v239 = vmax.f32 %v237, %v238
  %v240 = vsel %vm139, %v33, -inf
  %v241 = vsel %vm141, %v34, -inf
  %v242 = vmax.f32 %v240, %v241
  %v243 = vrot.slane %v242, 4
  %v244 = vmax.f32 %v242, %v243
  %v245 = vrot.slane %v244, 2
  %v246 = vmax.f32 %v244, %v245
  %v247 = vrot.slane %v246, 1
  %v248 = vmax.f32 %v246, %v247
  %v249 = vsel %vm139, %v35, -inf
  %v250 = vsel %vm141, %v36, -inf
  %v251 = vmax.f32 %v249, %v250
  %v252 = vrot.slane %v251, 4
  %v253 = vmax.f32 %v251, %v252
  %v254 = vrot.slane %v253, 2
  %v255 = vmax.f32 %v253, %v254
  %v256 = vrot.slane %v255, 1
  %v257 = vmax.f32 %v255, %v256
  %v258 = vsel %vm139, %v37, -inf
  %v259 = vsel %vm141, %v38, -inf
  %v260 = vmax.f32 %v258, %v259
  %v261 = vrot.slane %v260, 4
  %v262 = vmax.f32 %v260, %v261
  %v263 = vrot.slane %v262, 2
  %v264 = vmax.f32 %v262, %v263
  %v265 = vrot.slane %v264, 1
  %v266 = vmax.f32 %v264, %v265
  %v267 = vsel %vm139, %v39, -inf
  %v268 = vsel %vm141, %v40, -inf
  %v269 = vmax.f32 %v267, %v268
  %v270 = vrot.slane %v269, 4
  %v271 = vmax.f32 %v269, %v270
  %v272 = vrot.slane %v271, 2
  %v273 = vmax.f32 %v271, %v272
  %v274 = vrot.slane %v273, 1
  %v275 = vmax.f32 %v273, %v274
  %v276 = vsel %vm139, %v41, -inf
  %v277 = vsel %vm141, %v42, -inf
  %v278 = vmax.f32 %v276, %v277
  %v279 = vrot.slane %v278, 4
  %v280 = vmax.f32 %v278, %v279
  %v281 = vrot.slane %v280, 2
  %v282 = vmax.f32 %v280, %v281
  %v283 = vrot.slane %v282, 1
  %v284 = vmax.f32 %v282, %v283
  %v285 = vsel %vm139, %v43, -inf
  %v286 = vsel %vm141, %v44, -inf
  %v287 = vmax.f32 %v285, %v286
  %v288 = vrot.slane %v287, 4
  %v289 = vmax.f32 %v287, %v288
  %v290 = vrot.slane %v289, 2
  %v291 = vmax.f32 %v289, %v290
  %v292 = vrot.slane %v291, 1
  %v293 = vmax.f32 %v291, %v292
  %v294 = vsel %vm139, %v45, -inf
  %v295 = vsel %vm141, %v46, -inf
  %v296 = vmax.f32 %v294, %v295
  %v297 = vrot.slane %v296, 4
  %v298 = vmax.f32 %v296, %v297
  %v299 = vrot.slane %v298, 2
  %v300 = vmax.f32 %v298, %v299
  %v301 = vrot.slane %v300, 1
  %v302 = vmax.f32 %v300, %v301
  %v303 = vsel %vm139, %v47, -inf
  %v304 = vsel %vm141, %v48, -inf
  %v305 = vmax.f32 %v303, %v304
  %v306 = vrot.slane %v305, 4
  %v307 = vmax.f32 %v305, %v306
  %v308 = vrot.slane %v307, 2
  %v309 = vmax.f32 %v307, %v308
  %v310 = vrot.slane %v309, 1
  %v311 = vmax.f32 %v309, %v310
  %v312 = vsel %vm139, %v49, -inf
  %v313 = vsel %vm141, %v50, -inf
  %v314 = vmax.f32 %v312, %v313
  %v315 = vrot.slane %v314, 4
  %v316 = vmax.f32 %v314, %v315
  %v317 = vrot.slane %v316, 2
  %v318 = vmax.f32 %v316, %v317
  %v319 = vrot.slane %v318, 1
  %v320 = vmax.f32 %v318, %v319
  %v321 = vsel %vm139, %v51, -inf
  %v322 = vsel %vm141, %v52, -inf
  %v323 = vmax.f32 %v321, %v322
  %v324 = vrot.slane %v323, 4
  %v325 = vmax.f32 %v323, %v324
  %v326 = vrot.slane %v325, 2
  %v327 = vmax.f32 %v325, %v326
  %v328 = vrot.slane %v327, 1
  %v329 = vmax.f32 %v327, %v328
  %v330 = vsel %vm139, %v53, -inf
  %v331 = vsel %vm141, %v54, -inf
  %v332 = vmax.f32 %v330, %v331
  %v333 = vrot.slane %v332, 4
  %v334 = vmax.f32 %v332, %v333
  %v335 = vrot.slane %v334, 2
  %v336 = vmax.f32 %v334, %v335
  %v337 = vrot.slane %v336, 1
  %v338 = vmax.f32 %v336, %v337
  %v339 = vsel %vm139, %v55, -inf
  %v340 = vsel %vm141, %v56, -inf
  %v341 = vmax.f32 %v339, %v340
  %v342 = vrot.slane %v341, 4
  %v343 = vmax.f32 %v341, %v342
  %v344 = vrot.slane %v343, 2
  %v345 = vmax.f32 %v343, %v344
  %v346 = vrot.slane %v345, 1
  %v347 = vmax.f32 %v345, %v346
  %v348 = vsel %vm139, %v57, -inf
  %v349 = vsel %vm141, %v58, -inf
  %v350 = vmax.f32 %v348, %v349
  %v351 = vrot.slane %v350, 4
  %v352 = vmax.f32 %v350, %v351
  %v353 = vrot.slane %v352, 2
  %v354 = vmax.f32 %v352, %v353
  %v355 = vrot.slane %v354, 1
  %v356 = vmax.f32 %v354, %v355
  %v357 = vsel %vm139, %v59, -inf
  %v358 = vsel %vm141, %v60, -inf
  %v359 = vmax.f32 %v357, %v358
  %v360 = vrot.slane %v359, 4
  %v361 = vmax.f32 %v359, %v360
  %v362 = vrot.slane %v361, 2
  %v363 = vmax.f32 %v361, %v362
  %v364 = vrot.slane %v363, 1
  %v365 = vmax.f32 %v363, %v364
  %v366 = vsel %vm139, %v61, -inf
  %v367 = vsel %vm141, %v62, -inf
  %v368 = vmax.f32 %v366, %v367
  %v369 = vrot.slane %v368, 4
  %v370 = vmax.f32 %v368, %v369
  %v371 = vrot.slane %v370, 2
  %v372 = vmax.f32 %v370, %v371
  %v373 = vrot.slane %v372, 1
  %v374 = vmax.f32 %v372, %v373
  %v375 = vsel %vm139, %v63, -inf
  %v376 = vsel %vm141, %v64, -inf
  %v377 = vmax.f32 %v375, %v376
  %v378 = vrot.slane %v377, 4
  %v379 = vmax.f32 %v377, %v378
  %v380 = vrot.slane %v379, 2
  %v381 = vmax.f32 %v379, %v380
  %v382 = vrot.slane %v381, 1
  %v383 = vmax.f32 %v381, %v382
  %v384 = vsel %vm139, %v65, -inf
  %v385 = vsel %vm141, %v66, -inf
  %v386 = vmax.f32 %v384, %v385
  %v387 = vrot.slane %v386, 4
  %v388 = vmax.f32 %v386, %v387
  %v389 = vrot.slane %v388, 2
  %v390 = vmax.f32 %v388, %v389
  %v391 = vrot.slane %v390, 1
  %v392 = vmax.f32 %v390, %v391
  %v393 = vsel %vm139, %v67, -inf
  %v394 = vsel %vm141, %v68, -inf
  %v395 = vmax.f32 %v393, %v394
  %v396 = vrot.slane %v395, 4
  %v397 = vmax.f32 %v395, %v396
  %v398 = vrot.slane %v397, 2
  %v399 = vmax.f32 %v397, %v398
  %v400 = vrot.slane %v399, 1
  %v401 = vmax.f32 %v399, %v400
  %v402 = vsel %vm139, %v69, -inf
  %v403 = vsel %vm141, %v70, -inf
  %v404 = vmax.f32 %v402, %v403
  %v405 = vrot.slane %v404, 4
  %v406 = vmax.f32 %v404, %v405
  %v407 = vrot.slane %v406, 2
  %v408 = vmax.f32 %v406, %v407
  %v409 = vrot.slane %v408, 1
  %v410 = vmax.f32 %v408, %v409
  %v411 = vsel %vm139, %v71, -inf
  %v412 = vsel %vm141, %v72, -inf
  %v413 = vmax.f32 %v411, %v412
  %v414 = vrot.slane %v413, 4
  %v415 = vmax.f32 %v413, %v414
  %v416 = vrot.slane %v415, 2
  %v417 = vmax.f32 %v415, %v416
  %v418 = vrot.slane %v417, 1
  %v419 = vmax.f32 %v417, %v418
  %v420 = vsel %vm139, %v73, -inf
  %v421 = vsel %vm141, %v74, -inf
  %v422 = vmax.f32 %v420, %v421
  %v423 = vrot.slane %v422, 4
  %v424 = vmax.f32 %v422, %v423
  %v425 = vrot.slane %v424, 2
  %v426 = vmax.f32 %v424, %v425
  %v427 = vrot.slane %v426, 1
  %v428 = vmax.f32 %v426, %v427
  %v429 = vsub.f32 %v11, %v149
  %v430 = vsub.f32 %v12, %v149
  %v431 = vsub.f32 %v13, %v158
  %v432 = vsub.f32 %v14, %v158
  %v433 = vsub.f32 %v15, %v167
  %v434 = vsub.f32 %v16, %v167
  %v435 = vsub.f32 %v17, %v176
  %v436 = vsub.f32 %v18, %v176
  %v437 = vsub.f32 %v19, %v185
  %v438 = vsub.f32 %v20, %v185
  %v439 = vsub.f32 %v21, %v194
  %v440 = vsub.f32 %v22, %v194
  %v441 = vsub.f32 %v23, %v203
  %v442 = vsub.f32 %v24, %v203
  %v443 = vsub.f32 %v25, %v212
  %v444 = vsub.f32 %v26, %v212
  %v445 = vsub.f32 %v27, %v221
  %v446 = vsub.f32 %v28, %v221
  %v447 = vsub.f32 %v29, %v230
  %v448 = vsub.f32 %v30, %v230
  %v449 = vsub.f32 %v31, %v239
  %v450 = vsub.f32 %v32, %v239
  %v451 = vsub.f32 %v33, %v248
  %v452 = vsub.f32 %v34, %v248
  %v453 = vsub.f32 %v35, %v257
  %v454 = vsub.f32 %v36, %v257
  %v455 = vsub.f32 %v37, %v266
  %v456 = vsub.f32 %v38, %v266
  %v457 = vsub.f32 %v39, %v275
  %v458 = vsub.f32 %v40, %v275
  %v459 = vsub.f32 %v41, %v284
  %v460 = vsub.f32 %v42, %v284
  %v461 = vsub.f32 %v43, %v293
  %v462 = vsub.f32 %v44, %v293
  %v463 = vsub.f32 %v45, %v302
  %v464 = vsub.f32 %v46, %v302
  %v465 = vsub.f32 %v47, %v311
  %v466 = vsub.f32 %v48, %v311
  %v467 = vsub.f32 %v49, %v320
  %v468 = vsub.f32 %v50, %v320
  %v469 = vsub.f32 %v51, %v329
  %v470 = vsub.f32 %v52, %v329
  %v471 = vsub.f32 %v53, %v338
  %v472 = vsub.f32 %v54, %v338
  %v473 = vsub.f32 %v55, %v347
  %v474 = vsub.f32 %v56, %v347
  %v475 = vsub.f32 %v57, %v356
  %v476 = vsub.f32 %v58, %v356
  %v477 = vsub.f32 %v59, %v365
  %v478 = vsub.f32 %v60, %v365
  %v479 = vsub.f32 %v61, %v374
  %v480 = vsub.f32 %v62, %v374
  %v481 = vsub.f32 %v63, %v383
  %v482 = vsub.f32 %v64, %v383
  %v483 = vsub.f32 %v65, %v392
  %v484 = vsub.f32 %v66, %v392
  %v485 = vsub.f32 %v67, %v401
  %v486 = vsub.f32 %v68, %v401
  %v487 = vsub.f32 %v69, %v410
  %v488 = vsub.f32 %v70, %v410
  %v489 = vsub.f32 %v71, %v419
  %v490 = vsub.f32 %v72, %v419
  %v491 = vsub.f32 %v73, %v428
  %v492 = vsub.f32 %v74, %v428
  %v493 = vmul.f32 %v429, 1.442695
  %v494 = vpow.pop %v493
  %v495 = vmul.f32 %v430, 1.442695
  %v496 = vpow.pop %v495
  %v497 = vmul.f32 %v431, 1.442695
  %v498 = vpow.pop %v497
  %v499 = vmul.f32 %v432, 1.442695
  %v500 = vpow.pop %v499
  %v501 = vmul.f32 %v433, 1.442695
  %v502 = vpow.pop %v501
  %v503 = vmul.f32 %v434, 1.442695
  %v504 = vpow.pop %v503
  %v505 = vmul.f32 %v435, 1.442695
  %v506 = vpow.pop %v505
  %v507 = vmul.f32 %v436, 1.442695
  %v508 = vpow.pop %v507
  %v509 = vmul.f32 %v437, 1.442695
  %v510 = vpow.pop %v509
  %v511 = vmul.f32 %v438, 1.442695
  %v512 = vpow.pop %v511
  %v513 = vmul.f32 %v439, 1.442695
  %v514 = vpow.pop %v513
  %v515 = vmul.f32 %v440, 1.442695
  %v516 = vpow.pop %v515
  %v517 = vmul.f32 %v441, 1.442695
  %v518 = vpow.pop %v517
  %v519 = vmul.f32 %v442, 1.442695
  %v520 = vpow.pop %v519
  %v521 = vmul.f32 %v443, 1.442695
  %v522 = vpow.pop %v521
  %v523 = vmul.f32 %v444, 1.442695
  %v524 = vpow.pop %v523
  %v525 = vmul.f32 %v445, 1.442695
  %v526 = vpow.pop %v525
  %v527 = vmul.f32 %v446, 1.442695
  %v528 = vpow.pop %v527
  %v529 = vmul.f32 %v447, 1.442695
  %v530 = vpow.pop %v529
  %v531 = vmul.f32 %v448, 1.442695
  %v532 = vpow.pop %v531
  %v533 = vmul.f32 %v449, 1.442695
  %v534 = vpow.pop %v533
  %v535 = vmul.f32 %v450, 1.442695
  %v536 = vpow.pop %v535
  %v537 = vmul.f32 %v451, 1.442695
  %v538 = vpow.pop %v537
  %v539 = vmul.f32 %v452, 1.442695
  %v540 = vpow.pop %v539
  %v541 = vmul.f32 %v453, 1.442695
  %v542 = vpow.pop %v541
  %v543 = vmul.f32 %v454, 1.442695
  %v544 = vpow.pop %v543
  %v545 = vmul.f32 %v455, 1.442695
  %v546 = vpow.pop %v545
  %v547 = vmul.f32 %v456, 1.442695
  %v548 = vpow.pop %v547
  %v549 = vmul.f32 %v457, 1.442695
  %v550 = vpow.pop %v549
  %v551 = vmul.f32 %v458, 1.442695
  %v552 = vpow.pop %v551
  %v553 = vmul.f32 %v459, 1.442695
  %v554 = vpow.pop %v553
  %v555 = vmul.f32 %v460, 1.442695
  %v556 = vpow.pop %v555
  %v557 = vmul.f32 %v461, 1.442695
  %v558 = vpow.pop %v557
  %v559 = vmul.f32 %v462, 1.442695
  %v560 = vpow.pop %v559
  %v561 = vmul.f32 %v463, 1.442695
  %v562 = vpow.pop %v561
  %v563 = vmul.f32 %v464, 1.442695
  %v564 = vpow.pop %v563
  %v565 = vmul.f32 %v465, 1.442695
  %v566 = vpow.pop %v565
  %v567 = vmul.f32 %v466, 1.442695
  %v568 = vpow.pop %v567
  %v569 = vmul.f32 %v467, 1.442695
  %v570 = vpow.pop %v569
  %v571 = vmul.f32 %v468, 1.442695
  %v572 = vpow.pop %v571
  %v573 = vmul.f32 %v469, 1.442695
  %v574 = vpow.pop %v573
  %v575 = vmul.f32 %v470, 1.442695
  %v576 = vpow.pop %v575
  %v577 = vmul.f32 %v471, 1.442695
  %v578 = vpow.pop %v577
  %v579 = vmul.f32 %v472, 1.442695
  %v580 = vpow.pop %v579
  %v581 = vmul.f32 %v473, 1.442695
  %v582 = vpow.pop %v581
  %v583 = vmul.f32 %v474, 1.442695
  %v584 = vpow.pop %v583
  %v585 = vmul.f32 %v475, 1.442695
  %v586 = vpow.pop %v585
  %v587 = vmul.f32 %v476, 1.442695
  %v588 = vpow.pop %v587
  %v589 = vmul.f32 %v477, 1.442695
  %v590 = vpow.pop %v589
  %v591 = vmul.f32 %v478, 1.442695
  %v592 = vpow.pop %v591
  %v593 = vmul.f32 %v479, 1.442695
  %v594 = vpow.pop %v593
  %v595 = vmul.f32 %v480, 1.442695
  %v596 = vpow.pop %v595
  %v597 = vmul.f32 %v481, 1.442695
  %v598 = vpow.pop %v597
  %v599 = vmul.f32 %v482, 1.442695
  %v600 = vpow.pop %v599
  %v601 = vmul.f32 %v483, 1.442695
  %v602 = vpow.pop %v601
  %v603 = vmul.f32 %v484, 1.442695
  %v604 = vpow.pop %v603
  %v605 = vmul.f32 %v485, 1.442695
  %v606 = vpow.pop %v605
  %v607 = vmul.f32 %v486, 1.442695
  %v608 = vpow.pop %v607
  %v609 = vmul.f32 %v487, 1.442695
  %v610 = vpow.pop %v609
  %v611 = vmul.f32 %v488, 1.442695
  %v612 = vpow.pop %v611
  %v613 = vmul.f32 %v489, 1.442695
  %v614 = vpow.pop %v613
  %v615 = vmul.f32 %v490, 1.442695
  %v616 = vpow.pop %v615
  %v617 = vmul.f32 %v491, 1.442695
  %v618 = vpow.pop %v617
  %v619 = vmul.f32 %v492, 1.442695
  %v620 = vpow.pop %v619
  %v621 = vsel %vm139, %v494, 0.0
  %v622 = vsel %vm141, %v496, 0.0
  %v623 = vadd.f32 %v621, %v622
  %v624 = vrot.slane %v623, 4
  %v625 = vadd.f32 %v623, %v624
  %v626 = vrot.slane %v625, 2
  %v627 = vadd.f32 %v625, %v626
  %v628 = vrot.slane %v627, 1
  %v629 = vadd.f32 %v627, %v628
  %v630 = vsel %vm139, %v498, 0.0
  %v631 = vsel %vm141, %v500, 0.0
  %v632 = vadd.f32 %v630, %v631
  %v633 = vrot.slane %v632, 4
  %v634 = vadd.f32 %v632, %v633
  %v635 = vrot.slane %v634, 2
  %v636 = vadd.f32 %v634, %v635
  %v637 = vrot.slane %v636, 1
  %v638 = vadd.f32 %v636, %v637
  %v639 = vsel %vm139, %v502, 0.0
  %v640 = vsel %vm141, %v504, 0.0
  %v641 = vadd.f32 %v639, %v640
  %v642 = vrot.slane %v641, 4
  %v643 = vadd.f32 %v641, %v642
  %v644 = vrot.slane %v643, 2
  %v645 = vadd.f32 %v643, %v644
  %v646 = vrot.slane %v645, 1
  %v647 = vadd.f32 %v645, %v646
  %v648 = vsel %vm139, %v506, 0.0
  %v649 = vsel %vm141, %v508, 0.0
  %v650 = vadd.f32 %v648, %v649
  %v651 = vrot.slane %v650, 4
  %v652 = vadd.f32 %v650, %v651
  %v653 = vrot.slane %v652, 2
  %v654 = vadd.f32 %v652, %v653
  %v655 = vrot.slane %v654, 1
  %v656 = vadd.f32 %v654, %v655
  %v657 = vsel %vm139, %v510, 0.0
  %v658 = vsel %vm141, %v512, 0.0
  %v659 = vadd.f32 %v657, %v658
  %v660 = vrot.slane %v659, 4
  %v661 = vadd.f32 %v659, %v660
  %v662 = vrot.slane %v661, 2
  %v663 = vadd.f32 %v661, %v662
  %v664 = vrot.slane %v663, 1
  %v665 = vadd.f32 %v663, %v664
  %v666 = vsel %vm139, %v514, 0.0
  %v667 = vsel %vm141, %v516, 0.0
  %v668 = vadd.f32 %v666, %v667
  %v669 = vrot.slane %v668, 4
  %v670 = vadd.f32 %v668, %v669
  %v671 = vrot.slane %v670, 2
  %v672 = vadd.f32 %v670, %v671
  %v673 = vrot.slane %v672, 1
  %v674 = vadd.f32 %v672, %v673
  %v675 = vsel %vm139, %v518, 0.0
  %v676 = vsel %vm141, %v520, 0.0
  %v677 = vadd.f32 %v675, %v676
  %v678 = vrot.slane %v677, 4
  %v679 = vadd.f32 %v677, %v678
  %v680 = vrot.slane %v679, 2
  %v681 = vadd.f32 %v679, %v680
  %v682 = vrot.slane %v681, 1
  %v683 = vadd.f32 %v681, %v682
  %v684 = vsel %vm139, %v522, 0.0
  %v685 = vsel %vm141, %v524, 0.0
  %v686 = vadd.f32 %v684, %v685
  %v687 = vrot.slane %v686, 4
  %v688 = vadd.f32 %v686, %v687
  %v689 = vrot.slane %v688, 2
  %v690 = vadd.f32 %v688, %v689
  %v691 = vrot.slane %v690, 1
  %v692 = vadd.f32 %v690, %v691
  %v693 = vsel %vm139, %v526, 0.0
  %v694 = vsel %vm141, %v528, 0.0
  %v695 = vadd.f32 %v693, %v694
  %v696 = vrot.slane %v695, 4
  %v697 = vadd.f32 %v695, %v696
  %v698 = vrot.slane %v697, 2
  %v699 = vadd.f32 %v697, %v698
  %v700 = vrot.slane %v699, 1
  %v701 = vadd.f32 %v699, %v700
  %v702 = vsel %vm139, %v530, 0.0
  %v703 = vsel %vm141, %v532, 0.0
  %v704 = vadd.f32 %v702, %v703
  %v705 = vrot.slane %v704, 4
  %v706 = vadd.f32 %v704, %v705
  %v707 = vrot.slane %v706, 2
  %v708 = vadd.f32 %v706, %v707
  %v709 = vrot.slane %v708, 1
  %v710 = vadd.f32 %v708, %v709
  %v711 = vsel %vm139, %v534, 0.0
  %v712 = vsel %vm141, %v536, 0.0
  %v713 = vadd.f32 %v711, %v712
  %v714 = vrot.slane %v713, 4
  %v715 = vadd.f32 %v713, %v714
  %v716 = vrot.slane %v715, 2
  %v717 = vadd.f32 %v715, %v716
  %v718 = vrot.slane %v717, 1
  %v719 = vadd.f32 %v717, %v718
  %v720 = vsel %vm139, %v538, 0.0
  %v721 = vsel %vm141, %v540, 0.0
  %v722 = vadd.f32 %v720, %v721
  %v723 = vrot.slane %v722, 4
  %v724 = vadd.f32 %v722, %v723
  %v725 = vrot.slane %v724, 2
  %v726 = vadd.f32 %v724, %v725
  %v727 = vrot.slane %v726, 1
  %v728 = vadd.f32 %v726, %v727
  %v729 = vsel %vm139, %v542, 0.0
  %v730 = vsel %vm141, %v544, 0.0
  %v731 = vadd.f32 %v729, %v730
  %v732 = vrot.slane %v731, 4
  %v733 = vadd.f32 %v731, %v732
  %v734 = vrot.slane %v733, 2
  %v735 = vadd.f32 %v733, %v734
  %v736 = vrot.slane %v735, 1
  %v737 = vadd.f32 %v735, %v736
  %v738 = vsel %vm139, %v546, 0.0
  %v739 = vsel %vm141, %v548, 0.0
  %v740 = vadd.f32 %v738, %v739
  %v741 = vrot.slane %v740, 4
  %v742 = vadd.f32 %v740, %v741
  %v743 = vrot.slane %v742, 2
  %v744 = vadd.f32 %v742, %v743
  %v745 = vrot.slane %v744, 1
  %v746 = vadd.f32 %v744, %v745
  %v747 = vsel %vm139, %v550, 0.0
  %v748 = vsel %vm141, %v552, 0.0
  %v749 = vadd.f32 %v747, %v748
  %v750 = vrot.slane %v749, 4
  %v751 = vadd.f32 %v749, %v750
  %v752 = vrot.slane %v751, 2
  %v753 = vadd.f32 %v751, %v752
  %v754 = vrot.slane %v753, 1
  %v755 = vadd.f32 %v753, %v754
  %v756 = vsel %vm139, %v554, 0.0
  %v757 = vsel %vm141, %v556, 0.0
  %v758 = vadd.f32 %v756, %v757
  %v759 = vrot.slane %v758, 4
  %v760 = vadd.f32 %v758, %v759
  %v761 = vrot.slane %v760, 2
  %v762 = vadd.f32 %v760, %v761
  %v763 = vrot.slane %v762, 1
  %v764 = vadd.f32 %v762, %v763
  %v765 = vsel %vm139, %v558, 0.0
  %v766 = vsel %vm141, %v560, 0.0
  %v767 = vadd.f32 %v765, %v766
  %v768 = vrot.slane %v767, 4
  %v769 = vadd.f32 %v767, %v768
  %v770 = vrot.slane %v769, 2
  %v771 = vadd.f32 %v769, %v770
  %v772 = vrot.slane %v771, 1
  %v773 = vadd.f32 %v771, %v772
  %v774 = vsel %vm139, %v562, 0.0
  %v775 = vsel %vm141, %v564, 0.0
  %v776 = vadd.f32 %v774, %v775
  %v777 = vrot.slane %v776, 4
  %v778 = vadd.f32 %v776, %v777
  %v779 = vrot.slane %v778, 2
  %v780 = vadd.f32 %v778, %v779
  %v781 = vrot.slane %v780, 1
  %v782 = vadd.f32 %v780, %v781
  %v783 = vsel %vm139, %v566, 0.0
  %v784 = vsel %vm141, %v568, 0.0
  %v785 = vadd.f32 %v783, %v784
  %v786 = vrot.slane %v785, 4
  %v787 = vadd.f32 %v785, %v786
  %v788 = vrot.slane %v787, 2
  %v789 = vadd.f32 %v787, %v788
  %v790 = vrot.slane %v789, 1
  %v791 = vadd.f32 %v789, %v790
  %v792 = vsel %vm139, %v570, 0.0
  %v793 = vsel %vm141, %v572, 0.0
  %v794 = vadd.f32 %v792, %v793
  %v795 = vrot.slane %v794, 4
  %v796 = vadd.f32 %v794, %v795
  %v797 = vrot.slane %v796, 2
  %v798 = vadd.f32 %v796, %v797
  %v799 = vrot.slane %v798, 1
  %v800 = vadd.f32 %v798, %v799
  %v801 = vsel %vm139, %v574, 0.0
  %v802 = vsel %vm141, %v576, 0.0
  %v803 = vadd.f32 %v801, %v802
  %v804 = vrot.slane %v803, 4
  %v805 = vadd.f32 %v803, %v804
  %v806 = vrot.slane %v805, 2
  %v807 = vadd.f32 %v805, %v806
  %v808 = vrot.slane %v807, 1
  %v809 = vadd.f32 %v807, %v808
  %v810 = vsel %vm139, %v578, 0.0
  %v811 = vsel %vm141, %v580, 0.0
  %v812 = vadd.f32 %v810, %v811
  %v813 = vrot.slane %v812, 4
  %v814 = vadd.f32 %v812, %v813
  %v815 = vrot.slane %v814, 2
  %v816 = vadd.f32 %v814, %v815
  %v817 = vrot.slane %v816, 1
  %v818 = vadd.f32 %v816, %v817
  %v819 = vsel %vm139, %v582, 0.0
  %v820 = vsel %vm141, %v584, 0.0
  %v821 = vadd.f32 %v819, %v820
  %v822 = vrot.slane %v821, 4
  %v823 = vadd.f32 %v821, %v822
  %v824 = vrot.slane %v823, 2
  %v825 = vadd.f32 %v823, %v824
  %v826 = vrot.slane %v825, 1
  %v827 = vadd.f32 %v825, %v826
  %v828 = vsel %vm139, %v586, 0.0
  %v829 = vsel %vm141, %v588, 0.0
  %v830 = vadd.f32 %v828, %v829
  %v831 = vrot.slane %v830, 4
  %v832 = vadd.f32 %v830, %v831
  %v833 = vrot.slane %v832, 2
  %v834 = vadd.f32 %v832, %v833
  %v835 = vrot.slane %v834, 1
  %v836 = vadd.f32 %v834, %v835
  %v837 = vsel %vm139, %v590, 0.0
  %v838 = vsel %vm141, %v592, 0.0
  %v839 = vadd.f32 %v837, %v838
  %v840 = vrot.slane %v839, 4
  %v841 = vadd.f32 %v839, %v840
  %v842 = vrot.slane %v841, 2
  %v843 = vadd.f32 %v841, %v842
  %v844 = vrot.slane %v843, 1
  %v845 = vadd.f32 %v843, %v844
  %v846 = vsel %vm139, %v594, 0.0
  %v847 = vsel %vm141, %v596, 0.0
  %v848 = vadd.f32 %v846, %v847
  %v849 = vrot.slane %v848, 4
  %v850 = vadd.f32 %v848, %v849
  %v851 = vrot.slane %v850, 2
  %v852 = vadd.f32 %v850, %v851
  %v853 = vrot.slane %v852, 1
  %v854 = vadd.f32 %v852, %v853
  %v855 = vsel %vm139, %v598, 0.0
  %v856 = vsel %vm141, %v600, 0.0
  %v857 = vadd.f32 %v855, %v856
  %v858 = vrot.slane %v857, 4
  %v859 = vadd.f32 %v857, %v858
  %v860 = vrot.slane %v859, 2
  %v861 = vadd.f32 %v859, %v860
  %v862 = vrot.slane %v861, 1
  %v863 = vadd.f32 %v861, %v862
  %v864 = vsel %vm139, %v602, 0.0
  %v865 = vsel %vm141, %v604, 0.0
  %v866 = vadd.f32 %v864, %v865
  %v867 = vrot.slane %v866, 4
  %v868 = vadd.f32 %v866, %v867
  %v869 = vrot.slane %v868, 2
  %v870 = vadd.f32 %v868, %v869
  %v871 = vrot.slane %v870, 1
  %v872 = vadd.f32 %v870, %v871
  %v873 = vsel %vm139, %v606, 0.0
  %v874 = vsel %vm141, %v608, 0.0
  %v875 = vadd.f32 %v873, %v874
  %v876 = vrot.slane %v875, 4
  %v877 = vadd.f32 %v875, %v876
  %v878 = vrot.slane %v877, 2
  %v879 = vadd.f32 %v877, %v878
  %v880 = vrot.slane %v879, 1
  %v881 = vadd.f32 %v879, %v880
  %v882 = vsel %vm139, %v610, 0.0
  %v883 = vsel %vm141, %v612, 0.0
  %v884 = vadd.f32 %v882, %v883
  %v885 = vrot.slane %v884, 4
  %v886 = vadd.f32 %v884, %v885
  %v887 = vrot.slane %v886, 2
  %v888 = vadd.f32 %v886, %v887
  %v889 = vrot.slane %v888, 1
  %v890 = vadd.f32 %v888, %v889
  %v891 = vsel %vm139, %v614, 0.0
  %v892 = vsel %vm141, %v616, 0.0
  %v893 = vadd.f32 %v891, %v892
  %v894 = vrot.slane %v893, 4
  %v895 = vadd.f32 %v893, %v894
  %v896 = vrot.slane %v895, 2
  %v897 = vadd.f32 %v895, %v896
  %v898 = vrot.slane %v897, 1
  %v899 = vadd.f32 %v897, %v898
  %v900 = vsel %vm139, %v618, 0.0
  %v901 = vsel %vm141, %v620, 0.0
  %v902 = vadd.f32 %v900, %v901
  %v903 = vrot.slane %v902, 4
  %v904 = vadd.f32 %v902, %v903
  %v905 = vrot.slane %v904, 2
  %v906 = vadd.f32 %v904, %v905
  %v907 = vrot.slane %v906, 1
  %v908 = vadd.f32 %v906, %v907
  %v909 = vrcp.pop %v629
  %v910 = vrcp.pop %v638
  %v911 = vrcp.pop %v647
  %v912 = vrcp.pop %v656
  %v913 = vrcp.pop %v665
  %v914 = vrcp.pop %v674
  %v915 = vrcp.pop %v683
  %v916 = vrcp.pop %v692
  %v917 = vrcp.pop %v701
  %v918 = vrcp.pop %v710
  %v919 = vrcp.pop %v719
  %v920 = vrcp.pop %v728
  %v921 = vrcp.pop %v737
  %v922 = vrcp.pop %v746
  %v923 = vrcp.pop %v755
  %v924 = vrcp.pop %v764
  %v925 = vrcp.pop %v773
  %v926 = vrcp.pop %v782
  %v927 = vrcp.pop %v791
  %v928 = vrcp.pop %v800
  %v929 = vrcp.pop %v809
  %v930 = vrcp.pop %v818
  %v931 = vrcp.pop %v827
  %v932 = vrcp.pop %v836
  %v933 = vrcp.pop %v845
  %v934 = vrcp.pop %v854
  %v935 = vrcp.pop %v863
  %v936 = vrcp.pop %v872
  %v937 = vrcp.pop %v881
  %v938 = vrcp.pop %v890
  %v939 = vrcp.pop %v899
  %v940 = vrcp.pop %v908
  %v941 = vmul.f32 %v494, %v909
  %v942 = vmul.f32 %v496, %v909
  %v943 = vmul.f32 %v498, %v910
  %v944 = vmul.f32 %v500, %v910
  %v945 = vmul.f32 %v502, %v911
  %v946 = vmul.f32 %v504, %v911
  %v947 = vmul.f32 %v506, %v912
  %v948 = vmul.f32 %v508, %v912
  %v949 = vmul.f32 %v510, %v913
  %v950 = vmul.f32 %v512, %v913
  %v951 = vmul.f32 %v514, %v914
  %v952 = vmul.f32 %v516, %v914
  %v953 = vmul.f32 %v518, %v915
  %v954 = vmul.f32 %v520, %v915
  %v955 = vmul.f32 %v522, %v916
  %v956 = vmul.f32 %v524, %v916
  %v957 = vmul.f32 %v526, %v917
  %v958 = vmul.f32 %v528, %v917
  %v959 = vmul.f32 %v530, %v918
  %v960 = vmul.f32 %v532, %v918
  %v961 = vmul.f32 %v534, %v919
  %v962 = vmul.f32 %v536, %v919
  %v963 = vmul.f32 %v538, %v920
  %v964 = vmul.f32 %v540, %v920
  %v965 = vmul.f32 %v542, %v921
  %v966 = vmul.f32 %v544, %v921
  %v967 = vmul.f32 %v546, %v922
  %v968 = vmul.f32 %v548, %v922
  %v969 = vmul.f32 %v550, %v923
  %v970 = vmul.f32 %v552, %v923
  %v971 = vmul.f32 %v554, %v924
  %v972 = vmul.f32 %v556, %v924
  %v973 = vmul.f32 %v558, %v925
  %v974 = vmul.f32 %v560, %v925
  %v975 = vmul.f32 %v562, %v926
  %v976 = vmul.f32 %v564, %v926
  %v977 = vmul.f32 %v566, %v927
  %v978 = vmul.f32 %v568, %v927
  %v979 = vmul.f32 %v570, %v928
  %v980 = vmul.f32 %v572, %v928
  %v981 = vmul.f32 %v574, %v929
  %v982 = vmul.f32 %v576, %v929
  %v983 = vmul.f32 %v578, %v930
  %v984 = vmul.f32 %v580, %v930
  %v985 = vmul.f32 %v582, %v931
  %v986 = vmul.f32 %v584, %v931
  %v987 = vmul.f32 %v586, %v932
  %v988 = vmul.f32 %v588, %v932
  %v989 = vmul.f32 %v590, %v933
  %v990 = vmul.f32 %v592, %v933
  %v991 = vmul.f32 %v594, %v934
  %v992 = vmul.f32 %v596, %v934
  %v993 = vmul.f32 %v598, %v935
  %v994 = vmul.f32 %v600, %v935
  %v995 = vmul.f32 %v602, %v936
  %v996 = vmul.f32 %v604, %v936
  %v997 = vmul.f32 %v606, %v937
  %v998 = vmul.f32 %v608, %v937
  %v999 = vmul.f32 %v610, %v938
  %v1000 = vmul.f32 %v612, %v938
  %v1001 = vmul.f32 %v614, %v939
  %v1002 = vmul.f32 %v616, %v939
  %v1003 = vmul.f32 %v618, %v940
  %v1004 = vmul.f32 %v620, %v940
  %1006 = vset.pattern.permute.xlu0 0
  %1007 = vperm.xlu0 %1006, %v75
  %v1008 = vpop.permute.xlu0 %1007
  %1011 = vset.pattern.permute.xlu0 0
  %1012 = vperm.xlu0 %1011, %v76
  %v1013 = vpop.permute.xlu0 %1012
  %1016 = vset.pattern.permute.xlu0 0
  %1017 = vperm.xlu0 %1016, %v77
  %v1018 = vpop.permute.xlu0 %1017
  %1021 = vset.pattern.permute.xlu0 0
  %1022 = vperm.xlu0 %1021, %v78
  %v1023 = vpop.permute.xlu0 %1022
  %1026 = vset.pattern.permute.xlu0 0
  %1027 = vperm.xlu0 %1026, %v79
  %v1028 = vpop.permute.xlu0 %1027
  %1031 = vset.pattern.permute.xlu0 0
  %1032 = vperm.xlu0 %1031, %v80
  %v1033 = vpop.permute.xlu0 %1032
  %1036 = vset.pattern.permute.xlu0 0
  %1037 = vperm.xlu0 %1036, %v81
  %v1038 = vpop.permute.xlu0 %1037
  %1041 = vset.pattern.permute.xlu0 0
  %1042 = vperm.xlu0 %1041, %v82
  %v1043 = vpop.permute.xlu0 %1042
  %1046 = vset.pattern.permute.xlu0 0
  %1047 = vperm.xlu0 %1046, %v83
  %v1048 = vpop.permute.xlu0 %1047
  %1051 = vset.pattern.permute.xlu0 0
  %1052 = vperm.xlu0 %1051, %v84
  %v1053 = vpop.permute.xlu0 %1052
  %1056 = vset.pattern.permute.xlu0 0
  %1057 = vperm.xlu0 %1056, %v85
  %v1058 = vpop.permute.xlu0 %1057
  %1061 = vset.pattern.permute.xlu0 0
  %1062 = vperm.xlu0 %1061, %v86
  %v1063 = vpop.permute.xlu0 %1062
  %1066 = vset.pattern.permute.xlu0 0
  %1067 = vperm.xlu0 %1066, %v87
  %v1068 = vpop.permute.xlu0 %1067
  %1071 = vset.pattern.permute.xlu0 0
  %1072 = vperm.xlu0 %1071, %v88
  %v1073 = vpop.permute.xlu0 %1072
  %1076 = vset.pattern.permute.xlu0 0
  %1077 = vperm.xlu0 %1076, %v89
  %v1078 = vpop.permute.xlu0 %1077
  %1081 = vset.pattern.permute.xlu0 0
  %1082 = vperm.xlu0 %1081, %v90
  %v1083 = vpop.permute.xlu0 %1082
  %1086 = vset.pattern.permute.xlu0 0
  %1087 = vperm.xlu0 %1086, %v91
  %v1088 = vpop.permute.xlu0 %1087
  %1091 = vset.pattern.permute.xlu0 0
  %1092 = vperm.xlu0 %1091, %v92
  %v1093 = vpop.permute.xlu0 %1092
  %1096 = vset.pattern.permute.xlu0 0
  %1097 = vperm.xlu0 %1096, %v93
  %v1098 = vpop.permute.xlu0 %1097
  %1101 = vset.pattern.permute.xlu0 0
  %1102 = vperm.xlu0 %1101, %v94
  %v1103 = vpop.permute.xlu0 %1102
  %1106 = vset.pattern.permute.xlu0 0
  %1107 = vperm.xlu0 %1106, %v95
  %v1108 = vpop.permute.xlu0 %1107
  %1111 = vset.pattern.permute.xlu0 0
  %1112 = vperm.xlu0 %1111, %v96
  %v1113 = vpop.permute.xlu0 %1112
  %1116 = vset.pattern.permute.xlu0 0
  %1117 = vperm.xlu0 %1116, %v97
  %v1118 = vpop.permute.xlu0 %1117
  %1121 = vset.pattern.permute.xlu0 0
  %1122 = vperm.xlu0 %1121, %v98
  %v1123 = vpop.permute.xlu0 %1122
  %1126 = vset.pattern.permute.xlu0 0
  %1127 = vperm.xlu0 %1126, %v99
  %v1128 = vpop.permute.xlu0 %1127
  %1131 = vset.pattern.permute.xlu0 0
  %1132 = vperm.xlu0 %1131, %v100
  %v1133 = vpop.permute.xlu0 %1132
  %1136 = vset.pattern.permute.xlu0 0
  %1137 = vperm.xlu0 %1136, %v101
  %v1138 = vpop.permute.xlu0 %1137
  %1141 = vset.pattern.permute.xlu0 0
  %1142 = vperm.xlu0 %1141, %v102
  %v1143 = vpop.permute.xlu0 %1142
  %1146 = vset.pattern.permute.xlu0 0
  %1147 = vperm.xlu0 %1146, %v103
  %v1148 = vpop.permute.xlu0 %1147
  %1151 = vset.pattern.permute.xlu0 0
  %1152 = vperm.xlu0 %1151, %v104
  %v1153 = vpop.permute.xlu0 %1152
  %1156 = vset.pattern.permute.xlu0 0
  %1157 = vperm.xlu0 %1156, %v105
  %v1158 = vpop.permute.xlu0 %1157
  %1161 = vset.pattern.permute.xlu0 0
  %1162 = vperm.xlu0 %1161, %v106
  %v1163 = vpop.permute.xlu0 %1162
  %1166 = vset.pattern.permute.xlu0 0
  %1167 = vperm.xlu0 %1166, %v107
  %v1168 = vpop.permute.xlu0 %1167
  %1171 = vset.pattern.permute.xlu0 0
  %1172 = vperm.xlu0 %1171, %v108
  %v1173 = vpop.permute.xlu0 %1172
  %1176 = vset.pattern.permute.xlu0 0
  %1177 = vperm.xlu0 %1176, %v109
  %v1178 = vpop.permute.xlu0 %1177
  %1181 = vset.pattern.permute.xlu0 0
  %1182 = vperm.xlu0 %1181, %v110
  %v1183 = vpop.permute.xlu0 %1182
  %1186 = vset.pattern.permute.xlu0 0
  %1187 = vperm.xlu0 %1186, %v111
  %v1188 = vpop.permute.xlu0 %1187
  %1191 = vset.pattern.permute.xlu0 0
  %1192 = vperm.xlu0 %1191, %v112
  %v1193 = vpop.permute.xlu0 %1192
  %1196 = vset.pattern.permute.xlu0 0
  %1197 = vperm.xlu0 %1196, %v113
  %v1198 = vpop.permute.xlu0 %1197
  %1201 = vset.pattern.permute.xlu0 0
  %1202 = vperm.xlu0 %1201, %v114
  %v1203 = vpop.permute.xlu0 %1202
  %1206 = vset.pattern.permute.xlu0 0
  %1207 = vperm.xlu0 %1206, %v115
  %v1208 = vpop.permute.xlu0 %1207
  %1211 = vset.pattern.permute.xlu0 0
  %1212 = vperm.xlu0 %1211, %v116
  %v1213 = vpop.permute.xlu0 %1212
  %1216 = vset.pattern.permute.xlu0 0
  %1217 = vperm.xlu0 %1216, %v117
  %v1218 = vpop.permute.xlu0 %1217
  %1221 = vset.pattern.permute.xlu0 0
  %1222 = vperm.xlu0 %1221, %v118
  %v1223 = vpop.permute.xlu0 %1222
  %1226 = vset.pattern.permute.xlu0 0
  %1227 = vperm.xlu0 %1226, %v119
  %v1228 = vpop.permute.xlu0 %1227
  %1231 = vset.pattern.permute.xlu0 0
  %1232 = vperm.xlu0 %1231, %v120
  %v1233 = vpop.permute.xlu0 %1232
  %1236 = vset.pattern.permute.xlu0 0
  %1237 = vperm.xlu0 %1236, %v121
  %v1238 = vpop.permute.xlu0 %1237
  %1241 = vset.pattern.permute.xlu0 0
  %1242 = vperm.xlu0 %1241, %v122
  %v1243 = vpop.permute.xlu0 %1242
  %1246 = vset.pattern.permute.xlu0 0
  %1247 = vperm.xlu0 %1246, %v123
  %v1248 = vpop.permute.xlu0 %1247
  %1251 = vset.pattern.permute.xlu0 0
  %1252 = vperm.xlu0 %1251, %v124
  %v1253 = vpop.permute.xlu0 %1252
  %1256 = vset.pattern.permute.xlu0 0
  %1257 = vperm.xlu0 %1256, %v125
  %v1258 = vpop.permute.xlu0 %1257
  %1261 = vset.pattern.permute.xlu0 0
  %1262 = vperm.xlu0 %1261, %v126
  %v1263 = vpop.permute.xlu0 %1262
  %1266 = vset.pattern.permute.xlu0 0
  %1267 = vperm.xlu0 %1266, %v127
  %v1268 = vpop.permute.xlu0 %1267
  %1271 = vset.pattern.permute.xlu0 0
  %1272 = vperm.xlu0 %1271, %v128
  %v1273 = vpop.permute.xlu0 %1272
  %1276 = vset.pattern.permute.xlu0 0
  %1277 = vperm.xlu0 %1276, %v129
  %v1278 = vpop.permute.xlu0 %1277
  %1281 = vset.pattern.permute.xlu0 0
  %1282 = vperm.xlu0 %1281, %v130
  %v1283 = vpop.permute.xlu0 %1282
  %1286 = vset.pattern.permute.xlu0 0
  %1287 = vperm.xlu0 %1286, %v131
  %v1288 = vpop.permute.xlu0 %1287
  %1291 = vset.pattern.permute.xlu0 0
  %1292 = vperm.xlu0 %1291, %v132
  %v1293 = vpop.permute.xlu0 %1292
  %1296 = vset.pattern.permute.xlu0 0
  %1297 = vperm.xlu0 %1296, %v133
  %v1298 = vpop.permute.xlu0 %1297
  %1301 = vset.pattern.permute.xlu0 0
  %1302 = vperm.xlu0 %1301, %v134
  %v1303 = vpop.permute.xlu0 %1302
  %1306 = vset.pattern.permute.xlu0 0
  %1307 = vperm.xlu0 %1306, %v135
  %v1308 = vpop.permute.xlu0 %1307
  %1311 = vset.pattern.permute.xlu0 0
  %1312 = vperm.xlu0 %1311, %v136
  %v1313 = vpop.permute.xlu0 %1312
  %1316 = vset.pattern.permute.xlu0 0
  %1317 = vperm.xlu0 %1316, %v137
  %v1318 = vpop.permute.xlu0 %1317
  %1321 = vset.pattern.permute.xlu0 0
  %1322 = vperm.xlu0 %1321, %v138
  %v1323 = vpop.permute.xlu0 %1322
  %v1325 = vmul.f32 %v941, %v1008
  %v1326 = vmul.f32 %v942, %v1013
  %v1327 = vmul.f32 %v943, %v1018
  %v1328 = vmul.f32 %v944, %v1023
  %v1329 = vmul.f32 %v945, %v1028
  %v1330 = vmul.f32 %v946, %v1033
  %v1331 = vmul.f32 %v947, %v1038
  %v1332 = vmul.f32 %v948, %v1043
  %v1333 = vmul.f32 %v949, %v1048
  %v1334 = vmul.f32 %v950, %v1053
  %v1335 = vmul.f32 %v951, %v1058
  %v1336 = vmul.f32 %v952, %v1063
  %v1337 = vmul.f32 %v953, %v1068
  %v1338 = vmul.f32 %v954, %v1073
  %v1339 = vmul.f32 %v955, %v1078
  %v1340 = vmul.f32 %v956, %v1083
  %v1341 = vmul.f32 %v957, %v1088
  %v1342 = vmul.f32 %v958, %v1093
  %v1343 = vmul.f32 %v959, %v1098
  %v1344 = vmul.f32 %v960, %v1103
  %v1345 = vmul.f32 %v961, %v1108
  %v1346 = vmul.f32 %v962, %v1113
  %v1347 = vmul.f32 %v963, %v1118
  %v1348 = vmul.f32 %v964, %v1123
  %v1349 = vmul.f32 %v965, %v1128
  %v1350 = vmul.f32 %v966, %v1133
  %v1351 = vmul.f32 %v967, %v1138
  %v1352 = vmul.f32 %v968, %v1143
  %v1353 = vmul.f32 %v969, %v1148
  %v1354 = vmul.f32 %v970, %v1153
  %v1355 = vmul.f32 %v971, %v1158
  %v1356 = vmul.f32 %v972, %v1163
  %v1357 = vmul.f32 %v973, %v1168
  %v1358 = vmul.f32 %v974, %v1173
  %v1359 = vmul.f32 %v975, %v1178
  %v1360 = vmul.f32 %v976, %v1183
  %v1361 = vmul.f32 %v977, %v1188
  %v1362 = vmul.f32 %v978, %v1193
  %v1363 = vmul.f32 %v979, %v1198
  %v1364 = vmul.f32 %v980, %v1203
  %v1365 = vmul.f32 %v981, %v1208
  %v1366 = vmul.f32 %v982, %v1213
  %v1367 = vmul.f32 %v983, %v1218
  %v1368 = vmul.f32 %v984, %v1223
  %v1369 = vmul.f32 %v985, %v1228
  %v1370 = vmul.f32 %v986, %v1233
  %v1371 = vmul.f32 %v987, %v1238
  %v1372 = vmul.f32 %v988, %v1243
  %v1373 = vmul.f32 %v989, %v1248
  %v1374 = vmul.f32 %v990, %v1253
  %v1375 = vmul.f32 %v991, %v1258
  %v1376 = vmul.f32 %v992, %v1263
  %v1377 = vmul.f32 %v993, %v1268
  %v1378 = vmul.f32 %v994, %v1273
  %v1379 = vmul.f32 %v995, %v1278
  %v1380 = vmul.f32 %v996, %v1283
  %v1381 = vmul.f32 %v997, %v1288
  %v1382 = vmul.f32 %v998, %v1293
  %v1383 = vmul.f32 %v999, %v1298
  %v1384 = vmul.f32 %v1000, %v1303
  %v1385 = vmul.f32 %v1001, %v1308
  %v1386 = vmul.f32 %v1002, %v1313
  %v1387 = vmul.f32 %v1003, %v1318
  %v1388 = vmul.f32 %v1004, %v1323
  %v1389 = vsel %vm139, %v1325, 0.0
  %v1390 = vsel %vm141, %v1326, 0.0
  %v1391 = vadd.f32 %v1389, %v1390
  %v1392 = vrot.slane %v1391, 4
  %v1393 = vadd.f32 %v1391, %v1392
  %v1394 = vrot.slane %v1393, 2
  %v1395 = vadd.f32 %v1393, %v1394
  %v1396 = vrot.slane %v1395, 1
  %v1397 = vadd.f32 %v1395, %v1396
  %v1398 = vsel %vm139, %v1327, 0.0
  %v1399 = vsel %vm141, %v1328, 0.0
  %v1400 = vadd.f32 %v1398, %v1399
  %v1401 = vrot.slane %v1400, 4
  %v1402 = vadd.f32 %v1400, %v1401
  %v1403 = vrot.slane %v1402, 2
  %v1404 = vadd.f32 %v1402, %v1403
  %v1405 = vrot.slane %v1404, 1
  %v1406 = vadd.f32 %v1404, %v1405
  %v1407 = vsel %vm139, %v1329, 0.0
  %v1408 = vsel %vm141, %v1330, 0.0
  %v1409 = vadd.f32 %v1407, %v1408
  %v1410 = vrot.slane %v1409, 4
  %v1411 = vadd.f32 %v1409, %v1410
  %v1412 = vrot.slane %v1411, 2
  %v1413 = vadd.f32 %v1411, %v1412
  %v1414 = vrot.slane %v1413, 1
  %v1415 = vadd.f32 %v1413, %v1414
  %v1416 = vsel %vm139, %v1331, 0.0
  %v1417 = vsel %vm141, %v1332, 0.0
  %v1418 = vadd.f32 %v1416, %v1417
  %v1419 = vrot.slane %v1418, 4
  %v1420 = vadd.f32 %v1418, %v1419
  %v1421 = vrot.slane %v1420, 2
  %v1422 = vadd.f32 %v1420, %v1421
  %v1423 = vrot.slane %v1422, 1
  %v1424 = vadd.f32 %v1422, %v1423
  %v1425 = vsel %vm139, %v1333, 0.0
  %v1426 = vsel %vm141, %v1334, 0.0
  %v1427 = vadd.f32 %v1425, %v1426
  %v1428 = vrot.slane %v1427, 4
  %v1429 = vadd.f32 %v1427, %v1428
  %v1430 = vrot.slane %v1429, 2
  %v1431 = vadd.f32 %v1429, %v1430
  %v1432 = vrot.slane %v1431, 1
  %v1433 = vadd.f32 %v1431, %v1432
  %v1434 = vsel %vm139, %v1335, 0.0
  %v1435 = vsel %vm141, %v1336, 0.0
  %v1436 = vadd.f32 %v1434, %v1435
  %v1437 = vrot.slane %v1436, 4
  %v1438 = vadd.f32 %v1436, %v1437
  %v1439 = vrot.slane %v1438, 2
  %v1440 = vadd.f32 %v1438, %v1439
  %v1441 = vrot.slane %v1440, 1
  %v1442 = vadd.f32 %v1440, %v1441
  %v1443 = vsel %vm139, %v1337, 0.0
  %v1444 = vsel %vm141, %v1338, 0.0
  %v1445 = vadd.f32 %v1443, %v1444
  %v1446 = vrot.slane %v1445, 4
  %v1447 = vadd.f32 %v1445, %v1446
  %v1448 = vrot.slane %v1447, 2
  %v1449 = vadd.f32 %v1447, %v1448
  %v1450 = vrot.slane %v1449, 1
  %v1451 = vadd.f32 %v1449, %v1450
  %v1452 = vsel %vm139, %v1339, 0.0
  %v1453 = vsel %vm141, %v1340, 0.0
  %v1454 = vadd.f32 %v1452, %v1453
  %v1455 = vrot.slane %v1454, 4
  %v1456 = vadd.f32 %v1454, %v1455
  %v1457 = vrot.slane %v1456, 2
  %v1458 = vadd.f32 %v1456, %v1457
  %v1459 = vrot.slane %v1458, 1
  %v1460 = vadd.f32 %v1458, %v1459
  %v1461 = vsel %vm139, %v1341, 0.0
  %v1462 = vsel %vm141, %v1342, 0.0
  %v1463 = vadd.f32 %v1461, %v1462
  %v1464 = vrot.slane %v1463, 4
  %v1465 = vadd.f32 %v1463, %v1464
  %v1466 = vrot.slane %v1465, 2
  %v1467 = vadd.f32 %v1465, %v1466
  %v1468 = vrot.slane %v1467, 1
  %v1469 = vadd.f32 %v1467, %v1468
  %v1470 = vsel %vm139, %v1343, 0.0
  %v1471 = vsel %vm141, %v1344, 0.0
  %v1472 = vadd.f32 %v1470, %v1471
  %v1473 = vrot.slane %v1472, 4
  %v1474 = vadd.f32 %v1472, %v1473
  %v1475 = vrot.slane %v1474, 2
  %v1476 = vadd.f32 %v1474, %v1475
  %v1477 = vrot.slane %v1476, 1
  %v1478 = vadd.f32 %v1476, %v1477
  %v1479 = vsel %vm139, %v1345, 0.0
  %v1480 = vsel %vm141, %v1346, 0.0
  %v1481 = vadd.f32 %v1479, %v1480
  %v1482 = vrot.slane %v1481, 4
  %v1483 = vadd.f32 %v1481, %v1482
  %v1484 = vrot.slane %v1483, 2
  %v1485 = vadd.f32 %v1483, %v1484
  %v1486 = vrot.slane %v1485, 1
  %v1487 = vadd.f32 %v1485, %v1486
  %v1488 = vsel %vm139, %v1347, 0.0
  %v1489 = vsel %vm141, %v1348, 0.0
  %v1490 = vadd.f32 %v1488, %v1489
  %v1491 = vrot.slane %v1490, 4
  %v1492 = vadd.f32 %v1490, %v1491
  %v1493 = vrot.slane %v1492, 2
  %v1494 = vadd.f32 %v1492, %v1493
  %v1495 = vrot.slane %v1494, 1
  %v1496 = vadd.f32 %v1494, %v1495
  %v1497 = vsel %vm139, %v1349, 0.0
  %v1498 = vsel %vm141, %v1350, 0.0
  %v1499 = vadd.f32 %v1497, %v1498
  %v1500 = vrot.slane %v1499, 4
  %v1501 = vadd.f32 %v1499, %v1500
  %v1502 = vrot.slane %v1501, 2
  %v1503 = vadd.f32 %v1501, %v1502
  %v1504 = vrot.slane %v1503, 1
  %v1505 = vadd.f32 %v1503, %v1504
  %v1506 = vsel %vm139, %v1351, 0.0
  %v1507 = vsel %vm141, %v1352, 0.0
  %v1508 = vadd.f32 %v1506, %v1507
  %v1509 = vrot.slane %v1508, 4
  %v1510 = vadd.f32 %v1508, %v1509
  %v1511 = vrot.slane %v1510, 2
  %v1512 = vadd.f32 %v1510, %v1511
  %v1513 = vrot.slane %v1512, 1
  %v1514 = vadd.f32 %v1512, %v1513
  %v1515 = vsel %vm139, %v1353, 0.0
  %v1516 = vsel %vm141, %v1354, 0.0
  %v1517 = vadd.f32 %v1515, %v1516
  %v1518 = vrot.slane %v1517, 4
  %v1519 = vadd.f32 %v1517, %v1518
  %v1520 = vrot.slane %v1519, 2
  %v1521 = vadd.f32 %v1519, %v1520
  %v1522 = vrot.slane %v1521, 1
  %v1523 = vadd.f32 %v1521, %v1522
  %v1524 = vsel %vm139, %v1355, 0.0
  %v1525 = vsel %vm141, %v1356, 0.0
  %v1526 = vadd.f32 %v1524, %v1525
  %v1527 = vrot.slane %v1526, 4
  %v1528 = vadd.f32 %v1526, %v1527
  %v1529 = vrot.slane %v1528, 2
  %v1530 = vadd.f32 %v1528, %v1529
  %v1531 = vrot.slane %v1530, 1
  %v1532 = vadd.f32 %v1530, %v1531
  %v1533 = vsel %vm139, %v1357, 0.0
  %v1534 = vsel %vm141, %v1358, 0.0
  %v1535 = vadd.f32 %v1533, %v1534
  %v1536 = vrot.slane %v1535, 4
  %v1537 = vadd.f32 %v1535, %v1536
  %v1538 = vrot.slane %v1537, 2
  %v1539 = vadd.f32 %v1537, %v1538
  %v1540 = vrot.slane %v1539, 1
  %v1541 = vadd.f32 %v1539, %v1540
  %v1542 = vsel %vm139, %v1359, 0.0
  %v1543 = vsel %vm141, %v1360, 0.0
  %v1544 = vadd.f32 %v1542, %v1543
  %v1545 = vrot.slane %v1544, 4
  %v1546 = vadd.f32 %v1544, %v1545
  %v1547 = vrot.slane %v1546, 2
  %v1548 = vadd.f32 %v1546, %v1547
  %v1549 = vrot.slane %v1548, 1
  %v1550 = vadd.f32 %v1548, %v1549
  %v1551 = vsel %vm139, %v1361, 0.0
  %v1552 = vsel %vm141, %v1362, 0.0
  %v1553 = vadd.f32 %v1551, %v1552
  %v1554 = vrot.slane %v1553, 4
  %v1555 = vadd.f32 %v1553, %v1554
  %v1556 = vrot.slane %v1555, 2
  %v1557 = vadd.f32 %v1555, %v1556
  %v1558 = vrot.slane %v1557, 1
  %v1559 = vadd.f32 %v1557, %v1558
  %v1560 = vsel %vm139, %v1363, 0.0
  %v1561 = vsel %vm141, %v1364, 0.0
  %v1562 = vadd.f32 %v1560, %v1561
  %v1563 = vrot.slane %v1562, 4
  %v1564 = vadd.f32 %v1562, %v1563
  %v1565 = vrot.slane %v1564, 2
  %v1566 = vadd.f32 %v1564, %v1565
  %v1567 = vrot.slane %v1566, 1
  %v1568 = vadd.f32 %v1566, %v1567
  %v1569 = vsel %vm139, %v1365, 0.0
  %v1570 = vsel %vm141, %v1366, 0.0
  %v1571 = vadd.f32 %v1569, %v1570
  %v1572 = vrot.slane %v1571, 4
  %v1573 = vadd.f32 %v1571, %v1572
  %v1574 = vrot.slane %v1573, 2
  %v1575 = vadd.f32 %v1573, %v1574
  %v1576 = vrot.slane %v1575, 1
  %v1577 = vadd.f32 %v1575, %v1576
  %v1578 = vsel %vm139, %v1367, 0.0
  %v1579 = vsel %vm141, %v1368, 0.0
  %v1580 = vadd.f32 %v1578, %v1579
  %v1581 = vrot.slane %v1580, 4
  %v1582 = vadd.f32 %v1580, %v1581
  %v1583 = vrot.slane %v1582, 2
  %v1584 = vadd.f32 %v1582, %v1583
  %v1585 = vrot.slane %v1584, 1
  %v1586 = vadd.f32 %v1584, %v1585
  %v1587 = vsel %vm139, %v1369, 0.0
  %v1588 = vsel %vm141, %v1370, 0.0
  %v1589 = vadd.f32 %v1587, %v1588
  %v1590 = vrot.slane %v1589, 4
  %v1591 = vadd.f32 %v1589, %v1590
  %v1592 = vrot.slane %v1591, 2
  %v1593 = vadd.f32 %v1591, %v1592
  %v1594 = vrot.slane %v1593, 1
  %v1595 = vadd.f32 %v1593, %v1594
  %v1596 = vsel %vm139, %v1371, 0.0
  %v1597 = vsel %vm141, %v1372, 0.0
  %v1598 = vadd.f32 %v1596, %v1597
  %v1599 = vrot.slane %v1598, 4
  %v1600 = vadd.f32 %v1598, %v1599
  %v1601 = vrot.slane %v1600, 2
  %v1602 = vadd.f32 %v1600, %v1601
  %v1603 = vrot.slane %v1602, 1
  %v1604 = vadd.f32 %v1602, %v1603
  %v1605 = vsel %vm139, %v1373, 0.0
  %v1606 = vsel %vm141, %v1374, 0.0
  %v1607 = vadd.f32 %v1605, %v1606
  %v1608 = vrot.slane %v1607, 4
  %v1609 = vadd.f32 %v1607, %v1608
  %v1610 = vrot.slane %v1609, 2
  %v1611 = vadd.f32 %v1609, %v1610
  %v1612 = vrot.slane %v1611, 1
  %v1613 = vadd.f32 %v1611, %v1612
  %v1614 = vsel %vm139, %v1375, 0.0
  %v1615 = vsel %vm141, %v1376, 0.0
  %v1616 = vadd.f32 %v1614, %v1615
  %v1617 = vrot.slane %v1616, 4
  %v1618 = vadd.f32 %v1616, %v1617
  %v1619 = vrot.slane %v1618, 2
  %v1620 = vadd.f32 %v1618, %v1619
  %v1621 = vrot.slane %v1620, 1
  %v1622 = vadd.f32 %v1620, %v1621
  %v1623 = vsel %vm139, %v1377, 0.0
  %v1624 = vsel %vm141, %v1378, 0.0
  %v1625 = vadd.f32 %v1623, %v1624
  %v1626 = vrot.slane %v1625, 4
  %v1627 = vadd.f32 %v1625, %v1626
  %v1628 = vrot.slane %v1627, 2
  %v1629 = vadd.f32 %v1627, %v1628
  %v1630 = vrot.slane %v1629, 1
  %v1631 = vadd.f32 %v1629, %v1630
  %v1632 = vsel %vm139, %v1379, 0.0
  %v1633 = vsel %vm141, %v1380, 0.0
  %v1634 = vadd.f32 %v1632, %v1633
  %v1635 = vrot.slane %v1634, 4
  %v1636 = vadd.f32 %v1634, %v1635
  %v1637 = vrot.slane %v1636, 2
  %v1638 = vadd.f32 %v1636, %v1637
  %v1639 = vrot.slane %v1638, 1
  %v1640 = vadd.f32 %v1638, %v1639
  %v1641 = vsel %vm139, %v1381, 0.0
  %v1642 = vsel %vm141, %v1382, 0.0
  %v1643 = vadd.f32 %v1641, %v1642
  %v1644 = vrot.slane %v1643, 4
  %v1645 = vadd.f32 %v1643, %v1644
  %v1646 = vrot.slane %v1645, 2
  %v1647 = vadd.f32 %v1645, %v1646
  %v1648 = vrot.slane %v1647, 1
  %v1649 = vadd.f32 %v1647, %v1648
  %v1650 = vsel %vm139, %v1383, 0.0
  %v1651 = vsel %vm141, %v1384, 0.0
  %v1652 = vadd.f32 %v1650, %v1651
  %v1653 = vrot.slane %v1652, 4
  %v1654 = vadd.f32 %v1652, %v1653
  %v1655 = vrot.slane %v1654, 2
  %v1656 = vadd.f32 %v1654, %v1655
  %v1657 = vrot.slane %v1656, 1
  %v1658 = vadd.f32 %v1656, %v1657
  %v1659 = vsel %vm139, %v1385, 0.0
  %v1660 = vsel %vm141, %v1386, 0.0
  %v1661 = vadd.f32 %v1659, %v1660
  %v1662 = vrot.slane %v1661, 4
  %v1663 = vadd.f32 %v1661, %v1662
  %v1664 = vrot.slane %v1663, 2
  %v1665 = vadd.f32 %v1663, %v1664
  %v1666 = vrot.slane %v1665, 1
  %v1667 = vadd.f32 %v1665, %v1666
  %v1668 = vsel %vm139, %v1387, 0.0
  %v1669 = vsel %vm141, %v1388, 0.0
  %v1670 = vadd.f32 %v1668, %v1669
  %v1671 = vrot.slane %v1670, 4
  %v1672 = vadd.f32 %v1670, %v1671
  %v1673 = vrot.slane %v1672, 2
  %v1674 = vadd.f32 %v1672, %v1673
  %v1675 = vrot.slane %v1674, 1
  %v1676 = vadd.f32 %v1674, %v1675
  %vm1709 = vcmask 1041409
  %v1710 = vsel %vm1709, %v1406, %v1397
  %vm1711 = vcmask 1042434
  %v1712 = vsel %vm1711, %v1415, %v1710
  %vm1713 = vcmask 1043459
  %v1714 = vsel %vm1713, %v1424, %v1712
  %vm1715 = vcmask 1044484
  %v1716 = vsel %vm1715, %v1433, %v1714
  %vm1717 = vcmask 1045509
  %v1718 = vsel %vm1717, %v1442, %v1716
  %vm1719 = vcmask 1046534
  %v1720 = vsel %vm1719, %v1451, %v1718
  %vm1721 = vcmask 1047559
  %v1722 = vsel %vm1721, %v1460, %v1720
  %v1723 = vsel %vm1709, %v1478, %v1469
  %v1724 = vsel %vm1711, %v1487, %v1723
  %v1725 = vsel %vm1713, %v1496, %v1724
  %v1726 = vsel %vm1715, %v1505, %v1725
  %v1727 = vsel %vm1717, %v1514, %v1726
  %v1728 = vsel %vm1719, %v1523, %v1727
  %v1729 = vsel %vm1721, %v1532, %v1728
  %v1730 = vsel %vm1709, %v1550, %v1541
  %v1731 = vsel %vm1711, %v1559, %v1730
  %v1732 = vsel %vm1713, %v1568, %v1731
  %v1733 = vsel %vm1715, %v1577, %v1732
  %v1734 = vsel %vm1717, %v1586, %v1733
  %v1735 = vsel %vm1719, %v1595, %v1734
  %v1736 = vsel %vm1721, %v1604, %v1735
  %v1737 = vsel %vm1709, %v1622, %v1613
  %v1738 = vsel %vm1711, %v1631, %v1737
  %v1739 = vsel %vm1713, %v1640, %v1738
  %v1740 = vsel %vm1715, %v1649, %v1739
  %v1741 = vsel %vm1717, %v1658, %v1740
  %v1742 = vsel %vm1719, %v1667, %v1741
  %v1743 = vsel %vm1721, %v1676, %v1742
  %1748 = vst.msk [vmem:[%s2] sm:$0xff] %vm139, %v1722
  %1749 = vst.msk [vmem:[%s2 + $0x8] sm:$0xff] %vm139, %v1729
  %1750 = vst.msk [vmem:[%s2 + $0x10] sm:$0xff] %vm139, %v1736
  %1751 = vst.msk [vmem:[%s2 + $0x18] sm:$0xff] %vm139, %v1743
  %1752 = vset.pattern.permute.xlu0 1
  %1753 = vperm.xlu0 %1752, %v75
  %v1754 = vpop.permute.xlu0 %1753
  %1756 = vset.pattern.permute.xlu0 1
  %1757 = vperm.xlu0 %1756, %v76
  %v1758 = vpop.permute.xlu0 %1757
  %1760 = vset.pattern.permute.xlu0 1
  %1761 = vperm.xlu0 %1760, %v77
  %v1762 = vpop.permute.xlu0 %1761
  %1764 = vset.pattern.permute.xlu0 1
  %1765 = vperm.xlu0 %1764, %v78
  %v1766 = vpop.permute.xlu0 %1765
  %1768 = vset.pattern.permute.xlu0 1
  %1769 = vperm.xlu0 %1768, %v79
  %v1770 = vpop.permute.xlu0 %1769
  %1772 = vset.pattern.permute.xlu0 1
  %1773 = vperm.xlu0 %1772, %v80
  %v1774 = vpop.permute.xlu0 %1773
  %1776 = vset.pattern.permute.xlu0 1
  %1777 = vperm.xlu0 %1776, %v81
  %v1778 = vpop.permute.xlu0 %1777
  %1780 = vset.pattern.permute.xlu0 1
  %1781 = vperm.xlu0 %1780, %v82
  %v1782 = vpop.permute.xlu0 %1781
  %1784 = vset.pattern.permute.xlu0 1
  %1785 = vperm.xlu0 %1784, %v83
  %v1786 = vpop.permute.xlu0 %1785
  %1788 = vset.pattern.permute.xlu0 1
  %1789 = vperm.xlu0 %1788, %v84
  %v1790 = vpop.permute.xlu0 %1789
  %1792 = vset.pattern.permute.xlu0 1
  %1793 = vperm.xlu0 %1792, %v85
  %v1794 = vpop.permute.xlu0 %1793
  %1796 = vset.pattern.permute.xlu0 1
  %1797 = vperm.xlu0 %1796, %v86
  %v1798 = vpop.permute.xlu0 %1797
  %1800 = vset.pattern.permute.xlu0 1
  %1801 = vperm.xlu0 %1800, %v87
  %v1802 = vpop.permute.xlu0 %1801
  %1804 = vset.pattern.permute.xlu0 1
  %1805 = vperm.xlu0 %1804, %v88
  %v1806 = vpop.permute.xlu0 %1805
  %1808 = vset.pattern.permute.xlu0 1
  %1809 = vperm.xlu0 %1808, %v89
  %v1810 = vpop.permute.xlu0 %1809
  %1812 = vset.pattern.permute.xlu0 1
  %1813 = vperm.xlu0 %1812, %v90
  %v1814 = vpop.permute.xlu0 %1813
  %1816 = vset.pattern.permute.xlu0 1
  %1817 = vperm.xlu0 %1816, %v91
  %v1818 = vpop.permute.xlu0 %1817
  %1820 = vset.pattern.permute.xlu0 1
  %1821 = vperm.xlu0 %1820, %v92
  %v1822 = vpop.permute.xlu0 %1821
  %1824 = vset.pattern.permute.xlu0 1
  %1825 = vperm.xlu0 %1824, %v93
  %v1826 = vpop.permute.xlu0 %1825
  %1828 = vset.pattern.permute.xlu0 1
  %1829 = vperm.xlu0 %1828, %v94
  %v1830 = vpop.permute.xlu0 %1829
  %1832 = vset.pattern.permute.xlu0 1
  %1833 = vperm.xlu0 %1832, %v95
  %v1834 = vpop.permute.xlu0 %1833
  %1836 = vset.pattern.permute.xlu0 1
  %1837 = vperm.xlu0 %1836, %v96
  %v1838 = vpop.permute.xlu0 %1837
  %1840 = vset.pattern.permute.xlu0 1
  %1841 = vperm.xlu0 %1840, %v97
  %v1842 = vpop.permute.xlu0 %1841
  %1844 = vset.pattern.permute.xlu0 1
  %1845 = vperm.xlu0 %1844, %v98
  %v1846 = vpop.permute.xlu0 %1845
  %1848 = vset.pattern.permute.xlu0 1
  %1849 = vperm.xlu0 %1848, %v99
  %v1850 = vpop.permute.xlu0 %1849
  %1852 = vset.pattern.permute.xlu0 1
  %1853 = vperm.xlu0 %1852, %v100
  %v1854 = vpop.permute.xlu0 %1853
  %1856 = vset.pattern.permute.xlu0 1
  %1857 = vperm.xlu0 %1856, %v101
  %v1858 = vpop.permute.xlu0 %1857
  %1860 = vset.pattern.permute.xlu0 1
  %1861 = vperm.xlu0 %1860, %v102
  %v1862 = vpop.permute.xlu0 %1861
  %1864 = vset.pattern.permute.xlu0 1
  %1865 = vperm.xlu0 %1864, %v103
  %v1866 = vpop.permute.xlu0 %1865
  %1868 = vset.pattern.permute.xlu0 1
  %1869 = vperm.xlu0 %1868, %v104
  %v1870 = vpop.permute.xlu0 %1869
  %1872 = vset.pattern.permute.xlu0 1
  %1873 = vperm.xlu0 %1872, %v105
  %v1874 = vpop.permute.xlu0 %1873
  %1876 = vset.pattern.permute.xlu0 1
  %1877 = vperm.xlu0 %1876, %v106
  %v1878 = vpop.permute.xlu0 %1877
  %1880 = vset.pattern.permute.xlu0 1
  %1881 = vperm.xlu0 %1880, %v107
  %v1882 = vpop.permute.xlu0 %1881
  %1884 = vset.pattern.permute.xlu0 1
  %1885 = vperm.xlu0 %1884, %v108
  %v1886 = vpop.permute.xlu0 %1885
  %1888 = vset.pattern.permute.xlu0 1
  %1889 = vperm.xlu0 %1888, %v109
  %v1890 = vpop.permute.xlu0 %1889
  %1892 = vset.pattern.permute.xlu0 1
  %1893 = vperm.xlu0 %1892, %v110
  %v1894 = vpop.permute.xlu0 %1893
  %1896 = vset.pattern.permute.xlu0 1
  %1897 = vperm.xlu0 %1896, %v111
  %v1898 = vpop.permute.xlu0 %1897
  %1900 = vset.pattern.permute.xlu0 1
  %1901 = vperm.xlu0 %1900, %v112
  %v1902 = vpop.permute.xlu0 %1901
  %1904 = vset.pattern.permute.xlu0 1
  %1905 = vperm.xlu0 %1904, %v113
  %v1906 = vpop.permute.xlu0 %1905
  %1908 = vset.pattern.permute.xlu0 1
  %1909 = vperm.xlu0 %1908, %v114
  %v1910 = vpop.permute.xlu0 %1909
  %1912 = vset.pattern.permute.xlu0 1
  %1913 = vperm.xlu0 %1912, %v115
  %v1914 = vpop.permute.xlu0 %1913
  %1916 = vset.pattern.permute.xlu0 1
  %1917 = vperm.xlu0 %1916, %v116
  %v1918 = vpop.permute.xlu0 %1917
  %1920 = vset.pattern.permute.xlu0 1
  %1921 = vperm.xlu0 %1920, %v117
  %v1922 = vpop.permute.xlu0 %1921
  %1924 = vset.pattern.permute.xlu0 1
  %1925 = vperm.xlu0 %1924, %v118
  %v1926 = vpop.permute.xlu0 %1925
  %1928 = vset.pattern.permute.xlu0 1
  %1929 = vperm.xlu0 %1928, %v119
  %v1930 = vpop.permute.xlu0 %1929
  %1932 = vset.pattern.permute.xlu0 1
  %1933 = vperm.xlu0 %1932, %v120
  %v1934 = vpop.permute.xlu0 %1933
  %1936 = vset.pattern.permute.xlu0 1
  %1937 = vperm.xlu0 %1936, %v121
  %v1938 = vpop.permute.xlu0 %1937
  %1940 = vset.pattern.permute.xlu0 1
  %1941 = vperm.xlu0 %1940, %v122
  %v1942 = vpop.permute.xlu0 %1941
  %1944 = vset.pattern.permute.xlu0 1
  %1945 = vperm.xlu0 %1944, %v123
  %v1946 = vpop.permute.xlu0 %1945
  %1948 = vset.pattern.permute.xlu0 1
  %1949 = vperm.xlu0 %1948, %v124
  %v1950 = vpop.permute.xlu0 %1949
  %1952 = vset.pattern.permute.xlu0 1
  %1953 = vperm.xlu0 %1952, %v125
  %v1954 = vpop.permute.xlu0 %1953
  %1956 = vset.pattern.permute.xlu0 1
  %1957 = vperm.xlu0 %1956, %v126
  %v1958 = vpop.permute.xlu0 %1957
  %1960 = vset.pattern.permute.xlu0 1
  %1961 = vperm.xlu0 %1960, %v127
  %v1962 = vpop.permute.xlu0 %1961
  %1964 = vset.pattern.permute.xlu0 1
  %1965 = vperm.xlu0 %1964, %v128
  %v1966 = vpop.permute.xlu0 %1965
  %1968 = vset.pattern.permute.xlu0 1
  %1969 = vperm.xlu0 %1968, %v129
  %v1970 = vpop.permute.xlu0 %1969
  %1972 = vset.pattern.permute.xlu0 1
  %1973 = vperm.xlu0 %1972, %v130
  %v1974 = vpop.permute.xlu0 %1973
  %1976 = vset.pattern.permute.xlu0 1
  %1977 = vperm.xlu0 %1976, %v131
  %v1978 = vpop.permute.xlu0 %1977
  %1980 = vset.pattern.permute.xlu0 1
  %1981 = vperm.xlu0 %1980, %v132
  %v1982 = vpop.permute.xlu0 %1981
  %1984 = vset.pattern.permute.xlu0 1
  %1985 = vperm.xlu0 %1984, %v133
  %v1986 = vpop.permute.xlu0 %1985
  %1988 = vset.pattern.permute.xlu0 1
  %1989 = vperm.xlu0 %1988, %v134
  %v1990 = vpop.permute.xlu0 %1989
  %1992 = vset.pattern.permute.xlu0 1
  %1993 = vperm.xlu0 %1992, %v135
  %v1994 = vpop.permute.xlu0 %1993
  %1996 = vset.pattern.permute.xlu0 1
  %1997 = vperm.xlu0 %1996, %v136
  %v1998 = vpop.permute.xlu0 %1997
  %2000 = vset.pattern.permute.xlu0 1
  %2001 = vperm.xlu0 %2000, %v137
  %v2002 = vpop.permute.xlu0 %2001
  %2004 = vset.pattern.permute.xlu0 1
  %2005 = vperm.xlu0 %2004, %v138
  %v2006 = vpop.permute.xlu0 %2005
  %v2008 = vmul.f32 %v941, %v1754
  %v2009 = vmul.f32 %v942, %v1758
  %v2010 = vmul.f32 %v943, %v1762
  %v2011 = vmul.f32 %v944, %v1766
  %v2012 = vmul.f32 %v945, %v1770
  %v2013 = vmul.f32 %v946, %v1774
  %v2014 = vmul.f32 %v947, %v1778
  %v2015 = vmul.f32 %v948, %v1782
  %v2016 = vmul.f32 %v949, %v1786
  %v2017 = vmul.f32 %v950, %v1790
  %v2018 = vmul.f32 %v951, %v1794
  %v2019 = vmul.f32 %v952, %v1798
  %v2020 = vmul.f32 %v953, %v1802
  %v2021 = vmul.f32 %v954, %v1806
  %v2022 = vmul.f32 %v955, %v1810
  %v2023 = vmul.f32 %v956, %v1814
  %v2024 = vmul.f32 %v957, %v1818
  %v2025 = vmul.f32 %v958, %v1822
  %v2026 = vmul.f32 %v959, %v1826
  %v2027 = vmul.f32 %v960, %v1830
  %v2028 = vmul.f32 %v961, %v1834
  %v2029 = vmul.f32 %v962, %v1838
  %v2030 = vmul.f32 %v963, %v1842
  %v2031 = vmul.f32 %v964, %v1846
  %v2032 = vmul.f32 %v965, %v1850
  %v2033 = vmul.f32 %v966, %v1854
  %v2034 = vmul.f32 %v967, %v1858
  %v2035 = vmul.f32 %v968, %v1862
  %v2036 = vmul.f32 %v969, %v1866
  %v2037 = vmul.f32 %v970, %v1870
  %v2038 = vmul.f32 %v971, %v1874
  %v2039 = vmul.f32 %v972, %v1878
  %v2040 = vmul.f32 %v973, %v1882
  %v2041 = vmul.f32 %v974, %v1886
  %v2042 = vmul.f32 %v975, %v1890
  %v2043 = vmul.f32 %v976, %v1894
  %v2044 = vmul.f32 %v977, %v1898
  %v2045 = vmul.f32 %v978, %v1902
  %v2046 = vmul.f32 %v979, %v1906
  %v2047 = vmul.f32 %v980, %v1910
  %v2048 = vmul.f32 %v981, %v1914
  %v2049 = vmul.f32 %v982, %v1918
  %v2050 = vmul.f32 %v983, %v1922
  %v2051 = vmul.f32 %v984, %v1926
  %v2052 = vmul.f32 %v985, %v1930
  %v2053 = vmul.f32 %v986, %v1934
  %v2054 = vmul.f32 %v987, %v1938
  %v2055 = vmul.f32 %v988, %v1942
  %v2056 = vmul.f32 %v989, %v1946
  %v2057 = vmul.f32 %v990, %v1950
  %v2058 = vmul.f32 %v991, %v1954
  %v2059 = vmul.f32 %v992, %v1958
  %v2060 = vmul.f32 %v993, %v1962
  %v2061 = vmul.f32 %v994, %v1966
  %v2062 = vmul.f32 %v995, %v1970
  %v2063 = vmul.f32 %v996, %v1974
  %v2064 = vmul.f32 %v997, %v1978
  %v2065 = vmul.f32 %v998, %v1982
  %v2066 = vmul.f32 %v999, %v1986
  %v2067 = vmul.f32 %v1000, %v1990
  %v2068 = vmul.f32 %v1001, %v1994
  %v2069 = vmul.f32 %v1002, %v1998
  %v2070 = vmul.f32 %v1003, %v2002
  %v2071 = vmul.f32 %v1004, %v2006
  %v2072 = vsel %vm139, %v2008, 0.0
  %v2073 = vsel %vm141, %v2009, 0.0
  %v2074 = vadd.f32 %v2072, %v2073
  %v2075 = vrot.slane %v2074, 4
  %v2076 = vadd.f32 %v2074, %v2075
  %v2077 = vrot.slane %v2076, 2
  %v2078 = vadd.f32 %v2076, %v2077
  %v2079 = vrot.slane %v2078, 1
  %v2080 = vadd.f32 %v2078, %v2079
  %v2081 = vsel %vm139, %v2010, 0.0
  %v2082 = vsel %vm141, %v2011, 0.0
  %v2083 = vadd.f32 %v2081, %v2082
  %v2084 = vrot.slane %v2083, 4
  %v2085 = vadd.f32 %v2083, %v2084
  %v2086 = vrot.slane %v2085, 2
  %v2087 = vadd.f32 %v2085, %v2086
  %v2088 = vrot.slane %v2087, 1
  %v2089 = vadd.f32 %v2087, %v2088
  %v2090 = vsel %vm139, %v2012, 0.0
  %v2091 = vsel %vm141, %v2013, 0.0
  %v2092 = vadd.f32 %v2090, %v2091
  %v2093 = vrot.slane %v2092, 4
  %v2094 = vadd.f32 %v2092, %v2093
  %v2095 = vrot.slane %v2094, 2
  %v2096 = vadd.f32 %v2094, %v2095
  %v2097 = vrot.slane %v2096, 1
  %v2098 = vadd.f32 %v2096, %v2097
  %v2099 = vsel %vm139, %v2014, 0.0
  %v2100 = vsel %vm141, %v2015, 0.0
  %v2101 = vadd.f32 %v2099, %v2100
  %v2102 = vrot.slane %v2101, 4
  %v2103 = vadd.f32 %v2101, %v2102
  %v2104 = vrot.slane %v2103, 2
  %v2105 = vadd.f32 %v2103, %v2104
  %v2106 = vrot.slane %v2105, 1
  %v2107 = vadd.f32 %v2105, %v2106
  %v2108 = vsel %vm139, %v2016, 0.0
  %v2109 = vsel %vm141, %v2017, 0.0
  %v2110 = vadd.f32 %v2108, %v2109
  %v2111 = vrot.slane %v2110, 4
  %v2112 = vadd.f32 %v2110, %v2111
  %v2113 = vrot.slane %v2112, 2
  %v2114 = vadd.f32 %v2112, %v2113
  %v2115 = vrot.slane %v2114, 1
  %v2116 = vadd.f32 %v2114, %v2115
  %v2117 = vsel %vm139, %v2018, 0.0
  %v2118 = vsel %vm141, %v2019, 0.0
  %v2119 = vadd.f32 %v2117, %v2118
  %v2120 = vrot.slane %v2119, 4
  %v2121 = vadd.f32 %v2119, %v2120
  %v2122 = vrot.slane %v2121, 2
  %v2123 = vadd.f32 %v2121, %v2122
  %v2124 = vrot.slane %v2123, 1
  %v2125 = vadd.f32 %v2123, %v2124
  %v2126 = vsel %vm139, %v2020, 0.0
  %v2127 = vsel %vm141, %v2021, 0.0
  %v2128 = vadd.f32 %v2126, %v2127
  %v2129 = vrot.slane %v2128, 4
  %v2130 = vadd.f32 %v2128, %v2129
  %v2131 = vrot.slane %v2130, 2
  %v2132 = vadd.f32 %v2130, %v2131
  %v2133 = vrot.slane %v2132, 1
  %v2134 = vadd.f32 %v2132, %v2133
  %v2135 = vsel %vm139, %v2022, 0.0
  %v2136 = vsel %vm141, %v2023, 0.0
  %v2137 = vadd.f32 %v2135, %v2136
  %v2138 = vrot.slane %v2137, 4
  %v2139 = vadd.f32 %v2137, %v2138
  %v2140 = vrot.slane %v2139, 2
  %v2141 = vadd.f32 %v2139, %v2140
  %v2142 = vrot.slane %v2141, 1
  %v2143 = vadd.f32 %v2141, %v2142
  %v2144 = vsel %vm139, %v2024, 0.0
  %v2145 = vsel %vm141, %v2025, 0.0
  %v2146 = vadd.f32 %v2144, %v2145
  %v2147 = vrot.slane %v2146, 4
  %v2148 = vadd.f32 %v2146, %v2147
  %v2149 = vrot.slane %v2148, 2
  %v2150 = vadd.f32 %v2148, %v2149
  %v2151 = vrot.slane %v2150, 1
  %v2152 = vadd.f32 %v2150, %v2151
  %v2153 = vsel %vm139, %v2026, 0.0
  %v2154 = vsel %vm141, %v2027, 0.0
  %v2155 = vadd.f32 %v2153, %v2154
  %v2156 = vrot.slane %v2155, 4
  %v2157 = vadd.f32 %v2155, %v2156
  %v2158 = vrot.slane %v2157, 2
  %v2159 = vadd.f32 %v2157, %v2158
  %v2160 = vrot.slane %v2159, 1
  %v2161 = vadd.f32 %v2159, %v2160
  %v2162 = vsel %vm139, %v2028, 0.0
  %v2163 = vsel %vm141, %v2029, 0.0
  %v2164 = vadd.f32 %v2162, %v2163
  %v2165 = vrot.slane %v2164, 4
  %v2166 = vadd.f32 %v2164, %v2165
  %v2167 = vrot.slane %v2166, 2
  %v2168 = vadd.f32 %v2166, %v2167
  %v2169 = vrot.slane %v2168, 1
  %v2170 = vadd.f32 %v2168, %v2169
  %v2171 = vsel %vm139, %v2030, 0.0
  %v2172 = vsel %vm141, %v2031, 0.0
  %v2173 = vadd.f32 %v2171, %v2172
  %v2174 = vrot.slane %v2173, 4
  %v2175 = vadd.f32 %v2173, %v2174
  %v2176 = vrot.slane %v2175, 2
  %v2177 = vadd.f32 %v2175, %v2176
  %v2178 = vrot.slane %v2177, 1
  %v2179 = vadd.f32 %v2177, %v2178
  %v2180 = vsel %vm139, %v2032, 0.0
  %v2181 = vsel %vm141, %v2033, 0.0
  %v2182 = vadd.f32 %v2180, %v2181
  %v2183 = vrot.slane %v2182, 4
  %v2184 = vadd.f32 %v2182, %v2183
  %v2185 = vrot.slane %v2184, 2
  %v2186 = vadd.f32 %v2184, %v2185
  %v2187 = vrot.slane %v2186, 1
  %v2188 = vadd.f32 %v2186, %v2187
  %v2189 = vsel %vm139, %v2034, 0.0
  %v2190 = vsel %vm141, %v2035, 0.0
  %v2191 = vadd.f32 %v2189, %v2190
  %v2192 = vrot.slane %v2191, 4
  %v2193 = vadd.f32 %v2191, %v2192
  %v2194 = vrot.slane %v2193, 2
  %v2195 = vadd.f32 %v2193, %v2194
  %v2196 = vrot.slane %v2195, 1
  %v2197 = vadd.f32 %v2195, %v2196
  %v2198 = vsel %vm139, %v2036, 0.0
  %v2199 = vsel %vm141, %v2037, 0.0
  %v2200 = vadd.f32 %v2198, %v2199
  %v2201 = vrot.slane %v2200, 4
  %v2202 = vadd.f32 %v2200, %v2201
  %v2203 = vrot.slane %v2202, 2
  %v2204 = vadd.f32 %v2202, %v2203
  %v2205 = vrot.slane %v2204, 1
  %v2206 = vadd.f32 %v2204, %v2205
  %v2207 = vsel %vm139, %v2038, 0.0
  %v2208 = vsel %vm141, %v2039, 0.0
  %v2209 = vadd.f32 %v2207, %v2208
  %v2210 = vrot.slane %v2209, 4
  %v2211 = vadd.f32 %v2209, %v2210
  %v2212 = vrot.slane %v2211, 2
  %v2213 = vadd.f32 %v2211, %v2212
  %v2214 = vrot.slane %v2213, 1
  %v2215 = vadd.f32 %v2213, %v2214
  %v2216 = vsel %vm139, %v2040, 0.0
  %v2217 = vsel %vm141, %v2041, 0.0
  %v2218 = vadd.f32 %v2216, %v2217
  %v2219 = vrot.slane %v2218, 4
  %v2220 = vadd.f32 %v2218, %v2219
  %v2221 = vrot.slane %v2220, 2
  %v2222 = vadd.f32 %v2220, %v2221
  %v2223 = vrot.slane %v2222, 1
  %v2224 = vadd.f32 %v2222, %v2223
  %v2225 = vsel %vm139, %v2042, 0.0
  %v2226 = vsel %vm141, %v2043, 0.0
  %v2227 = vadd.f32 %v2225, %v2226
  %v2228 = vrot.slane %v2227, 4
  %v2229 = vadd.f32 %v2227, %v2228
  %v2230 = vrot.slane %v2229, 2
  %v2231 = vadd.f32 %v2229, %v2230
  %v2232 = vrot.slane %v2231, 1
  %v2233 = vadd.f32 %v2231, %v2232
  %v2234 = vsel %vm139, %v2044, 0.0
  %v2235 = vsel %vm141, %v2045, 0.0
  %v2236 = vadd.f32 %v2234, %v2235
  %v2237 = vrot.slane %v2236, 4
  %v2238 = vadd.f32 %v2236, %v2237
  %v2239 = vrot.slane %v2238, 2
  %v2240 = vadd.f32 %v2238, %v2239
  %v2241 = vrot.slane %v2240, 1
  %v2242 = vadd.f32 %v2240, %v2241
  %v2243 = vsel %vm139, %v2046, 0.0
  %v2244 = vsel %vm141, %v2047, 0.0
  %v2245 = vadd.f32 %v2243, %v2244
  %v2246 = vrot.slane %v2245, 4
  %v2247 = vadd.f32 %v2245, %v2246
  %v2248 = vrot.slane %v2247, 2
  %v2249 = vadd.f32 %v2247, %v2248
  %v2250 = vrot.slane %v2249, 1
  %v2251 = vadd.f32 %v2249, %v2250
  %v2252 = vsel %vm139, %v2048, 0.0
  %v2253 = vsel %vm141, %v2049, 0.0
  %v2254 = vadd.f32 %v2252, %v2253
  %v2255 = vrot.slane %v2254, 4
  %v2256 = vadd.f32 %v2254, %v2255
  %v2257 = vrot.slane %v2256, 2
  %v2258 = vadd.f32 %v2256, %v2257
  %v2259 = vrot.slane %v2258, 1
  %v2260 = vadd.f32 %v2258, %v2259
  %v2261 = vsel %vm139, %v2050, 0.0
  %v2262 = vsel %vm141, %v2051, 0.0
  %v2263 = vadd.f32 %v2261, %v2262
  %v2264 = vrot.slane %v2263, 4
  %v2265 = vadd.f32 %v2263, %v2264
  %v2266 = vrot.slane %v2265, 2
  %v2267 = vadd.f32 %v2265, %v2266
  %v2268 = vrot.slane %v2267, 1
  %v2269 = vadd.f32 %v2267, %v2268
  %v2270 = vsel %vm139, %v2052, 0.0
  %v2271 = vsel %vm141, %v2053, 0.0
  %v2272 = vadd.f32 %v2270, %v2271
  %v2273 = vrot.slane %v2272, 4
  %v2274 = vadd.f32 %v2272, %v2273
  %v2275 = vrot.slane %v2274, 2
  %v2276 = vadd.f32 %v2274, %v2275
  %v2277 = vrot.slane %v2276, 1
  %v2278 = vadd.f32 %v2276, %v2277
  %v2279 = vsel %vm139, %v2054, 0.0
  %v2280 = vsel %vm141, %v2055, 0.0
  %v2281 = vadd.f32 %v2279, %v2280
  %v2282 = vrot.slane %v2281, 4
  %v2283 = vadd.f32 %v2281, %v2282
  %v2284 = vrot.slane %v2283, 2
  %v2285 = vadd.f32 %v2283, %v2284
  %v2286 = vrot.slane %v2285, 1
  %v2287 = vadd.f32 %v2285, %v2286
  %v2288 = vsel %vm139, %v2056, 0.0
  %v2289 = vsel %vm141, %v2057, 0.0
  %v2290 = vadd.f32 %v2288, %v2289
  %v2291 = vrot.slane %v2290, 4
  %v2292 = vadd.f32 %v2290, %v2291
  %v2293 = vrot.slane %v2292, 2
  %v2294 = vadd.f32 %v2292, %v2293
  %v2295 = vrot.slane %v2294, 1
  %v2296 = vadd.f32 %v2294, %v2295
  %v2297 = vsel %vm139, %v2058, 0.0
  %v2298 = vsel %vm141, %v2059, 0.0
  %v2299 = vadd.f32 %v2297, %v2298
  %v2300 = vrot.slane %v2299, 4
  %v2301 = vadd.f32 %v2299, %v2300
  %v2302 = vrot.slane %v2301, 2
  %v2303 = vadd.f32 %v2301, %v2302
  %v2304 = vrot.slane %v2303, 1
  %v2305 = vadd.f32 %v2303, %v2304
  %v2306 = vsel %vm139, %v2060, 0.0
  %v2307 = vsel %vm141, %v2061, 0.0
  %v2308 = vadd.f32 %v2306, %v2307
  %v2309 = vrot.slane %v2308, 4
  %v2310 = vadd.f32 %v2308, %v2309
  %v2311 = vrot.slane %v2310, 2
  %v2312 = vadd.f32 %v2310, %v2311
  %v2313 = vrot.slane %v2312, 1
  %v2314 = vadd.f32 %v2312, %v2313
  %v2315 = vsel %vm139, %v2062, 0.0
  %v2316 = vsel %vm141, %v2063, 0.0
  %v2317 = vadd.f32 %v2315, %v2316
  %v2318 = vrot.slane %v2317, 4
  %v2319 = vadd.f32 %v2317, %v2318
  %v2320 = vrot.slane %v2319, 2
  %v2321 = vadd.f32 %v2319, %v2320
  %v2322 = vrot.slane %v2321, 1
  %v2323 = vadd.f32 %v2321, %v2322
  %v2324 = vsel %vm139, %v2064, 0.0
  %v2325 = vsel %vm141, %v2065, 0.0
  %v2326 = vadd.f32 %v2324, %v2325
  %v2327 = vrot.slane %v2326, 4
  %v2328 = vadd.f32 %v2326, %v2327
  %v2329 = vrot.slane %v2328, 2
  %v2330 = vadd.f32 %v2328, %v2329
  %v2331 = vrot.slane %v2330, 1
  %v2332 = vadd.f32 %v2330, %v2331
  %v2333 = vsel %vm139, %v2066, 0.0
  %v2334 = vsel %vm141, %v2067, 0.0
  %v2335 = vadd.f32 %v2333, %v2334
  %v2336 = vrot.slane %v2335, 4
  %v2337 = vadd.f32 %v2335, %v2336
  %v2338 = vrot.slane %v2337, 2
  %v2339 = vadd.f32 %v2337, %v2338
  %v2340 = vrot.slane %v2339, 1
  %v2341 = vadd.f32 %v2339, %v2340
  %v2342 = vsel %vm139, %v2068, 0.0
  %v2343 = vsel %vm141, %v2069, 0.0
  %v2344 = vadd.f32 %v2342, %v2343
  %v2345 = vrot.slane %v2344, 4
  %v2346 = vadd.f32 %v2344, %v2345
  %v2347 = vrot.slane %v2346, 2
  %v2348 = vadd.f32 %v2346, %v2347
  %v2349 = vrot.slane %v2348, 1
  %v2350 = vadd.f32 %v2348, %v2349
  %v2351 = vsel %vm139, %v2070, 0.0
  %v2352 = vsel %vm141, %v2071, 0.0
  %v2353 = vadd.f32 %v2351, %v2352
  %v2354 = vrot.slane %v2353, 4
  %v2355 = vadd.f32 %v2353, %v2354
  %v2356 = vrot.slane %v2355, 2
  %v2357 = vadd.f32 %v2355, %v2356
  %v2358 = vrot.slane %v2357, 1
  %v2359 = vadd.f32 %v2357, %v2358
  %v2392 = vsel %vm1709, %v2089, %v2080
  %v2393 = vsel %vm1711, %v2098, %v2392
  %v2394 = vsel %vm1713, %v2107, %v2393
  %v2395 = vsel %vm1715, %v2116, %v2394
  %v2396 = vsel %vm1717, %v2125, %v2395
  %v2397 = vsel %vm1719, %v2134, %v2396
  %v2398 = vsel %vm1721, %v2143, %v2397
  %v2399 = vsel %vm1709, %v2161, %v2152
  %v2400 = vsel %vm1711, %v2170, %v2399
  %v2401 = vsel %vm1713, %v2179, %v2400
  %v2402 = vsel %vm1715, %v2188, %v2401
  %v2403 = vsel %vm1717, %v2197, %v2402
  %v2404 = vsel %vm1719, %v2206, %v2403
  %v2405 = vsel %vm1721, %v2215, %v2404
  %v2406 = vsel %vm1709, %v2233, %v2224
  %v2407 = vsel %vm1711, %v2242, %v2406
  %v2408 = vsel %vm1713, %v2251, %v2407
  %v2409 = vsel %vm1715, %v2260, %v2408
  %v2410 = vsel %vm1717, %v2269, %v2409
  %v2411 = vsel %vm1719, %v2278, %v2410
  %v2412 = vsel %vm1721, %v2287, %v2411
  %v2413 = vsel %vm1709, %v2305, %v2296
  %v2414 = vsel %vm1711, %v2314, %v2413
  %v2415 = vsel %vm1713, %v2323, %v2414
  %v2416 = vsel %vm1715, %v2332, %v2415
  %v2417 = vsel %vm1717, %v2341, %v2416
  %v2418 = vsel %vm1719, %v2350, %v2417
  %v2419 = vsel %vm1721, %v2359, %v2418
  %2420 = vrot.lane.b32.xlu0 %v2398, 16
  %v2421 = vpop.permute.xlu0 %2420
  %2422 = vrot.lane.b32.xlu0 %v2405, 16
  %v2423 = vpop.permute.xlu0 %2422
  %2424 = vrot.lane.b32.xlu0 %v2412, 16
  %v2425 = vpop.permute.xlu0 %2424
  %2426 = vrot.lane.b32.xlu0 %v2419, 16
  %v2427 = vpop.permute.xlu0 %2426
  %vm2432 = vcmask 261248
  %2433 = vst.msk [vmem:[%s2] sm:$0xff] %vm2432, %v2421
  %2434 = vst.msk [vmem:[%s2 + $0x8] sm:$0xff] %vm2432, %v2423
  %2435 = vst.msk [vmem:[%s2 + $0x10] sm:$0xff] %vm2432, %v2425
  %2436 = vst.msk [vmem:[%s2 + $0x18] sm:$0xff] %vm2432, %v2427
  // Predicated region
  $region10: #{raft_stereo_human_forward.45} parent=0 // pred_check
    _
  $region11: #{raft_stereo_human_forward.45} parent=0 // pred_check_branch
    %2438 = sbr.rel (0) target = $region13
  $region12: #{raft_stereo_human_forward.45} parent=0 // pred_region
    _
  $region13: #{raft_stereo_human_forward.45} parent=0 // pred_fallthru
    _
  // Predicated region
  $region14: #{raft_stereo_human_forward.45} parent=0 // pred_check
    _
  $region15: #{raft_stereo_human_forward.45} parent=0 // pred_check_branch
    %2440 = sbr.rel (0) target = $region17
  $region16: #{raft_stereo_human_forward.45} parent=0 // pred_region
    _
  $region17: #{raft_stereo_human_forward.45} parent=0 // pred_fallthru
    _

</llo_original>
